<compile_context>
chip_gen: v7x
topology: tpu7x:2x2x1
jax: 0.10.0
libtpu: 0.0.40
codegen_flags: <defaults>
</compile_context>

<pallas_src>
import functools

import jax
import jax.numpy as jnp
from jax.experimental import pallas as pl
from jax.experimental.pallas import tpu as pltpu

BN_EPS = 1e-5
LANE = 128
MATMUL_DTYPE = jnp.bfloat16      # MXU operand dtype (accumulation stays f32)
Y35_DTYPE = jnp.bfloat16         # HBM dtype of the 3x3/5x5 conv intermediate


def _round_up(x, m):
    return ((x + m - 1) // m) * m


def _vmem_limit_bytes():
    """Generation-aware scoped-VMEM budget (~3/4 of physical VMEM)."""
    try:
        cap = getattr(pltpu.get_tpu_info(), "vmem_capacity_bytes", None)
        if cap:
            return int(cap) * 3 // 4
    except Exception:
        pass
    return 48 * 1024 * 1024       # safe on v5e/v6e (128 MiB) and v7x (64 MiB)


def _pick_row_tile(h):
    """Spatial row tile for the fused 3x3/5x5 kernel."""
    return 8 if h % 8 == 0 else h


def _pick_tile_m(m, cap=1024):
    """Row tile for the (M, C) finalize pass.  Prefers a divisor of M; falls
    back to a cdiv grid with a masked tail block."""
    if m <= cap:
        return m, 1
    cap8 = (cap // 8) * 8
    for t in range(cap8, 7, -8):
        if m % t == 0:
            return t, m // t
    return cap8, pl.cdiv(m, cap8)


# ----------------------------------------------------------------------------
# Kernels
# ----------------------------------------------------------------------------
def stem_kernel(x_ref, wmain_ref, wpool_ref, y_ref, stat_ref, *, H, W):
    """Fused x-consumers for one batch element.

    x_ref     : (1, H, W, Cin) f32
    wmain_ref : (Cin, CP1) bf16   columns [b1 | b2r | b3r | 0  | pad]
    wpool_ref : (Cin, CP1) bf16   columns [0  | 0   | 0   | b4 | pad]
    y_ref     : (H*W, CP1) f32    raw conv outputs (pre-BN)
    stat_ref  : (1, 8, CP1) f32   rows 0..3 = per-channel sum, 4..7 = sum of squares
    """
    x = x_ref[...]
    cin = x.shape[-1]
    a = jnp.maximum(x, 0.0)                       # shared ReLU

    # branch_4 3x3/s1/p1 max pool (zero padding == -inf padding after ReLU),
    # computed separably with shifted maxes - no pooled HBM intermediate.
    zr = jnp.zeros_like(a[:, :1])
    mh = jnp.maximum(a, jnp.concatenate([a[:, 1:], zr], axis=1))
    mh = jnp.maximum(mh, jnp.concatenate([zr, a[:, :-1]], axis=1))
    zc = jnp.zeros_like(mh[:, :, :1])
    mp = jnp.maximum(mh, jnp.concatenate([mh[:, :, 1:], zc], axis=2))
    mp = jnp.maximum(mp, jnp.concatenate([zc, mh[:, :, :-1]], axis=2))

    a2 = a.reshape(H * W, cin).astype(wmain_ref.dtype)
    p2 = mp.reshape(H * W, cin).astype(wpool_ref.dtype)
    # Conv biases dropped: exactly cancelled by training-mode BN mean subtraction.
    y = (jnp.dot(a2, wmain_ref[...], preferred_element_type=jnp.float32)
         + jnp.dot(p2, wpool_ref[...], preferred_element_type=jnp.float32))
    y_ref[...] = y

    cp = y.shape[-1]
    s = jnp.sum(y, axis=0, keepdims=True)
    s2 = jnp.sum(y * y, axis=0, keepdims=True)
    stat_ref[...] = jnp.concatenate(
        [jnp.broadcast_to(s, (4, cp)), jnp.broadcast_to(s2, (4, cp))],
        axis=0).reshape(1, 8, cp)


def conv35_kernel(y1_ref, sc_ref, sh_ref, w_ref, y35_ref, stat_ref,
                  ap_ref, lhs_ref, *, H, W, TH, CP1):
    """Fused 3x3 + 5x5 conv_blocks on one batch element, tiled over TH rows.

    y1_ref  : (1, H, W, CP1) f32  raw stem slab (resident across row tiles)
    sc_ref  : (1, CP1) f32        fused BN scale  = gamma * rsqrt(var + eps)
    sh_ref  : (1, CP1) f32        fused BN shift  = beta - mean * scale
    w_ref   : (25*CP1, C35) bf16  folded weights (3x3 in the central taps)
    y35_ref : (TH*W, C35) bf16    raw conv outputs (pre-BN)
    stat_ref: (1, 8, C35) f32     per-row-tile partial BN sums
    ap_ref  : VMEM (H+4, W+4, CP1) f32  normalized+ReLU'd, zero-padded slab
    lhs_ref : VMEM (TH*W, 25*CP1) bf16  im2col row tile
    """
    rt = pl.program_id(1)

    @pl.when(rt == 0)
    def _():
        # BN normalize + ReLU of the 1x1 reductions, fused (no HBM round trip).
        ap_ref[...] = jnp.zeros_like(ap_ref)
        a = jnp.maximum(y1_ref[...] * sc_ref[...] + sh_ref[...], 0.0)
        ap_ref[pl.ds(2, H), pl.ds(2, W), :] = a.reshape(H, W, CP1)

    # Fold all 25 taps into the contraction dimension: one big-K MXU matmul.
    r0 = rt * TH
    for tap in range(25):
        dy, dx = tap // 5, tap % 5
        patch = ap_ref[pl.ds(r0 + dy, TH), pl.ds(dx, W), :]
        lhs_ref[:, pl.ds(tap * CP1, CP1)] = (
            patch.reshape(TH * W, CP1).astype(lhs_ref.dtype))

    y = jnp.dot(lhs_ref[...], w_ref[...], preferred_element_type=jnp.float32)
    y35_ref[...] = y.astype(y35_ref.dtype)

    cp = y.shape[-1]
    s = jnp.sum(y, axis=0, keepdims=True)
    s2 = jnp.sum(y * y, axis=0, keepdims=True)
    stat_ref[...] = jnp.concatenate(
        [jnp.broadcast_to(s, (4, cp)), jnp.broadcast_to(s2, (4, cp))],
        axis=0).reshape(1, 8, cp)


def finalize_kernel(y1_ref, y35_ref, sc1_ref, sh1_ref, sc35_ref, sh35_ref,
                    sel1_ref, sel35_ref, out_ref):
    """BN-normalize every branch and pack channels straight into the final
    concat layout.  The channel permutation is an exact 0/1 selection matmul
    (avoids sub-128 lane slicing and a separate XLA concat pass)."""
    n1 = y1_ref[...] * sc1_ref[...] + sh1_ref[...]
    n35 = y35_ref[...].astype(jnp.float32) * sc35_ref[...] + sh35_ref[...]
    out_ref[...] = (
        jnp.dot(n1, sel1_ref[...], preferred_element_type=jnp.float32)
        + jnp.dot(n35, sel35_ref[...], preferred_element_type=jnp.float32))


# ----------------------------------------------------------------------------
# Host-side helpers
# ----------------------------------------------------------------------------
def _bn_scale_shift(s, s2, gamma, beta, count):
    """Fused BN affine from accumulated sums (training-mode, biased variance).

    TODO(synk): E[y^2] - mean^2 in f32 can cancel for very large M; switch to
    shifted / Welford-combined sums if realistic sizes show variance underflow.
    """
    mean = s / count
    var = jnp.maximum(s2 / count - mean * mean, 0.0)
    scale = gamma * jax.lax.rsqrt(var + BN_EPS)
    shift = beta - mean * scale
    return scale.reshape(1, -1), shift.reshape(1, -1)


# ----------------------------------------------------------------------------
# Inception forward (Pallas-backed)
# ----------------------------------------------------------------------------
@jax.jit
def inception_forward(x_nchw, params):
    x = jnp.transpose(x_nchw, (0, 2, 3, 1))                     # NCHW -> NHWC
    n, h, w, cin = x.shape
    p1, p2r, p2 = params["b1"], params["b2_reduce"], params["b2"]
    p3r, p3, p4 = params["b3_reduce"], params["b3"], params["b4"]
    o1, r3, o3 = p1["w"].shape[-1], p2r["w"].shape[-1], p2["w"].shape[-1]
    r5, o5, op = p3r["w"].shape[-1], p3["w"].shape[-1], p4["w"].shape[-1]

    c4 = o1 + r3 + r5                          # column where b4 starts in the stem slab
    CP1 = _round_up(o1 + r3 + r5 + op, LANE)   # stem slab width
    C3P = _round_up(o3, LANE)
    C5P = _round_up(o5, LANE)
    C35 = C3P + C5P                            # 3x3/5x5 slab width
    CO = o1 + o3 + o5 + op                     # real output channels
    M = n * h * w
    vmem_limit = _vmem_limit_bytes()

    # ---- stem weights: [b1 | b2r | b3r | b4 | pad] along Cout ----------------
    w_main = jnp.zeros((cin, CP1), jnp.float32)
    w_main = w_main.at[:, :o1].set(p1["w"][0, 0])
    w_main = w_main.at[:, o1:o1 + r3].set(p2r["w"][0, 0])
    w_main = w_main.at[:, o1 + r3:c4].set(p3r["w"][0, 0])
    w_pool = jnp.zeros((cin, CP1), jnp.float32)
    w_pool = w_pool.at[:, c4:c4 + op].set(p4["w"][0, 0])
    w_main = w_main.astype(MATMUL_DTYPE)
    w_pool = w_pool.astype(MATMUL_DTYPE)

    gam1 = jnp.ones((CP1,), jnp.float32)
    bet1 = jnp.zeros((CP1,), jnp.float32)
    gam1 = (gam1.at[:o1].set(p1["gamma"]).at[o1:o1 + r3].set(p2r["gamma"])
            .at[o1 + r3:c4].set(p3r["gamma"]).at[c4:c4 + op].set(p4["gamma"]))
    bet1 = (bet1.at[:o1].set(p1["beta"]).at[o1:o1 + r3].set(p2r["beta"])
            .at[o1 + r3:c4].set(p3r["beta"]).at[c4:c4 + op].set(p4["beta"]))

    # ---- folded 3x3 + 5x5 weights (3x3 sits in the central 3x3 taps) ---------
    w35 = jnp.zeros((5, 5, CP1, C35), jnp.float32)
    w35 = w35.at[1:4, 1:4, o1:o1 + r3, :o3].set(p2["w"])
    w35 = w35.at[:, :, o1 + r3:c4, C3P:C3P + o5].set(p3["w"])
    w35 = w35.reshape(25 * CP1, C35).astype(MATMUL_DTYPE)

    gam35 = jnp.ones((C35,), jnp.float32)
    bet35 = jnp.zeros((C35,), jnp.float32)
    gam35 = gam35.at[:o3].set(p2["gamma"]).at[C3P:C3P + o5].set(p3["gamma"])
    bet35 = bet35.at[:o3].set(p2["beta"]).at[C3P:C3P + o5].set(p3["beta"])

    # ---- 0/1 channel-selection matrices for the final concat layout ----------
    sel1 = jnp.zeros((CP1, CO), jnp.float32)
    sel1 = sel1.at[:o1, :o1].set(jnp.eye(o1, dtype=jnp.float32))
    sel1 = sel1.at[c4:c4 + op, o1 + o3 + o5:].set(jnp.eye(op, dtype=jnp.float32))
    sel35 = jnp.zeros((C35, CO), jnp.float32)
    sel35 = sel35.at[:o3, o1:o1 + o3].set(jnp.eye(o3, dtype=jnp.float32))
    sel35 = sel35.at[C3P:C3P + o5, o1 + o3:o1 + o3 + o5].set(
        jnp.eye(o5, dtype=jnp.float32))

    # ---- pass 1a: stem (one pallas_call over batch elements, "parallel") -----
    hw = h * w
    y1, st1 = pl.pallas_call(
        functools.partial(stem_kernel, H=h, W=w),
        out_shape=(jax.ShapeDtypeStruct((M, CP1), jnp.float32),
                   jax.ShapeDtypeStruct((n, 8, CP1), jnp.float32)),
        grid=(n,),
        in_specs=[pl.BlockSpec((1, h, w, cin), lambda i: (i, 0, 0, 0)),
                  pl.BlockSpec((cin, CP1), lambda i: (0, 0)),
                  pl.BlockSpec((cin, CP1), lambda i: (0, 0))],
        out_specs=(pl.BlockSpec((hw, CP1), lambda i: (i, 0)),
                   pl.BlockSpec((1, 8, CP1), lambda i: (i, 0, 0))),
        compiler_params=pltpu.CompilerParams(
            dimension_semantics=("parallel",), vmem_limit_bytes=vmem_limit),
        cost_estimate=pl.CostEstimate(
            flops=4 * M * cin * CP1 + 10 * M * cin, transcendentals=0,
            bytes_accessed=4 * M * cin + 4 * M * CP1 + 4 * cin * CP1),
    )(x, w_main, w_pool)

    s1 = jnp.sum(st1[:, 0, :], axis=0)
    q1 = jnp.sum(st1[:, 4, :], axis=0)
    sc1, sh1 = _bn_scale_shift(s1, q1, gam1, bet1, M)

    # ---- pass 1b: fused 3x3 + 5x5 conv_blocks ("parallel", "arbitrary") ------
    TH = _pick_row_tile(h)
    R = h // TH
    y1_nhwc = y1.reshape(n, h, w, CP1)
    y35, st35 = pl.pallas_call(
        functools.partial(conv35_kernel, H=h, W=w, TH=TH, CP1=CP1),
        out_shape=(jax.ShapeDtypeStruct((M, C35), Y35_DTYPE),
                   jax.ShapeDtypeStruct((n * R, 8, C35), jnp.float32)),
        grid=(n, R),
        in_specs=[pl.BlockSpec((1, h, w, CP1), lambda i, r: (i, 0, 0, 0)),
                  pl.BlockSpec((1, CP1), lambda i, r: (0, 0)),
                  pl.BlockSpec((1, CP1), lambda i, r: (0, 0)),
                  pl.BlockSpec((25 * CP1, C35), lambda i, r: (0, 0))],
        out_specs=(pl.BlockSpec((TH * w, C35), lambda i, r, R=R: (i * R + r, 0)),
                   pl.BlockSpec((1, 8, C35), lambda i, r, R=R: (i * R + r, 0, 0))),
        scratch_shapes=[pltpu.VMEM((h + 4, w + 4, CP1), jnp.float32),
                        pltpu.VMEM((TH * w, 25 * CP1), MATMUL_DTYPE)],
        compiler_params=pltpu.CompilerParams(
            dimension_semantics=("parallel", "arbitrary"),
            vmem_limit_bytes=vmem_limit),
        cost_estimate=pl.CostEstimate(
            flops=2 * M * 25 * CP1 * C35 + 4 * M * CP1, transcendentals=0,
            bytes_accessed=4 * M * CP1 + 2 * M * C35 + 2 * 25 * CP1 * C35),
    )(y1_nhwc, sc1, sh1, w35)

    s35 = jnp.sum(st35[:, 0, :], axis=0)
    q35 = jnp.sum(st35[:, 4, :], axis=0)
    sc35, sh35 = _bn_scale_shift(s35, q35, gam35, bet35, M)

    # ---- pass 2: normalize + pack channels into the concat layout ------------
    TM, G = _pick_tile_m(M)
    out_flat = pl.pallas_call(
        finalize_kernel,
        out_shape=jax.ShapeDtypeStruct((M, CO), jnp.float32),
        grid=(G,),
        in_specs=[pl.BlockSpec((TM, CP1), lambda i: (i, 0)),
                  pl.BlockSpec((TM, C35), lambda i: (i, 0)),
                  pl.BlockSpec((1, CP1), lambda i: (0, 0)),
                  pl.BlockSpec((1, CP1), lambda i: (0, 0)),
                  pl.BlockSpec((1, C35), lambda i: (0, 0)),
                  pl.BlockSpec((1, C35), lambda i: (0, 0)),
                  pl.BlockSpec((CP1, CO), lambda i: (0, 0)),
                  pl.BlockSpec((C35, CO), lambda i: (0, 0))],
        out_specs=pl.BlockSpec((TM, CO), lambda i: (i, 0)),
        compiler_params=pltpu.CompilerParams(
            dimension_semantics=("parallel",), vmem_limit_bytes=vmem_limit),
        cost_estimate=pl.CostEstimate(
            flops=2 * M * (CP1 + C35) * CO + 4 * M * (CP1 + C35),
            transcendentals=0,
            bytes_accessed=4 * M * CP1 + 2 * M * C35 + 4 * M * CO),
    )(y1, y35, sc1, sh1, sc35, sh35, sel1, sel35)

    out = out_flat.reshape(n, h, w, CO)
    return jnp.transpose(out, (0, 3, 1, 2))                     # NHWC -> NCHW


# ----------------------------------------------------------------------------
# Parameter construction (deterministic, synthetic)
# ----------------------------------------------------------------------------
def make_conv_block_params(key, cin, cout, k):
    k0, k1, k2, k3 = jax.random.split(key, 4)
    return dict(
        w=0.1 * jax.random.normal(k0, (k, k, cin, cout), jnp.float32),   # HWIO
        b=0.1 * jax.random.normal(k1, (cout,), jnp.float32),
        gamma=1.0 + 0.1 * jax.random.normal(k2, (cout,), jnp.float32),
        beta=0.1 * jax.random.normal(k3, (cout,), jnp.float32),
    )


def make_inception_params(key, in_channels, out_1, red_3, out_3, red_5, out_5,
                          out_pool):
    keys = jax.random.split(key, 6)
    return dict(
        b1=make_conv_block_params(keys[0], in_channels, out_1, 1),
        b2_reduce=make_conv_block_params(keys[1], in_channels, red_3, 1),
        b2=make_conv_block_params(keys[2], red_3, out_3, 3),
        b3_reduce=make_conv_block_params(keys[3], in_channels, red_5, 1),
        b3=make_conv_block_params(keys[4], red_5, out_5, 5),
        b4=make_conv_block_params(keys[5], in_channels, out_pool, 1),
    )


# ----------------------------------------------------------------------------
# Pure-JAX reference (mirrors the PyTorch forward) for validation
# ----------------------------------------------------------------------------
def _conv_block_ref(x_nhwc, p, *, matmul_dtype):
    k = p["w"].shape[0]
    pad = (k - 1) // 2
    a = jnp.maximum(x_nhwc, 0.0)
    y = jax.lax.conv_general_dilated(
        a.astype(matmul_dtype), p["w"].astype(matmul_dtype),
        window_strides=(1, 1), padding=[(pad, pad), (pad, pad)],
        dimension_numbers=("NHWC", "HWIO", "NHWC"),
        preferred_element_type=jnp.float32,
        precision=jax.lax.Precision.HIGHEST) + p["b"]
    mean = y.mean(axis=(0, 1, 2))
    var = ((y - mean) ** 2).mean(axis=(0, 1, 2))
    return (y - mean) * jax.lax.rsqrt(var + BN_EPS) * p["gamma"] + p["beta"]


def _inception_ref(x_nchw, params, *, matmul_dtype):
    x = jnp.transpose(x_nchw, (0, 2, 3, 1))
    cb = functools.partial(_conv_block_ref, matmul_dtype=matmul_dtype)
    b1 = cb(x, params["b1"])
    b2 = cb(cb(x, params["b2_reduce"]), params["b2"])
    b3 = cb(cb(x, params["b3_reduce"]), params["b3"])
    pooled = jax.lax.reduce_window(
        x, -jnp.inf, jax.lax.max, (1, 3, 3, 1), (1, 1, 1, 1),
        [(0, 0), (1, 1), (1, 1), (0, 0)])
    b4 = cb(pooled, params["b4"])
    out = jnp.concatenate([b1, b2, b3, b4], axis=-1)
    return jnp.transpose(out, (0, 3, 1, 2))


# ----------------------------------------------------------------------------
if __name__ == "__main__":
    key = jax.random.PRNGKey(0)
    k_x, k_p = jax.random.split(key)

    # Small shapes: batch=2, in_channels=4, spatial=16x16 (NCHW like PyTorch).
    N, C, H, W = 2, 4, 16, 16
    x = jax.random.normal(k_x, (N, C, H, W), jnp.float32)

    # inception(in_channels=4, out_1=8, reduction_3=4, out_3=8,
    #           reduction_5=4, out_5=8, out_pool=8) -> 32 output channels.
    params = make_inception_params(k_p, C, 8, 4, 8, 4, 8, 8)

    out = jax.block_until_ready(inception_forward(x, params))
    assert out.shape == (N, 32, H, W), out.shape

    # Precision-matched reference (bf16 MXU operands, f32 accumulation).
    ref_matched = _inception_ref(x, params, matmul_dtype=MATMUL_DTYPE)
    err = float(jnp.max(jnp.abs(out - ref_matched)))
    assert err < 3e-2, err

    # Full-f32 reference (exact PyTorch semantics): RMS-level sanity check.
    ref_f32 = _inception_ref(x, params, matmul_dtype=jnp.float32)
    rms = float(jnp.sqrt(jnp.mean((out - ref_f32) ** 2)))
    assert rms < 6e-2, rms

    print("KERNEL_OK")
</pallas_src>

<mosaic_0001>
module attributes {stable_mosaic.version = 11 : i64} {
  func.func @stem_kernel(%arg0: i32, %arg1: memref<1x16x16x4xf32, #tpu.memory_space<vmem>>, %arg2: memref<4x128xbf16, #tpu.memory_space<vmem>>, %arg3: memref<4x128xbf16, #tpu.memory_space<vmem>>, %arg4: memref<256x128xf32, #tpu.memory_space<vmem>>, %arg5: memref<1x8x128xf32, #tpu.memory_space<vmem>>) attributes {dimension_semantics = [#tpu.dimension_semantics<parallel>], iteration_bounds = array<i64: 2>, scalar_prefetch = 0 : i64, scratch_operands = 0 : i64, tpu.core_type = #tpu.core_type<tc>, window_params = [{transform_indices = @transform_0, window_bounds = array<i64: 1, 16, 16, 4>}, {pipeline_mode = #tpu.pipeline_mode<synchronous>, transform_indices = @transform_1, window_bounds = array<i64: 4, 128>}, {pipeline_mode = #tpu.pipeline_mode<synchronous>, transform_indices = @transform_2, window_bounds = array<i64: 4, 128>}, {transform_indices = @transform_3, window_bounds = array<i64: 256, 128>}, {transform_indices = @transform_4, window_bounds = array<i64: 1, 8, 128>}]} {
    %c0 = arith.constant 0 : index
    %c0_0 = arith.constant 0 : index
    %c0_1 = arith.constant 0 : index
    %c0_2 = arith.constant 0 : index
    %0 = vector.load %arg1[%c0, %c0_0, %c0_1, %c0_2] : memref<1x16x16x4xf32, #tpu.memory_space<vmem>>, vector<1x16x16x4xf32>
    %cst = arith.constant 0.000000e+00 : f32
    %1 = vector.broadcast %cst : f32 to vector<1x16x16x4xf32>
    %2 = arith.maximumf %0, %1 : vector<1x16x16x4xf32>
    %cst_3 = arith.constant 0.000000e+00 : f32
    %3 = vector.broadcast %cst_3 : f32 to vector<1x1x16x4xf32>
    %4 = vector.extract_strided_slice %2 {offsets = [0, 1, 0, 0], sizes = [1, 15, 16, 4], strides = [1, 1, 1, 1]} : vector<1x16x16x4xf32> to vector<1x15x16x4xf32>
    %5 = tpu.concatenate %4, %3 in 1 : vector<1x15x16x4xf32>, vector<1x1x16x4xf32> -> vector<1x16x16x4xf32>
    %6 = arith.maximumf %2, %5 : vector<1x16x16x4xf32>
    %7 = vector.extract_strided_slice %2 {offsets = [0, 0, 0, 0], sizes = [1, 15, 16, 4], strides = [1, 1, 1, 1]} : vector<1x16x16x4xf32> to vector<1x15x16x4xf32>
    %8 = tpu.concatenate %3, %7 in 1 : vector<1x1x16x4xf32>, vector<1x15x16x4xf32> -> vector<1x16x16x4xf32>
    %9 = arith.maximumf %6, %8 : vector<1x16x16x4xf32>
    %cst_4 = arith.constant 0.000000e+00 : f32
    %10 = vector.broadcast %cst_4 : f32 to vector<1x16x1x4xf32>
    %11 = vector.extract_strided_slice %9 {offsets = [0, 0, 1, 0], sizes = [1, 16, 15, 4], strides = [1, 1, 1, 1]} : vector<1x16x16x4xf32> to vector<1x16x15x4xf32>
    %12 = tpu.concatenate %11, %10 in 2 : vector<1x16x15x4xf32>, vector<1x16x1x4xf32> -> vector<1x16x16x4xf32>
    %13 = arith.maximumf %9, %12 : vector<1x16x16x4xf32>
    %14 = vector.extract_strided_slice %9 {offsets = [0, 0, 0, 0], sizes = [1, 16, 15, 4], strides = [1, 1, 1, 1]} : vector<1x16x16x4xf32> to vector<1x16x15x4xf32>
    %15 = tpu.concatenate %10, %14 in 2 : vector<1x16x1x4xf32>, vector<1x16x15x4xf32> -> vector<1x16x16x4xf32>
    %16 = arith.maximumf %13, %15 : vector<1x16x16x4xf32>
    %17 = vector.shape_cast %2 : vector<1x16x16x4xf32> to vector<256x4xf32>
    %18 = arith.truncf %17 : vector<256x4xf32> to vector<256x4xbf16>
    %19 = vector.shape_cast %16 : vector<1x16x16x4xf32> to vector<256x4xf32>
    %20 = arith.truncf %19 : vector<256x4xf32> to vector<256x4xbf16>
    %c0_5 = arith.constant 0 : index
    %c0_6 = arith.constant 0 : index
    %21 = vector.load %arg2[%c0_5, %c0_6] : memref<4x128xbf16, #tpu.memory_space<vmem>>, vector<4x128xbf16>
    %cst_7 = arith.constant dense<0.000000e+00> : vector<256x128xf32>
    %22 = tpu.matmul %18, %21, %cst_7 {dimension_numbers = #tpu.dot_dimension_numbers<[1], [0], [0], [1], [0, 0, 1, 1], [], []>} : vector<256x4xbf16>, vector<4x128xbf16>, vector<256x128xf32> -> vector<256x128xf32>
    %c0_8 = arith.constant 0 : index
    %c0_9 = arith.constant 0 : index
    %23 = vector.load %arg3[%c0_8, %c0_9] : memref<4x128xbf16, #tpu.memory_space<vmem>>, vector<4x128xbf16>
    %cst_10 = arith.constant dense<0.000000e+00> : vector<256x128xf32>
    %24 = tpu.matmul %20, %23, %cst_10 {dimension_numbers = #tpu.dot_dimension_numbers<[1], [0], [0], [1], [0, 0, 1, 1], [], []>} : vector<256x4xbf16>, vector<4x128xbf16>, vector<256x128xf32> -> vector<256x128xf32>
    %25 = arith.addf %22, %24 : vector<256x128xf32>
    %c0_11 = arith.constant 0 : index
    %c0_12 = arith.constant 0 : index
    %26 = vector.load %arg4[%c0_11, %c0_12] : memref<256x128xf32, #tpu.memory_space<vmem>>, vector<256x128xf32>
    tpu.vector_store %arg4[%c0_11, %c0_12], %25 {strides = array<i32>} : memref<256x128xf32, #tpu.memory_space<vmem>>, vector<256x128xf32>,
    %cst_13 = arith.constant dense<0.000000e+00> : vector<128xf32>
    %27 = vector.multi_reduction <add>, %25, %cst_13 [0] : vector<256x128xf32> to vector<128xf32>
    %28 = vector.shape_cast %27 : vector<128xf32> to vector<1x128xf32>
    %29 = arith.mulf %25, %25 : vector<256x128xf32>
    %cst_14 = arith.constant dense<0.000000e+00> : vector<128xf32>
    %30 = vector.multi_reduction <add>, %29, %cst_14 [0] : vector<256x128xf32> to vector<128xf32>
    %31 = vector.shape_cast %30 : vector<128xf32> to vector<1x128xf32>
    %32 = vector.shape_cast %28 : vector<1x128xf32> to vector<1x128xf32>
    %33 = vector.broadcast %32 : vector<1x128xf32> to vector<4x128xf32>
    %34 = vector.shape_cast %31 : vector<1x128xf32> to vector<1x128xf32>
    %35 = vector.broadcast %34 : vector<1x128xf32> to vector<4x128xf32>
    %36 = tpu.concatenate %33, %35 in 0 : vector<4x128xf32>, vector<4x128xf32> -> vector<8x128xf32>
    %37 = vector.shape_cast %36 : vector<8x128xf32> to vector<1x8x128xf32>
    %c0_15 = arith.constant 0 : index
    %c0_16 = arith.constant 0 : index
    %c0_17 = arith.constant 0 : index
    %38 = vector.load %arg5[%c0_15, %c0_16, %c0_17] : memref<1x8x128xf32, #tpu.memory_space<vmem>>, vector<1x8x128xf32>
    tpu.vector_store %arg5[%c0_15, %c0_16, %c0_17], %37 {strides = array<i32>} : memref<1x8x128xf32, #tpu.memory_space<vmem>>, vector<1x8x128xf32>,
    return
  }
  func.func @transform_0(%arg0: i32) -> (i32, i32, i32, i32) {
    %c0_i32 = arith.constant 0 : i32
    %c0_i32_0 = arith.constant 0 : i32
    %c0_i32_1 = arith.constant 0 : i32
    %c0_i32_2 = arith.constant 0 : i32
    return %arg0, %c0_i32, %c0_i32_0, %c0_i32_1 : i32, i32, i32, i32
  }
  func.func @transform_1(%arg0: i32) -> (i32, i32) {
    %c0_i32 = arith.constant 0 : i32
    %c0_i32_0 = arith.constant 0 : i32
    %c0_i32_1 = arith.constant 0 : i32
    return %c0_i32, %c0_i32_0 : i32, i32
  }
  func.func @transform_2(%arg0: i32) -> (i32, i32) {
    %c0_i32 = arith.constant 0 : i32
    %c0_i32_0 = arith.constant 0 : i32
    %c0_i32_1 = arith.constant 0 : i32
    return %c0_i32, %c0_i32_0 : i32, i32
  }
  func.func @transform_3(%arg0: i32) -> (i32, i32) {
    %c0_i32 = arith.constant 0 : i32
    %c0_i32_0 = arith.constant 0 : i32
    return %arg0, %c0_i32 : i32, i32
  }
  func.func @transform_4(%arg0: i32) -> (i32, i32, i32) {
    %c0_i32 = arith.constant 0 : i32
    %c0_i32_0 = arith.constant 0 : i32
    %c0_i32_1 = arith.constant 0 : i32
    return %arg0, %c0_i32, %c0_i32_0 : i32, i32, i32
  }
}

module attributes {stable_mosaic.version = 11 : i64} {
  func.func @conv35_kernel(%arg0: i32, %arg1: i32, %arg2: memref<1x16x16x128xf32, #tpu.memory_space<vmem>>, %arg3: memref<1x128xf32, #tpu.memory_space<vmem>>, %arg4: memref<1x128xf32, #tpu.memory_space<vmem>>, %arg5: memref<3200x256xbf16, #tpu.memory_space<vmem>>, %arg6: memref<128x256xbf16, #tpu.memory_space<vmem>>, %arg7: memref<1x8x256xf32, #tpu.memory_space<vmem>>, %arg8: memref<20x20x128xf32, #tpu.memory_space<vmem>>, %arg9: memref<128x3200xbf16, #tpu.memory_space<vmem>>) attributes {dimension_semantics = [#tpu.dimension_semantics<parallel>, #tpu.dimension_semantics<arbitrary>], iteration_bounds = array<i64: 2, 2>, scalar_prefetch = 0 : i64, scratch_operands = 2 : i64, tpu.core_type = #tpu.core_type<tc>, window_params = [{transform_indices = @transform_0, window_bounds = array<i64: 1, 16, 16, 128>}, {pipeline_mode = #tpu.pipeline_mode<synchronous>, transform_indices = @transform_1, window_bounds = array<i64: 1, 128>}, {pipeline_mode = #tpu.pipeline_mode<synchronous>, transform_indices = @transform_2, window_bounds = array<i64: 1, 128>}, {pipeline_mode = #tpu.pipeline_mode<synchronous>, transform_indices = @transform_3, window_bounds = array<i64: 3200, 256>}, {transform_indices = @transform_4, window_bounds = array<i64: 128, 256>}, {transform_indices = @transform_5, window_bounds = array<i64: 1, 8, 256>}]} {
    %c0_i32 = arith.constant 0 : i32
    %0 = arith.cmpi eq, %arg1, %c0_i32 : i32
    %1 = arith.extui %0 : i1 to i32
    %c0_i32_0 = arith.constant 0 : i32
    %2 = arith.cmpi ne, %1, %c0_i32_0 : i32
    scf.if %2 {
      %cst_104 = arith.constant 0.000000e+00 : f32
      %171 = vector.broadcast %cst_104 : f32 to vector<20x20x128xf32>
      %c0_105 = arith.constant 0 : index
      %c0_106 = arith.constant 0 : index
      %c0_107 = arith.constant 0 : index
      %172 = vector.load %arg8[%c0_105, %c0_106, %c0_107] : memref<20x20x128xf32, #tpu.memory_space<vmem>>, vector<20x20x128xf32>
      tpu.vector_store %arg8[%c0_105, %c0_106, %c0_107], %171 {strides = array<i32>} : memref<20x20x128xf32, #tpu.memory_space<vmem>>, vector<20x20x128xf32>,
      %c0_108 = arith.constant 0 : index
      %c0_109 = arith.constant 0 : index
      %c0_110 = arith.constant 0 : index
      %c0_111 = arith.constant 0 : index
      %173 = vector.load %arg2[%c0_108, %c0_109, %c0_110, %c0_111] : memref<1x16x16x128xf32, #tpu.memory_space<vmem>>, vector<1x16x16x128xf32>
      %c0_112 = arith.constant 0 : index
      %c0_113 = arith.constant 0 : index
      %174 = vector.load %arg3[%c0_112, %c0_113] : memref<1x128xf32, #tpu.memory_space<vmem>>, vector<1x128xf32>
      %175 = vector.shape_cast %174 : vector<1x128xf32> to vector<1x1x1x128xf32>
      %176 = vector.broadcast %175 : vector<1x1x1x128xf32> to vector<1x16x16x128xf32>
      %177 = arith.mulf %173, %176 : vector<1x16x16x128xf32>
      %c0_114 = arith.constant 0 : index
      %c0_115 = arith.constant 0 : index
      %178 = vector.load %arg4[%c0_114, %c0_115] : memref<1x128xf32, #tpu.memory_space<vmem>>, vector<1x128xf32>
      %179 = vector.shape_cast %178 : vector<1x128xf32> to vector<1x1x1x128xf32>
      %180 = vector.broadcast %179 : vector<1x1x1x128xf32> to vector<1x16x16x128xf32>
      %181 = arith.addf %177, %180 : vector<1x16x16x128xf32>
      %cst_116 = arith.constant 0.000000e+00 : f32
      %182 = vector.broadcast %cst_116 : f32 to vector<1x16x16x128xf32>
      %183 = arith.maximumf %181, %182 : vector<1x16x16x128xf32>
      %184 = vector.shape_cast %183 : vector<1x16x16x128xf32> to vector<16x16x128xf32>
      %c2_117 = arith.constant 2 : index
      %c2_118 = arith.constant 2 : index
      %c0_119 = arith.constant 0 : index
      %185 = vector.load %arg8[%c2_117, %c2_118, %c0_119] : memref<20x20x128xf32, #tpu.memory_space<vmem>>, vector<16x16x128xf32>
      tpu.vector_store %arg8[%c2_117, %c2_118, %c0_119], %184 {strides = array<i32>} : memref<20x20x128xf32, #tpu.memory_space<vmem>>, vector<16x16x128xf32>,
    } else {
    }
    %c8_i32 = arith.constant 8 : i32
    %3 = arith.muli %arg1, %c8_i32 : i32
    %c0_i32_1 = arith.constant 0 : i32
    %4 = arith.addi %3, %c0_i32_1 : i32
    %5 = arith.index_cast %4 : i32 to index
    %c0 = arith.constant 0 : index
    %c0_2 = arith.constant 0 : index
    %6 = vector.load %arg8[%5, %c0, %c0_2] : memref<20x20x128xf32, #tpu.memory_space<vmem>>, vector<8x16x128xf32>
    %7 = vector.shape_cast %6 : vector<8x16x128xf32> to vector<128x128xf32>
    %8 = arith.truncf %7 : vector<128x128xf32> to vector<128x128xbf16>
    %c0_3 = arith.constant 0 : index
    %c0_4 = arith.constant 0 : index
    %9 = vector.load %arg9[%c0_3, %c0_4] : memref<128x3200xbf16, #tpu.memory_space<vmem>>, vector<128x128xbf16>
    tpu.vector_store %arg9[%c0_3, %c0_4], %8 {strides = array<i32>} : memref<128x3200xbf16, #tpu.memory_space<vmem>>, vector<128x128xbf16>,
    %c0_i32_5 = arith.constant 0 : i32
    %10 = arith.addi %3, %c0_i32_5 : i32
    %11 = arith.index_cast %10 : i32 to index
    %c1 = arith.constant 1 : index
    %c0_6 = arith.constant 0 : index
    %12 = vector.load %arg8[%11, %c1, %c0_6] : memref<20x20x128xf32, #tpu.memory_space<vmem>>, vector<8x16x128xf32>
    %13 = vector.shape_cast %12 : vector<8x16x128xf32> to vector<128x128xf32>
    %14 = arith.truncf %13 : vector<128x128xf32> to vector<128x128xbf16>
    %c0_7 = arith.constant 0 : index
    %c128 = arith.constant 128 : index
    %15 = vector.load %arg9[%c0_7, %c128] : memref<128x3200xbf16, #tpu.memory_space<vmem>>, vector<128x128xbf16>
    tpu.vector_store %arg9[%c0_7, %c128], %14 {strides = array<i32>} : memref<128x3200xbf16, #tpu.memory_space<vmem>>, vector<128x128xbf16>,
    %c0_i32_8 = arith.constant 0 : i32
    %16 = arith.addi %3, %c0_i32_8 : i32
    %17 = arith.index_cast %16 : i32 to index
    %c2 = arith.constant 2 : index
    %c0_9 = arith.constant 0 : index
    %18 = vector.load %arg8[%17, %c2, %c0_9] : memref<20x20x128xf32, #tpu.memory_space<vmem>>, vector<8x16x128xf32>
    %19 = vector.shape_cast %18 : vector<8x16x128xf32> to vector<128x128xf32>
    %20 = arith.truncf %19 : vector<128x128xf32> to vector<128x128xbf16>
    %c0_10 = arith.constant 0 : index
    %c256 = arith.constant 256 : index
    %21 = vector.load %arg9[%c0_10, %c256] : memref<128x3200xbf16, #tpu.memory_space<vmem>>, vector<128x128xbf16>
    tpu.vector_store %arg9[%c0_10, %c256], %20 {strides = array<i32>} : memref<128x3200xbf16, #tpu.memory_space<vmem>>, vector<128x128xbf16>,
    %c0_i32_11 = arith.constant 0 : i32
    %22 = arith.addi %3, %c0_i32_11 : i32
    %23 = arith.index_cast %22 : i32 to index
    %c3 = arith.constant 3 : index
    %c0_12 = arith.constant 0 : index
    %24 = vector.load %arg8[%23, %c3, %c0_12] : memref<20x20x128xf32, #tpu.memory_space<vmem>>, vector<8x16x128xf32>
    %25 = vector.shape_cast %24 : vector<8x16x128xf32> to vector<128x128xf32>
    %26 = arith.truncf %25 : vector<128x128xf32> to vector<128x128xbf16>
    %c0_13 = arith.constant 0 : index
    %c384 = arith.constant 384 : index
    %27 = vector.load %arg9[%c0_13, %c384] : memref<128x3200xbf16, #tpu.memory_space<vmem>>, vector<128x128xbf16>
    tpu.vector_store %arg9[%c0_13, %c384], %26 {strides = array<i32>} : memref<128x3200xbf16, #tpu.memory_space<vmem>>, vector<128x128xbf16>,
    %c0_i32_14 = arith.constant 0 : i32
    %28 = arith.addi %3, %c0_i32_14 : i32
    %29 = arith.index_cast %28 : i32 to index
    %c4 = arith.constant 4 : index
    %c0_15 = arith.constant 0 : index
    %30 = vector.load %arg8[%29, %c4, %c0_15] : memref<20x20x128xf32, #tpu.memory_space<vmem>>, vector<8x16x128xf32>
    %31 = vector.shape_cast %30 : vector<8x16x128xf32> to vector<128x128xf32>
    %32 = arith.truncf %31 : vector<128x128xf32> to vector<128x128xbf16>
    %c0_16 = arith.constant 0 : index
    %c512 = arith.constant 512 : index
    %33 = vector.load %arg9[%c0_16, %c512] : memref<128x3200xbf16, #tpu.memory_space<vmem>>, vector<128x128xbf16>
    tpu.vector_store %arg9[%c0_16, %c512], %32 {strides = array<i32>} : memref<128x3200xbf16, #tpu.memory_space<vmem>>, vector<128x128xbf16>,
    %c1_i32 = arith.constant 1 : i32
    %34 = arith.addi %3, %c1_i32 : i32
    %35 = arith.index_cast %34 : i32 to index
    %c0_17 = arith.constant 0 : index
    %c0_18 = arith.constant 0 : index
    %36 = vector.load %arg8[%35, %c0_17, %c0_18] : memref<20x20x128xf32, #tpu.memory_space<vmem>>, vector<8x16x128xf32>
    %37 = vector.shape_cast %36 : vector<8x16x128xf32> to vector<128x128xf32>
    %38 = arith.truncf %37 : vector<128x128xf32> to vector<128x128xbf16>
    %c0_19 = arith.constant 0 : index
    %c640 = arith.constant 640 : index
    %39 = vector.load %arg9[%c0_19, %c640] : memref<128x3200xbf16, #tpu.memory_space<vmem>>, vector<128x128xbf16>
    tpu.vector_store %arg9[%c0_19, %c640], %38 {strides = array<i32>} : memref<128x3200xbf16, #tpu.memory_space<vmem>>, vector<128x128xbf16>,
    %c1_i32_20 = arith.constant 1 : i32
    %40 = arith.addi %3, %c1_i32_20 : i32
    %41 = arith.index_cast %40 : i32 to index
    %c1_21 = arith.constant 1 : index
    %c0_22 = arith.constant 0 : index
    %42 = vector.load %arg8[%41, %c1_21, %c0_22] : memref<20x20x128xf32, #tpu.memory_space<vmem>>, vector<8x16x128xf32>
    %43 = vector.shape_cast %42 : vector<8x16x128xf32> to vector<128x128xf32>
    %44 = arith.truncf %43 : vector<128x128xf32> to vector<128x128xbf16>
    %c0_23 = arith.constant 0 : index
    %c768 = arith.constant 768 : index
    %45 = vector.load %arg9[%c0_23, %c768] : memref<128x3200xbf16, #tpu.memory_space<vmem>>, vector<128x128xbf16>
    tpu.vector_store %arg9[%c0_23, %c768], %44 {strides = array<i32>} : memref<128x3200xbf16, #tpu.memory_space<vmem>>, vector<128x128xbf16>,
    %c1_i32_24 = arith.constant 1 : i32
    %46 = arith.addi %3, %c1_i32_24 : i32
    %47 = arith.index_cast %46 : i32 to index
    %c2_25 = arith.constant 2 : index
    %c0_26 = arith.constant 0 : index
    %48 = vector.load %arg8[%47, %c2_25, %c0_26] : memref<20x20x128xf32, #tpu.memory_space<vmem>>, vector<8x16x128xf32>
    %49 = vector.shape_cast %48 : vector<8x16x128xf32> to vector<128x128xf32>
    %50 = arith.truncf %49 : vector<128x128xf32> to vector<128x128xbf16>
    %c0_27 = arith.constant 0 : index
    %c896 = arith.constant 896 : index
    %51 = vector.load %arg9[%c0_27, %c896] : memref<128x3200xbf16, #tpu.memory_space<vmem>>, vector<128x128xbf16>
    tpu.vector_store %arg9[%c0_27, %c896], %50 {strides = array<i32>} : memref<128x3200xbf16, #tpu.memory_space<vmem>>, vector<128x128xbf16>,
    %c1_i32_28 = arith.constant 1 : i32
    %52 = arith.addi %3, %c1_i32_28 : i32
    %53 = arith.index_cast %52 : i32 to index
    %c3_29 = arith.constant 3 : index
    %c0_30 = arith.constant 0 : index
    %54 = vector.load %arg8[%53, %c3_29, %c0_30] : memref<20x20x128xf32, #tpu.memory_space<vmem>>, vector<8x16x128xf32>
    %55 = vector.shape_cast %54 : vector<8x16x128xf32> to vector<128x128xf32>
    %56 = arith.truncf %55 : vector<128x128xf32> to vector<128x128xbf16>
    %c0_31 = arith.constant 0 : index
    %c1024 = arith.constant 1024 : index
    %57 = vector.load %arg9[%c0_31, %c1024] : memref<128x3200xbf16, #tpu.memory_space<vmem>>, vector<128x128xbf16>
    tpu.vector_store %arg9[%c0_31, %c1024], %56 {strides = array<i32>} : memref<128x3200xbf16, #tpu.memory_space<vmem>>, vector<128x128xbf16>,
    %c1_i32_32 = arith.constant 1 : i32
    %58 = arith.addi %3, %c1_i32_32 : i32
    %59 = arith.index_cast %58 : i32 to index
    %c4_33 = arith.constant 4 : index
    %c0_34 = arith.constant 0 : index
    %60 = vector.load %arg8[%59, %c4_33, %c0_34] : memref<20x20x128xf32, #tpu.memory_space<vmem>>, vector<8x16x128xf32>
    %61 = vector.shape_cast %60 : vector<8x16x128xf32> to vector<128x128xf32>
    %62 = arith.truncf %61 : vector<128x128xf32> to vector<128x128xbf16>
    %c0_35 = arith.constant 0 : index
    %c1152 = arith.constant 1152 : index
    %63 = vector.load %arg9[%c0_35, %c1152] : memref<128x3200xbf16, #tpu.memory_space<vmem>>, vector<128x128xbf16>
    tpu.vector_store %arg9[%c0_35, %c1152], %62 {strides = array<i32>} : memref<128x3200xbf16, #tpu.memory_space<vmem>>, vector<128x128xbf16>,
    %c2_i32 = arith.constant 2 : i32
    %64 = arith.addi %3, %c2_i32 : i32
    %65 = arith.index_cast %64 : i32 to index
    %c0_36 = arith.constant 0 : index
    %c0_37 = arith.constant 0 : index
    %66 = vector.load %arg8[%65, %c0_36, %c0_37] : memref<20x20x128xf32, #tpu.memory_space<vmem>>, vector<8x16x128xf32>
    %67 = vector.shape_cast %66 : vector<8x16x128xf32> to vector<128x128xf32>
    %68 = arith.truncf %67 : vector<128x128xf32> to vector<128x128xbf16>
    %c0_38 = arith.constant 0 : index
    %c1280 = arith.constant 1280 : index
    %69 = vector.load %arg9[%c0_38, %c1280] : memref<128x3200xbf16, #tpu.memory_space<vmem>>, vector<128x128xbf16>
    tpu.vector_store %arg9[%c0_38, %c1280], %68 {strides = array<i32>} : memref<128x3200xbf16, #tpu.memory_space<vmem>>, vector<128x128xbf16>,
    %c2_i32_39 = arith.constant 2 : i32
    %70 = arith.addi %3, %c2_i32_39 : i32
    %71 = arith.index_cast %70 : i32 to index
    %c1_40 = arith.constant 1 : index
    %c0_41 = arith.constant 0 : index
    %72 = vector.load %arg8[%71, %c1_40, %c0_41] : memref<20x20x128xf32, #tpu.memory_space<vmem>>, vector<8x16x128xf32>
    %73 = vector.shape_cast %72 : vector<8x16x128xf32> to vector<128x128xf32>
    %74 = arith.truncf %73 : vector<128x128xf32> to vector<128x128xbf16>
    %c0_42 = arith.constant 0 : index
    %c1408 = arith.constant 1408 : index
    %75 = vector.load %arg9[%c0_42, %c1408] : memref<128x3200xbf16, #tpu.memory_space<vmem>>, vector<128x128xbf16>
    tpu.vector_store %arg9[%c0_42, %c1408], %74 {strides = array<i32>} : memref<128x3200xbf16, #tpu.memory_space<vmem>>, vector<128x128xbf16>,
    %c2_i32_43 = arith.constant 2 : i32
    %76 = arith.addi %3, %c2_i32_43 : i32
    %77 = arith.index_cast %76 : i32 to index
    %c2_44 = arith.constant 2 : index
    %c0_45 = arith.constant 0 : index
    %78 = vector.load %arg8[%77, %c2_44, %c0_45] : memref<20x20x128xf32, #tpu.memory_space<vmem>>, vector<8x16x128xf32>
    %79 = vector.shape_cast %78 : vector<8x16x128xf32> to vector<128x128xf32>
    %80 = arith.truncf %79 : vector<128x128xf32> to vector<128x128xbf16>
    %c0_46 = arith.constant 0 : index
    %c1536 = arith.constant 1536 : index
    %81 = vector.load %arg9[%c0_46, %c1536] : memref<128x3200xbf16, #tpu.memory_space<vmem>>, vector<128x128xbf16>
    tpu.vector_store %arg9[%c0_46, %c1536], %80 {strides = array<i32>} : memref<128x3200xbf16, #tpu.memory_space<vmem>>, vector<128x128xbf16>,
    %c2_i32_47 = arith.constant 2 : i32
    %82 = arith.addi %3, %c2_i32_47 : i32
    %83 = arith.index_cast %82 : i32 to index
    %c3_48 = arith.constant 3 : index
    %c0_49 = arith.constant 0 : index
    %84 = vector.load %arg8[%83, %c3_48, %c0_49] : memref<20x20x128xf32, #tpu.memory_space<vmem>>, vector<8x16x128xf32>
    %85 = vector.shape_cast %84 : vector<8x16x128xf32> to vector<128x128xf32>
    %86 = arith.truncf %85 : vector<128x128xf32> to vector<128x128xbf16>
    %c0_50 = arith.constant 0 : index
    %c1664 = arith.constant 1664 : index
    %87 = vector.load %arg9[%c0_50, %c1664] : memref<128x3200xbf16, #tpu.memory_space<vmem>>, vector<128x128xbf16>
    tpu.vector_store %arg9[%c0_50, %c1664], %86 {strides = array<i32>} : memref<128x3200xbf16, #tpu.memory_space<vmem>>, vector<128x128xbf16>,
    %c2_i32_51 = arith.constant 2 : i32
    %88 = arith.addi %3, %c2_i32_51 : i32
    %89 = arith.index_cast %88 : i32 to index
    %c4_52 = arith.constant 4 : index
    %c0_53 = arith.constant 0 : index
    %90 = vector.load %arg8[%89, %c4_52, %c0_53] : memref<20x20x128xf32, #tpu.memory_space<vmem>>, vector<8x16x128xf32>
    %91 = vector.shape_cast %90 : vector<8x16x128xf32> to vector<128x128xf32>
    %92 = arith.truncf %91 : vector<128x128xf32> to vector<128x128xbf16>
    %c0_54 = arith.constant 0 : index
    %c1792 = arith.constant 1792 : index
    %93 = vector.load %arg9[%c0_54, %c1792] : memref<128x3200xbf16, #tpu.memory_space<vmem>>, vector<128x128xbf16>
    tpu.vector_store %arg9[%c0_54, %c1792], %92 {strides = array<i32>} : memref<128x3200xbf16, #tpu.memory_space<vmem>>, vector<128x128xbf16>,
    %c3_i32 = arith.constant 3 : i32
    %94 = arith.addi %3, %c3_i32 : i32
    %95 = arith.index_cast %94 : i32 to index
    %c0_55 = arith.constant 0 : index
    %c0_56 = arith.constant 0 : index
    %96 = vector.load %arg8[%95, %c0_55, %c0_56] : memref<20x20x128xf32, #tpu.memory_space<vmem>>, vector<8x16x128xf32>
    %97 = vector.shape_cast %96 : vector<8x16x128xf32> to vector<128x128xf32>
    %98 = arith.truncf %97 : vector<128x128xf32> to vector<128x128xbf16>
    %c0_57 = arith.constant 0 : index
    %c1920 = arith.constant 1920 : index
    %99 = vector.load %arg9[%c0_57, %c1920] : memref<128x3200xbf16, #tpu.memory_space<vmem>>, vector<128x128xbf16>
    tpu.vector_store %arg9[%c0_57, %c1920], %98 {strides = array<i32>} : memref<128x3200xbf16, #tpu.memory_space<vmem>>, vector<128x128xbf16>,
    %c3_i32_58 = arith.constant 3 : i32
    %100 = arith.addi %3, %c3_i32_58 : i32
    %101 = arith.index_cast %100 : i32 to index
    %c1_59 = arith.constant 1 : index
    %c0_60 = arith.constant 0 : index
    %102 = vector.load %arg8[%101, %c1_59, %c0_60] : memref<20x20x128xf32, #tpu.memory_space<vmem>>, vector<8x16x128xf32>
    %103 = vector.shape_cast %102 : vector<8x16x128xf32> to vector<128x128xf32>
    %104 = arith.truncf %103 : vector<128x128xf32> to vector<128x128xbf16>
    %c0_61 = arith.constant 0 : index
    %c2048 = arith.constant 2048 : index
    %105 = vector.load %arg9[%c0_61, %c2048] : memref<128x3200xbf16, #tpu.memory_space<vmem>>, vector<128x128xbf16>
    tpu.vector_store %arg9[%c0_61, %c2048], %104 {strides = array<i32>} : memref<128x3200xbf16, #tpu.memory_space<vmem>>, vector<128x128xbf16>,
    %c3_i32_62 = arith.constant 3 : i32
    %106 = arith.addi %3, %c3_i32_62 : i32
    %107 = arith.index_cast %106 : i32 to index
    %c2_63 = arith.constant 2 : index
    %c0_64 = arith.constant 0 : index
    %108 = vector.load %arg8[%107, %c2_63, %c0_64] : memref<20x20x128xf32, #tpu.memory_space<vmem>>, vector<8x16x128xf32>
    %109 = vector.shape_cast %108 : vector<8x16x128xf32> to vector<128x128xf32>
    %110 = arith.truncf %109 : vector<128x128xf32> to vector<128x128xbf16>
    %c0_65 = arith.constant 0 : index
    %c2176 = arith.constant 2176 : index
    %111 = vector.load %arg9[%c0_65, %c2176] : memref<128x3200xbf16, #tpu.memory_space<vmem>>, vector<128x128xbf16>
    tpu.vector_store %arg9[%c0_65, %c2176], %110 {strides = array<i32>} : memref<128x3200xbf16, #tpu.memory_space<vmem>>, vector<128x128xbf16>,
    %c3_i32_66 = arith.constant 3 : i32
    %112 = arith.addi %3, %c3_i32_66 : i32
    %113 = arith.index_cast %112 : i32 to index
    %c3_67 = arith.constant 3 : index
    %c0_68 = arith.constant 0 : index
    %114 = vector.load %arg8[%113, %c3_67, %c0_68] : memref<20x20x128xf32, #tpu.memory_space<vmem>>, vector<8x16x128xf32>
    %115 = vector.shape_cast %114 : vector<8x16x128xf32> to vector<128x128xf32>
    %116 = arith.truncf %115 : vector<128x128xf32> to vector<128x128xbf16>
    %c0_69 = arith.constant 0 : index
    %c2304 = arith.constant 2304 : index
    %117 = vector.load %arg9[%c0_69, %c2304] : memref<128x3200xbf16, #tpu.memory_space<vmem>>, vector<128x128xbf16>
    tpu.vector_store %arg9[%c0_69, %c2304], %116 {strides = array<i32>} : memref<128x3200xbf16, #tpu.memory_space<vmem>>, vector<128x128xbf16>,
    %c3_i32_70 = arith.constant 3 : i32
    %118 = arith.addi %3, %c3_i32_70 : i32
    %119 = arith.index_cast %118 : i32 to index
    %c4_71 = arith.constant 4 : index
    %c0_72 = arith.constant 0 : index
    %120 = vector.load %arg8[%119, %c4_71, %c0_72] : memref<20x20x128xf32, #tpu.memory_space<vmem>>, vector<8x16x128xf32>
    %121 = vector.shape_cast %120 : vector<8x16x128xf32> to vector<128x128xf32>
    %122 = arith.truncf %121 : vector<128x128xf32> to vector<128x128xbf16>
    %c0_73 = arith.constant 0 : index
    %c2432 = arith.constant 2432 : index
    %123 = vector.load %arg9[%c0_73, %c2432] : memref<128x3200xbf16, #tpu.memory_space<vmem>>, vector<128x128xbf16>
    tpu.vector_store %arg9[%c0_73, %c2432], %122 {strides = array<i32>} : memref<128x3200xbf16, #tpu.memory_space<vmem>>, vector<128x128xbf16>,
    %c4_i32 = arith.constant 4 : i32
    %124 = arith.addi %3, %c4_i32 : i32
    %125 = arith.index_cast %124 : i32 to index
    %c0_74 = arith.constant 0 : index
    %c0_75 = arith.constant 0 : index
    %126 = vector.load %arg8[%125, %c0_74, %c0_75] : memref<20x20x128xf32, #tpu.memory_space<vmem>>, vector<8x16x128xf32>
    %127 = vector.shape_cast %126 : vector<8x16x128xf32> to vector<128x128xf32>
    %128 = arith.truncf %127 : vector<128x128xf32> to vector<128x128xbf16>
    %c0_76 = arith.constant 0 : index
    %c2560 = arith.constant 2560 : index
    %129 = vector.load %arg9[%c0_76, %c2560] : memref<128x3200xbf16, #tpu.memory_space<vmem>>, vector<128x128xbf16>
    tpu.vector_store %arg9[%c0_76, %c2560], %128 {strides = array<i32>} : memref<128x3200xbf16, #tpu.memory_space<vmem>>, vector<128x128xbf16>,
    %c4_i32_77 = arith.constant 4 : i32
    %130 = arith.addi %3, %c4_i32_77 : i32
    %131 = arith.index_cast %130 : i32 to index
    %c1_78 = arith.constant 1 : index
    %c0_79 = arith.constant 0 : index
    %132 = vector.load %arg8[%131, %c1_78, %c0_79] : memref<20x20x128xf32, #tpu.memory_space<vmem>>, vector<8x16x128xf32>
    %133 = vector.shape_cast %132 : vector<8x16x128xf32> to vector<128x128xf32>
    %134 = arith.truncf %133 : vector<128x128xf32> to vector<128x128xbf16>
    %c0_80 = arith.constant 0 : index
    %c2688 = arith.constant 2688 : index
    %135 = vector.load %arg9[%c0_80, %c2688] : memref<128x3200xbf16, #tpu.memory_space<vmem>>, vector<128x128xbf16>
    tpu.vector_store %arg9[%c0_80, %c2688], %134 {strides = array<i32>} : memref<128x3200xbf16, #tpu.memory_space<vmem>>, vector<128x128xbf16>,
    %c4_i32_81 = arith.constant 4 : i32
    %136 = arith.addi %3, %c4_i32_81 : i32
    %137 = arith.index_cast %136 : i32 to index
    %c2_82 = arith.constant 2 : index
    %c0_83 = arith.constant 0 : index
    %138 = vector.load %arg8[%137, %c2_82, %c0_83] : memref<20x20x128xf32, #tpu.memory_space<vmem>>, vector<8x16x128xf32>
    %139 = vector.shape_cast %138 : vector<8x16x128xf32> to vector<128x128xf32>
    %140 = arith.truncf %139 : vector<128x128xf32> to vector<128x128xbf16>
    %c0_84 = arith.constant 0 : index
    %c2816 = arith.constant 2816 : index
    %141 = vector.load %arg9[%c0_84, %c2816] : memref<128x3200xbf16, #tpu.memory_space<vmem>>, vector<128x128xbf16>
    tpu.vector_store %arg9[%c0_84, %c2816], %140 {strides = array<i32>} : memref<128x3200xbf16, #tpu.memory_space<vmem>>, vector<128x128xbf16>,
    %c4_i32_85 = arith.constant 4 : i32
    %142 = arith.addi %3, %c4_i32_85 : i32
    %143 = arith.index_cast %142 : i32 to index
    %c3_86 = arith.constant 3 : index
    %c0_87 = arith.constant 0 : index
    %144 = vector.load %arg8[%143, %c3_86, %c0_87] : memref<20x20x128xf32, #tpu.memory_space<vmem>>, vector<8x16x128xf32>
    %145 = vector.shape_cast %144 : vector<8x16x128xf32> to vector<128x128xf32>
    %146 = arith.truncf %145 : vector<128x128xf32> to vector<128x128xbf16>
    %c0_88 = arith.constant 0 : index
    %c2944 = arith.constant 2944 : index
    %147 = vector.load %arg9[%c0_88, %c2944] : memref<128x3200xbf16, #tpu.memory_space<vmem>>, vector<128x128xbf16>
    tpu.vector_store %arg9[%c0_88, %c2944], %146 {strides = array<i32>} : memref<128x3200xbf16, #tpu.memory_space<vmem>>, vector<128x128xbf16>,
    %c4_i32_89 = arith.constant 4 : i32
    %148 = arith.addi %3, %c4_i32_89 : i32
    %149 = arith.index_cast %148 : i32 to index
    %c4_90 = arith.constant 4 : index
    %c0_91 = arith.constant 0 : index
    %150 = vector.load %arg8[%149, %c4_90, %c0_91] : memref<20x20x128xf32, #tpu.memory_space<vmem>>, vector<8x16x128xf32>
    %151 = vector.shape_cast %150 : vector<8x16x128xf32> to vector<128x128xf32>
    %152 = arith.truncf %151 : vector<128x128xf32> to vector<128x128xbf16>
    %c0_92 = arith.constant 0 : index
    %c3072 = arith.constant 3072 : index
    %153 = vector.load %arg9[%c0_92, %c3072] : memref<128x3200xbf16, #tpu.memory_space<vmem>>, vector<128x128xbf16>
    tpu.vector_store %arg9[%c0_92, %c3072], %152 {strides = array<i32>} : memref<128x3200xbf16, #tpu.memory_space<vmem>>, vector<128x128xbf16>,
    %c0_93 = arith.constant 0 : index
    %c0_94 = arith.constant 0 : index
    %154 = vector.load %arg9[%c0_93, %c0_94] : memref<128x3200xbf16, #tpu.memory_space<vmem>>, vector<128x3200xbf16>
    %c0_95 = arith.constant 0 : index
    %c0_96 = arith.constant 0 : index
    %155 = vector.load %arg5[%c0_95, %c0_96] : memref<3200x256xbf16, #tpu.memory_space<vmem>>, vector<3200x256xbf16>
    %cst = arith.constant dense<0.000000e+00> : vector<128x256xf32>
    %156 = tpu.matmul %154, %155, %cst {dimension_numbers = #tpu.dot_dimension_numbers<[1], [0], [0], [1], [0, 0, 1, 1], [], []>} : vector<128x3200xbf16>, vector<3200x256xbf16>, vector<128x256xf32> -> vector<128x256xf32>
    %157 = arith.truncf %156 : vector<128x256xf32> to vector<128x256xbf16>
    %c0_97 = arith.constant 0 : index
    %c0_98 = arith.constant 0 : index
    %158 = vector.load %arg6[%c0_97, %c0_98] : memref<128x256xbf16, #tpu.memory_space<vmem>>, vector<128x256xbf16>
    tpu.vector_store %arg6[%c0_97, %c0_98], %157 {strides = array<i32>} : memref<128x256xbf16, #tpu.memory_space<vmem>>, vector<128x256xbf16>,
    %cst_99 = arith.constant dense<0.000000e+00> : vector<256xf32>
    %159 = vector.multi_reduction <add>, %156, %cst_99 [0] : vector<128x256xf32> to vector<256xf32>
    %160 = vector.shape_cast %159 : vector<256xf32> to vector<1x256xf32>
    %161 = arith.mulf %156, %156 : vector<128x256xf32>
    %cst_100 = arith.constant dense<0.000000e+00> : vector<256xf32>
    %162 = vector.multi_reduction <add>, %161, %cst_100 [0] : vector<128x256xf32> to vector<256xf32>
    %163 = vector.shape_cast %162 : vector<256xf32> to vector<1x256xf32>
    %164 = vector.shape_cast %160 : vector<1x256xf32> to vector<1x256xf32>
    %165 = vector.broadcast %164 : vector<1x256xf32> to vector<4x256xf32>
    %166 = vector.shape_cast %163 : vector<1x256xf32> to vector<1x256xf32>
    %167 = vector.broadcast %166 : vector<1x256xf32> to vector<4x256xf32>
    %168 = tpu.concatenate %165, %167 in 0 : vector<4x256xf32>, vector<4x256xf32> -> vector<8x256xf32>
    %169 = vector.shape_cast %168 : vector<8x256xf32> to vector<1x8x256xf32>
    %c0_101 = arith.constant 0 : index
    %c0_102 = arith.constant 0 : index
    %c0_103 = arith.constant 0 : index
    %170 = vector.load %arg7[%c0_101, %c0_102, %c0_103] : memref<1x8x256xf32, #tpu.memory_space<vmem>>, vector<1x8x256xf32>
    tpu.vector_store %arg7[%c0_101, %c0_102, %c0_103], %169 {strides = array<i32>} : memref<1x8x256xf32, #tpu.memory_space<vmem>>, vector<1x8x256xf32>,
    return
  }
  func.func @transform_0(%arg0: i32, %arg1: i32) -> (i32, i32, i32, i32) {
    %c0_i32 = arith.constant 0 : i32
    %c0_i32_0 = arith.constant 0 : i32
    %c0_i32_1 = arith.constant 0 : i32
    %c0_i32_2 = arith.constant 0 : i32
    return %arg0, %c0_i32, %c0_i32_0, %c0_i32_1 : i32, i32, i32, i32
  }
  func.func @transform_1(%arg0: i32, %arg1: i32) -> (i32, i32) {
    %c0_i32 = arith.constant 0 : i32
    %c0_i32_0 = arith.constant 0 : i32
    %c0_i32_1 = arith.constant 0 : i32
    return %c0_i32, %c0_i32_0 : i32, i32
  }
  func.func @transform_2(%arg0: i32, %arg1: i32) -> (i32, i32) {
    %c0_i32 = arith.constant 0 : i32
    %c0_i32_0 = arith.constant 0 : i32
    %c0_i32_1 = arith.constant 0 : i32
    return %c0_i32, %c0_i32_0 : i32, i32
  }
  func.func @transform_3(%arg0: i32, %arg1: i32) -> (i32, i32) {
    %c0_i32 = arith.constant 0 : i32
    %c0_i32_0 = arith.constant 0 : i32
    %c0_i32_1 = arith.constant 0 : i32
    return %c0_i32, %c0_i32_0 : i32, i32
  }
  func.func @transform_4(%arg0: i32, %arg1: i32) -> (i32, i32) {
    %c2_i32 = arith.constant 2 : i32
    %0 = arith.muli %arg0, %c2_i32 : i32
    %1 = arith.addi %0, %arg1 : i32
    %c0_i32 = arith.constant 0 : i32
    %c0_i32_0 = arith.constant 0 : i32
    return %1, %c0_i32 : i32, i32
  }
  func.func @transform_5(%arg0: i32, %arg1: i32) -> (i32, i32, i32) {
    %c2_i32 = arith.constant 2 : i32
    %0 = arith.muli %arg0, %c2_i32 : i32
    %1 = arith.addi %0, %arg1 : i32
    %c0_i32 = arith.constant 0 : i32
    %c0_i32_0 = arith.constant 0 : i32
    %c0_i32_1 = arith.constant 0 : i32
    return %1, %c0_i32, %c0_i32_0 : i32, i32, i32
  }
}

module attributes {stable_mosaic.version = 11 : i64} {
  func.func @finalize_kernel(%arg0: i32, %arg1: memref<512x128xf32, #tpu.memory_space<vmem>>, %arg2: memref<512x256xbf16, #tpu.memory_space<vmem>>, %arg3: memref<1x128xf32, #tpu.memory_space<vmem>>, %arg4: memref<1x128xf32, #tpu.memory_space<vmem>>, %arg5: memref<1x256xf32, #tpu.memory_space<vmem>>, %arg6: memref<1x256xf32, #tpu.memory_space<vmem>>, %arg7: memref<128x32xf32, #tpu.memory_space<vmem>>, %arg8: memref<256x32xf32, #tpu.memory_space<vmem>>, %arg9: memref<512x32xf32, #tpu.memory_space<vmem>>) attributes {dimension_semantics = [#tpu.dimension_semantics<parallel>], iteration_bounds = array<i64: 1>, scalar_prefetch = 0 : i64, scratch_operands = 0 : i64, tpu.core_type = #tpu.core_type<tc>, window_params = [{transform_indices = @transform_0, window_bounds = array<i64: 512, 128>}, {transform_indices = @transform_1, window_bounds = array<i64: 512, 256>}, {pipeline_mode = #tpu.pipeline_mode<synchronous>, transform_indices = @transform_2, window_bounds = array<i64: 1, 128>}, {pipeline_mode = #tpu.pipeline_mode<synchronous>, transform_indices = @transform_3, window_bounds = array<i64: 1, 128>}, {pipeline_mode = #tpu.pipeline_mode<synchronous>, transform_indices = @transform_4, window_bounds = array<i64: 1, 256>}, {pipeline_mode = #tpu.pipeline_mode<synchronous>, transform_indices = @transform_5, window_bounds = array<i64: 1, 256>}, {pipeline_mode = #tpu.pipeline_mode<synchronous>, transform_indices = @transform_6, window_bounds = array<i64: 128, 32>}, {pipeline_mode = #tpu.pipeline_mode<synchronous>, transform_indices = @transform_7, window_bounds = array<i64: 256, 32>}, {transform_indices = @transform_8, window_bounds = array<i64: 512, 32>}]} {
    %c0 = arith.constant 0 : index
    %c0_0 = arith.constant 0 : index
    %0 = vector.load %arg1[%c0, %c0_0] : memref<512x128xf32, #tpu.memory_space<vmem>>, vector<512x128xf32>
    %c0_1 = arith.constant 0 : index
    %c0_2 = arith.constant 0 : index
    %1 = vector.load %arg3[%c0_1, %c0_2] : memref<1x128xf32, #tpu.memory_space<vmem>>, vector<1x128xf32>
    %2 = vector.broadcast %1 : vector<1x128xf32> to vector<512x128xf32>
    %3 = arith.mulf %0, %2 : vector<512x128xf32>
    %c0_3 = arith.constant 0 : index
    %c0_4 = arith.constant 0 : index
    %4 = vector.load %arg4[%c0_3, %c0_4] : memref<1x128xf32, #tpu.memory_space<vmem>>, vector<1x128xf32>
    %5 = vector.broadcast %4 : vector<1x128xf32> to vector<512x128xf32>
    %6 = arith.addf %3, %5 : vector<512x128xf32>
    %c0_5 = arith.constant 0 : index
    %c0_6 = arith.constant 0 : index
    %7 = vector.load %arg2[%c0_5, %c0_6] : memref<512x256xbf16, #tpu.memory_space<vmem>>, vector<512x256xbf16>
    %8 = arith.extf %7 : vector<512x256xbf16> to vector<512x256xf32>
    %c0_7 = arith.constant 0 : index
    %c0_8 = arith.constant 0 : index
    %9 = vector.load %arg5[%c0_7, %c0_8] : memref<1x256xf32, #tpu.memory_space<vmem>>, vector<1x256xf32>
    %10 = vector.broadcast %9 : vector<1x256xf32> to vector<512x256xf32>
    %11 = arith.mulf %8, %10 : vector<512x256xf32>
    %c0_9 = arith.constant 0 : index
    %c0_10 = arith.constant 0 : index
    %12 = vector.load %arg6[%c0_9, %c0_10] : memref<1x256xf32, #tpu.memory_space<vmem>>, vector<1x256xf32>
    %13 = vector.broadcast %12 : vector<1x256xf32> to vector<512x256xf32>
    %14 = arith.addf %11, %13 : vector<512x256xf32>
    %c0_11 = arith.constant 0 : index
    %c0_12 = arith.constant 0 : index
    %15 = vector.load %arg7[%c0_11, %c0_12] : memref<128x32xf32, #tpu.memory_space<vmem>>, vector<128x32xf32>
    %cst = arith.constant dense<0.000000e+00> : vector<512x32xf32>
    %16 = tpu.matmul %6, %15, %cst {dimension_numbers = #tpu.dot_dimension_numbers<[1], [0], [0], [1], [0, 0, 1, 1], [], []>} : vector<512x128xf32>, vector<128x32xf32>, vector<512x32xf32> -> vector<512x32xf32>
    %c0_13 = arith.constant 0 : index
    %c0_14 = arith.constant 0 : index
    %17 = vector.load %arg8[%c0_13, %c0_14] : memref<256x32xf32, #tpu.memory_space<vmem>>, vector<256x32xf32>
    %cst_15 = arith.constant dense<0.000000e+00> : vector<512x32xf32>
    %18 = tpu.matmul %14, %17, %cst_15 {dimension_numbers = #tpu.dot_dimension_numbers<[1], [0], [0], [1], [0, 0, 1, 1], [], []>} : vector<512x256xf32>, vector<256x32xf32>, vector<512x32xf32> -> vector<512x32xf32>
    %19 = arith.addf %16, %18 : vector<512x32xf32>
    %c0_16 = arith.constant 0 : index
    %c0_17 = arith.constant 0 : index
    %20 = vector.load %arg9[%c0_16, %c0_17] : memref<512x32xf32, #tpu.memory_space<vmem>>, vector<512x32xf32>
    tpu.vector_store %arg9[%c0_16, %c0_17], %19 {strides = array<i32>} : memref<512x32xf32, #tpu.memory_space<vmem>>, vector<512x32xf32>,
    return
  }
  func.func @transform_0(%arg0: i32) -> (i32, i32) {
    %c0_i32 = arith.constant 0 : i32
    %c0_i32_0 = arith.constant 0 : i32
    return %arg0, %c0_i32 : i32, i32
  }
  func.func @transform_1(%arg0: i32) -> (i32, i32) {
    %c0_i32 = arith.constant 0 : i32
    %c0_i32_0 = arith.constant 0 : i32
    return %arg0, %c0_i32 : i32, i32
  }
  func.func @transform_2(%arg0: i32) -> (i32, i32) {
    %c0_i32 = arith.constant 0 : i32
    %c0_i32_0 = arith.constant 0 : i32
    %c0_i32_1 = arith.constant 0 : i32
    return %c0_i32, %c0_i32_0 : i32, i32
  }
  func.func @transform_3(%arg0: i32) -> (i32, i32) {
    %c0_i32 = arith.constant 0 : i32
    %c0_i32_0 = arith.constant 0 : i32
    %c0_i32_1 = arith.constant 0 : i32
    return %c0_i32, %c0_i32_0 : i32, i32
  }
  func.func @transform_4(%arg0: i32) -> (i32, i32) {
    %c0_i32 = arith.constant 0 : i32
    %c0_i32_0 = arith.constant 0 : i32
    %c0_i32_1 = arith.constant 0 : i32
    return %c0_i32, %c0_i32_0 : i32, i32
  }
  func.func @transform_5(%arg0: i32) -> (i32, i32) {
    %c0_i32 = arith.constant 0 : i32
    %c0_i32_0 = arith.constant 0 : i32
    %c0_i32_1 = arith.constant 0 : i32
    return %c0_i32, %c0_i32_0 : i32, i32
  }
  func.func @transform_6(%arg0: i32) -> (i32, i32) {
    %c0_i32 = arith.constant 0 : i32
    %c0_i32_0 = arith.constant 0 : i32
    %c0_i32_1 = arith.constant 0 : i32
    return %c0_i32, %c0_i32_0 : i32, i32
  }
  func.func @transform_7(%arg0: i32) -> (i32, i32) {
    %c0_i32 = arith.constant 0 : i32
    %c0_i32_0 = arith.constant 0 : i32
    %c0_i32_1 = arith.constant 0 : i32
    return %c0_i32, %c0_i32_0 : i32, i32
  }
  func.func @transform_8(%arg0: i32) -> (i32, i32) {
    %c0_i32 = arith.constant 0 : i32
    %c0_i32_0 = arith.constant 0 : i32
    return %arg0, %c0_i32 : i32, i32
  }
}

</mosaic_0001>

<llo_original>
// kernel: inception_forward.3
$region0: #{inception_forward.3}
  #allocation0 [shape = 'u32[]', space=smem, size = 0x4, offset = 0x4, fixed_abs, tag = 'smem constant byte address 0x4 - core index']
  #allocation1 [shape = 'u32[144,128]{1,0:T(1,128)}', space=vmem, size = 0x12000, scoped, tag = 'internal scratch']
  %s0 = inlined_call_operand.vmem [shape: f32[2,16,16,4], index: 0, kind: input, shape index: {}]
  %s1 = inlined_call_operand.vmem [shape: bf16[4,128], index: 1, kind: input, shape index: {}]
  %s2 = inlined_call_operand.vmem [shape: bf16[4,128], index: 2, kind: input, shape index: {}]
  %s3 = inlined_call_operand.vmem [shape: f32[512,128], index: 3, kind: output, shape index: {0}]
  %s4 = inlined_call_operand.vmem [shape: f32[2,8,128], index: 4, kind: output, shape index: {1}]
  %5 = xla_tuple %s3, %s4
  %s6 = sld [smem:[#allocation0]]
  $region53: #{inception_forward.3} parent=0
    _
  %s8 = ssub.s32 1, %s6
  %s9 = scalar_select 0, %s8, %s6
  loop: start=0, step=1, limit=4
  $region2: #{inception_forward.3} parent=0 // loop_pre_header
    _
  $region3: #{inception_forward.3} parent=0 // loop_header
    %s11 = sphi 0, %s15
    %p12 = scmp.ge.s32.totalorder %s11, 4
    %s21 = sphi 0, %s23
    %s24 = sphi 0, %s21
    %s25 = sphi 0, %s24
    %s41 = sphi 0, %s25
    %s45 = sphi 0, %s45
    %s47 = sphi 0, %s45
    %s48 = sphi 0, %s47
    %s62 = sphi 0, %s48
    %s66 = sphi 0, %s66
    %s68 = sphi 0, %s66
    %s69 = sphi 0, %s68
    %s83 = sphi 0, %s69
    %s89 = sphi 0, %s91
    %s92 = sphi 0, %s89
    %s93 = sphi 0, %s92
    %s109 = sphi 0, %s93
    %s115 = sphi 0, %s117
    %s118 = sphi 0, %s115
    %s119 = sphi 0, %s118
    %s135 = sphi 0, %s119
  $region4: #{inception_forward.3} parent=0 // loop_header_branch
    %14 = sbr.rel (%p12) target = $region8
  $region5: #{inception_forward.3} parent=0 // loop_body
    %s16 = ssub.s32 %s11, 1
    %s17 = ssub.s32 %s11, 2
    %s18 = sadd.s32 %s11, 1
    %s19 = ssub.s32 %s11, %s18
    %p20 = scmp.eq.s32.totalorder %s19, 0
    %s22 = sadd.s32 %s21, 1
    %s23 = scalar_select %p20, %s21, %s22
    %p26 = pneg %p20
    %p27 = scmp.eq.s32.totalorder %s11, 1
    %p28 = por %p26, %p27
    %p29 = scmp.ne.s32.totalorder %s21, %s24
    %p30 = scmp.eq.s32.totalorder %s11, 0
    %p31 = por %p29, %p30
    %p32 = scmp.ne.s32.totalorder %s21, %s24
    %p33 = scmp.eq.s32.totalorder %s16, 1
    %p34 = por %p32, %p33
    %p35 = scmp.ne.s32.totalorder %s24, %s25
    %p36 = scmp.eq.s32.totalorder %s16, 0
    %p37 = por %p35, %p36
    %p38 = scmp.ne.s32.totalorder %s24, %s25
    %p39 = scmp.eq.s32.totalorder %s17, 1
    %p40 = por %p38, %p39
    %p42 = scmp.ne.s32.totalorder %s25, %s41
    %p43 = scmp.eq.s32.totalorder %s17, 0
    %p44 = por %p42, %p43
    %s46 = sadd.s32 %s45, 1
    %p49 = scmp.eq.s32.totalorder %s11, 1
    %p50 = scmp.ne.s32.totalorder %s45, %s47
    %p51 = scmp.eq.s32.totalorder %s11, 0
    %p52 = por %p50, %p51
    %p53 = scmp.ne.s32.totalorder %s45, %s47
    %p54 = scmp.eq.s32.totalorder %s16, 1
    %p55 = por %p53, %p54
    %p56 = scmp.ne.s32.totalorder %s47, %s48
    %p57 = scmp.eq.s32.totalorder %s16, 0
    %p58 = por %p56, %p57
    %p59 = scmp.ne.s32.totalorder %s47, %s48
    %p60 = scmp.eq.s32.totalorder %s17, 1
    %p61 = por %p59, %p60
    %p63 = scmp.ne.s32.totalorder %s48, %s62
    %p64 = scmp.eq.s32.totalorder %s17, 0
    %p65 = por %p63, %p64
    %s67 = sadd.s32 %s66, 1
    %p70 = scmp.eq.s32.totalorder %s11, 1
    %p71 = scmp.ne.s32.totalorder %s66, %s68
    %p72 = scmp.eq.s32.totalorder %s11, 0
    %p73 = por %p71, %p72
    %p74 = scmp.ne.s32.totalorder %s66, %s68
    %p75 = scmp.eq.s32.totalorder %s16, 1
    %p76 = por %p74, %p75
    %p77 = scmp.ne.s32.totalorder %s68, %s69
    %p78 = scmp.eq.s32.totalorder %s16, 0
    %p79 = por %p77, %p78
    %p80 = scmp.ne.s32.totalorder %s68, %s69
    %p81 = scmp.eq.s32.totalorder %s17, 1
    %p82 = por %p80, %p81
    %p84 = scmp.ne.s32.totalorder %s69, %s83
    %p85 = scmp.eq.s32.totalorder %s17, 0
    %p86 = por %p84, %p85
    %s87 = ssub.s32 %s11, %s18
    %p88 = scmp.eq.s32.totalorder %s87, 0
    %s90 = sadd.s32 %s89, 1
    %s91 = scalar_select %p88, %s89, %s90
    %p94 = pneg %p88
    %p95 = scmp.eq.s32.totalorder %s11, 1
    %p96 = por %p94, %p95
    %p97 = scmp.ne.s32.totalorder %s89, %s92
    %p98 = scmp.eq.s32.totalorder %s11, 0
    %p99 = por %p97, %p98
    %p100 = scmp.ne.s32.totalorder %s89, %s92
    %p101 = scmp.eq.s32.totalorder %s16, 1
    %p102 = por %p100, %p101
    %p103 = scmp.ne.s32.totalorder %s92, %s93
    %p104 = scmp.eq.s32.totalorder %s16, 0
    %p105 = por %p103, %p104
    %p106 = scmp.ne.s32.totalorder %s92, %s93
    %p107 = scmp.eq.s32.totalorder %s17, 1
    %p108 = por %p106, %p107
    %p110 = scmp.ne.s32.totalorder %s93, %s109
    %p111 = scmp.eq.s32.totalorder %s17, 0
    %p112 = por %p110, %p111
    %s113 = ssub.s32 %s11, %s18
    %p114 = scmp.eq.s32.totalorder %s113, 0
    %s116 = sadd.s32 %s115, 1
    %s117 = scalar_select %p114, %s115, %s116
    %p120 = pneg %p114
    %p121 = scmp.eq.s32.totalorder %s11, 1
    %p122 = por %p120, %p121
    %p123 = scmp.ne.s32.totalorder %s115, %s118
    %p124 = scmp.eq.s32.totalorder %s11, 0
    %p125 = por %p123, %p124
    %p126 = scmp.ne.s32.totalorder %s115, %s118
    %p127 = scmp.eq.s32.totalorder %s16, 1
    %p128 = por %p126, %p127
    %p129 = scmp.ne.s32.totalorder %s118, %s119
    %p130 = scmp.eq.s32.totalorder %s16, 0
    %p131 = por %p129, %p130
    %p132 = scmp.ne.s32.totalorder %s118, %s119
    %p133 = scmp.eq.s32.totalorder %s17, 1
    %p134 = por %p132, %p133
    %p136 = scmp.ne.s32.totalorder %s119, %s135
    %p137 = scmp.eq.s32.totalorder %s17, 0
    %p138 = por %p136, %p137
    %p139 = scmp.le.s32.totalorder 1, %s11
    %p140 = scmp.lt.s32.totalorder %s11, 3
    %p141 = pnand %p139, %p140
    %p142 = pneg %p141
    // Predicated region
    $region9: #{inception_forward.3} parent=5 // pred_check
      _
    $region10: #{inception_forward.3} parent=5 // pred_check_branch
      %144 = sbr.rel (%p141) target = $region12
    $region11: #{inception_forward.3} parent=5 // pred_region
      %s145 = ssub.s32 %s11, 1
      // Predicated region
      $region13: #{inception_forward.3} parent=11 // pred_check
        %p146 = pneg %p58
      $region14: #{inception_forward.3} parent=11 // pred_check_branch
        %148 = sbr.rel (%p146) target = $region16
      $region15: #{inception_forward.3} parent=11 // pred_region
        _
      $region16: #{inception_forward.3} parent=11 // pred_fallthru
        _
      // Predicated region
      $region17: #{inception_forward.3} parent=11 // pred_check
        %p149 = pneg %p79
      $region18: #{inception_forward.3} parent=11 // pred_check_branch
        %151 = sbr.rel (%p149) target = $region20
      $region19: #{inception_forward.3} parent=11 // pred_region
        _
      $region20: #{inception_forward.3} parent=11 // pred_fallthru
        _
    $region12: #{inception_forward.3} parent=5 // pred_fallthru
      _
    %p152 = scmp.lt.s32.totalorder %s11, 2
    // Predicated region
    $region21: #{inception_forward.3} parent=5 // pred_check
      %p153 = pneg %p152
    $region22: #{inception_forward.3} parent=5 // pred_check_branch
      %155 = sbr.rel (%p153) target = $region24
    $region23: #{inception_forward.3} parent=5 // pred_region
      // Predicated region
      $region25: #{inception_forward.3} parent=23 // pred_check
        %p156 = pneg %p31
      $region26: #{inception_forward.3} parent=23 // pred_check_branch
        %158 = sbr.rel (%p156) target = $region28
      $region27: #{inception_forward.3} parent=23 // pred_region
        %p159 = scmp.lt.s32.totalorder %s11, 1
        %s160 = scalar_select %p159, %s11, 1
        %s161 = smul.addr %s160, 32
        %s162 = smul.addr %s161, 8
        %s163 = scalar_lea.vmem %s0, %s162
      $region28: #{inception_forward.3} parent=23 // pred_fallthru
        _
    $region24: #{inception_forward.3} parent=5 // pred_fallthru
      _
    %p164 = scmp.le.s32.totalorder 1, %s11
    %p165 = scmp.lt.s32.totalorder %s11, 3
    %p166 = pnand %p164, %p165
    %p167 = pneg %p166
    // Predicated region
    $region29: #{inception_forward.3} parent=5 // pred_check
      _
    $region30: #{inception_forward.3} parent=5 // pred_check_branch
      %169 = sbr.rel (%p166) target = $region32
    $region31: #{inception_forward.3} parent=5 // pred_region
      %s170 = ssub.s32 %s11, 1
      %p171 = scmp.lt.s32.totalorder %s16, 1
      %s172 = scalar_select %p171, %s16, 1
      %s173 = smul.addr %s172, 32
      %s174 = smul.addr %s173, 8
      %s175 = scalar_lea.vmem %s0, %s174
      %p176 = pneg %p37
      %p177 = pneg %p34
      %p178 = pneg %p58
      %p179 = pneg %p55
      %p180 = pneg %p79
      %p181 = pneg %p76
      %p182 = pneg %p105
      %p183 = pneg %p102
      %s184 = smul.u32 32, %s16
      %p185 = scmp.lt.s32.totalorder %s184, 63
      %s186 = scalar_select %p185, %s184, 63
      %s187 = smul.addr %s186, 8
      %s188 = scalar_lea.vmem %s3, %s187
      %p189 = pneg %p131
      %p190 = pneg %p128
      %p191 = scmp.lt.s32.totalorder %s16, 1
      %s192 = scalar_select %p191, %s16, 1
      %s193 = smul.addr %s192, 8
      %s194 = scalar_lea.vmem %s4, %s193
      %p195 = scmp.lt.s32.totalorder %s16, 1
      %s196 = scalar_select %p195, %s16, 1
      %s197 = smul.addr %s196, 32
      %s198 = smul.addr %s197, 8
      %s199 = scalar_lea.vmem %s0, %s198
      %s200 = smul.u32 32, %s16
      %p201 = scmp.lt.s32.totalorder %s200, 63
      %s202 = scalar_select %p201, %s200, 63
      %s203 = smul.addr %s202, 8
      %s204 = scalar_lea.vmem %s3, %s203
      %s205 = smul.u32 32, %s16
      %p206 = scmp.lt.s32.totalorder %s16, 1
      %s207 = scalar_select %p206, %s16, 1
      %s208 = smul.addr %s207, 8
      %s209 = scalar_lea.vmem %s4, %s208
      %v211 = vld [vmem:[%s199] sm:$0xff]
      %v212 = vld [vmem:[%s199 + $0x8] sm:$0xff]
      %v213 = vld [vmem:[%s199 + $0x10] sm:$0xff]
      %v214 = vld [vmem:[%s199 + $0x18] sm:$0xff]
      %v215 = vld [vmem:[%s199 + $0x20] sm:$0xff]
      %v216 = vld [vmem:[%s199 + $0x28] sm:$0xff]
      %v217 = vld [vmem:[%s199 + $0x30] sm:$0xff]
      %v218 = vld [vmem:[%s199 + $0x38] sm:$0xff]
      %v219 = vld [vmem:[%s199 + $0x40] sm:$0xff]
      %v220 = vld [vmem:[%s199 + $0x48] sm:$0xff]
      %v221 = vld [vmem:[%s199 + $0x50] sm:$0xff]
      %v222 = vld [vmem:[%s199 + $0x58] sm:$0xff]
      %v223 = vld [vmem:[%s199 + $0x60] sm:$0xff]
      %v224 = vld [vmem:[%s199 + $0x68] sm:$0xff]
      %v225 = vld [vmem:[%s199 + $0x70] sm:$0xff]
      %v226 = vld [vmem:[%s199 + $0x78] sm:$0xff]
      %v227 = vld [vmem:[%s199 + $0x80] sm:$0xff]
      %v228 = vld [vmem:[%s199 + $0x88] sm:$0xff]
      %v229 = vld [vmem:[%s199 + $0x90] sm:$0xff]
      %v230 = vld [vmem:[%s199 + $0x98] sm:$0xff]
      %v231 = vld [vmem:[%s199 + $0xa0] sm:$0xff]
      %v232 = vld [vmem:[%s199 + $0xa8] sm:$0xff]
      %v233 = vld [vmem:[%s199 + $0xb0] sm:$0xff]
      %v234 = vld [vmem:[%s199 + $0xb8] sm:$0xff]
      %v235 = vld [vmem:[%s199 + $0xc0] sm:$0xff]
      %v236 = vld [vmem:[%s199 + $0xc8] sm:$0xff]
      %v237 = vld [vmem:[%s199 + $0xd0] sm:$0xff]
      %v238 = vld [vmem:[%s199 + $0xd8] sm:$0xff]
      %v239 = vld [vmem:[%s199 + $0xe0] sm:$0xff]
      %v240 = vld [vmem:[%s199 + $0xe8] sm:$0xff]
      %v241 = vld [vmem:[%s199 + $0xf0] sm:$0xff]
      %v242 = vld [vmem:[%s199 + $0xf8] sm:$0xff]
      %v243 = vmax.f32 %v211, 0.0
      %v244 = vmax.f32 %v212, 0.0
      %v245 = vmax.f32 %v213, 0.0
      %v246 = vmax.f32 %v214, 0.0
      %v247 = vmax.f32 %v215, 0.0
      %v248 = vmax.f32 %v216, 0.0
      %v249 = vmax.f32 %v217, 0.0
      %v250 = vmax.f32 %v218, 0.0
      %v251 = vmax.f32 %v219, 0.0
      %v252 = vmax.f32 %v220, 0.0
      %v253 = vmax.f32 %v221, 0.0
      %v254 = vmax.f32 %v222, 0.0
      %v255 = vmax.f32 %v223, 0.0
      %v256 = vmax.f32 %v224, 0.0
      %v257 = vmax.f32 %v225, 0.0
      %v258 = vmax.f32 %v226, 0.0
      %v259 = vmax.f32 %v227, 0.0
      %v260 = vmax.f32 %v228, 0.0
      %v261 = vmax.f32 %v229, 0.0
      %v262 = vmax.f32 %v230, 0.0
      %v263 = vmax.f32 %v231, 0.0
      %v264 = vmax.f32 %v232, 0.0
      %v265 = vmax.f32 %v233, 0.0
      %v266 = vmax.f32 %v234, 0.0
      %v267 = vmax.f32 %v235, 0.0
      %v268 = vmax.f32 %v236, 0.0
      %v269 = vmax.f32 %v237, 0.0
      %v270 = vmax.f32 %v238, 0.0
      %v271 = vmax.f32 %v239, 0.0
      %v272 = vmax.f32 %v240, 0.0
      %v273 = vmax.f32 %v241, 0.0
      %v274 = vmax.f32 %v242, 0.0
      %v275 = vmax.f32 %v243, %v245
      %v276 = vmax.f32 %v244, %v246
      %v277 = vmax.f32 %v245, %v247
      %v278 = vmax.f32 %v246, %v248
      %v279 = vmax.f32 %v247, %v249
      %v280 = vmax.f32 %v248, %v250
      %v281 = vmax.f32 %v249, %v251
      %v282 = vmax.f32 %v250, %v252
      %v283 = vmax.f32 %v251, %v253
      %v284 = vmax.f32 %v252, %v254
      %v285 = vmax.f32 %v253, %v255
      %v286 = vmax.f32 %v254, %v256
      %v287 = vmax.f32 %v255, %v257
      %v288 = vmax.f32 %v256, %v258
      %v289 = vmax.f32 %v257, %v259
      %v290 = vmax.f32 %v258, %v260
      %v291 = vmax.f32 %v259, %v261
      %v292 = vmax.f32 %v260, %v262
      %v293 = vmax.f32 %v261, %v263
      %v294 = vmax.f32 %v262, %v264
      %v295 = vmax.f32 %v263, %v265
      %v296 = vmax.f32 %v264, %v266
      %v297 = vmax.f32 %v265, %v267
      %v298 = vmax.f32 %v266, %v268
      %v299 = vmax.f32 %v267, %v269
      %v300 = vmax.f32 %v268, %v270
      %v301 = vmax.f32 %v269, %v271
      %v302 = vmax.f32 %v270, %v272
      %v303 = vmax.f32 %v271, %v273
      %v304 = vmax.f32 %v272, %v274
      %v305 = vmax.f32 %v273, 0.0
      %v306 = vmax.f32 %v274, 0.0
      %v307 = vmax.f32 %v275, 0.0
      %v308 = vmax.f32 %v276, 0.0
      %v309 = vmax.f32 %v277, %v243
      %v310 = vmax.f32 %v278, %v244
      %v311 = vmax.f32 %v279, %v245
      %v312 = vmax.f32 %v280, %v246
      %v313 = vmax.f32 %v281, %v247
      %v314 = vmax.f32 %v282, %v248
      %v315 = vmax.f32 %v283, %v249
      %v316 = vmax.f32 %v284, %v250
      %v317 = vmax.f32 %v285, %v251
      %v318 = vmax.f32 %v286, %v252
      %v319 = vmax.f32 %v287, %v253
      %v320 = vmax.f32 %v288, %v254
      %v321 = vmax.f32 %v289, %v255
      %v322 = vmax.f32 %v290, %v256
      %v323 = vmax.f32 %v291, %v257
      %v324 = vmax.f32 %v292, %v258
      %v325 = vmax.f32 %v293, %v259
      %v326 = vmax.f32 %v294, %v260
      %v327 = vmax.f32 %v295, %v261
      %v328 = vmax.f32 %v296, %v262
      %v329 = vmax.f32 %v297, %v263
      %v330 = vmax.f32 %v298, %v264
      %v331 = vmax.f32 %v299, %v265
      %v332 = vmax.f32 %v300, %v266
      %v333 = vmax.f32 %v301, %v267
      %v334 = vmax.f32 %v302, %v268
      %v335 = vmax.f32 %v303, %v269
      %v336 = vmax.f32 %v304, %v270
      %v337 = vmax.f32 %v305, %v271
      %v338 = vmax.f32 %v306, %v272
      %vm371 = vcmask 1046528
      %v372 = vrot.slane %v307, 1
      %v373 = vrot.slane %v308, 1
      %v374 = vsel %vm371, %v372, %v373
      %v375 = vrot.slane %v309, 1
      %v376 = vrot.slane %v310, 1
      %v377 = vsel %vm371, %v375, %v376
      %v378 = vrot.slane %v311, 1
      %v379 = vrot.slane %v312, 1
      %v380 = vsel %vm371, %v378, %v379
      %v381 = vrot.slane %v313, 1
      %v382 = vrot.slane %v314, 1
      %v383 = vsel %vm371, %v381, %v382
      %v384 = vrot.slane %v315, 1
      %v385 = vrot.slane %v316, 1
      %v386 = vsel %vm371, %v384, %v385
      %v387 = vrot.slane %v317, 1
      %v388 = vrot.slane %v318, 1
      %v389 = vsel %vm371, %v387, %v388
      %v390 = vrot.slane %v319, 1
      %v391 = vrot.slane %v320, 1
      %v392 = vsel %vm371, %v390, %v391
      %v393 = vrot.slane %v321, 1
      %v394 = vrot.slane %v322, 1
      %v395 = vsel %vm371, %v393, %v394
      %v396 = vrot.slane %v323, 1
      %v397 = vrot.slane %v324, 1
      %v398 = vsel %vm371, %v396, %v397
      %v399 = vrot.slane %v325, 1
      %v400 = vrot.slane %v326, 1
      %v401 = vsel %vm371, %v399, %v400
      %v402 = vrot.slane %v327, 1
      %v403 = vrot.slane %v328, 1
      %v404 = vsel %vm371, %v402, %v403
      %v405 = vrot.slane %v329, 1
      %v406 = vrot.slane %v330, 1
      %v407 = vsel %vm371, %v405, %v406
      %v408 = vrot.slane %v331, 1
      %v409 = vrot.slane %v332, 1
      %v410 = vsel %vm371, %v408, %v409
      %v411 = vrot.slane %v333, 1
      %v412 = vrot.slane %v334, 1
      %v413 = vsel %vm371, %v411, %v412
      %v414 = vrot.slane %v335, 1
      %v415 = vrot.slane %v336, 1
      %v416 = vsel %vm371, %v414, %v415
      %v417 = vrot.slane %v337, 1
      %v418 = vrot.slane %v338, 1
      %v419 = vsel %vm371, %v417, %v418
      %v452 = vsel %vm371, %v373, 0.0
      %v453 = vsel %vm371, %v376, 0.0
      %v454 = vsel %vm371, %v379, 0.0
      %v455 = vsel %vm371, %v382, 0.0
      %v456 = vsel %vm371, %v385, 0.0
      %v457 = vsel %vm371, %v388, 0.0
      %v458 = vsel %vm371, %v391, 0.0
      %v459 = vsel %vm371, %v394, 0.0
      %v460 = vsel %vm371, %v397, 0.0
      %v461 = vsel %vm371, %v400, 0.0
      %v462 = vsel %vm371, %v403, 0.0
      %v463 = vsel %vm371, %v406, 0.0
      %v464 = vsel %vm371, %v409, 0.0
      %v465 = vsel %vm371, %v412, 0.0
      %v466 = vsel %vm371, %v415, 0.0
      %v467 = vsel %vm371, %v418, 0.0
      %v468 = vmax.f32 %v307, %v374
      %v469 = vmax.f32 %v308, %v452
      %v470 = vmax.f32 %v309, %v377
      %v471 = vmax.f32 %v310, %v453
      %v472 = vmax.f32 %v311, %v380
      %v473 = vmax.f32 %v312, %v454
      %v474 = vmax.f32 %v313, %v383
      %v475 = vmax.f32 %v314, %v455
      %v476 = vmax.f32 %v315, %v386
      %v477 = vmax.f32 %v316, %v456
      %v478 = vmax.f32 %v317, %v389
      %v479 = vmax.f32 %v318, %v457
      %v480 = vmax.f32 %v319, %v392
      %v481 = vmax.f32 %v320, %v458
      %v482 = vmax.f32 %v321, %v395
      %v483 = vmax.f32 %v322, %v459
      %v484 = vmax.f32 %v323, %v398
      %v485 = vmax.f32 %v324, %v460
      %v486 = vmax.f32 %v325, %v401
      %v487 = vmax.f32 %v326, %v461
      %v488 = vmax.f32 %v327, %v404
      %v489 = vmax.f32 %v328, %v462
      %v490 = vmax.f32 %v329, %v407
      %v491 = vmax.f32 %v330, %v463
      %v492 = vmax.f32 %v331, %v410
      %v493 = vmax.f32 %v332, %v464
      %v494 = vmax.f32 %v333, %v413
      %v495 = vmax.f32 %v334, %v465
      %v496 = vmax.f32 %v335, %v416
      %v497 = vmax.f32 %v336, %v466
      %v498 = vmax.f32 %v337, %v419
      %v499 = vmax.f32 %v338, %v467
      %vm500 = vcmask 1040384
      %v501 = vrot.slane %v307, 7
      %v502 = vrot.slane %v308, 7
      %v503 = vsel %vm500, %v501, %v502
      %v504 = vrot.slane %v309, 7
      %v505 = vrot.slane %v310, 7
      %v506 = vsel %vm500, %v504, %v505
      %v507 = vrot.slane %v311, 7
      %v508 = vrot.slane %v312, 7
      %v509 = vsel %vm500, %v507, %v508
      %v510 = vrot.slane %v313, 7
      %v511 = vrot.slane %v314, 7
      %v512 = vsel %vm500, %v510, %v511
      %v513 = vrot.slane %v315, 7
      %v514 = vrot.slane %v316, 7
      %v515 = vsel %vm500, %v513, %v514
      %v516 = vrot.slane %v317, 7
      %v517 = vrot.slane %v318, 7
      %v518 = vsel %vm500, %v516, %v517
      %v519 = vrot.slane %v319, 7
      %v520 = vrot.slane %v320, 7
      %v521 = vsel %vm500, %v519, %v520
      %v522 = vrot.slane %v321, 7
      %v523 = vrot.slane %v322, 7
      %v524 = vsel %vm500, %v522, %v523
      %v525 = vrot.slane %v323, 7
      %v526 = vrot.slane %v324, 7
      %v527 = vsel %vm500, %v525, %v526
      %v528 = vrot.slane %v325, 7
      %v529 = vrot.slane %v326, 7
      %v530 = vsel %vm500, %v528, %v529
      %v531 = vrot.slane %v327, 7
      %v532 = vrot.slane %v328, 7
      %v533 = vsel %vm500, %v531, %v532
      %v534 = vrot.slane %v329, 7
      %v535 = vrot.slane %v330, 7
      %v536 = vsel %vm500, %v534, %v535
      %v537 = vrot.slane %v331, 7
      %v538 = vrot.slane %v332, 7
      %v539 = vsel %vm500, %v537, %v538
      %v540 = vrot.slane %v333, 7
      %v541 = vrot.slane %v334, 7
      %v542 = vsel %vm500, %v540, %v541
      %v543 = vrot.slane %v335, 7
      %v544 = vrot.slane %v336, 7
      %v545 = vsel %vm500, %v543, %v544
      %v546 = vrot.slane %v337, 7
      %v547 = vrot.slane %v338, 7
      %v548 = vsel %vm500, %v546, %v547
      %v581 = vsel %vm500, 0.0, %v501
      %v582 = vsel %vm500, 0.0, %v504
      %v583 = vsel %vm500, 0.0, %v507
      %v584 = vsel %vm500, 0.0, %v510
      %v585 = vsel %vm500, 0.0, %v513
      %v586 = vsel %vm500, 0.0, %v516
      %v587 = vsel %vm500, 0.0, %v519
      %v588 = vsel %vm500, 0.0, %v522
      %v589 = vsel %vm500, 0.0, %v525
      %v590 = vsel %vm500, 0.0, %v528
      %v591 = vsel %vm500, 0.0, %v531
      %v592 = vsel %vm500, 0.0, %v534
      %v593 = vsel %vm500, 0.0, %v537
      %v594 = vsel %vm500, 0.0, %v540
      %v595 = vsel %vm500, 0.0, %v543
      %v596 = vsel %vm500, 0.0, %v546
      %v597 = vmax.f32 %v468, %v581
      %v598 = vmax.f32 %v469, %v503
      %v599 = vmax.f32 %v470, %v582
      %v600 = vmax.f32 %v471, %v506
      %v601 = vmax.f32 %v472, %v583
      %v602 = vmax.f32 %v473, %v509
      %v603 = vmax.f32 %v474, %v584
      %v604 = vmax.f32 %v475, %v512
      %v605 = vmax.f32 %v476, %v585
      %v606 = vmax.f32 %v477, %v515
      %v607 = vmax.f32 %v478, %v586
      %v608 = vmax.f32 %v479, %v518
      %v609 = vmax.f32 %v480, %v587
      %v610 = vmax.f32 %v481, %v521
      %v611 = vmax.f32 %v482, %v588
      %v612 = vmax.f32 %v483, %v524
      %v613 = vmax.f32 %v484, %v589
      %v614 = vmax.f32 %v485, %v527
      %v615 = vmax.f32 %v486, %v590
      %v616 = vmax.f32 %v487, %v530
      %v617 = vmax.f32 %v488, %v591
      %v618 = vmax.f32 %v489, %v533
      %v619 = vmax.f32 %v490, %v592
      %v620 = vmax.f32 %v491, %v536
      %v621 = vmax.f32 %v492, %v593
      %v622 = vmax.f32 %v493, %v539
      %v623 = vmax.f32 %v494, %v594
      %v624 = vmax.f32 %v495, %v542
      %v625 = vmax.f32 %v496, %v595
      %v626 = vmax.f32 %v497, %v545
      %v627 = vmax.f32 %v498, %v596
      %v628 = vmax.f32 %v499, %v548
      %v629 = vpack.c.bf16 %v244, %v243
      %v630 = vpack.c.bf16 %v246, %v245
      %v631 = vpack.c.bf16 %v248, %v247
      %v632 = vpack.c.bf16 %v250, %v249
      %v633 = vpack.c.bf16 %v252, %v251
      %v634 = vpack.c.bf16 %v254, %v253
      %v635 = vpack.c.bf16 %v256, %v255
      %v636 = vpack.c.bf16 %v258, %v257
      %v637 = vpack.c.bf16 %v260, %v259
      %v638 = vpack.c.bf16 %v262, %v261
      %v639 = vpack.c.bf16 %v264, %v263
      %v640 = vpack.c.bf16 %v266, %v265
      %v641 = vpack.c.bf16 %v268, %v267
      %v642 = vpack.c.bf16 %v270, %v269
      %v643 = vpack.c.bf16 %v272, %v271
      %v644 = vpack.c.bf16 %v274, %v273
      %v645 = vpack.c.bf16 %v598, %v597
      %v646 = vpack.c.bf16 %v600, %v599
      %v647 = vpack.c.bf16 %v602, %v601
      %v648 = vpack.c.bf16 %v604, %v603
      %v649 = vpack.c.bf16 %v606, %v605
      %v650 = vpack.c.bf16 %v608, %v607
      %v651 = vpack.c.bf16 %v610, %v609
      %v652 = vpack.c.bf16 %v612, %v611
      %v653 = vpack.c.bf16 %v614, %v613
      %v654 = vpack.c.bf16 %v616, %v615
      %v655 = vpack.c.bf16 %v618, %v617
      %v656 = vpack.c.bf16 %v620, %v619
      %v657 = vpack.c.bf16 %v622, %v621
      %v658 = vpack.c.bf16 %v624, %v623
      %v659 = vpack.c.bf16 %v626, %v625
      %v660 = vpack.c.bf16 %v628, %v627
      %v661 = vld [vmem:[%s1] sm:$0x3]
      %v662 = vld [vmem:[%s2] sm:$0x3]
      %vm663 = vcmask 31744
      %v665 = vsel %vm663, %v645, 0
      %v668 = vsel %vm663, %v646, 0
      %v671 = vsel %vm663, %v647, 0
      %v674 = vsel %vm663, %v648, 0
      %v677 = vsel %vm663, %v649, 0
      %v680 = vsel %vm663, %v650, 0
      %v683 = vsel %vm663, %v651, 0
      %v686 = vsel %vm663, %v652, 0
      %v689 = vsel %vm663, %v653, 0
      %v692 = vsel %vm663, %v654, 0
      %v695 = vsel %vm663, %v655, 0
      %v698 = vsel %vm663, %v656, 0
      %v701 = vsel %vm663, %v657, 0
      %v704 = vsel %vm663, %v658, 0
      %v707 = vsel %vm663, %v659, 0
      %v710 = vsel %vm663, %v660, 0
      %vm712 = vcmask 1041408
      %v714 = vsel %vm712, %v662, 0
      %716 = vmatprep.subr.bf16.mxu0 0
      %717 = vmatpush1.bf16.msra.mxu0 %v714
      %718 = vmatprep.subr.bf16.mxu0 0
      %719 = vmatpush1.bf16.msra.mxu0 0
      %720 = vmatprep.subr.bf16.mxu0 0
      %721 = vmatpush1.bf16.msra.mxu0 0
      %722 = vmatprep.subr.bf16.mxu0 0
      %723 = vmatpush1.bf16.msra.mxu0 0
      %724 = vmatprep.subr.bf16.mxu0 0
      %725 = vmatpush1.bf16.msra.mxu0 0
      %726 = vmatprep.subr.bf16.mxu0 0
      %727 = vmatpush1.bf16.msra.mxu0 0
      %728 = vmatprep.subr.bf16.mxu0 0
      %729 = vmatpush1.bf16.msra.mxu0 0
      %730 = vmatprep.subr.bf16.mxu0 0
      %731 = vmatpush1.bf16.msra.mxu0 0
      %732 = vmatprep.subr.bf16.mxu0 0
      %733 = vmatpush1.bf16.msra.mxu0 0
      %734 = vmatprep.subr.bf16.mxu0 0
      %735 = vmatpush1.bf16.msra.mxu0 0
      %736 = vmatprep.subr.bf16.mxu0 0
      %737 = vmatpush1.bf16.msra.mxu0 0
      %738 = vmatprep.subr.bf16.mxu0 0
      %739 = vmatpush1.bf16.msra.mxu0 0
      %740 = vmatprep.subr.bf16.mxu0 0
      %741 = vmatpush1.bf16.msra.mxu0 0
      %742 = vmatprep.subr.bf16.mxu0 0
      %743 = vmatpush1.bf16.msra.mxu0 0
      %744 = vmatprep.subr.bf16.mxu0 0
      %745 = vmatpush1.bf16.msra.mxu0 0
      %746 = vmatprep.subr.bf16.mxu0 0
      %747 = vmatpush1.bf16.msra.mxu0 0
      %748 = vmatprep.mubr.bf16.mxu0 0
      %749 = vmatmul.mubr.bf16.gmra.mrb[0].mxu0 %v665
      %v750 = vpop.f32.mrb[0].mxu0
      %v751 = vadd.f32 0.0, %v750
      %v752 = vpop.f32.mrb[0].mxu0
      %v753 = vpop.f32.mrb[0].mxu0
      %v754 = vadd.f32 0.0, %v753
      %v755 = vpop.f32.mrb[0].mxu0
      %756 = vmatprep.mubr.bf16.mxu0 0
      %757 = vmatmul.mubr.bf16.gmra.mrb[0].mxu0 %v668
      %v758 = vpop.f32.mrb[0].mxu0
      %v759 = vadd.f32 0.0, %v758
      %v760 = vpop.f32.mrb[0].mxu0
      %v761 = vpop.f32.mrb[0].mxu0
      %v762 = vadd.f32 0.0, %v761
      %v763 = vpop.f32.mrb[0].mxu0
      %764 = vmatprep.mubr.bf16.mxu0 0
      %765 = vmatmul.mubr.bf16.gmra.mrb[0].mxu0 %v671
      %v766 = vpop.f32.mrb[0].mxu0
      %v767 = vadd.f32 0.0, %v766
      %v768 = vpop.f32.mrb[0].mxu0
      %v769 = vpop.f32.mrb[0].mxu0
      %v770 = vadd.f32 0.0, %v769
      %v771 = vpop.f32.mrb[0].mxu0
      %772 = vmatprep.mubr.bf16.mxu0 0
      %773 = vmatmul.mubr.bf16.gmra.mrb[0].mxu0 %v674
      %v774 = vpop.f32.mrb[0].mxu0
      %v775 = vadd.f32 0.0, %v774
      %v776 = vpop.f32.mrb[0].mxu0
      %v777 = vpop.f32.mrb[0].mxu0
      %v778 = vadd.f32 0.0, %v777
      %v779 = vpop.f32.mrb[0].mxu0
      %780 = vmatprep.mubr.bf16.mxu0 0
      %781 = vmatmul.mubr.bf16.gmra.mrb[0].mxu0 %v677
      %v782 = vpop.f32.mrb[0].mxu0
      %v783 = vadd.f32 0.0, %v782
      %v784 = vpop.f32.mrb[0].mxu0
      %v785 = vpop.f32.mrb[0].mxu0
      %v786 = vadd.f32 0.0, %v785
      %v787 = vpop.f32.mrb[0].mxu0
      %788 = vmatprep.mubr.bf16.mxu0 0
      %789 = vmatmul.mubr.bf16.gmra.mrb[0].mxu0 %v680
      %v790 = vpop.f32.mrb[0].mxu0
      %v791 = vadd.f32 0.0, %v790
      %v792 = vpop.f32.mrb[0].mxu0
      %v793 = vpop.f32.mrb[0].mxu0
      %v794 = vadd.f32 0.0, %v793
      %v795 = vpop.f32.mrb[0].mxu0
      %796 = vmatprep.mubr.bf16.mxu0 0
      %797 = vmatmul.mubr.bf16.gmra.mrb[0].mxu0 %v683
      %v798 = vpop.f32.mrb[0].mxu0
      %v799 = vadd.f32 0.0, %v798
      %v800 = vpop.f32.mrb[0].mxu0
      %v801 = vpop.f32.mrb[0].mxu0
      %v802 = vadd.f32 0.0, %v801
      %v803 = vpop.f32.mrb[0].mxu0
      %804 = vmatprep.mubr.bf16.mxu0 0
      %805 = vmatmul.mubr.bf16.gmra.mrb[0].mxu0 %v686
      %v806 = vpop.f32.mrb[0].mxu0
      %v807 = vadd.f32 0.0, %v806
      %v808 = vpop.f32.mrb[0].mxu0
      %v809 = vpop.f32.mrb[0].mxu0
      %v810 = vadd.f32 0.0, %v809
      %v811 = vpop.f32.mrb[0].mxu0
      %812 = vmatprep.mubr.bf16.mxu0 0
      %813 = vmatmul.mubr.bf16.gmra.mrb[0].mxu0 %v689
      %v814 = vpop.f32.mrb[0].mxu0
      %v815 = vadd.f32 0.0, %v814
      %v816 = vpop.f32.mrb[0].mxu0
      %v817 = vpop.f32.mrb[0].mxu0
      %v818 = vadd.f32 0.0, %v817
      %v819 = vpop.f32.mrb[0].mxu0
      %820 = vmatprep.mubr.bf16.mxu0 0
      %821 = vmatmul.mubr.bf16.gmra.mrb[0].mxu0 %v692
      %v822 = vpop.f32.mrb[0].mxu0
      %v823 = vadd.f32 0.0, %v822
      %v824 = vpop.f32.mrb[0].mxu0
      %v825 = vpop.f32.mrb[0].mxu0
      %v826 = vadd.f32 0.0, %v825
      %v827 = vpop.f32.mrb[0].mxu0
      %828 = vmatprep.mubr.bf16.mxu0 0
      %829 = vmatmul.mubr.bf16.gmra.mrb[0].mxu0 %v695
      %v830 = vpop.f32.mrb[0].mxu0
      %v831 = vadd.f32 0.0, %v830
      %v832 = vpop.f32.mrb[0].mxu0
      %v833 = vpop.f32.mrb[0].mxu0
      %v834 = vadd.f32 0.0, %v833
      %v835 = vpop.f32.mrb[0].mxu0
      %836 = vmatprep.mubr.bf16.mxu0 0
      %837 = vmatmul.mubr.bf16.gmra.mrb[0].mxu0 %v698
      %v838 = vpop.f32.mrb[0].mxu0
      %v839 = vadd.f32 0.0, %v838
      %v840 = vpop.f32.mrb[0].mxu0
      %v841 = vpop.f32.mrb[0].mxu0
      %v842 = vadd.f32 0.0, %v841
      %v843 = vpop.f32.mrb[0].mxu0
      %844 = vmatprep.mubr.bf16.mxu0 0
      %845 = vmatmul.mubr.bf16.gmra.mrb[0].mxu0 %v701
      %v846 = vpop.f32.mrb[0].mxu0
      %v847 = vadd.f32 0.0, %v846
      %v848 = vpop.f32.mrb[0].mxu0
      %v849 = vpop.f32.mrb[0].mxu0
      %v850 = vadd.f32 0.0, %v849
      %v851 = vpop.f32.mrb[0].mxu0
      %852 = vmatprep.mubr.bf16.mxu0 0
      %853 = vmatmul.mubr.bf16.gmra.mrb[0].mxu0 %v704
      %v854 = vpop.f32.mrb[0].mxu0
      %v855 = vadd.f32 0.0, %v854
      %v856 = vpop.f32.mrb[0].mxu0
      %v857 = vpop.f32.mrb[0].mxu0
      %v858 = vadd.f32 0.0, %v857
      %v859 = vpop.f32.mrb[0].mxu0
      %860 = vmatprep.mubr.bf16.mxu0 0
      %861 = vmatmul.mubr.bf16.gmra.mrb[0].mxu0 %v707
      %v862 = vpop.f32.mrb[0].mxu0
      %v863 = vadd.f32 0.0, %v862
      %v864 = vpop.f32.mrb[0].mxu0
      %v865 = vpop.f32.mrb[0].mxu0
      %v866 = vadd.f32 0.0, %v865
      %v867 = vpop.f32.mrb[0].mxu0
      %868 = vmatprep.mubr.bf16.mxu0 0
      %869 = vmatmul.mubr.bf16.gmra.mrb[0].mxu0 %v710
      %v870 = vpop.f32.mrb[0].mxu0
      %v871 = vadd.f32 0.0, %v870
      %v872 = vpop.f32.mrb[0].mxu0
      %v873 = vpop.f32.mrb[0].mxu0
      %v874 = vadd.f32 0.0, %v873
      %v875 = vpop.f32.mrb[0].mxu0
      %876 = vdwg.mxu0
      %v878 = vsel %vm663, %v629, 0
      %v881 = vsel %vm663, %v630, 0
      %v884 = vsel %vm663, %v631, 0
      %v887 = vsel %vm663, %v632, 0
      %v890 = vsel %vm663, %v633, 0
      %v893 = vsel %vm663, %v634, 0
      %v896 = vsel %vm663, %v635, 0
      %v899 = vsel %vm663, %v636, 0
      %v902 = vsel %vm663, %v637, 0
      %v905 = vsel %vm663, %v638, 0
      %v908 = vsel %vm663, %v639, 0
      %v911 = vsel %vm663, %v640, 0
      %v914 = vsel %vm663, %v641, 0
      %v917 = vsel %vm663, %v642, 0
      %v920 = vsel %vm663, %v643, 0
      %v923 = vsel %vm663, %v644, 0
      %v926 = vsel %vm712, %v661, 0
      %928 = vmatprep.subr.bf16.mxu0 0
      %929 = vmatpush1.bf16.msra.mxu0 %v926
      %930 = vmatprep.subr.bf16.mxu0 0
      %931 = vmatpush1.bf16.msra.mxu0 0
      %932 = vmatprep.subr.bf16.mxu0 0
      %933 = vmatpush1.bf16.msra.mxu0 0
      %934 = vmatprep.subr.bf16.mxu0 0
      %935 = vmatpush1.bf16.msra.mxu0 0
      %936 = vmatprep.subr.bf16.mxu0 0
      %937 = vmatpush1.bf16.msra.mxu0 0
      %938 = vmatprep.subr.bf16.mxu0 0
      %939 = vmatpush1.bf16.msra.mxu0 0
      %940 = vmatprep.subr.bf16.mxu0 0
      %941 = vmatpush1.bf16.msra.mxu0 0
      %942 = vmatprep.subr.bf16.mxu0 0
      %943 = vmatpush1.bf16.msra.mxu0 0
      %944 = vmatprep.subr.bf16.mxu0 0
      %945 = vmatpush1.bf16.msra.mxu0 0
      %946 = vmatprep.subr.bf16.mxu0 0
      %947 = vmatpush1.bf16.msra.mxu0 0
      %948 = vmatprep.subr.bf16.mxu0 0
      %949 = vmatpush1.bf16.msra.mxu0 0
      %950 = vmatprep.subr.bf16.mxu0 0
      %951 = vmatpush1.bf16.msra.mxu0 0
      %952 = vmatprep.subr.bf16.mxu0 0
      %953 = vmatpush1.bf16.msra.mxu0 0
      %954 = vmatprep.subr.bf16.mxu0 0
      %955 = vmatpush1.bf16.msra.mxu0 0
      %956 = vmatprep.subr.bf16.mxu0 0
      %957 = vmatpush1.bf16.msra.mxu0 0
      %958 = vmatprep.subr.bf16.mxu0 0
      %959 = vmatpush1.bf16.msra.mxu0 0
      %960 = vmatprep.mubr.bf16.mxu0 0
      %961 = vmatmul.mubr.bf16.gmra.mrb[0].mxu0 %v878
      %v962 = vpop.f32.mrb[0].mxu0
      %v963 = vadd.f32 %v751, %v962
      %v964 = vpop.f32.mrb[0].mxu0
      %v965 = vpop.f32.mrb[0].mxu0
      %v966 = vadd.f32 %v754, %v965
      %v967 = vpop.f32.mrb[0].mxu0
      %968 = vmatprep.mubr.bf16.mxu0 0
      %969 = vmatmul.mubr.bf16.gmra.mrb[0].mxu0 %v881
      %v970 = vpop.f32.mrb[0].mxu0
      %v971 = vadd.f32 %v759, %v970
      %v972 = vpop.f32.mrb[0].mxu0
      %v973 = vpop.f32.mrb[0].mxu0
      %v974 = vadd.f32 %v762, %v973
      %v975 = vpop.f32.mrb[0].mxu0
      %976 = vmatprep.mubr.bf16.mxu0 0
      %977 = vmatmul.mubr.bf16.gmra.mrb[0].mxu0 %v884
      %v978 = vpop.f32.mrb[0].mxu0
      %v979 = vadd.f32 %v767, %v978
      %v980 = vpop.f32.mrb[0].mxu0
      %v981 = vpop.f32.mrb[0].mxu0
      %v982 = vadd.f32 %v770, %v981
      %v983 = vpop.f32.mrb[0].mxu0
      %984 = vmatprep.mubr.bf16.mxu0 0
      %985 = vmatmul.mubr.bf16.gmra.mrb[0].mxu0 %v887
      %v986 = vpop.f32.mrb[0].mxu0
      %v987 = vadd.f32 %v775, %v986
      %v988 = vpop.f32.mrb[0].mxu0
      %v989 = vpop.f32.mrb[0].mxu0
      %v990 = vadd.f32 %v778, %v989
      %v991 = vpop.f32.mrb[0].mxu0
      %992 = vmatprep.mubr.bf16.mxu0 0
      %993 = vmatmul.mubr.bf16.gmra.mrb[0].mxu0 %v890
      %v994 = vpop.f32.mrb[0].mxu0
      %v995 = vadd.f32 %v783, %v994
      %v996 = vpop.f32.mrb[0].mxu0
      %v997 = vpop.f32.mrb[0].mxu0
      %v998 = vadd.f32 %v786, %v997
      %v999 = vpop.f32.mrb[0].mxu0
      %1000 = vmatprep.mubr.bf16.mxu0 0
      %1001 = vmatmul.mubr.bf16.gmra.mrb[0].mxu0 %v893
      %v1002 = vpop.f32.mrb[0].mxu0
      %v1003 = vadd.f32 %v791, %v1002
      %v1004 = vpop.f32.mrb[0].mxu0
      %v1005 = vpop.f32.mrb[0].mxu0
      %v1006 = vadd.f32 %v794, %v1005
      %v1007 = vpop.f32.mrb[0].mxu0
      %1008 = vmatprep.mubr.bf16.mxu0 0
      %1009 = vmatmul.mubr.bf16.gmra.mrb[0].mxu0 %v896
      %v1010 = vpop.f32.mrb[0].mxu0
      %v1011 = vadd.f32 %v799, %v1010
      %v1012 = vpop.f32.mrb[0].mxu0
      %v1013 = vpop.f32.mrb[0].mxu0
      %v1014 = vadd.f32 %v802, %v1013
      %v1015 = vpop.f32.mrb[0].mxu0
      %1016 = vmatprep.mubr.bf16.mxu0 0
      %1017 = vmatmul.mubr.bf16.gmra.mrb[0].mxu0 %v899
      %v1018 = vpop.f32.mrb[0].mxu0
      %v1019 = vadd.f32 %v807, %v1018
      %v1020 = vpop.f32.mrb[0].mxu0
      %v1021 = vpop.f32.mrb[0].mxu0
      %v1022 = vadd.f32 %v810, %v1021
      %v1023 = vpop.f32.mrb[0].mxu0
      %1024 = vmatprep.mubr.bf16.mxu0 0
      %1025 = vmatmul.mubr.bf16.gmra.mrb[0].mxu0 %v902
      %v1026 = vpop.f32.mrb[0].mxu0
      %v1027 = vadd.f32 %v815, %v1026
      %v1028 = vpop.f32.mrb[0].mxu0
      %v1029 = vpop.f32.mrb[0].mxu0
      %v1030 = vadd.f32 %v818, %v1029
      %v1031 = vpop.f32.mrb[0].mxu0
      %1032 = vmatprep.mubr.bf16.mxu0 0
      %1033 = vmatmul.mubr.bf16.gmra.mrb[0].mxu0 %v905
      %v1034 = vpop.f32.mrb[0].mxu0
      %v1035 = vadd.f32 %v823, %v1034
      %v1036 = vpop.f32.mrb[0].mxu0
      %v1037 = vpop.f32.mrb[0].mxu0
      %v1038 = vadd.f32 %v826, %v1037
      %v1039 = vpop.f32.mrb[0].mxu0
      %1040 = vmatprep.mubr.bf16.mxu0 0
      %1041 = vmatmul.mubr.bf16.gmra.mrb[0].mxu0 %v908
      %v1042 = vpop.f32.mrb[0].mxu0
      %v1043 = vadd.f32 %v831, %v1042
      %v1044 = vpop.f32.mrb[0].mxu0
      %v1045 = vpop.f32.mrb[0].mxu0
      %v1046 = vadd.f32 %v834, %v1045
      %v1047 = vpop.f32.mrb[0].mxu0
      %1048 = vmatprep.mubr.bf16.mxu0 0
      %1049 = vmatmul.mubr.bf16.gmra.mrb[0].mxu0 %v911
      %v1050 = vpop.f32.mrb[0].mxu0
      %v1051 = vadd.f32 %v839, %v1050
      %v1052 = vpop.f32.mrb[0].mxu0
      %v1053 = vpop.f32.mrb[0].mxu0
      %v1054 = vadd.f32 %v842, %v1053
      %v1055 = vpop.f32.mrb[0].mxu0
      %1056 = vmatprep.mubr.bf16.mxu0 0
      %1057 = vmatmul.mubr.bf16.gmra.mrb[0].mxu0 %v914
      %v1058 = vpop.f32.mrb[0].mxu0
      %v1059 = vadd.f32 %v847, %v1058
      %v1060 = vpop.f32.mrb[0].mxu0
      %v1061 = vpop.f32.mrb[0].mxu0
      %v1062 = vadd.f32 %v850, %v1061
      %v1063 = vpop.f32.mrb[0].mxu0
      %1064 = vmatprep.mubr.bf16.mxu0 0
      %1065 = vmatmul.mubr.bf16.gmra.mrb[0].mxu0 %v917
      %v1066 = vpop.f32.mrb[0].mxu0
      %v1067 = vadd.f32 %v855, %v1066
      %v1068 = vpop.f32.mrb[0].mxu0
      %v1069 = vpop.f32.mrb[0].mxu0
      %v1070 = vadd.f32 %v858, %v1069
      %v1071 = vpop.f32.mrb[0].mxu0
      %1072 = vmatprep.mubr.bf16.mxu0 0
      %1073 = vmatmul.mubr.bf16.gmra.mrb[0].mxu0 %v920
      %v1074 = vpop.f32.mrb[0].mxu0
      %v1075 = vadd.f32 %v863, %v1074
      %v1076 = vpop.f32.mrb[0].mxu0
      %v1077 = vpop.f32.mrb[0].mxu0
      %v1078 = vadd.f32 %v866, %v1077
      %v1079 = vpop.f32.mrb[0].mxu0
      %1080 = vmatprep.mubr.bf16.mxu0 0
      %1081 = vmatmul.mubr.bf16.gmra.mrb[0].mxu0 %v923
      %v1082 = vpop.f32.mrb[0].mxu0
      %v1083 = vadd.f32 %v871, %v1082
      %v1084 = vpop.f32.mrb[0].mxu0
      %v1085 = vpop.f32.mrb[0].mxu0
      %v1086 = vadd.f32 %v874, %v1085
      %v1087 = vpop.f32.mrb[0].mxu0
      %1088 = vdwg.mxu0
      %1089 = vst [vmem:[%s204] sm:$0xff] %v963
      %1090 = vst [vmem:[%s204 + $0x8] sm:$0xff] %v966
      %1091 = vst [vmem:[%s204 + $0x10] sm:$0xff] %v971
      %1092 = vst [vmem:[%s204 + $0x18] sm:$0xff] %v974
      %1093 = vst [vmem:[%s204 + $0x20] sm:$0xff] %v979
      %1094 = vst [vmem:[%s204 + $0x28] sm:$0xff] %v982
      %1095 = vst [vmem:[%s204 + $0x30] sm:$0xff] %v987
      %1096 = vst [vmem:[%s204 + $0x38] sm:$0xff] %v990
      %1097 = vst [vmem:[%s204 + $0x40] sm:$0xff] %v995
      %1098 = vst [vmem:[%s204 + $0x48] sm:$0xff] %v998
      %1099 = vst [vmem:[%s204 + $0x50] sm:$0xff] %v1003
      %1100 = vst [vmem:[%s204 + $0x58] sm:$0xff] %v1006
      %1101 = vst [vmem:[%s204 + $0x60] sm:$0xff] %v1011
      %1102 = vst [vmem:[%s204 + $0x68] sm:$0xff] %v1014
      %1103 = vst [vmem:[%s204 + $0x70] sm:$0xff] %v1019
      %1104 = vst [vmem:[%s204 + $0x78] sm:$0xff] %v1022
      %1105 = vst [vmem:[%s204 + $0x80] sm:$0xff] %v1027
      %1106 = vst [vmem:[%s204 + $0x88] sm:$0xff] %v1030
      %1107 = vst [vmem:[%s204 + $0x90] sm:$0xff] %v1035
      %1108 = vst [vmem:[%s204 + $0x98] sm:$0xff] %v1038
      %1109 = vst [vmem:[%s204 + $0xa0] sm:$0xff] %v1043
      %1110 = vst [vmem:[%s204 + $0xa8] sm:$0xff] %v1046
      %1111 = vst [vmem:[%s204 + $0xb0] sm:$0xff] %v1051
      %1112 = vst [vmem:[%s204 + $0xb8] sm:$0xff] %v1054
      %1113 = vst [vmem:[%s204 + $0xc0] sm:$0xff] %v1059
      %1114 = vst [vmem:[%s204 + $0xc8] sm:$0xff] %v1062
      %1115 = vst [vmem:[%s204 + $0xd0] sm:$0xff] %v1067
      %1116 = vst [vmem:[%s204 + $0xd8] sm:$0xff] %v1070
      %1117 = vst [vmem:[%s204 + $0xe0] sm:$0xff] %v1075
      %1118 = vst [vmem:[%s204 + $0xe8] sm:$0xff] %v1078
      %1119 = vst [vmem:[%s204 + $0xf0] sm:$0xff] %v1083
      %1120 = vst [vmem:[%s204 + $0xf8] sm:$0xff] %v1086
      %v1121 = vadd.f32 %v963, %v966
      %v1122 = vadd.f32 %v1121, %v971
      %v1123 = vadd.f32 %v1122, %v974
      %v1124 = vadd.f32 %v1123, %v979
      %v1125 = vadd.f32 %v1124, %v982
      %v1126 = vadd.f32 %v1125, %v987
      %v1127 = vadd.f32 %v1126, %v990
      %v1128 = vadd.f32 %v1127, %v995
      %v1129 = vadd.f32 %v1128, %v998
      %v1130 = vadd.f32 %v1129, %v1003
      %v1131 = vadd.f32 %v1130, %v1006
      %v1132 = vadd.f32 %v1131, %v1011
      %v1133 = vadd.f32 %v1132, %v1014
      %v1134 = vadd.f32 %v1133, %v1019
      %v1135 = vadd.f32 %v1134, %v1022
      %v1136 = vadd.f32 %v1135, %v1027
      %v1137 = vadd.f32 %v1136, %v1030
      %v1138 = vadd.f32 %v1137, %v1035
      %v1139 = vadd.f32 %v1138, %v1038
      %v1140 = vadd.f32 %v1139, %v1043
      %v1141 = vadd.f32 %v1140, %v1046
      %v1142 = vadd.f32 %v1141, %v1051
      %v1143 = vadd.f32 %v1142, %v1054
      %v1144 = vadd.f32 %v1143, %v1059
      %v1145 = vadd.f32 %v1144, %v1062
      %v1146 = vadd.f32 %v1145, %v1067
      %v1147 = vadd.f32 %v1146, %v1070
      %v1148 = vadd.f32 %v1147, %v1075
      %v1149 = vadd.f32 %v1148, %v1078
      %v1150 = vadd.f32 %v1149, %v1083
      %v1151 = vadd.f32 %v1150, %v1086
      %v1152 = vrot.slane %v1151, 4
      %v1153 = vadd.f32 %v1151, %v1152
      %v1154 = vrot.slane %v1153, 2
      %v1155 = vadd.f32 %v1153, %v1154
      %v1156 = vrot.slane %v1155, 1
      %v1157 = vadd.f32 %v1155, %v1156
      %v1158 = vmul.f32 %v963, %v963
      %v1159 = vmul.f32 %v966, %v966
      %v1160 = vmul.f32 %v971, %v971
      %v1161 = vmul.f32 %v974, %v974
      %v1162 = vmul.f32 %v979, %v979
      %v1163 = vmul.f32 %v982, %v982
      %v1164 = vmul.f32 %v987, %v987
      %v1165 = vmul.f32 %v990, %v990
      %v1166 = vmul.f32 %v995, %v995
      %v1167 = vmul.f32 %v998, %v998
      %v1168 = vmul.f32 %v1003, %v1003
      %v1169 = vmul.f32 %v1006, %v1006
      %v1170 = vmul.f32 %v1011, %v1011
      %v1171 = vmul.f32 %v1014, %v1014
      %v1172 = vmul.f32 %v1019, %v1019
      %v1173 = vmul.f32 %v1022, %v1022
      %v1174 = vmul.f32 %v1027, %v1027
      %v1175 = vmul.f32 %v1030, %v1030
      %v1176 = vmul.f32 %v1035, %v1035
      %v1177 = vmul.f32 %v1038, %v1038
      %v1178 = vmul.f32 %v1043, %v1043
      %v1179 = vmul.f32 %v1046, %v1046
      %v1180 = vmul.f32 %v1051, %v1051
      %v1181 = vmul.f32 %v1054, %v1054
      %v1182 = vmul.f32 %v1059, %v1059
      %v1183 = vmul.f32 %v1062, %v1062
      %v1184 = vmul.f32 %v1067, %v1067
      %v1185 = vmul.f32 %v1070, %v1070
      %v1186 = vmul.f32 %v1075, %v1075
      %v1187 = vmul.f32 %v1078, %v1078
      %v1188 = vmul.f32 %v1083, %v1083
      %v1189 = vmul.f32 %v1086, %v1086
      %v1190 = vadd.f32 %v1158, %v1159
      %v1191 = vadd.f32 %v1190, %v1160
      %v1192 = vadd.f32 %v1191, %v1161
      %v1193 = vadd.f32 %v1192, %v1162
      %v1194 = vadd.f32 %v1193, %v1163
      %v1195 = vadd.f32 %v1194, %v1164
      %v1196 = vadd.f32 %v1195, %v1165
      %v1197 = vadd.f32 %v1196, %v1166
      %v1198 = vadd.f32 %v1197, %v1167
      %v1199 = vadd.f32 %v1198, %v1168
      %v1200 = vadd.f32 %v1199, %v1169
      %v1201 = vadd.f32 %v1200, %v1170
      %v1202 = vadd.f32 %v1201, %v1171
      %v1203 = vadd.f32 %v1202, %v1172
      %v1204 = vadd.f32 %v1203, %v1173
      %v1205 = vadd.f32 %v1204, %v1174
      %v1206 = vadd.f32 %v1205, %v1175
      %v1207 = vadd.f32 %v1206, %v1176
      %v1208 = vadd.f32 %v1207, %v1177
      %v1209 = vadd.f32 %v1208, %v1178
      %v1210 = vadd.f32 %v1209, %v1179
      %v1211 = vadd.f32 %v1210, %v1180
      %v1212 = vadd.f32 %v1211, %v1181
      %v1213 = vadd.f32 %v1212, %v1182
      %v1214 = vadd.f32 %v1213, %v1183
      %v1215 = vadd.f32 %v1214, %v1184
      %v1216 = vadd.f32 %v1215, %v1185
      %v1217 = vadd.f32 %v1216, %v1186
      %v1218 = vadd.f32 %v1217, %v1187
      %v1219 = vadd.f32 %v1218, %v1188
      %v1220 = vadd.f32 %v1219, %v1189
      %v1221 = vrot.slane %v1220, 4
      %v1222 = vadd.f32 %v1220, %v1221
      %v1223 = vrot.slane %v1222, 2
      %v1224 = vadd.f32 %v1222, %v1223
      %v1225 = vrot.slane %v1224, 1
      %v1226 = vadd.f32 %v1224, %v1225
      %vm1227 = vcmask 1043456
      %v1228 = vsel %vm1227, %v1157, %v1226
      %1229 = vst [vmem:[%s209] sm:$0xff] %v1228
      %s1230 = smul.u32 32, %s16
      %p1231 = scmp.lt.s32.totalorder %s1230, 63
      %s1232 = scalar_select %p1231, %s1230, 63
      %s1233 = smul.addr %s1232, 8
      %s1234 = scalar_lea.vmem %s3, %s1233
      %p1235 = scmp.lt.s32.totalorder %s16, 1
      %s1236 = scalar_select %p1235, %s16, 1
      %s1237 = smul.addr %s1236, 8
      %s1238 = scalar_lea.vmem %s4, %s1237
      // Predicated region
      $region33: #{inception_forward.3} parent=31 // pred_check
        %p1239 = pneg %p102
      $region34: #{inception_forward.3} parent=31 // pred_check_branch
        %1241 = sbr.rel (%p1239) target = $region36
      $region35: #{inception_forward.3} parent=31 // pred_region
        %s1242 = smul.u32 32, %s16
      $region36: #{inception_forward.3} parent=31 // pred_fallthru
        _
      // Predicated region
      $region37: #{inception_forward.3} parent=31 // pred_check
        %p1243 = pneg %p128
      $region38: #{inception_forward.3} parent=31 // pred_check_branch
        %1245 = sbr.rel (%p1243) target = $region40
      $region39: #{inception_forward.3} parent=31 // pred_region
        _
      $region40: #{inception_forward.3} parent=31 // pred_fallthru
        _
    $region32: #{inception_forward.3} parent=5 // pred_fallthru
      _
    %p1246 = scmp.le.s32.totalorder 2, %s11
    // Predicated region
    $region41: #{inception_forward.3} parent=5 // pred_check
      %p1247 = pneg %p1246
    $region42: #{inception_forward.3} parent=5 // pred_check_branch
      %1249 = sbr.rel (%p1247) target = $region44
    $region43: #{inception_forward.3} parent=5 // pred_region
      %s1250 = ssub.s32 %s11, 2
      // Predicated region
      $region45: #{inception_forward.3} parent=43 // pred_check
        %p1251 = pneg %p108
      $region46: #{inception_forward.3} parent=43 // pred_check_branch
        %1253 = sbr.rel (%p1251) target = $region48
      $region47: #{inception_forward.3} parent=43 // pred_region
        %s1254 = smul.u32 32, %s17
        %p1255 = scmp.lt.s32.totalorder %s1254, 63
        %s1256 = scalar_select %p1255, %s1254, 63
        %s1257 = smul.addr %s1256, 8
        %s1258 = scalar_lea.vmem %s3, %s1257
      $region48: #{inception_forward.3} parent=43 // pred_fallthru
        _
      // Predicated region
      $region49: #{inception_forward.3} parent=43 // pred_check
        %p1259 = pneg %p134
      $region50: #{inception_forward.3} parent=43 // pred_check_branch
        %1261 = sbr.rel (%p1259) target = $region52
      $region51: #{inception_forward.3} parent=43 // pred_region
        %p1262 = scmp.lt.s32.totalorder %s17, 1
        %s1263 = scalar_select %p1262, %s17, 1
        %s1264 = smul.addr %s1263, 8
        %s1265 = scalar_lea.vmem %s4, %s1264
      $region52: #{inception_forward.3} parent=43 // pred_fallthru
        _
    $region44: #{inception_forward.3} parent=5 // pred_fallthru
      _
  $region6: #{inception_forward.3} parent=0 // loop_footer
    %s15 = sadd.s32 1, %s11
  $region7: #{inception_forward.3} parent=0 // loop_footer_branch
    %10 = sbr.rel target = $region3
  $region8: #{inception_forward.3} parent=0 // loop_exit
    _

// kernel: inception_forward.5
$region0: #{inception_forward.5}
  #allocation0 [shape = 'u32[]', space=smem, size = 0x4, offset = 0x4, fixed_abs, tag = 'smem constant byte address 0x4 - core index']
  #allocation1 [shape = 'u32[144,128]{1,0:T(1,128)}', space=vmem, size = 0x12000, scoped, tag = 'internal scratch']
  %s0 = inlined_call_operand.vmem [shape: f32[512,128], index: 0, kind: input, shape index: {}]
  %s1 = inlined_call_operand.vmem [shape: bf16[512,256], index: 1, kind: input, shape index: {}]
  %s2 = inlined_call_operand.vmem [shape: f32[1,128], index: 2, kind: input, shape index: {}]
  %s3 = inlined_call_operand.vmem [shape: f32[1,128], index: 3, kind: input, shape index: {}]
  %s4 = inlined_call_operand.vmem [shape: f32[1,256], index: 4, kind: input, shape index: {}]
  %s5 = inlined_call_operand.vmem [shape: f32[1,256], index: 5, kind: input, shape index: {}]
  %s6 = inlined_call_operand.vmem [shape: f32[128,32], index: 6, kind: input, shape index: {}]
  %s7 = inlined_call_operand.vmem [shape: f32[256,32], index: 7, kind: input, shape index: {}]
  %s8 = inlined_call_operand.hbm [shape: f32[512,32], index: 8, kind: output, shape index: {}]
  %s9 = sld [smem:[#allocation0]]
  $region42: #{inception_forward.5} parent=0
    _
  %s11 = ssub.s32 1, %s9
  %s12 = scalar_select 0, %s11, %s9
  $region1: #{inception_forward.5} parent=0
    #allocation2 [shape = 'u8[262144]{0}', space=vmem, size = 0x40000, scoped, tag = 'output window, operand 0, single buffered']
    #allocation3 [shape = 's32[1]{0}', space=sflag, size = 0x4, scoped, tag = 'scoped memory for inception_forward.5']
    %13 = vsyncpa [#allocation3], 0
    // Predicated region
    $region2: #{inception_forward.5} parent=1 // pred_check
      _
    $region3: #{inception_forward.5} parent=1 // pred_check_branch
      %15 = sbr.rel (0) target = $region5
    $region4: #{inception_forward.5} parent=1 // pred_region
      _
    $region5: #{inception_forward.5} parent=1 // pred_fallthru
      _
    // Predicated region
    $region6: #{inception_forward.5} parent=1 // pred_check
      _
    $region7: #{inception_forward.5} parent=1 // pred_check_branch
      %17 = sbr.rel (0) target = $region9
    $region8: #{inception_forward.5} parent=1 // pred_region
      _
    $region9: #{inception_forward.5} parent=1 // pred_fallthru
      _
    // Predicated region
    $region10: #{inception_forward.5} parent=1 // pred_check
      _
    $region11: #{inception_forward.5} parent=1 // pred_check_branch
      %19 = sbr.rel (0) target = $region13
    $region12: #{inception_forward.5} parent=1 // pred_region
      _
    $region13: #{inception_forward.5} parent=1 // pred_fallthru
      _
    // Predicated region
    $region14: #{inception_forward.5} parent=1 // pred_check
      _
    $region15: #{inception_forward.5} parent=1 // pred_check_branch
      %21 = sbr.rel (0) target = $region17
    $region16: #{inception_forward.5} parent=1 // pred_region
      _
    $region17: #{inception_forward.5} parent=1 // pred_fallthru
      _
    // Predicated region
    $region18: #{inception_forward.5} parent=1 // pred_check
      _
    $region19: #{inception_forward.5} parent=1 // pred_check_branch
      %23 = sbr.rel (0) target = $region21
    $region20: #{inception_forward.5} parent=1 // pred_region
      _
    $region21: #{inception_forward.5} parent=1 // pred_fallthru
      _
    // Predicated region
    $region22: #{inception_forward.5} parent=1 // pred_check
      _
    $region23: #{inception_forward.5} parent=1 // pred_check_branch
      %25 = sbr.rel (0) target = $region25
    $region24: #{inception_forward.5} parent=1 // pred_region
      _
    $region25: #{inception_forward.5} parent=1 // pred_fallthru
      _
    // Predicated region
    $region26: #{inception_forward.5} parent=1 // pred_check
      _
    $region27: #{inception_forward.5} parent=1 // pred_check_branch
      %27 = sbr.rel (0) target = $region29
    $region28: #{inception_forward.5} parent=1 // pred_region
      _
    $region29: #{inception_forward.5} parent=1 // pred_fallthru
      _
    // Predicated region
    $region30: #{inception_forward.5} parent=1 // pred_check
      _
    $region31: #{inception_forward.5} parent=1 // pred_check_branch
      %29 = sbr.rel (0) target = $region33
    $region32: #{inception_forward.5} parent=1 // pred_region
      _
    $region33: #{inception_forward.5} parent=1 // pred_fallthru
      _
    %v30 = vld [vmem:[%s0] sm:$0xff]
    %v31 = vld [vmem:[%s0 + $0x8] sm:$0xff]
    %v32 = vld [vmem:[%s0 + $0x10] sm:$0xff]
    %v33 = vld [vmem:[%s0 + $0x18] sm:$0xff]
    %v34 = vld [vmem:[%s0 + $0x20] sm:$0xff]
    %v35 = vld [vmem:[%s0 + $0x28] sm:$0xff]
    %v36 = vld [vmem:[%s0 + $0x30] sm:$0xff]
    %v37 = vld [vmem:[%s0 + $0x38] sm:$0xff]
    %v38 = vld [vmem:[%s0 + $0x40] sm:$0xff]
    %v39 = vld [vmem:[%s0 + $0x48] sm:$0xff]
    %v40 = vld [vmem:[%s0 + $0x50] sm:$0xff]
    %v41 = vld [vmem:[%s0 + $0x58] sm:$0xff]
    %v42 = vld [vmem:[%s0 + $0x60] sm:$0xff]
    %v43 = vld [vmem:[%s0 + $0x68] sm:$0xff]
    %v44 = vld [vmem:[%s0 + $0x70] sm:$0xff]
    %v45 = vld [vmem:[%s0 + $0x78] sm:$0xff]
    %v46 = vld [vmem:[%s0 + $0x80] sm:$0xff]
    %v47 = vld [vmem:[%s0 + $0x88] sm:$0xff]
    %v48 = vld [vmem:[%s0 + $0x90] sm:$0xff]
    %v49 = vld [vmem:[%s0 + $0x98] sm:$0xff]
    %v50 = vld [vmem:[%s0 + $0xa0] sm:$0xff]
    %v51 = vld [vmem:[%s0 + $0xa8] sm:$0xff]
    %v52 = vld [vmem:[%s0 + $0xb0] sm:$0xff]
    %v53 = vld [vmem:[%s0 + $0xb8] sm:$0xff]
    %v54 = vld [vmem:[%s0 + $0xc0] sm:$0xff]
    %v55 = vld [vmem:[%s0 + $0xc8] sm:$0xff]
    %v56 = vld [vmem:[%s0 + $0xd0] sm:$0xff]
    %v57 = vld [vmem:[%s0 + $0xd8] sm:$0xff]
    %v58 = vld [vmem:[%s0 + $0xe0] sm:$0xff]
    %v59 = vld [vmem:[%s0 + $0xe8] sm:$0xff]
    %v60 = vld [vmem:[%s0 + $0xf0] sm:$0xff]
    %v61 = vld [vmem:[%s0 + $0xf8] sm:$0xff]
    %v62 = vld [vmem:[%s0 + $0x100] sm:$0xff]
    %v63 = vld [vmem:[%s0 + $0x108] sm:$0xff]
    %v64 = vld [vmem:[%s0 + $0x110] sm:$0xff]
    %v65 = vld [vmem:[%s0 + $0x118] sm:$0xff]
    %v66 = vld [vmem:[%s0 + $0x120] sm:$0xff]
    %v67 = vld [vmem:[%s0 + $0x128] sm:$0xff]
    %v68 = vld [vmem:[%s0 + $0x130] sm:$0xff]
    %v69 = vld [vmem:[%s0 + $0x138] sm:$0xff]
    %v70 = vld [vmem:[%s0 + $0x140] sm:$0xff]
    %v71 = vld [vmem:[%s0 + $0x148] sm:$0xff]
    %v72 = vld [vmem:[%s0 + $0x150] sm:$0xff]
    %v73 = vld [vmem:[%s0 + $0x158] sm:$0xff]
    %v74 = vld [vmem:[%s0 + $0x160] sm:$0xff]
    %v75 = vld [vmem:[%s0 + $0x168] sm:$0xff]
    %v76 = vld [vmem:[%s0 + $0x170] sm:$0xff]
    %v77 = vld [vmem:[%s0 + $0x178] sm:$0xff]
    %v78 = vld [vmem:[%s0 + $0x180] sm:$0xff]
    %v79 = vld [vmem:[%s0 + $0x188] sm:$0xff]
    %v80 = vld [vmem:[%s0 + $0x190] sm:$0xff]
    %v81 = vld [vmem:[%s0 + $0x198] sm:$0xff]
    %v82 = vld [vmem:[%s0 + $0x1a0] sm:$0xff]
    %v83 = vld [vmem:[%s0 + $0x1a8] sm:$0xff]
    %v84 = vld [vmem:[%s0 + $0x1b0] sm:$0xff]
    %v85 = vld [vmem:[%s0 + $0x1b8] sm:$0xff]
    %v86 = vld [vmem:[%s0 + $0x1c0] sm:$0xff]
    %v87 = vld [vmem:[%s0 + $0x1c8] sm:$0xff]
    %v88 = vld [vmem:[%s0 + $0x1d0] sm:$0xff]
    %v89 = vld [vmem:[%s0 + $0x1d8] sm:$0xff]
    %v90 = vld [vmem:[%s0 + $0x1e0] sm:$0xff]
    %v91 = vld [vmem:[%s0 + $0x1e8] sm:$0xff]
    %v92 = vld [vmem:[%s0 + $0x1f0] sm:$0xff]
    %v93 = vld [vmem:[%s0 + $0x1f8] sm:$0xff]
    %v94 = vld [vmem:[%s2] sm:$0x1]
    %v96 = vlaneseq
    %v97 = vshrl.u32 %v96, 7
    %v98 = vsub.s32 0, %v97
    %v99 = vrot.slane %v94, %v98
    %v101 = vmul.f32 %v30, %v99
    %v102 = vmul.f32 %v31, %v99
    %v103 = vmul.f32 %v32, %v99
    %v104 = vmul.f32 %v33, %v99
    %v105 = vmul.f32 %v34, %v99
    %v106 = vmul.f32 %v35, %v99
    %v107 = vmul.f32 %v36, %v99
    %v108 = vmul.f32 %v37, %v99
    %v109 = vmul.f32 %v38, %v99
    %v110 = vmul.f32 %v39, %v99
    %v111 = vmul.f32 %v40, %v99
    %v112 = vmul.f32 %v41, %v99
    %v113 = vmul.f32 %v42, %v99
    %v114 = vmul.f32 %v43, %v99
    %v115 = vmul.f32 %v44, %v99
    %v116 = vmul.f32 %v45, %v99
    %v117 = vmul.f32 %v46, %v99
    %v118 = vmul.f32 %v47, %v99
    %v119 = vmul.f32 %v48, %v99
    %v120 = vmul.f32 %v49, %v99
    %v121 = vmul.f32 %v50, %v99
    %v122 = vmul.f32 %v51, %v99
    %v123 = vmul.f32 %v52, %v99
    %v124 = vmul.f32 %v53, %v99
    %v125 = vmul.f32 %v54, %v99
    %v126 = vmul.f32 %v55, %v99
    %v127 = vmul.f32 %v56, %v99
    %v128 = vmul.f32 %v57, %v99
    %v129 = vmul.f32 %v58, %v99
    %v130 = vmul.f32 %v59, %v99
    %v131 = vmul.f32 %v60, %v99
    %v132 = vmul.f32 %v61, %v99
    %v133 = vmul.f32 %v62, %v99
    %v134 = vmul.f32 %v63, %v99
    %v135 = vmul.f32 %v64, %v99
    %v136 = vmul.f32 %v65, %v99
    %v137 = vmul.f32 %v66, %v99
    %v138 = vmul.f32 %v67, %v99
    %v139 = vmul.f32 %v68, %v99
    %v140 = vmul.f32 %v69, %v99
    %v141 = vmul.f32 %v70, %v99
    %v142 = vmul.f32 %v71, %v99
    %v143 = vmul.f32 %v72, %v99
    %v144 = vmul.f32 %v73, %v99
    %v145 = vmul.f32 %v74, %v99
    %v146 = vmul.f32 %v75, %v99
    %v147 = vmul.f32 %v76, %v99
    %v148 = vmul.f32 %v77, %v99
    %v149 = vmul.f32 %v78, %v99
    %v150 = vmul.f32 %v79, %v99
    %v151 = vmul.f32 %v80, %v99
    %v152 = vmul.f32 %v81, %v99
    %v153 = vmul.f32 %v82, %v99
    %v154 = vmul.f32 %v83, %v99
    %v155 = vmul.f32 %v84, %v99
    %v156 = vmul.f32 %v85, %v99
    %v157 = vmul.f32 %v86, %v99
    %v158 = vmul.f32 %v87, %v99
    %v159 = vmul.f32 %v88, %v99
    %v160 = vmul.f32 %v89, %v99
    %v161 = vmul.f32 %v90, %v99
    %v162 = vmul.f32 %v91, %v99
    %v163 = vmul.f32 %v92, %v99
    %v164 = vmul.f32 %v93, %v99
    %v165 = vld [vmem:[%s3] sm:$0x1]
    %v167 = vlaneseq
    %v168 = vshrl.u32 %v167, 7
    %v169 = vsub.s32 0, %v168
    %v170 = vrot.slane %v165, %v169
    %v172 = vadd.f32 %v101, %v170
    %v173 = vadd.f32 %v102, %v170
    %v174 = vadd.f32 %v103, %v170
    %v175 = vadd.f32 %v104, %v170
    %v176 = vadd.f32 %v105, %v170
    %v177 = vadd.f32 %v106, %v170
    %v178 = vadd.f32 %v107, %v170
    %v179 = vadd.f32 %v108, %v170
    %v180 = vadd.f32 %v109, %v170
    %v181 = vadd.f32 %v110, %v170
    %v182 = vadd.f32 %v111, %v170
    %v183 = vadd.f32 %v112, %v170
    %v184 = vadd.f32 %v113, %v170
    %v185 = vadd.f32 %v114, %v170
    %v186 = vadd.f32 %v115, %v170
    %v187 = vadd.f32 %v116, %v170
    %v188 = vadd.f32 %v117, %v170
    %v189 = vadd.f32 %v118, %v170
    %v190 = vadd.f32 %v119, %v170
    %v191 = vadd.f32 %v120, %v170
    %v192 = vadd.f32 %v121, %v170
    %v193 = vadd.f32 %v122, %v170
    %v194 = vadd.f32 %v123, %v170
    %v195 = vadd.f32 %v124, %v170
    %v196 = vadd.f32 %v125, %v170
    %v197 = vadd.f32 %v126, %v170
    %v198 = vadd.f32 %v127, %v170
    %v199 = vadd.f32 %v128, %v170
    %v200 = vadd.f32 %v129, %v170
    %v201 = vadd.f32 %v130, %v170
    %v202 = vadd.f32 %v131, %v170
    %v203 = vadd.f32 %v132, %v170
    %v204 = vadd.f32 %v133, %v170
    %v205 = vadd.f32 %v134, %v170
    %v206 = vadd.f32 %v135, %v170
    %v207 = vadd.f32 %v136, %v170
    %v208 = vadd.f32 %v137, %v170
    %v209 = vadd.f32 %v138, %v170
    %v210 = vadd.f32 %v139, %v170
    %v211 = vadd.f32 %v140, %v170
    %v212 = vadd.f32 %v141, %v170
    %v213 = vadd.f32 %v142, %v170
    %v214 = vadd.f32 %v143, %v170
    %v215 = vadd.f32 %v144, %v170
    %v216 = vadd.f32 %v145, %v170
    %v217 = vadd.f32 %v146, %v170
    %v218 = vadd.f32 %v147, %v170
    %v219 = vadd.f32 %v148, %v170
    %v220 = vadd.f32 %v149, %v170
    %v221 = vadd.f32 %v150, %v170
    %v222 = vadd.f32 %v151, %v170
    %v223 = vadd.f32 %v152, %v170
    %v224 = vadd.f32 %v153, %v170
    %v225 = vadd.f32 %v154, %v170
    %v226 = vadd.f32 %v155, %v170
    %v227 = vadd.f32 %v156, %v170
    %v228 = vadd.f32 %v157, %v170
    %v229 = vadd.f32 %v158, %v170
    %v230 = vadd.f32 %v159, %v170
    %v231 = vadd.f32 %v160, %v170
    %v232 = vadd.f32 %v161, %v170
    %v233 = vadd.f32 %v162, %v170
    %v234 = vadd.f32 %v163, %v170
    %v235 = vadd.f32 %v164, %v170
    %v236 = vld [vmem:[%s1] sm:$0xff]
    %v237 = vld [vmem:[%s1 + $0x8] sm:$0xff]
    %v238 = vld [vmem:[%s1 + $0x10] sm:$0xff]
    %v239 = vld [vmem:[%s1 + $0x18] sm:$0xff]
    %v240 = vld [vmem:[%s1 + $0x20] sm:$0xff]
    %v241 = vld [vmem:[%s1 + $0x28] sm:$0xff]
    %v242 = vld [vmem:[%s1 + $0x30] sm:$0xff]
    %v243 = vld [vmem:[%s1 + $0x38] sm:$0xff]
    %v244 = vld [vmem:[%s1 + $0x40] sm:$0xff]
    %v245 = vld [vmem:[%s1 + $0x48] sm:$0xff]
    %v246 = vld [vmem:[%s1 + $0x50] sm:$0xff]
    %v247 = vld [vmem:[%s1 + $0x58] sm:$0xff]
    %v248 = vld [vmem:[%s1 + $0x60] sm:$0xff]
    %v249 = vld [vmem:[%s1 + $0x68] sm:$0xff]
    %v250 = vld [vmem:[%s1 + $0x70] sm:$0xff]
    %v251 = vld [vmem:[%s1 + $0x78] sm:$0xff]
    %v252 = vld [vmem:[%s1 + $0x80] sm:$0xff]
    %v253 = vld [vmem:[%s1 + $0x88] sm:$0xff]
    %v254 = vld [vmem:[%s1 + $0x90] sm:$0xff]
    %v255 = vld [vmem:[%s1 + $0x98] sm:$0xff]
    %v256 = vld [vmem:[%s1 + $0xa0] sm:$0xff]
    %v257 = vld [vmem:[%s1 + $0xa8] sm:$0xff]
    %v258 = vld [vmem:[%s1 + $0xb0] sm:$0xff]
    %v259 = vld [vmem:[%s1 + $0xb8] sm:$0xff]
    %v260 = vld [vmem:[%s1 + $0xc0] sm:$0xff]
    %v261 = vld [vmem:[%s1 + $0xc8] sm:$0xff]
    %v262 = vld [vmem:[%s1 + $0xd0] sm:$0xff]
    %v263 = vld [vmem:[%s1 + $0xd8] sm:$0xff]
    %v264 = vld [vmem:[%s1 + $0xe0] sm:$0xff]
    %v265 = vld [vmem:[%s1 + $0xe8] sm:$0xff]
    %v266 = vld [vmem:[%s1 + $0xf0] sm:$0xff]
    %v267 = vld [vmem:[%s1 + $0xf8] sm:$0xff]
    %v268 = vld [vmem:[%s1 + $0x100] sm:$0xff]
    %v269 = vld [vmem:[%s1 + $0x108] sm:$0xff]
    %v270 = vld [vmem:[%s1 + $0x110] sm:$0xff]
    %v271 = vld [vmem:[%s1 + $0x118] sm:$0xff]
    %v272 = vld [vmem:[%s1 + $0x120] sm:$0xff]
    %v273 = vld [vmem:[%s1 + $0x128] sm:$0xff]
    %v274 = vld [vmem:[%s1 + $0x130] sm:$0xff]
    %v275 = vld [vmem:[%s1 + $0x138] sm:$0xff]
    %v276 = vld [vmem:[%s1 + $0x140] sm:$0xff]
    %v277 = vld [vmem:[%s1 + $0x148] sm:$0xff]
    %v278 = vld [vmem:[%s1 + $0x150] sm:$0xff]
    %v279 = vld [vmem:[%s1 + $0x158] sm:$0xff]
    %v280 = vld [vmem:[%s1 + $0x160] sm:$0xff]
    %v281 = vld [vmem:[%s1 + $0x168] sm:$0xff]
    %v282 = vld [vmem:[%s1 + $0x170] sm:$0xff]
    %v283 = vld [vmem:[%s1 + $0x178] sm:$0xff]
    %v284 = vld [vmem:[%s1 + $0x180] sm:$0xff]
    %v285 = vld [vmem:[%s1 + $0x188] sm:$0xff]
    %v286 = vld [vmem:[%s1 + $0x190] sm:$0xff]
    %v287 = vld [vmem:[%s1 + $0x198] sm:$0xff]
    %v288 = vld [vmem:[%s1 + $0x1a0] sm:$0xff]
    %v289 = vld [vmem:[%s1 + $0x1a8] sm:$0xff]
    %v290 = vld [vmem:[%s1 + $0x1b0] sm:$0xff]
    %v291 = vld [vmem:[%s1 + $0x1b8] sm:$0xff]
    %v292 = vld [vmem:[%s1 + $0x1c0] sm:$0xff]
    %v293 = vld [vmem:[%s1 + $0x1c8] sm:$0xff]
    %v294 = vld [vmem:[%s1 + $0x1d0] sm:$0xff]
    %v295 = vld [vmem:[%s1 + $0x1d8] sm:$0xff]
    %v296 = vld [vmem:[%s1 + $0x1e0] sm:$0xff]
    %v297 = vld [vmem:[%s1 + $0x1e8] sm:$0xff]
    %v298 = vld [vmem:[%s1 + $0x1f0] sm:$0xff]
    %v299 = vld [vmem:[%s1 + $0x1f8] sm:$0xff]
    %v300 = vunpack.c.l.bf16 %v236
    %v301 = vunpack.c.h.bf16 %v236
    %v302 = vunpack.c.l.bf16 %v237
    %v303 = vunpack.c.h.bf16 %v237
    %v304 = vunpack.c.l.bf16 %v238
    %v305 = vunpack.c.h.bf16 %v238
    %v306 = vunpack.c.l.bf16 %v239
    %v307 = vunpack.c.h.bf16 %v239
    %v308 = vunpack.c.l.bf16 %v240
    %v309 = vunpack.c.h.bf16 %v240
    %v310 = vunpack.c.l.bf16 %v241
    %v311 = vunpack.c.h.bf16 %v241
    %v312 = vunpack.c.l.bf16 %v242
    %v313 = vunpack.c.h.bf16 %v242
    %v314 = vunpack.c.l.bf16 %v243
    %v315 = vunpack.c.h.bf16 %v243
    %v316 = vunpack.c.l.bf16 %v244
    %v317 = vunpack.c.h.bf16 %v244
    %v318 = vunpack.c.l.bf16 %v245
    %v319 = vunpack.c.h.bf16 %v245
    %v320 = vunpack.c.l.bf16 %v246
    %v321 = vunpack.c.h.bf16 %v246
    %v322 = vunpack.c.l.bf16 %v247
    %v323 = vunpack.c.h.bf16 %v247
    %v324 = vunpack.c.l.bf16 %v248
    %v325 = vunpack.c.h.bf16 %v248
    %v326 = vunpack.c.l.bf16 %v249
    %v327 = vunpack.c.h.bf16 %v249
    %v328 = vunpack.c.l.bf16 %v250
    %v329 = vunpack.c.h.bf16 %v250
    %v330 = vunpack.c.l.bf16 %v251
    %v331 = vunpack.c.h.bf16 %v251
    %v332 = vunpack.c.l.bf16 %v252
    %v333 = vunpack.c.h.bf16 %v252
    %v334 = vunpack.c.l.bf16 %v253
    %v335 = vunpack.c.h.bf16 %v253
    %v336 = vunpack.c.l.bf16 %v254
    %v337 = vunpack.c.h.bf16 %v254
    %v338 = vunpack.c.l.bf16 %v255
    %v339 = vunpack.c.h.bf16 %v255
    %v340 = vunpack.c.l.bf16 %v256
    %v341 = vunpack.c.h.bf16 %v256
    %v342 = vunpack.c.l.bf16 %v257
    %v343 = vunpack.c.h.bf16 %v257
    %v344 = vunpack.c.l.bf16 %v258
    %v345 = vunpack.c.h.bf16 %v258
    %v346 = vunpack.c.l.bf16 %v259
    %v347 = vunpack.c.h.bf16 %v259
    %v348 = vunpack.c.l.bf16 %v260
    %v349 = vunpack.c.h.bf16 %v260
    %v350 = vunpack.c.l.bf16 %v261
    %v351 = vunpack.c.h.bf16 %v261
    %v352 = vunpack.c.l.bf16 %v262
    %v353 = vunpack.c.h.bf16 %v262
    %v354 = vunpack.c.l.bf16 %v263
    %v355 = vunpack.c.h.bf16 %v263
    %v356 = vunpack.c.l.bf16 %v264
    %v357 = vunpack.c.h.bf16 %v264
    %v358 = vunpack.c.l.bf16 %v265
    %v359 = vunpack.c.h.bf16 %v265
    %v360 = vunpack.c.l.bf16 %v266
    %v361 = vunpack.c.h.bf16 %v266
    %v362 = vunpack.c.l.bf16 %v267
    %v363 = vunpack.c.h.bf16 %v267
    %v364 = vunpack.c.l.bf16 %v268
    %v365 = vunpack.c.h.bf16 %v268
    %v366 = vunpack.c.l.bf16 %v269
    %v367 = vunpack.c.h.bf16 %v269
    %v368 = vunpack.c.l.bf16 %v270
    %v369 = vunpack.c.h.bf16 %v270
    %v370 = vunpack.c.l.bf16 %v271
    %v371 = vunpack.c.h.bf16 %v271
    %v372 = vunpack.c.l.bf16 %v272
    %v373 = vunpack.c.h.bf16 %v272
    %v374 = vunpack.c.l.bf16 %v273
    %v375 = vunpack.c.h.bf16 %v273
    %v376 = vunpack.c.l.bf16 %v274
    %v377 = vunpack.c.h.bf16 %v274
    %v378 = vunpack.c.l.bf16 %v275
    %v379 = vunpack.c.h.bf16 %v275
    %v380 = vunpack.c.l.bf16 %v276
    %v381 = vunpack.c.h.bf16 %v276
    %v382 = vunpack.c.l.bf16 %v277
    %v383 = vunpack.c.h.bf16 %v277
    %v384 = vunpack.c.l.bf16 %v278
    %v385 = vunpack.c.h.bf16 %v278
    %v386 = vunpack.c.l.bf16 %v279
    %v387 = vunpack.c.h.bf16 %v279
    %v388 = vunpack.c.l.bf16 %v280
    %v389 = vunpack.c.h.bf16 %v280
    %v390 = vunpack.c.l.bf16 %v281
    %v391 = vunpack.c.h.bf16 %v281
    %v392 = vunpack.c.l.bf16 %v282
    %v393 = vunpack.c.h.bf16 %v282
    %v394 = vunpack.c.l.bf16 %v283
    %v395 = vunpack.c.h.bf16 %v283
    %v396 = vunpack.c.l.bf16 %v284
    %v397 = vunpack.c.h.bf16 %v284
    %v398 = vunpack.c.l.bf16 %v285
    %v399 = vunpack.c.h.bf16 %v285
    %v400 = vunpack.c.l.bf16 %v286
    %v401 = vunpack.c.h.bf16 %v286
    %v402 = vunpack.c.l.bf16 %v287
    %v403 = vunpack.c.h.bf16 %v287
    %v404 = vunpack.c.l.bf16 %v288
    %v405 = vunpack.c.h.bf16 %v288
    %v406 = vunpack.c.l.bf16 %v289
    %v407 = vunpack.c.h.bf16 %v289
    %v408 = vunpack.c.l.bf16 %v290
    %v409 = vunpack.c.h.bf16 %v290
    %v410 = vunpack.c.l.bf16 %v291
    %v411 = vunpack.c.h.bf16 %v291
    %v412 = vunpack.c.l.bf16 %v292
    %v413 = vunpack.c.h.bf16 %v292
    %v414 = vunpack.c.l.bf16 %v293
    %v415 = vunpack.c.h.bf16 %v293
    %v416 = vunpack.c.l.bf16 %v294
    %v417 = vunpack.c.h.bf16 %v294
    %v418 = vunpack.c.l.bf16 %v295
    %v419 = vunpack.c.h.bf16 %v295
    %v420 = vunpack.c.l.bf16 %v296
    %v421 = vunpack.c.h.bf16 %v296
    %v422 = vunpack.c.l.bf16 %v297
    %v423 = vunpack.c.h.bf16 %v297
    %v424 = vunpack.c.l.bf16 %v298
    %v425 = vunpack.c.h.bf16 %v298
    %v426 = vunpack.c.l.bf16 %v299
    %v427 = vunpack.c.h.bf16 %v299
    %v428 = vld [vmem:[%s4] sm:$0x3]
    %v430 = vlaneseq
    %v431 = vshrl.u32 %v430, 7
    %v432 = vsub.s32 0, %v431
    %v433 = vrot.slane %v428, %v432
    %v434 = vlaneseq
    %v435 = vshrl.u32 %v434, 7
    %v436 = vsub.s32 1, %v435
    %v437 = vrot.slane %v428, %v436
    %v440 = vmul.f32 %v300, %v433
    %v441 = vmul.f32 %v301, %v437
    %v442 = vmul.f32 %v302, %v433
    %v443 = vmul.f32 %v303, %v437
    %v444 = vmul.f32 %v304, %v433
    %v445 = vmul.f32 %v305, %v437
    %v446 = vmul.f32 %v306, %v433
    %v447 = vmul.f32 %v307, %v437
    %v448 = vmul.f32 %v308, %v433
    %v449 = vmul.f32 %v309, %v437
    %v450 = vmul.f32 %v310, %v433
    %v451 = vmul.f32 %v311, %v437
    %v452 = vmul.f32 %v312, %v433
    %v453 = vmul.f32 %v313, %v437
    %v454 = vmul.f32 %v314, %v433
    %v455 = vmul.f32 %v315, %v437
    %v456 = vmul.f32 %v316, %v433
    %v457 = vmul.f32 %v317, %v437
    %v458 = vmul.f32 %v318, %v433
    %v459 = vmul.f32 %v319, %v437
    %v460 = vmul.f32 %v320, %v433
    %v461 = vmul.f32 %v321, %v437
    %v462 = vmul.f32 %v322, %v433
    %v463 = vmul.f32 %v323, %v437
    %v464 = vmul.f32 %v324, %v433
    %v465 = vmul.f32 %v325, %v437
    %v466 = vmul.f32 %v326, %v433
    %v467 = vmul.f32 %v327, %v437
    %v468 = vmul.f32 %v328, %v433
    %v469 = vmul.f32 %v329, %v437
    %v470 = vmul.f32 %v330, %v433
    %v471 = vmul.f32 %v331, %v437
    %v472 = vmul.f32 %v332, %v433
    %v473 = vmul.f32 %v333, %v437
    %v474 = vmul.f32 %v334, %v433
    %v475 = vmul.f32 %v335, %v437
    %v476 = vmul.f32 %v336, %v433
    %v477 = vmul.f32 %v337, %v437
    %v478 = vmul.f32 %v338, %v433
    %v479 = vmul.f32 %v339, %v437
    %v480 = vmul.f32 %v340, %v433
    %v481 = vmul.f32 %v341, %v437
    %v482 = vmul.f32 %v342, %v433
    %v483 = vmul.f32 %v343, %v437
    %v484 = vmul.f32 %v344, %v433
    %v485 = vmul.f32 %v345, %v437
    %v486 = vmul.f32 %v346, %v433
    %v487 = vmul.f32 %v347, %v437
    %v488 = vmul.f32 %v348, %v433
    %v489 = vmul.f32 %v349, %v437
    %v490 = vmul.f32 %v350, %v433
    %v491 = vmul.f32 %v351, %v437
    %v492 = vmul.f32 %v352, %v433
    %v493 = vmul.f32 %v353, %v437
    %v494 = vmul.f32 %v354, %v433
    %v495 = vmul.f32 %v355, %v437
    %v496 = vmul.f32 %v356, %v433
    %v497 = vmul.f32 %v357, %v437
    %v498 = vmul.f32 %v358, %v433
    %v499 = vmul.f32 %v359, %v437
    %v500 = vmul.f32 %v360, %v433
    %v501 = vmul.f32 %v361, %v437
    %v502 = vmul.f32 %v362, %v433
    %v503 = vmul.f32 %v363, %v437
    %v504 = vmul.f32 %v364, %v433
    %v505 = vmul.f32 %v365, %v437
    %v506 = vmul.f32 %v366, %v433
    %v507 = vmul.f32 %v367, %v437
    %v508 = vmul.f32 %v368, %v433
    %v509 = vmul.f32 %v369, %v437
    %v510 = vmul.f32 %v370, %v433
    %v511 = vmul.f32 %v371, %v437
    %v512 = vmul.f32 %v372, %v433
    %v513 = vmul.f32 %v373, %v437
    %v514 = vmul.f32 %v374, %v433
    %v515 = vmul.f32 %v375, %v437
    %v516 = vmul.f32 %v376, %v433
    %v517 = vmul.f32 %v377, %v437
    %v518 = vmul.f32 %v378, %v433
    %v519 = vmul.f32 %v379, %v437
    %v520 = vmul.f32 %v380, %v433
    %v521 = vmul.f32 %v381, %v437
    %v522 = vmul.f32 %v382, %v433
    %v523 = vmul.f32 %v383, %v437
    %v524 = vmul.f32 %v384, %v433
    %v525 = vmul.f32 %v385, %v437
    %v526 = vmul.f32 %v386, %v433
    %v527 = vmul.f32 %v387, %v437
    %v528 = vmul.f32 %v388, %v433
    %v529 = vmul.f32 %v389, %v437
    %v530 = vmul.f32 %v390, %v433
    %v531 = vmul.f32 %v391, %v437
    %v532 = vmul.f32 %v392, %v433
    %v533 = vmul.f32 %v393, %v437
    %v534 = vmul.f32 %v394, %v433
    %v535 = vmul.f32 %v395, %v437
    %v536 = vmul.f32 %v396, %v433
    %v537 = vmul.f32 %v397, %v437
    %v538 = vmul.f32 %v398, %v433
    %v539 = vmul.f32 %v399, %v437
    %v540 = vmul.f32 %v400, %v433
    %v541 = vmul.f32 %v401, %v437
    %v542 = vmul.f32 %v402, %v433
    %v543 = vmul.f32 %v403, %v437
    %v544 = vmul.f32 %v404, %v433
    %v545 = vmul.f32 %v405, %v437
    %v546 = vmul.f32 %v406, %v433
    %v547 = vmul.f32 %v407, %v437
    %v548 = vmul.f32 %v408, %v433
    %v549 = vmul.f32 %v409, %v437
    %v550 = vmul.f32 %v410, %v433
    %v551 = vmul.f32 %v411, %v437
    %v552 = vmul.f32 %v412, %v433
    %v553 = vmul.f32 %v413, %v437
    %v554 = vmul.f32 %v414, %v433
    %v555 = vmul.f32 %v415, %v437
    %v556 = vmul.f32 %v416, %v433
    %v557 = vmul.f32 %v417, %v437
    %v558 = vmul.f32 %v418, %v433
    %v559 = vmul.f32 %v419, %v437
    %v560 = vmul.f32 %v420, %v433
    %v561 = vmul.f32 %v421, %v437
    %v562 = vmul.f32 %v422, %v433
    %v563 = vmul.f32 %v423, %v437
    %v564 = vmul.f32 %v424, %v433
    %v565 = vmul.f32 %v425, %v437
    %v566 = vmul.f32 %v426, %v433
    %v567 = vmul.f32 %v427, %v437
    %v568 = vld [vmem:[%s5] sm:$0x3]
    %v570 = vlaneseq
    %v571 = vshrl.u32 %v570, 7
    %v572 = vsub.s32 0, %v571
    %v573 = vrot.slane %v568, %v572
    %v574 = vlaneseq
    %v575 = vshrl.u32 %v574, 7
    %v576 = vsub.s32 1, %v575
    %v577 = vrot.slane %v568, %v576
    %v580 = vadd.f32 %v440, %v573
    %v581 = vadd.f32 %v441, %v577
    %v582 = vadd.f32 %v442, %v573
    %v583 = vadd.f32 %v443, %v577
    %v584 = vadd.f32 %v444, %v573
    %v585 = vadd.f32 %v445, %v577
    %v586 = vadd.f32 %v446, %v573
    %v587 = vadd.f32 %v447, %v577
    %v588 = vadd.f32 %v448, %v573
    %v589 = vadd.f32 %v449, %v577
    %v590 = vadd.f32 %v450, %v573
    %v591 = vadd.f32 %v451, %v577
    %v592 = vadd.f32 %v452, %v573
    %v593 = vadd.f32 %v453, %v577
    %v594 = vadd.f32 %v454, %v573
    %v595 = vadd.f32 %v455, %v577
    %v596 = vadd.f32 %v456, %v573
    %v597 = vadd.f32 %v457, %v577
    %v598 = vadd.f32 %v458, %v573
    %v599 = vadd.f32 %v459, %v577
    %v600 = vadd.f32 %v460, %v573
    %v601 = vadd.f32 %v461, %v577
    %v602 = vadd.f32 %v462, %v573
    %v603 = vadd.f32 %v463, %v577
    %v604 = vadd.f32 %v464, %v573
    %v605 = vadd.f32 %v465, %v577
    %v606 = vadd.f32 %v466, %v573
    %v607 = vadd.f32 %v467, %v577
    %v608 = vadd.f32 %v468, %v573
    %v609 = vadd.f32 %v469, %v577
    %v610 = vadd.f32 %v470, %v573
    %v611 = vadd.f32 %v471, %v577
    %v612 = vadd.f32 %v472, %v573
    %v613 = vadd.f32 %v473, %v577
    %v614 = vadd.f32 %v474, %v573
    %v615 = vadd.f32 %v475, %v577
    %v616 = vadd.f32 %v476, %v573
    %v617 = vadd.f32 %v477, %v577
    %v618 = vadd.f32 %v478, %v573
    %v619 = vadd.f32 %v479, %v577
    %v620 = vadd.f32 %v480, %v573
    %v621 = vadd.f32 %v481, %v577
    %v622 = vadd.f32 %v482, %v573
    %v623 = vadd.f32 %v483, %v577
    %v624 = vadd.f32 %v484, %v573
    %v625 = vadd.f32 %v485, %v577
    %v626 = vadd.f32 %v486, %v573
    %v627 = vadd.f32 %v487, %v577
    %v628 = vadd.f32 %v488, %v573
    %v629 = vadd.f32 %v489, %v577
    %v630 = vadd.f32 %v490, %v573
    %v631 = vadd.f32 %v491, %v577
    %v632 = vadd.f32 %v492, %v573
    %v633 = vadd.f32 %v493, %v577
    %v634 = vadd.f32 %v494, %v573
    %v635 = vadd.f32 %v495, %v577
    %v636 = vadd.f32 %v496, %v573
    %v637 = vadd.f32 %v497, %v577
    %v638 = vadd.f32 %v498, %v573
    %v639 = vadd.f32 %v499, %v577
    %v640 = vadd.f32 %v500, %v573
    %v641 = vadd.f32 %v501, %v577
    %v642 = vadd.f32 %v502, %v573
    %v643 = vadd.f32 %v503, %v577
    %v644 = vadd.f32 %v504, %v573
    %v645 = vadd.f32 %v505, %v577
    %v646 = vadd.f32 %v506, %v573
    %v647 = vadd.f32 %v507, %v577
    %v648 = vadd.f32 %v508, %v573
    %v649 = vadd.f32 %v509, %v577
    %v650 = vadd.f32 %v510, %v573
    %v651 = vadd.f32 %v511, %v577
    %v652 = vadd.f32 %v512, %v573
    %v653 = vadd.f32 %v513, %v577
    %v654 = vadd.f32 %v514, %v573
    %v655 = vadd.f32 %v515, %v577
    %v656 = vadd.f32 %v516, %v573
    %v657 = vadd.f32 %v517, %v577
    %v658 = vadd.f32 %v518, %v573
    %v659 = vadd.f32 %v519, %v577
    %v660 = vadd.f32 %v520, %v573
    %v661 = vadd.f32 %v521, %v577
    %v662 = vadd.f32 %v522, %v573
    %v663 = vadd.f32 %v523, %v577
    %v664 = vadd.f32 %v524, %v573
    %v665 = vadd.f32 %v525, %v577
    %v666 = vadd.f32 %v526, %v573
    %v667 = vadd.f32 %v527, %v577
    %v668 = vadd.f32 %v528, %v573
    %v669 = vadd.f32 %v529, %v577
    %v670 = vadd.f32 %v530, %v573
    %v671 = vadd.f32 %v531, %v577
    %v672 = vadd.f32 %v532, %v573
    %v673 = vadd.f32 %v533, %v577
    %v674 = vadd.f32 %v534, %v573
    %v675 = vadd.f32 %v535, %v577
    %v676 = vadd.f32 %v536, %v573
    %v677 = vadd.f32 %v537, %v577
    %v678 = vadd.f32 %v538, %v573
    %v679 = vadd.f32 %v539, %v577
    %v680 = vadd.f32 %v540, %v573
    %v681 = vadd.f32 %v541, %v577
    %v682 = vadd.f32 %v542, %v573
    %v683 = vadd.f32 %v543, %v577
    %v684 = vadd.f32 %v544, %v573
    %v685 = vadd.f32 %v545, %v577
    %v686 = vadd.f32 %v546, %v573
    %v687 = vadd.f32 %v547, %v577
    %v688 = vadd.f32 %v548, %v573
    %v689 = vadd.f32 %v549, %v577
    %v690 = vadd.f32 %v550, %v573
    %v691 = vadd.f32 %v551, %v577
    %v692 = vadd.f32 %v552, %v573
    %v693 = vadd.f32 %v553, %v577
    %v694 = vadd.f32 %v554, %v573
    %v695 = vadd.f32 %v555, %v577
    %v696 = vadd.f32 %v556, %v573
    %v697 = vadd.f32 %v557, %v577
    %v698 = vadd.f32 %v558, %v573
    %v699 = vadd.f32 %v559, %v577
    %v700 = vadd.f32 %v560, %v573
    %v701 = vadd.f32 %v561, %v577
    %v702 = vadd.f32 %v562, %v573
    %v703 = vadd.f32 %v563, %v577
    %v704 = vadd.f32 %v564, %v573
    %v705 = vadd.f32 %v565, %v577
    %v706 = vadd.f32 %v566, %v573
    %v707 = vadd.f32 %v567, %v577
    %v708 = vld [vmem:[%s6] sm:$0xff]
    %v709 = vld [vmem:[%s6 + $0x8] sm:$0xff]
    %v710 = vld [vmem:[%s6 + $0x10] sm:$0xff]
    %v711 = vld [vmem:[%s6 + $0x18] sm:$0xff]
    %v712 = vld [vmem:[%s6 + $0x20] sm:$0xff]
    %v713 = vld [vmem:[%s6 + $0x28] sm:$0xff]
    %v714 = vld [vmem:[%s6 + $0x30] sm:$0xff]
    %v715 = vld [vmem:[%s6 + $0x38] sm:$0xff]
    %v716 = vld [vmem:[%s6 + $0x40] sm:$0xff]
    %v717 = vld [vmem:[%s6 + $0x48] sm:$0xff]
    %v718 = vld [vmem:[%s6 + $0x50] sm:$0xff]
    %v719 = vld [vmem:[%s6 + $0x58] sm:$0xff]
    %v720 = vld [vmem:[%s6 + $0x60] sm:$0xff]
    %v721 = vld [vmem:[%s6 + $0x68] sm:$0xff]
    %v722 = vld [vmem:[%s6 + $0x70] sm:$0xff]
    %v723 = vld [vmem:[%s6 + $0x78] sm:$0xff]
    %v724 = vld [vmem:[%s7] sm:$0xff]
    %v725 = vld [vmem:[%s7 + $0x8] sm:$0xff]
    %v726 = vld [vmem:[%s7 + $0x10] sm:$0xff]
    %v727 = vld [vmem:[%s7 + $0x18] sm:$0xff]
    %v728 = vld [vmem:[%s7 + $0x20] sm:$0xff]
    %v729 = vld [vmem:[%s7 + $0x28] sm:$0xff]
    %v730 = vld [vmem:[%s7 + $0x30] sm:$0xff]
    %v731 = vld [vmem:[%s7 + $0x38] sm:$0xff]
    %v732 = vld [vmem:[%s7 + $0x40] sm:$0xff]
    %v733 = vld [vmem:[%s7 + $0x48] sm:$0xff]
    %v734 = vld [vmem:[%s7 + $0x50] sm:$0xff]
    %v735 = vld [vmem:[%s7 + $0x58] sm:$0xff]
    %v736 = vld [vmem:[%s7 + $0x60] sm:$0xff]
    %v737 = vld [vmem:[%s7 + $0x68] sm:$0xff]
    %v738 = vld [vmem:[%s7 + $0x70] sm:$0xff]
    %v739 = vld [vmem:[%s7 + $0x78] sm:$0xff]
    %v740 = vld [vmem:[%s7 + $0x80] sm:$0xff]
    %v741 = vld [vmem:[%s7 + $0x88] sm:$0xff]
    %v742 = vld [vmem:[%s7 + $0x90] sm:$0xff]
    %v743 = vld [vmem:[%s7 + $0x98] sm:$0xff]
    %v744 = vld [vmem:[%s7 + $0xa0] sm:$0xff]
    %v745 = vld [vmem:[%s7 + $0xa8] sm:$0xff]
    %v746 = vld [vmem:[%s7 + $0xb0] sm:$0xff]
    %v747 = vld [vmem:[%s7 + $0xb8] sm:$0xff]
    %v748 = vld [vmem:[%s7 + $0xc0] sm:$0xff]
    %v749 = vld [vmem:[%s7 + $0xc8] sm:$0xff]
    %v750 = vld [vmem:[%s7 + $0xd0] sm:$0xff]
    %v751 = vld [vmem:[%s7 + $0xd8] sm:$0xff]
    %v752 = vld [vmem:[%s7 + $0xe0] sm:$0xff]
    %v753 = vld [vmem:[%s7 + $0xe8] sm:$0xff]
    %v754 = vld [vmem:[%s7 + $0xf0] sm:$0xff]
    %v755 = vld [vmem:[%s7 + $0xf8] sm:$0xff]
    %756 = vmatprep.subr.mxu0 0.0
    %757 = vmatpush1.msra.mxu0 %v724
    %758 = vmatprep.subr.mxu0 0.0
    %759 = vmatpush1.msra.mxu0 %v725
    %760 = vmatprep.subr.mxu0 0.0
    %761 = vmatpush1.msra.mxu0 %v726
    %762 = vmatprep.subr.mxu0 0.0
    %763 = vmatpush1.msra.mxu0 %v727
    %764 = vmatprep.subr.mxu0 0.0
    %765 = vmatpush1.msra.mxu0 %v728
    %766 = vmatprep.subr.mxu0 0.0
    %767 = vmatpush1.msra.mxu0 %v729
    %768 = vmatprep.subr.mxu0 0.0
    %769 = vmatpush1.msra.mxu0 %v730
    %770 = vmatprep.subr.mxu0 0.0
    %771 = vmatpush1.msra.mxu0 %v731
    %772 = vmatprep.subr.mxu0 0.0
    %773 = vmatpush1.msra.mxu0 %v732
    %774 = vmatprep.subr.mxu0 0.0
    %775 = vmatpush1.msra.mxu0 %v733
    %776 = vmatprep.subr.mxu0 0.0
    %777 = vmatpush1.msra.mxu0 %v734
    %778 = vmatprep.subr.mxu0 0.0
    %779 = vmatpush1.msra.mxu0 %v735
    %780 = vmatprep.subr.mxu0 0.0
    %781 = vmatpush1.msra.mxu0 %v736
    %782 = vmatprep.subr.mxu0 0.0
    %783 = vmatpush1.msra.mxu0 %v737
    %784 = vmatprep.subr.mxu0 0.0
    %785 = vmatpush1.msra.mxu0 %v738
    %786 = vmatprep.subr.mxu0 0.0
    %787 = vmatpush1.msra.mxu0 %v739
    %788 = vmatprep.subr.mxu0 0.0
    %789 = vmatpush1.msra.mxu0 %v740
    %790 = vmatprep.subr.mxu0 0.0
    %791 = vmatpush1.msra.mxu0 %v741
    %792 = vmatprep.subr.mxu0 0.0
    %793 = vmatpush1.msra.mxu0 %v742
    %794 = vmatprep.subr.mxu0 0.0
    %795 = vmatpush1.msra.mxu0 %v743
    %796 = vmatprep.subr.mxu0 0.0
    %797 = vmatpush1.msra.mxu0 %v744
    %798 = vmatprep.subr.mxu0 0.0
    %799 = vmatpush1.msra.mxu0 %v745
    %800 = vmatprep.subr.mxu0 0.0
    %801 = vmatpush1.msra.mxu0 %v746
    %802 = vmatprep.subr.mxu0 0.0
    %803 = vmatpush1.msra.mxu0 %v747
    %804 = vmatprep.subr.mxu0 0.0
    %805 = vmatpush1.msra.mxu0 %v748
    %806 = vmatprep.subr.mxu0 0.0
    %807 = vmatpush1.msra.mxu0 %v749
    %808 = vmatprep.subr.mxu0 0.0
    %809 = vmatpush1.msra.mxu0 %v750
    %810 = vmatprep.subr.mxu0 0.0
    %811 = vmatpush1.msra.mxu0 %v751
    %812 = vmatprep.subr.mxu0 0.0
    %813 = vmatpush1.msra.mxu0 %v752
    %814 = vmatprep.subr.mxu0 0.0
    %815 = vmatpush1.msra.mxu0 %v753
    %816 = vmatprep.subr.mxu0 0.0
    %817 = vmatpush1.msra.mxu0 %v754
    %818 = vmatprep.subr.mxu0 0.0
    %819 = vmatpush1.msra.mxu0 %v755
    %820 = vmatprep.mubr.f32.mxu0 %v581
    %821 = vmatmul.mubr.f32.gmra.mrb[0].mxu0 %v580
    %v822 = vpop.f32.mrb[0].mxu0
    %v823 = vadd.f32 0.0, %v822
    %v824 = vpop.f32.mrb[0].mxu0
    %825 = vmatprep.mubr.f32.mxu0 %v583
    %826 = vmatmul.mubr.f32.gmra.mrb[0].mxu0 %v582
    %v827 = vpop.f32.mrb[0].mxu0
    %v828 = vadd.f32 0.0, %v827
    %v829 = vpop.f32.mrb[0].mxu0
    %830 = vmatprep.mubr.f32.mxu0 %v585
    %831 = vmatmul.mubr.f32.gmra.mrb[0].mxu0 %v584
    %v832 = vpop.f32.mrb[0].mxu0
    %v833 = vadd.f32 0.0, %v832
    %v834 = vpop.f32.mrb[0].mxu0
    %835 = vmatprep.mubr.f32.mxu0 %v587
    %836 = vmatmul.mubr.f32.gmra.mrb[0].mxu0 %v586
    %v837 = vpop.f32.mrb[0].mxu0
    %v838 = vadd.f32 0.0, %v837
    %v839 = vpop.f32.mrb[0].mxu0
    %840 = vmatprep.mubr.f32.mxu0 %v589
    %841 = vmatmul.mubr.f32.gmra.mrb[0].mxu0 %v588
    %v842 = vpop.f32.mrb[0].mxu0
    %v843 = vadd.f32 0.0, %v842
    %v844 = vpop.f32.mrb[0].mxu0
    %845 = vmatprep.mubr.f32.mxu0 %v591
    %846 = vmatmul.mubr.f32.gmra.mrb[0].mxu0 %v590
    %v847 = vpop.f32.mrb[0].mxu0
    %v848 = vadd.f32 0.0, %v847
    %v849 = vpop.f32.mrb[0].mxu0
    %850 = vmatprep.mubr.f32.mxu0 %v593
    %851 = vmatmul.mubr.f32.gmra.mrb[0].mxu0 %v592
    %v852 = vpop.f32.mrb[0].mxu0
    %v853 = vadd.f32 0.0, %v852
    %v854 = vpop.f32.mrb[0].mxu0
    %855 = vmatprep.mubr.f32.mxu0 %v595
    %856 = vmatmul.mubr.f32.gmra.mrb[0].mxu0 %v594
    %v857 = vpop.f32.mrb[0].mxu0
    %v858 = vadd.f32 0.0, %v857
    %v859 = vpop.f32.mrb[0].mxu0
    %860 = vmatprep.mubr.f32.mxu0 %v597
    %861 = vmatmul.mubr.f32.gmra.mrb[0].mxu0 %v596
    %v862 = vpop.f32.mrb[0].mxu0
    %v863 = vadd.f32 0.0, %v862
    %v864 = vpop.f32.mrb[0].mxu0
    %865 = vmatprep.mubr.f32.mxu0 %v599
    %866 = vmatmul.mubr.f32.gmra.mrb[0].mxu0 %v598
    %v867 = vpop.f32.mrb[0].mxu0
    %v868 = vadd.f32 0.0, %v867
    %v869 = vpop.f32.mrb[0].mxu0
    %870 = vmatprep.mubr.f32.mxu0 %v601
    %871 = vmatmul.mubr.f32.gmra.mrb[0].mxu0 %v600
    %v872 = vpop.f32.mrb[0].mxu0
    %v873 = vadd.f32 0.0, %v872
    %v874 = vpop.f32.mrb[0].mxu0
    %875 = vmatprep.mubr.f32.mxu0 %v603
    %876 = vmatmul.mubr.f32.gmra.mrb[0].mxu0 %v602
    %v877 = vpop.f32.mrb[0].mxu0
    %v878 = vadd.f32 0.0, %v877
    %v879 = vpop.f32.mrb[0].mxu0
    %880 = vmatprep.mubr.f32.mxu0 %v605
    %881 = vmatmul.mubr.f32.gmra.mrb[0].mxu0 %v604
    %v882 = vpop.f32.mrb[0].mxu0
    %v883 = vadd.f32 0.0, %v882
    %v884 = vpop.f32.mrb[0].mxu0
    %885 = vmatprep.mubr.f32.mxu0 %v607
    %886 = vmatmul.mubr.f32.gmra.mrb[0].mxu0 %v606
    %v887 = vpop.f32.mrb[0].mxu0
    %v888 = vadd.f32 0.0, %v887
    %v889 = vpop.f32.mrb[0].mxu0
    %890 = vmatprep.mubr.f32.mxu0 %v609
    %891 = vmatmul.mubr.f32.gmra.mrb[0].mxu0 %v608
    %v892 = vpop.f32.mrb[0].mxu0
    %v893 = vadd.f32 0.0, %v892
    %v894 = vpop.f32.mrb[0].mxu0
    %895 = vmatprep.mubr.f32.mxu0 %v611
    %896 = vmatmul.mubr.f32.gmra.mrb[0].mxu0 %v610
    %v897 = vpop.f32.mrb[0].mxu0
    %v898 = vadd.f32 0.0, %v897
    %v899 = vpop.f32.mrb[0].mxu0
    %900 = vmatprep.mubr.f32.mxu0 %v613
    %901 = vmatmul.mubr.f32.gmra.mrb[0].mxu0 %v612
    %v902 = vpop.f32.mrb[0].mxu0
    %v903 = vadd.f32 0.0, %v902
    %v904 = vpop.f32.mrb[0].mxu0
    %905 = vmatprep.mubr.f32.mxu0 %v615
    %906 = vmatmul.mubr.f32.gmra.mrb[0].mxu0 %v614
    %v907 = vpop.f32.mrb[0].mxu0
    %v908 = vadd.f32 0.0, %v907
    %v909 = vpop.f32.mrb[0].mxu0
    %910 = vmatprep.mubr.f32.mxu0 %v617
    %911 = vmatmul.mubr.f32.gmra.mrb[0].mxu0 %v616
    %v912 = vpop.f32.mrb[0].mxu0
    %v913 = vadd.f32 0.0, %v912
    %v914 = vpop.f32.mrb[0].mxu0
    %915 = vmatprep.mubr.f32.mxu0 %v619
    %916 = vmatmul.mubr.f32.gmra.mrb[0].mxu0 %v618
    %v917 = vpop.f32.mrb[0].mxu0
    %v918 = vadd.f32 0.0, %v917
    %v919 = vpop.f32.mrb[0].mxu0
    %920 = vmatprep.mubr.f32.mxu0 %v621
    %921 = vmatmul.mubr.f32.gmra.mrb[0].mxu0 %v620
    %v922 = vpop.f32.mrb[0].mxu0
    %v923 = vadd.f32 0.0, %v922
    %v924 = vpop.f32.mrb[0].mxu0
    %925 = vmatprep.mubr.f32.mxu0 %v623
    %926 = vmatmul.mubr.f32.gmra.mrb[0].mxu0 %v622
    %v927 = vpop.f32.mrb[0].mxu0
    %v928 = vadd.f32 0.0, %v927
    %v929 = vpop.f32.mrb[0].mxu0
    %930 = vmatprep.mubr.f32.mxu0 %v625
    %931 = vmatmul.mubr.f32.gmra.mrb[0].mxu0 %v624
    %v932 = vpop.f32.mrb[0].mxu0
    %v933 = vadd.f32 0.0, %v932
    %v934 = vpop.f32.mrb[0].mxu0
    %935 = vmatprep.mubr.f32.mxu0 %v627
    %936 = vmatmul.mubr.f32.gmra.mrb[0].mxu0 %v626
    %v937 = vpop.f32.mrb[0].mxu0
    %v938 = vadd.f32 0.0, %v937
    %v939 = vpop.f32.mrb[0].mxu0
    %940 = vmatprep.mubr.f32.mxu0 %v629
    %941 = vmatmul.mubr.f32.gmra.mrb[0].mxu0 %v628
    %v942 = vpop.f32.mrb[0].mxu0
    %v943 = vadd.f32 0.0, %v942
    %v944 = vpop.f32.mrb[0].mxu0
    %945 = vmatprep.mubr.f32.mxu0 %v631
    %946 = vmatmul.mubr.f32.gmra.mrb[0].mxu0 %v630
    %v947 = vpop.f32.mrb[0].mxu0
    %v948 = vadd.f32 0.0, %v947
    %v949 = vpop.f32.mrb[0].mxu0
    %950 = vmatprep.mubr.f32.mxu0 %v633
    %951 = vmatmul.mubr.f32.gmra.mrb[0].mxu0 %v632
    %v952 = vpop.f32.mrb[0].mxu0
    %v953 = vadd.f32 0.0, %v952
    %v954 = vpop.f32.mrb[0].mxu0
    %955 = vmatprep.mubr.f32.mxu0 %v635
    %956 = vmatmul.mubr.f32.gmra.mrb[0].mxu0 %v634
    %v957 = vpop.f32.mrb[0].mxu0
    %v958 = vadd.f32 0.0, %v957
    %v959 = vpop.f32.mrb[0].mxu0
    %960 = vmatprep.mubr.f32.mxu0 %v637
    %961 = vmatmul.mubr.f32.gmra.mrb[0].mxu0 %v636
    %v962 = vpop.f32.mrb[0].mxu0
    %v963 = vadd.f32 0.0, %v962
    %v964 = vpop.f32.mrb[0].mxu0
    %965 = vmatprep.mubr.f32.mxu0 %v639
    %966 = vmatmul.mubr.f32.gmra.mrb[0].mxu0 %v638
    %v967 = vpop.f32.mrb[0].mxu0
    %v968 = vadd.f32 0.0, %v967
    %v969 = vpop.f32.mrb[0].mxu0
    %970 = vmatprep.mubr.f32.mxu0 %v641
    %971 = vmatmul.mubr.f32.gmra.mrb[0].mxu0 %v640
    %v972 = vpop.f32.mrb[0].mxu0
    %v973 = vadd.f32 0.0, %v972
    %v974 = vpop.f32.mrb[0].mxu0
    %975 = vmatprep.mubr.f32.mxu0 %v643
    %976 = vmatmul.mubr.f32.gmra.mrb[0].mxu0 %v642
    %v977 = vpop.f32.mrb[0].mxu0
    %v978 = vadd.f32 0.0, %v977
    %v979 = vpop.f32.mrb[0].mxu0
    %980 = vmatprep.mubr.f32.mxu0 %v645
    %981 = vmatmul.mubr.f32.gmra.mrb[0].mxu0 %v644
    %v982 = vpop.f32.mrb[0].mxu0
    %v983 = vadd.f32 0.0, %v982
    %v984 = vpop.f32.mrb[0].mxu0
    %985 = vmatprep.mubr.f32.mxu0 %v647
    %986 = vmatmul.mubr.f32.gmra.mrb[0].mxu0 %v646
    %v987 = vpop.f32.mrb[0].mxu0
    %v988 = vadd.f32 0.0, %v987
    %v989 = vpop.f32.mrb[0].mxu0
    %990 = vmatprep.mubr.f32.mxu0 %v649
    %991 = vmatmul.mubr.f32.gmra.mrb[0].mxu0 %v648
    %v992 = vpop.f32.mrb[0].mxu0
    %v993 = vadd.f32 0.0, %v992
    %v994 = vpop.f32.mrb[0].mxu0
    %995 = vmatprep.mubr.f32.mxu0 %v651
    %996 = vmatmul.mubr.f32.gmra.mrb[0].mxu0 %v650
    %v997 = vpop.f32.mrb[0].mxu0
    %v998 = vadd.f32 0.0, %v997
    %v999 = vpop.f32.mrb[0].mxu0
    %1000 = vmatprep.mubr.f32.mxu0 %v653
    %1001 = vmatmul.mubr.f32.gmra.mrb[0].mxu0 %v652
    %v1002 = vpop.f32.mrb[0].mxu0
    %v1003 = vadd.f32 0.0, %v1002
    %v1004 = vpop.f32.mrb[0].mxu0
    %1005 = vmatprep.mubr.f32.mxu0 %v655
    %1006 = vmatmul.mubr.f32.gmra.mrb[0].mxu0 %v654
    %v1007 = vpop.f32.mrb[0].mxu0
    %v1008 = vadd.f32 0.0, %v1007
    %v1009 = vpop.f32.mrb[0].mxu0
    %1010 = vmatprep.mubr.f32.mxu0 %v657
    %1011 = vmatmul.mubr.f32.gmra.mrb[0].mxu0 %v656
    %v1012 = vpop.f32.mrb[0].mxu0
    %v1013 = vadd.f32 0.0, %v1012
    %v1014 = vpop.f32.mrb[0].mxu0
    %1015 = vmatprep.mubr.f32.mxu0 %v659
    %1016 = vmatmul.mubr.f32.gmra.mrb[0].mxu0 %v658
    %v1017 = vpop.f32.mrb[0].mxu0
    %v1018 = vadd.f32 0.0, %v1017
    %v1019 = vpop.f32.mrb[0].mxu0
    %1020 = vmatprep.mubr.f32.mxu0 %v661
    %1021 = vmatmul.mubr.f32.gmra.mrb[0].mxu0 %v660
    %v1022 = vpop.f32.mrb[0].mxu0
    %v1023 = vadd.f32 0.0, %v1022
    %v1024 = vpop.f32.mrb[0].mxu0
    %1025 = vmatprep.mubr.f32.mxu0 %v663
    %1026 = vmatmul.mubr.f32.gmra.mrb[0].mxu0 %v662
    %v1027 = vpop.f32.mrb[0].mxu0
    %v1028 = vadd.f32 0.0, %v1027
    %v1029 = vpop.f32.mrb[0].mxu0
    %1030 = vmatprep.mubr.f32.mxu0 %v665
    %1031 = vmatmul.mubr.f32.gmra.mrb[0].mxu0 %v664
    %v1032 = vpop.f32.mrb[0].mxu0
    %v1033 = vadd.f32 0.0, %v1032
    %v1034 = vpop.f32.mrb[0].mxu0
    %1035 = vmatprep.mubr.f32.mxu0 %v667
    %1036 = vmatmul.mubr.f32.gmra.mrb[0].mxu0 %v666
    %v1037 = vpop.f32.mrb[0].mxu0
    %v1038 = vadd.f32 0.0, %v1037
    %v1039 = vpop.f32.mrb[0].mxu0
    %1040 = vmatprep.mubr.f32.mxu0 %v669
    %1041 = vmatmul.mubr.f32.gmra.mrb[0].mxu0 %v668
    %v1042 = vpop.f32.mrb[0].mxu0
    %v1043 = vadd.f32 0.0, %v1042
    %v1044 = vpop.f32.mrb[0].mxu0
    %1045 = vmatprep.mubr.f32.mxu0 %v671
    %1046 = vmatmul.mubr.f32.gmra.mrb[0].mxu0 %v670
    %v1047 = vpop.f32.mrb[0].mxu0
    %v1048 = vadd.f32 0.0, %v1047
    %v1049 = vpop.f32.mrb[0].mxu0
    %1050 = vmatprep.mubr.f32.mxu0 %v673
    %1051 = vmatmul.mubr.f32.gmra.mrb[0].mxu0 %v672
    %v1052 = vpop.f32.mrb[0].mxu0
    %v1053 = vadd.f32 0.0, %v1052
    %v1054 = vpop.f32.mrb[0].mxu0
    %1055 = vmatprep.mubr.f32.mxu0 %v675
    %1056 = vmatmul.mubr.f32.gmra.mrb[0].mxu0 %v674
    %v1057 = vpop.f32.mrb[0].mxu0
    %v1058 = vadd.f32 0.0, %v1057
    %v1059 = vpop.f32.mrb[0].mxu0
    %1060 = vmatprep.mubr.f32.mxu0 %v677
    %1061 = vmatmul.mubr.f32.gmra.mrb[0].mxu0 %v676
    %v1062 = vpop.f32.mrb[0].mxu0
    %v1063 = vadd.f32 0.0, %v1062
    %v1064 = vpop.f32.mrb[0].mxu0
    %1065 = vmatprep.mubr.f32.mxu0 %v679
    %1066 = vmatmul.mubr.f32.gmra.mrb[0].mxu0 %v678
    %v1067 = vpop.f32.mrb[0].mxu0
    %v1068 = vadd.f32 0.0, %v1067
    %v1069 = vpop.f32.mrb[0].mxu0
    %1070 = vmatprep.mubr.f32.mxu0 %v681
    %1071 = vmatmul.mubr.f32.gmra.mrb[0].mxu0 %v680
    %v1072 = vpop.f32.mrb[0].mxu0
    %v1073 = vadd.f32 0.0, %v1072
    %v1074 = vpop.f32.mrb[0].mxu0
    %1075 = vmatprep.mubr.f32.mxu0 %v683
    %1076 = vmatmul.mubr.f32.gmra.mrb[0].mxu0 %v682
    %v1077 = vpop.f32.mrb[0].mxu0
    %v1078 = vadd.f32 0.0, %v1077
    %v1079 = vpop.f32.mrb[0].mxu0
    %1080 = vmatprep.mubr.f32.mxu0 %v685
    %1081 = vmatmul.mubr.f32.gmra.mrb[0].mxu0 %v684
    %v1082 = vpop.f32.mrb[0].mxu0
    %v1083 = vadd.f32 0.0, %v1082
    %v1084 = vpop.f32.mrb[0].mxu0
    %1085 = vmatprep.mubr.f32.mxu0 %v687
    %1086 = vmatmul.mubr.f32.gmra.mrb[0].mxu0 %v686
    %v1087 = vpop.f32.mrb[0].mxu0
    %v1088 = vadd.f32 0.0, %v1087
    %v1089 = vpop.f32.mrb[0].mxu0
    %1090 = vmatprep.mubr.f32.mxu0 %v689
    %1091 = vmatmul.mubr.f32.gmra.mrb[0].mxu0 %v688
    %v1092 = vpop.f32.mrb[0].mxu0
    %v1093 = vadd.f32 0.0, %v1092
    %v1094 = vpop.f32.mrb[0].mxu0
    %1095 = vmatprep.mubr.f32.mxu0 %v691
    %1096 = vmatmul.mubr.f32.gmra.mrb[0].mxu0 %v690
    %v1097 = vpop.f32.mrb[0].mxu0
    %v1098 = vadd.f32 0.0, %v1097
    %v1099 = vpop.f32.mrb[0].mxu0
    %1100 = vmatprep.mubr.f32.mxu0 %v693
    %1101 = vmatmul.mubr.f32.gmra.mrb[0].mxu0 %v692
    %v1102 = vpop.f32.mrb[0].mxu0
    %v1103 = vadd.f32 0.0, %v1102
    %v1104 = vpop.f32.mrb[0].mxu0
    %1105 = vmatprep.mubr.f32.mxu0 %v695
    %1106 = vmatmul.mubr.f32.gmra.mrb[0].mxu0 %v694
    %v1107 = vpop.f32.mrb[0].mxu0
    %v1108 = vadd.f32 0.0, %v1107
    %v1109 = vpop.f32.mrb[0].mxu0
    %1110 = vmatprep.mubr.f32.mxu0 %v697
    %1111 = vmatmul.mubr.f32.gmra.mrb[0].mxu0 %v696
    %v1112 = vpop.f32.mrb[0].mxu0
    %v1113 = vadd.f32 0.0, %v1112
    %v1114 = vpop.f32.mrb[0].mxu0
    %1115 = vmatprep.mubr.f32.mxu0 %v699
    %1116 = vmatmul.mubr.f32.gmra.mrb[0].mxu0 %v698
    %v1117 = vpop.f32.mrb[0].mxu0
    %v1118 = vadd.f32 0.0, %v1117
    %v1119 = vpop.f32.mrb[0].mxu0
    %1120 = vmatprep.mubr.f32.mxu0 %v701
    %1121 = vmatmul.mubr.f32.gmra.mrb[0].mxu0 %v700
    %v1122 = vpop.f32.mrb[0].mxu0
    %v1123 = vadd.f32 0.0, %v1122
    %v1124 = vpop.f32.mrb[0].mxu0
    %1125 = vmatprep.mubr.f32.mxu0 %v703
    %1126 = vmatmul.mubr.f32.gmra.mrb[0].mxu0 %v702
    %v1127 = vpop.f32.mrb[0].mxu0
    %v1128 = vadd.f32 0.0, %v1127
    %v1129 = vpop.f32.mrb[0].mxu0
    %1130 = vmatprep.mubr.f32.mxu0 %v705
    %1131 = vmatmul.mubr.f32.gmra.mrb[0].mxu0 %v704
    %v1132 = vpop.f32.mrb[0].mxu0
    %v1133 = vadd.f32 0.0, %v1132
    %v1134 = vpop.f32.mrb[0].mxu0
    %1135 = vmatprep.mubr.f32.mxu0 %v707
    %1136 = vmatmul.mubr.f32.gmra.mrb[0].mxu0 %v706
    %v1137 = vpop.f32.mrb[0].mxu0
    %v1138 = vadd.f32 0.0, %v1137
    %v1139 = vpop.f32.mrb[0].mxu0
    %1140 = vdwg.mxu0
    %1141 = vmatprep.subr.mxu0 0.0
    %1142 = vmatpush1.msra.mxu0 %v708
    %1143 = vmatprep.subr.mxu0 0.0
    %1144 = vmatpush1.msra.mxu0 %v709
    %1145 = vmatprep.subr.mxu0 0.0
    %1146 = vmatpush1.msra.mxu0 %v710
    %1147 = vmatprep.subr.mxu0 0.0
    %1148 = vmatpush1.msra.mxu0 %v711
    %1149 = vmatprep.subr.mxu0 0.0
    %1150 = vmatpush1.msra.mxu0 %v712
    %1151 = vmatprep.subr.mxu0 0.0
    %1152 = vmatpush1.msra.mxu0 %v713
    %1153 = vmatprep.subr.mxu0 0.0
    %1154 = vmatpush1.msra.mxu0 %v714
    %1155 = vmatprep.subr.mxu0 0.0
    %1156 = vmatpush1.msra.mxu0 %v715
    %1157 = vmatprep.subr.mxu0 0.0
    %1158 = vmatpush1.msra.mxu0 %v716
    %1159 = vmatprep.subr.mxu0 0.0
    %1160 = vmatpush1.msra.mxu0 %v717
    %1161 = vmatprep.subr.mxu0 0.0
    %1162 = vmatpush1.msra.mxu0 %v718
    %1163 = vmatprep.subr.mxu0 0.0
    %1164 = vmatpush1.msra.mxu0 %v719
    %1165 = vmatprep.subr.mxu0 0.0
    %1166 = vmatpush1.msra.mxu0 %v720
    %1167 = vmatprep.subr.mxu0 0.0
    %1168 = vmatpush1.msra.mxu0 %v721
    %1169 = vmatprep.subr.mxu0 0.0
    %1170 = vmatpush1.msra.mxu0 %v722
    %1171 = vmatprep.subr.mxu0 0.0
    %1172 = vmatpush1.msra.mxu0 %v723
    %1173 = vmatprep.subr.mxu0 0.0
    %1174 = vmatpush1.msra.mxu0 0.0
    %1175 = vmatprep.subr.mxu0 0.0
    %1176 = vmatpush1.msra.mxu0 0.0
    %1177 = vmatprep.subr.mxu0 0.0
    %1178 = vmatpush1.msra.mxu0 0.0
    %1179 = vmatprep.subr.mxu0 0.0
    %1180 = vmatpush1.msra.mxu0 0.0
    %1181 = vmatprep.subr.mxu0 0.0
    %1182 = vmatpush1.msra.mxu0 0.0
    %1183 = vmatprep.subr.mxu0 0.0
    %1184 = vmatpush1.msra.mxu0 0.0
    %1185 = vmatprep.subr.mxu0 0.0
    %1186 = vmatpush1.msra.mxu0 0.0
    %1187 = vmatprep.subr.mxu0 0.0
    %1188 = vmatpush1.msra.mxu0 0.0
    %1189 = vmatprep.subr.mxu0 0.0
    %1190 = vmatpush1.msra.mxu0 0.0
    %1191 = vmatprep.subr.mxu0 0.0
    %1192 = vmatpush1.msra.mxu0 0.0
    %1193 = vmatprep.subr.mxu0 0.0
    %1194 = vmatpush1.msra.mxu0 0.0
    %1195 = vmatprep.subr.mxu0 0.0
    %1196 = vmatpush1.msra.mxu0 0.0
    %1197 = vmatprep.subr.mxu0 0.0
    %1198 = vmatpush1.msra.mxu0 0.0
    %1199 = vmatprep.subr.mxu0 0.0
    %1200 = vmatpush1.msra.mxu0 0.0
    %1201 = vmatprep.subr.mxu0 0.0
    %1202 = vmatpush1.msra.mxu0 0.0
    %1203 = vmatprep.subr.mxu0 0.0
    %1204 = vmatpush1.msra.mxu0 0.0
    %1205 = vmatprep.mubr.f32.mxu0 0.0
    %1206 = vmatmul.mubr.f32.gmra.mrb[0].mxu0 %v172
    %v1207 = vpop.f32.mrb[0].mxu0
    %v1208 = vadd.f32 %v823, %v1207
    %v1209 = vpop.f32.mrb[0].mxu0
    %1210 = vmatprep.mubr.f32.mxu0 0.0
    %1211 = vmatmul.mubr.f32.gmra.mrb[0].mxu0 %v173
    %v1212 = vpop.f32.mrb[0].mxu0
    %v1213 = vadd.f32 %v828, %v1212
    %v1214 = vpop.f32.mrb[0].mxu0
    %1215 = vmatprep.mubr.f32.mxu0 0.0
    %1216 = vmatmul.mubr.f32.gmra.mrb[0].mxu0 %v174
    %v1217 = vpop.f32.mrb[0].mxu0
    %v1218 = vadd.f32 %v833, %v1217
    %v1219 = vpop.f32.mrb[0].mxu0
    %1220 = vmatprep.mubr.f32.mxu0 0.0
    %1221 = vmatmul.mubr.f32.gmra.mrb[0].mxu0 %v175
    %v1222 = vpop.f32.mrb[0].mxu0
    %v1223 = vadd.f32 %v838, %v1222
    %v1224 = vpop.f32.mrb[0].mxu0
    %1225 = vmatprep.mubr.f32.mxu0 0.0
    %1226 = vmatmul.mubr.f32.gmra.mrb[0].mxu0 %v176
    %v1227 = vpop.f32.mrb[0].mxu0
    %v1228 = vadd.f32 %v843, %v1227
    %v1229 = vpop.f32.mrb[0].mxu0
    %1230 = vmatprep.mubr.f32.mxu0 0.0
    %1231 = vmatmul.mubr.f32.gmra.mrb[0].mxu0 %v177
    %v1232 = vpop.f32.mrb[0].mxu0
    %v1233 = vadd.f32 %v848, %v1232
    %v1234 = vpop.f32.mrb[0].mxu0
    %1235 = vmatprep.mubr.f32.mxu0 0.0
    %1236 = vmatmul.mubr.f32.gmra.mrb[0].mxu0 %v178
    %v1237 = vpop.f32.mrb[0].mxu0
    %v1238 = vadd.f32 %v853, %v1237
    %v1239 = vpop.f32.mrb[0].mxu0
    %1240 = vmatprep.mubr.f32.mxu0 0.0
    %1241 = vmatmul.mubr.f32.gmra.mrb[0].mxu0 %v179
    %v1242 = vpop.f32.mrb[0].mxu0
    %v1243 = vadd.f32 %v858, %v1242
    %v1244 = vpop.f32.mrb[0].mxu0
    %1245 = vmatprep.mubr.f32.mxu0 0.0
    %1246 = vmatmul.mubr.f32.gmra.mrb[0].mxu0 %v180
    %v1247 = vpop.f32.mrb[0].mxu0
    %v1248 = vadd.f32 %v863, %v1247
    %v1249 = vpop.f32.mrb[0].mxu0
    %1250 = vmatprep.mubr.f32.mxu0 0.0
    %1251 = vmatmul.mubr.f32.gmra.mrb[0].mxu0 %v181
    %v1252 = vpop.f32.mrb[0].mxu0
    %v1253 = vadd.f32 %v868, %v1252
    %v1254 = vpop.f32.mrb[0].mxu0
    %1255 = vmatprep.mubr.f32.mxu0 0.0
    %1256 = vmatmul.mubr.f32.gmra.mrb[0].mxu0 %v182
    %v1257 = vpop.f32.mrb[0].mxu0
    %v1258 = vadd.f32 %v873, %v1257
    %v1259 = vpop.f32.mrb[0].mxu0
    %1260 = vmatprep.mubr.f32.mxu0 0.0
    %1261 = vmatmul.mubr.f32.gmra.mrb[0].mxu0 %v183
    %v1262 = vpop.f32.mrb[0].mxu0
    %v1263 = vadd.f32 %v878, %v1262
    %v1264 = vpop.f32.mrb[0].mxu0
    %1265 = vmatprep.mubr.f32.mxu0 0.0
    %1266 = vmatmul.mubr.f32.gmra.mrb[0].mxu0 %v184
    %v1267 = vpop.f32.mrb[0].mxu0
    %v1268 = vadd.f32 %v883, %v1267
    %v1269 = vpop.f32.mrb[0].mxu0
    %1270 = vmatprep.mubr.f32.mxu0 0.0
    %1271 = vmatmul.mubr.f32.gmra.mrb[0].mxu0 %v185
    %v1272 = vpop.f32.mrb[0].mxu0
    %v1273 = vadd.f32 %v888, %v1272
    %v1274 = vpop.f32.mrb[0].mxu0
    %1275 = vmatprep.mubr.f32.mxu0 0.0
    %1276 = vmatmul.mubr.f32.gmra.mrb[0].mxu0 %v186
    %v1277 = vpop.f32.mrb[0].mxu0
    %v1278 = vadd.f32 %v893, %v1277
    %v1279 = vpop.f32.mrb[0].mxu0
    %1280 = vmatprep.mubr.f32.mxu0 0.0
    %1281 = vmatmul.mubr.f32.gmra.mrb[0].mxu0 %v187
    %v1282 = vpop.f32.mrb[0].mxu0
    %v1283 = vadd.f32 %v898, %v1282
    %v1284 = vpop.f32.mrb[0].mxu0
    %1285 = vmatprep.mubr.f32.mxu0 0.0
    %1286 = vmatmul.mubr.f32.gmra.mrb[0].mxu0 %v188
    %v1287 = vpop.f32.mrb[0].mxu0
    %v1288 = vadd.f32 %v903, %v1287
    %v1289 = vpop.f32.mrb[0].mxu0
    %1290 = vmatprep.mubr.f32.mxu0 0.0
    %1291 = vmatmul.mubr.f32.gmra.mrb[0].mxu0 %v189
    %v1292 = vpop.f32.mrb[0].mxu0
    %v1293 = vadd.f32 %v908, %v1292
    %v1294 = vpop.f32.mrb[0].mxu0
    %1295 = vmatprep.mubr.f32.mxu0 0.0
    %1296 = vmatmul.mubr.f32.gmra.mrb[0].mxu0 %v190
    %v1297 = vpop.f32.mrb[0].mxu0
    %v1298 = vadd.f32 %v913, %v1297
    %v1299 = vpop.f32.mrb[0].mxu0
    %1300 = vmatprep.mubr.f32.mxu0 0.0
    %1301 = vmatmul.mubr.f32.gmra.mrb[0].mxu0 %v191
    %v1302 = vpop.f32.mrb[0].mxu0
    %v1303 = vadd.f32 %v918, %v1302
    %v1304 = vpop.f32.mrb[0].mxu0
    %1305 = vmatprep.mubr.f32.mxu0 0.0
    %1306 = vmatmul.mubr.f32.gmra.mrb[0].mxu0 %v192
    %v1307 = vpop.f32.mrb[0].mxu0
    %v1308 = vadd.f32 %v923, %v1307
    %v1309 = vpop.f32.mrb[0].mxu0
    %1310 = vmatprep.mubr.f32.mxu0 0.0
    %1311 = vmatmul.mubr.f32.gmra.mrb[0].mxu0 %v193
    %v1312 = vpop.f32.mrb[0].mxu0
    %v1313 = vadd.f32 %v928, %v1312
    %v1314 = vpop.f32.mrb[0].mxu0
    %1315 = vmatprep.mubr.f32.mxu0 0.0
    %1316 = vmatmul.mubr.f32.gmra.mrb[0].mxu0 %v194
    %v1317 = vpop.f32.mrb[0].mxu0
    %v1318 = vadd.f32 %v933, %v1317
    %v1319 = vpop.f32.mrb[0].mxu0
    %1320 = vmatprep.mubr.f32.mxu0 0.0
    %1321 = vmatmul.mubr.f32.gmra.mrb[0].mxu0 %v195
    %v1322 = vpop.f32.mrb[0].mxu0
    %v1323 = vadd.f32 %v938, %v1322
    %v1324 = vpop.f32.mrb[0].mxu0
    %1325 = vmatprep.mubr.f32.mxu0 0.0
    %1326 = vmatmul.mubr.f32.gmra.mrb[0].mxu0 %v196
    %v1327 = vpop.f32.mrb[0].mxu0
    %v1328 = vadd.f32 %v943, %v1327
    %v1329 = vpop.f32.mrb[0].mxu0
    %1330 = vmatprep.mubr.f32.mxu0 0.0
    %1331 = vmatmul.mubr.f32.gmra.mrb[0].mxu0 %v197
    %v1332 = vpop.f32.mrb[0].mxu0
    %v1333 = vadd.f32 %v948, %v1332
    %v1334 = vpop.f32.mrb[0].mxu0
    %1335 = vmatprep.mubr.f32.mxu0 0.0
    %1336 = vmatmul.mubr.f32.gmra.mrb[0].mxu0 %v198
    %v1337 = vpop.f32.mrb[0].mxu0
    %v1338 = vadd.f32 %v953, %v1337
    %v1339 = vpop.f32.mrb[0].mxu0
    %1340 = vmatprep.mubr.f32.mxu0 0.0
    %1341 = vmatmul.mubr.f32.gmra.mrb[0].mxu0 %v199
    %v1342 = vpop.f32.mrb[0].mxu0
    %v1343 = vadd.f32 %v958, %v1342
    %v1344 = vpop.f32.mrb[0].mxu0
    %1345 = vmatprep.mubr.f32.mxu0 0.0
    %1346 = vmatmul.mubr.f32.gmra.mrb[0].mxu0 %v200
    %v1347 = vpop.f32.mrb[0].mxu0
    %v1348 = vadd.f32 %v963, %v1347
    %v1349 = vpop.f32.mrb[0].mxu0
    %1350 = vmatprep.mubr.f32.mxu0 0.0
    %1351 = vmatmul.mubr.f32.gmra.mrb[0].mxu0 %v201
    %v1352 = vpop.f32.mrb[0].mxu0
    %v1353 = vadd.f32 %v968, %v1352
    %v1354 = vpop.f32.mrb[0].mxu0
    %1355 = vmatprep.mubr.f32.mxu0 0.0
    %1356 = vmatmul.mubr.f32.gmra.mrb[0].mxu0 %v202
    %v1357 = vpop.f32.mrb[0].mxu0
    %v1358 = vadd.f32 %v973, %v1357
    %v1359 = vpop.f32.mrb[0].mxu0
    %1360 = vmatprep.mubr.f32.mxu0 0.0
    %1361 = vmatmul.mubr.f32.gmra.mrb[0].mxu0 %v203
    %v1362 = vpop.f32.mrb[0].mxu0
    %v1363 = vadd.f32 %v978, %v1362
    %v1364 = vpop.f32.mrb[0].mxu0
    %1365 = vmatprep.mubr.f32.mxu0 0.0
    %1366 = vmatmul.mubr.f32.gmra.mrb[0].mxu0 %v204
    %v1367 = vpop.f32.mrb[0].mxu0
    %v1368 = vadd.f32 %v983, %v1367
    %v1369 = vpop.f32.mrb[0].mxu0
    %1370 = vmatprep.mubr.f32.mxu0 0.0
    %1371 = vmatmul.mubr.f32.gmra.mrb[0].mxu0 %v205
    %v1372 = vpop.f32.mrb[0].mxu0
    %v1373 = vadd.f32 %v988, %v1372
    %v1374 = vpop.f32.mrb[0].mxu0
    %1375 = vmatprep.mubr.f32.mxu0 0.0
    %1376 = vmatmul.mubr.f32.gmra.mrb[0].mxu0 %v206
    %v1377 = vpop.f32.mrb[0].mxu0
    %v1378 = vadd.f32 %v993, %v1377
    %v1379 = vpop.f32.mrb[0].mxu0
    %1380 = vmatprep.mubr.f32.mxu0 0.0
    %1381 = vmatmul.mubr.f32.gmra.mrb[0].mxu0 %v207
    %v1382 = vpop.f32.mrb[0].mxu0
    %v1383 = vadd.f32 %v998, %v1382
    %v1384 = vpop.f32.mrb[0].mxu0
    %1385 = vmatprep.mubr.f32.mxu0 0.0
    %1386 = vmatmul.mubr.f32.gmra.mrb[0].mxu0 %v208
    %v1387 = vpop.f32.mrb[0].mxu0
    %v1388 = vadd.f32 %v1003, %v1387
    %v1389 = vpop.f32.mrb[0].mxu0
    %1390 = vmatprep.mubr.f32.mxu0 0.0
    %1391 = vmatmul.mubr.f32.gmra.mrb[0].mxu0 %v209
    %v1392 = vpop.f32.mrb[0].mxu0
    %v1393 = vadd.f32 %v1008, %v1392
    %v1394 = vpop.f32.mrb[0].mxu0
    %1395 = vmatprep.mubr.f32.mxu0 0.0
    %1396 = vmatmul.mubr.f32.gmra.mrb[0].mxu0 %v210
    %v1397 = vpop.f32.mrb[0].mxu0
    %v1398 = vadd.f32 %v1013, %v1397
    %v1399 = vpop.f32.mrb[0].mxu0
    %1400 = vmatprep.mubr.f32.mxu0 0.0
    %1401 = vmatmul.mubr.f32.gmra.mrb[0].mxu0 %v211
    %v1402 = vpop.f32.mrb[0].mxu0
    %v1403 = vadd.f32 %v1018, %v1402
    %v1404 = vpop.f32.mrb[0].mxu0
    %1405 = vmatprep.mubr.f32.mxu0 0.0
    %1406 = vmatmul.mubr.f32.gmra.mrb[0].mxu0 %v212
    %v1407 = vpop.f32.mrb[0].mxu0
    %v1408 = vadd.f32 %v1023, %v1407
    %v1409 = vpop.f32.mrb[0].mxu0
    %1410 = vmatprep.mubr.f32.mxu0 0.0
    %1411 = vmatmul.mubr.f32.gmra.mrb[0].mxu0 %v213
    %v1412 = vpop.f32.mrb[0].mxu0
    %v1413 = vadd.f32 %v1028, %v1412
    %v1414 = vpop.f32.mrb[0].mxu0
    %1415 = vmatprep.mubr.f32.mxu0 0.0
    %1416 = vmatmul.mubr.f32.gmra.mrb[0].mxu0 %v214
    %v1417 = vpop.f32.mrb[0].mxu0
    %v1418 = vadd.f32 %v1033, %v1417
    %v1419 = vpop.f32.mrb[0].mxu0
    %1420 = vmatprep.mubr.f32.mxu0 0.0
    %1421 = vmatmul.mubr.f32.gmra.mrb[0].mxu0 %v215
    %v1422 = vpop.f32.mrb[0].mxu0
    %v1423 = vadd.f32 %v1038, %v1422
    %v1424 = vpop.f32.mrb[0].mxu0
    %1425 = vmatprep.mubr.f32.mxu0 0.0
    %1426 = vmatmul.mubr.f32.gmra.mrb[0].mxu0 %v216
    %v1427 = vpop.f32.mrb[0].mxu0
    %v1428 = vadd.f32 %v1043, %v1427
    %v1429 = vpop.f32.mrb[0].mxu0
    %1430 = vmatprep.mubr.f32.mxu0 0.0
    %1431 = vmatmul.mubr.f32.gmra.mrb[0].mxu0 %v217
    %v1432 = vpop.f32.mrb[0].mxu0
    %v1433 = vadd.f32 %v1048, %v1432
    %v1434 = vpop.f32.mrb[0].mxu0
    %1435 = vmatprep.mubr.f32.mxu0 0.0
    %1436 = vmatmul.mubr.f32.gmra.mrb[0].mxu0 %v218
    %v1437 = vpop.f32.mrb[0].mxu0
    %v1438 = vadd.f32 %v1053, %v1437
    %v1439 = vpop.f32.mrb[0].mxu0
    %1440 = vmatprep.mubr.f32.mxu0 0.0
    %1441 = vmatmul.mubr.f32.gmra.mrb[0].mxu0 %v219
    %v1442 = vpop.f32.mrb[0].mxu0
    %v1443 = vadd.f32 %v1058, %v1442
    %v1444 = vpop.f32.mrb[0].mxu0
    %1445 = vmatprep.mubr.f32.mxu0 0.0
    %1446 = vmatmul.mubr.f32.gmra.mrb[0].mxu0 %v220
    %v1447 = vpop.f32.mrb[0].mxu0
    %v1448 = vadd.f32 %v1063, %v1447
    %v1449 = vpop.f32.mrb[0].mxu0
    %1450 = vmatprep.mubr.f32.mxu0 0.0
    %1451 = vmatmul.mubr.f32.gmra.mrb[0].mxu0 %v221
    %v1452 = vpop.f32.mrb[0].mxu0
    %v1453 = vadd.f32 %v1068, %v1452
    %v1454 = vpop.f32.mrb[0].mxu0
    %1455 = vmatprep.mubr.f32.mxu0 0.0
    %1456 = vmatmul.mubr.f32.gmra.mrb[0].mxu0 %v222
    %v1457 = vpop.f32.mrb[0].mxu0
    %v1458 = vadd.f32 %v1073, %v1457
    %v1459 = vpop.f32.mrb[0].mxu0
    %1460 = vmatprep.mubr.f32.mxu0 0.0
    %1461 = vmatmul.mubr.f32.gmra.mrb[0].mxu0 %v223
    %v1462 = vpop.f32.mrb[0].mxu0
    %v1463 = vadd.f32 %v1078, %v1462
    %v1464 = vpop.f32.mrb[0].mxu0
    %1465 = vmatprep.mubr.f32.mxu0 0.0
    %1466 = vmatmul.mubr.f32.gmra.mrb[0].mxu0 %v224
    %v1467 = vpop.f32.mrb[0].mxu0
    %v1468 = vadd.f32 %v1083, %v1467
    %v1469 = vpop.f32.mrb[0].mxu0
    %1470 = vmatprep.mubr.f32.mxu0 0.0
    %1471 = vmatmul.mubr.f32.gmra.mrb[0].mxu0 %v225
    %v1472 = vpop.f32.mrb[0].mxu0
    %v1473 = vadd.f32 %v1088, %v1472
    %v1474 = vpop.f32.mrb[0].mxu0
    %1475 = vmatprep.mubr.f32.mxu0 0.0
    %1476 = vmatmul.mubr.f32.gmra.mrb[0].mxu0 %v226
    %v1477 = vpop.f32.mrb[0].mxu0
    %v1478 = vadd.f32 %v1093, %v1477
    %v1479 = vpop.f32.mrb[0].mxu0
    %1480 = vmatprep.mubr.f32.mxu0 0.0
    %1481 = vmatmul.mubr.f32.gmra.mrb[0].mxu0 %v227
    %v1482 = vpop.f32.mrb[0].mxu0
    %v1483 = vadd.f32 %v1098, %v1482
    %v1484 = vpop.f32.mrb[0].mxu0
    %1485 = vmatprep.mubr.f32.mxu0 0.0
    %1486 = vmatmul.mubr.f32.gmra.mrb[0].mxu0 %v228
    %v1487 = vpop.f32.mrb[0].mxu0
    %v1488 = vadd.f32 %v1103, %v1487
    %v1489 = vpop.f32.mrb[0].mxu0
    %1490 = vmatprep.mubr.f32.mxu0 0.0
    %1491 = vmatmul.mubr.f32.gmra.mrb[0].mxu0 %v229
    %v1492 = vpop.f32.mrb[0].mxu0
    %v1493 = vadd.f32 %v1108, %v1492
    %v1494 = vpop.f32.mrb[0].mxu0
    %1495 = vmatprep.mubr.f32.mxu0 0.0
    %1496 = vmatmul.mubr.f32.gmra.mrb[0].mxu0 %v230
    %v1497 = vpop.f32.mrb[0].mxu0
    %v1498 = vadd.f32 %v1113, %v1497
    %v1499 = vpop.f32.mrb[0].mxu0
    %1500 = vmatprep.mubr.f32.mxu0 0.0
    %1501 = vmatmul.mubr.f32.gmra.mrb[0].mxu0 %v231
    %v1502 = vpop.f32.mrb[0].mxu0
    %v1503 = vadd.f32 %v1118, %v1502
    %v1504 = vpop.f32.mrb[0].mxu0
    %1505 = vmatprep.mubr.f32.mxu0 0.0
    %1506 = vmatmul.mubr.f32.gmra.mrb[0].mxu0 %v232
    %v1507 = vpop.f32.mrb[0].mxu0
    %v1508 = vadd.f32 %v1123, %v1507
    %v1509 = vpop.f32.mrb[0].mxu0
    %1510 = vmatprep.mubr.f32.mxu0 0.0
    %1511 = vmatmul.mubr.f32.gmra.mrb[0].mxu0 %v233
    %v1512 = vpop.f32.mrb[0].mxu0
    %v1513 = vadd.f32 %v1128, %v1512
    %v1514 = vpop.f32.mrb[0].mxu0
    %1515 = vmatprep.mubr.f32.mxu0 0.0
    %1516 = vmatmul.mubr.f32.gmra.mrb[0].mxu0 %v234
    %v1517 = vpop.f32.mrb[0].mxu0
    %v1518 = vadd.f32 %v1133, %v1517
    %v1519 = vpop.f32.mrb[0].mxu0
    %1520 = vmatprep.mubr.f32.mxu0 0.0
    %1521 = vmatmul.mubr.f32.gmra.mrb[0].mxu0 %v235
    %v1522 = vpop.f32.mrb[0].mxu0
    %v1523 = vadd.f32 %v1138, %v1522
    %v1524 = vpop.f32.mrb[0].mxu0
    %1525 = vdwg.mxu0
    %vm1526 = vcmask 261120
    %1527 = vst.msk [vmem:[#allocation2] sm:$0xff] %vm1526, %v1208
    %1528 = vst.msk [vmem:[#allocation2 + $0x8] sm:$0xff] %vm1526, %v1213
    %1529 = vst.msk [vmem:[#allocation2 + $0x10] sm:$0xff] %vm1526, %v1218
    %1530 = vst.msk [vmem:[#allocation2 + $0x18] sm:$0xff] %vm1526, %v1223
    %1531 = vst.msk [vmem:[#allocation2 + $0x20] sm:$0xff] %vm1526, %v1228
    %1532 = vst.msk [vmem:[#allocation2 + $0x28] sm:$0xff] %vm1526, %v1233
    %1533 = vst.msk [vmem:[#allocation2 + $0x30] sm:$0xff] %vm1526, %v1238
    %1534 = vst.msk [vmem:[#allocation2 + $0x38] sm:$0xff] %vm1526, %v1243
    %1535 = vst.msk [vmem:[#allocation2 + $0x40] sm:$0xff] %vm1526, %v1248
    %1536 = vst.msk [vmem:[#allocation2 + $0x48] sm:$0xff] %vm1526, %v1253
    %1537 = vst.msk [vmem:[#allocation2 + $0x50] sm:$0xff] %vm1526, %v1258
    %1538 = vst.msk [vmem:[#allocation2 + $0x58] sm:$0xff] %vm1526, %v1263
    %1539 = vst.msk [vmem:[#allocation2 + $0x60] sm:$0xff] %vm1526, %v1268
    %1540 = vst.msk [vmem:[#allocation2 + $0x68] sm:$0xff] %vm1526, %v1273
    %1541 = vst.msk [vmem:[#allocation2 + $0x70] sm:$0xff] %vm1526, %v1278
    %1542 = vst.msk [vmem:[#allocation2 + $0x78] sm:$0xff] %vm1526, %v1283
    %1543 = vst.msk [vmem:[#allocation2 + $0x80] sm:$0xff] %vm1526, %v1288
    %1544 = vst.msk [vmem:[#allocation2 + $0x88] sm:$0xff] %vm1526, %v1293
    %1545 = vst.msk [vmem:[#allocation2 + $0x90] sm:$0xff] %vm1526, %v1298
    %1546 = vst.msk [vmem:[#allocation2 + $0x98] sm:$0xff] %vm1526, %v1303
    %1547 = vst.msk [vmem:[#allocation2 + $0xa0] sm:$0xff] %vm1526, %v1308
    %1548 = vst.msk [vmem:[#allocation2 + $0xa8] sm:$0xff] %vm1526, %v1313
    %1549 = vst.msk [vmem:[#allocation2 + $0xb0] sm:$0xff] %vm1526, %v1318
    %1550 = vst.msk [vmem:[#allocation2 + $0xb8] sm:$0xff] %vm1526, %v1323
    %1551 = vst.msk [vmem:[#allocation2 + $0xc0] sm:$0xff] %vm1526, %v1328
    %1552 = vst.msk [vmem:[#allocation2 + $0xc8] sm:$0xff] %vm1526, %v1333
    %1553 = vst.msk [vmem:[#allocation2 + $0xd0] sm:$0xff] %vm1526, %v1338
    %1554 = vst.msk [vmem:[#allocation2 + $0xd8] sm:$0xff] %vm1526, %v1343
    %1555 = vst.msk [vmem:[#allocation2 + $0xe0] sm:$0xff] %vm1526, %v1348
    %1556 = vst.msk [vmem:[#allocation2 + $0xe8] sm:$0xff] %vm1526, %v1353
    %1557 = vst.msk [vmem:[#allocation2 + $0xf0] sm:$0xff] %vm1526, %v1358
    %1558 = vst.msk [vmem:[#allocation2 + $0xf8] sm:$0xff] %vm1526, %v1363
    %1559 = vst.msk [vmem:[#allocation2 + $0x100] sm:$0xff] %vm1526, %v1368
    %1560 = vst.msk [vmem:[#allocation2 + $0x108] sm:$0xff] %vm1526, %v1373
    %1561 = vst.msk [vmem:[#allocation2 + $0x110] sm:$0xff] %vm1526, %v1378
    %1562 = vst.msk [vmem:[#allocation2 + $0x118] sm:$0xff] %vm1526, %v1383
    %1563 = vst.msk [vmem:[#allocation2 + $0x120] sm:$0xff] %vm1526, %v1388
    %1564 = vst.msk [vmem:[#allocation2 + $0x128] sm:$0xff] %vm1526, %v1393
    %1565 = vst.msk [vmem:[#allocation2 + $0x130] sm:$0xff] %vm1526, %v1398
    %1566 = vst.msk [vmem:[#allocation2 + $0x138] sm:$0xff] %vm1526, %v1403
    %1567 = vst.msk [vmem:[#allocation2 + $0x140] sm:$0xff] %vm1526, %v1408
    %1568 = vst.msk [vmem:[#allocation2 + $0x148] sm:$0xff] %vm1526, %v1413
    %1569 = vst.msk [vmem:[#allocation2 + $0x150] sm:$0xff] %vm1526, %v1418
    %1570 = vst.msk [vmem:[#allocation2 + $0x158] sm:$0xff] %vm1526, %v1423
    %1571 = vst.msk [vmem:[#allocation2 + $0x160] sm:$0xff] %vm1526, %v1428
    %1572 = vst.msk [vmem:[#allocation2 + $0x168] sm:$0xff] %vm1526, %v1433
    %1573 = vst.msk [vmem:[#allocation2 + $0x170] sm:$0xff] %vm1526, %v1438
    %1574 = vst.msk [vmem:[#allocation2 + $0x178] sm:$0xff] %vm1526, %v1443
    %1575 = vst.msk [vmem:[#allocation2 + $0x180] sm:$0xff] %vm1526, %v1448
    %1576 = vst.msk [vmem:[#allocation2 + $0x188] sm:$0xff] %vm1526, %v1453
    %1577 = vst.msk [vmem:[#allocation2 + $0x190] sm:$0xff] %vm1526, %v1458
    %1578 = vst.msk [vmem:[#allocation2 + $0x198] sm:$0xff] %vm1526, %v1463
    %1579 = vst.msk [vmem:[#allocation2 + $0x1a0] sm:$0xff] %vm1526, %v1468
    %1580 = vst.msk [vmem:[#allocation2 + $0x1a8] sm:$0xff] %vm1526, %v1473
    %1581 = vst.msk [vmem:[#allocation2 + $0x1b0] sm:$0xff] %vm1526, %v1478
    %1582 = vst.msk [vmem:[#allocation2 + $0x1b8] sm:$0xff] %vm1526, %v1483
    %1583 = vst.msk [vmem:[#allocation2 + $0x1c0] sm:$0xff] %vm1526, %v1488
    %1584 = vst.msk [vmem:[#allocation2 + $0x1c8] sm:$0xff] %vm1526, %v1493
    %1585 = vst.msk [vmem:[#allocation2 + $0x1d0] sm:$0xff] %vm1526, %v1498
    %1586 = vst.msk [vmem:[#allocation2 + $0x1d8] sm:$0xff] %vm1526, %v1503
    %1587 = vst.msk [vmem:[#allocation2 + $0x1e0] sm:$0xff] %vm1526, %v1508
    %1588 = vst.msk [vmem:[#allocation2 + $0x1e8] sm:$0xff] %vm1526, %v1513
    %1589 = vst.msk [vmem:[#allocation2 + $0x1f0] sm:$0xff] %vm1526, %v1518
    %1590 = vst.msk [vmem:[#allocation2 + $0x1f8] sm:$0xff] %vm1526, %v1523
    // Predicated region
    $region34: #{inception_forward.5} parent=1 // pred_check
      _
    $region35: #{inception_forward.5} parent=1 // pred_check_branch
      %1592 = sbr.rel (0) target = $region37
    $region36: #{inception_forward.5} parent=1 // pred_region
      %s1594 = ssub.s32 8192, 8192
      %1595 = vsyncadd [#allocation3], %s1594
      %s1596 = sshll.u32 [#allocation2], 4
      %s1597 = int_to_ptr.vmem [resolvable:$true] %s1596
      %1602 = dma.vmem_to_hbm [thread:$0]  %s1597, 8192, %s8, [#allocation3], 128, 128, 8
    $region37: #{inception_forward.5} parent=1 // pred_fallthru
      _
    // Predicated region
    $region38: #{inception_forward.5} parent=1 // pred_check
      _
    $region39: #{inception_forward.5} parent=1 // pred_check_branch
      %1604 = sbr.rel (0) target = $region41
    $region40: #{inception_forward.5} parent=1 // pred_region
      %1605 = dma.done [#allocation3], 8192
    $region41: #{inception_forward.5} parent=1 // pred_fallthru
      _
    %1606 = vsyncpa [#allocation3], 1

// kernel: inception_forward.4
$region0: #{inception_forward.4}
  #allocation0 [shape = 'u32[]', space=smem, size = 0x4, offset = 0x4, fixed_abs, tag = 'smem constant byte address 0x4 - core index']
  #allocation1 [shape = 'u32[144,128]{1,0:T(1,128)}', space=vmem, size = 0x12000, scoped, tag = 'internal scratch']
  #allocation2 [shape = 'f32[20,20,128]{2,1,0:T(8,128)}', space=vmem, size = 0x3c000, scoped, tag = 'scratch operand']
  #allocation3 [shape = 'bf16[128,3200]{1,0:T(16,128)(2,1)}', space=vmem, size = 0xc8000, scoped, tag = 'scratch operand']
  %s0 = inlined_call_operand.vmem [shape: f32[2,16,16,128], index: 0, kind: input, shape index: {}]
  %s1 = inlined_call_operand.vmem [shape: f32[1,128], index: 1, kind: input, shape index: {}]
  %s2 = inlined_call_operand.vmem [shape: f32[1,128], index: 2, kind: input, shape index: {}]
  %s3 = inlined_call_operand.vmem [shape: bf16[3200,256], index: 3, kind: input, shape index: {}]
  %s4 = inlined_call_operand.vmem [shape: bf16[512,256], index: 4, kind: output, shape index: {0}]
  %s5 = inlined_call_operand.vmem [shape: f32[4,8,256], index: 5, kind: output, shape index: {1}]
  %6 = xla_tuple %s4, %s5
  %s7 = sld [smem:[#allocation0]]
  $region61: #{inception_forward.4} parent=0
    _
  %s9 = ssub.s32 1, %s7
  %s10 = scalar_select 0, %s9, %s7
  loop: start=0, step=1, limit=6
  $region2: #{inception_forward.4} parent=0 // loop_pre_header
    _
  $region3: #{inception_forward.4} parent=0 // loop_header
    %s12 = sphi 0, %s16
    %p13 = scmp.ge.s32.totalorder %s12, 6
    %s19 = sphi 0, %s31
    %s20 = sphi 0, %s27
    %s21 = sphi 0, %s19
    %s22 = sphi 0, %s20
    %s23 = sphi 0, %s21
    %s24 = sphi 0, %s22
    %s34 = sphi 0, %s36
    %s37 = sphi 0, %s34
    %s38 = sphi 0, %s37
    %s54 = sphi 0, %s38
    %s58 = sphi 0, %s58
    %s60 = sphi 0, %s58
    %s61 = sphi 0, %s60
    %s75 = sphi 0, %s61
    %s79 = sphi 0, %s79
    %s81 = sphi 0, %s79
    %s82 = sphi 0, %s81
    %s96 = sphi 0, %s82
    %s100 = sphi 0, %s100
    %s102 = sphi 0, %s100
    %s103 = sphi 0, %s102
    %s117 = sphi 0, %s103
    %s127 = sphi 0, %s129
    %s130 = sphi 0, %s127
    %s131 = sphi 0, %s130
    %s147 = sphi 0, %s131
    %s157 = sphi 0, %s159
    %s160 = sphi 0, %s157
    %s161 = sphi 0, %s160
    %s177 = sphi 0, %s161
  $region4: #{inception_forward.4} parent=0 // loop_header_branch
    %15 = sbr.rel (%p13) target = $region8
  $region5: #{inception_forward.4} parent=0 // loop_body
    %s17 = ssub.s32 %s12, 1
    %s18 = ssub.s32 %s12, 2
    %s25 = sadd.s32 1, %s20
    %p26 = scmp.ge.s32.totalorder %s25, 2
    %s27 = scalar_select %p26, 0, %s25
    %s28 = sadd.s32 1, %s19
    %s29 = scalar_select %p26, %s28, %s19
    %p30 = scmp.ge.s32.totalorder %s29, 2
    %s31 = scalar_select %p30, 0, %s29
    %s32 = ssub.s32 %s19, %s31
    %p33 = scmp.eq.s32.totalorder %s32, 0
    %s35 = sadd.s32 %s34, 1
    %s36 = scalar_select %p33, %s34, %s35
    %p39 = pneg %p33
    %p40 = scmp.eq.s32.totalorder %s12, 3
    %p41 = por %p39, %p40
    %p42 = scmp.ne.s32.totalorder %s34, %s37
    %p43 = scmp.eq.s32.totalorder %s12, 0
    %p44 = por %p42, %p43
    %p45 = scmp.ne.s32.totalorder %s34, %s37
    %p46 = scmp.eq.s32.totalorder %s17, 3
    %p47 = por %p45, %p46
    %p48 = scmp.ne.s32.totalorder %s37, %s38
    %p49 = scmp.eq.s32.totalorder %s17, 0
    %p50 = por %p48, %p49
    %p51 = scmp.ne.s32.totalorder %s37, %s38
    %p52 = scmp.eq.s32.totalorder %s18, 3
    %p53 = por %p51, %p52
    %p55 = scmp.ne.s32.totalorder %s38, %s54
    %p56 = scmp.eq.s32.totalorder %s18, 0
    %p57 = por %p55, %p56
    %s59 = sadd.s32 %s58, 1
    %p62 = scmp.eq.s32.totalorder %s12, 3
    %p63 = scmp.ne.s32.totalorder %s58, %s60
    %p64 = scmp.eq.s32.totalorder %s12, 0
    %p65 = por %p63, %p64
    %p66 = scmp.ne.s32.totalorder %s58, %s60
    %p67 = scmp.eq.s32.totalorder %s17, 3
    %p68 = por %p66, %p67
    %p69 = scmp.ne.s32.totalorder %s60, %s61
    %p70 = scmp.eq.s32.totalorder %s17, 0
    %p71 = por %p69, %p70
    %p72 = scmp.ne.s32.totalorder %s60, %s61
    %p73 = scmp.eq.s32.totalorder %s18, 3
    %p74 = por %p72, %p73
    %p76 = scmp.ne.s32.totalorder %s61, %s75
    %p77 = scmp.eq.s32.totalorder %s18, 0
    %p78 = por %p76, %p77
    %s80 = sadd.s32 %s79, 1
    %p83 = scmp.eq.s32.totalorder %s12, 3
    %p84 = scmp.ne.s32.totalorder %s79, %s81
    %p85 = scmp.eq.s32.totalorder %s12, 0
    %p86 = por %p84, %p85
    %p87 = scmp.ne.s32.totalorder %s79, %s81
    %p88 = scmp.eq.s32.totalorder %s17, 3
    %p89 = por %p87, %p88
    %p90 = scmp.ne.s32.totalorder %s81, %s82
    %p91 = scmp.eq.s32.totalorder %s17, 0
    %p92 = por %p90, %p91
    %p93 = scmp.ne.s32.totalorder %s81, %s82
    %p94 = scmp.eq.s32.totalorder %s18, 3
    %p95 = por %p93, %p94
    %p97 = scmp.ne.s32.totalorder %s82, %s96
    %p98 = scmp.eq.s32.totalorder %s18, 0
    %p99 = por %p97, %p98
    %s101 = sadd.s32 %s100, 1
    %p104 = scmp.eq.s32.totalorder %s12, 3
    %p105 = scmp.ne.s32.totalorder %s100, %s102
    %p106 = scmp.eq.s32.totalorder %s12, 0
    %p107 = por %p105, %p106
    %p108 = scmp.ne.s32.totalorder %s100, %s102
    %p109 = scmp.eq.s32.totalorder %s17, 3
    %p110 = por %p108, %p109
    %p111 = scmp.ne.s32.totalorder %s102, %s103
    %p112 = scmp.eq.s32.totalorder %s17, 0
    %p113 = por %p111, %p112
    %p114 = scmp.ne.s32.totalorder %s102, %s103
    %p115 = scmp.eq.s32.totalorder %s18, 3
    %p116 = por %p114, %p115
    %p118 = scmp.ne.s32.totalorder %s103, %s117
    %p119 = scmp.eq.s32.totalorder %s18, 0
    %p120 = por %p118, %p119
    %s121 = smul.u32 %s19, 2
    %s122 = sadd.s32 %s121, %s20
    %s123 = smul.u32 %s31, 2
    %s124 = sadd.s32 %s123, %s27
    %s125 = ssub.s32 %s122, %s124
    %p126 = scmp.eq.s32.totalorder %s125, 0
    %s128 = sadd.s32 %s127, 1
    %s129 = scalar_select %p126, %s127, %s128
    %p132 = pneg %p126
    %p133 = scmp.eq.s32.totalorder %s12, 3
    %p134 = por %p132, %p133
    %p135 = scmp.ne.s32.totalorder %s127, %s130
    %p136 = scmp.eq.s32.totalorder %s12, 0
    %p137 = por %p135, %p136
    %p138 = scmp.ne.s32.totalorder %s127, %s130
    %p139 = scmp.eq.s32.totalorder %s17, 3
    %p140 = por %p138, %p139
    %p141 = scmp.ne.s32.totalorder %s130, %s131
    %p142 = scmp.eq.s32.totalorder %s17, 0
    %p143 = por %p141, %p142
    %p144 = scmp.ne.s32.totalorder %s130, %s131
    %p145 = scmp.eq.s32.totalorder %s18, 3
    %p146 = por %p144, %p145
    %p148 = scmp.ne.s32.totalorder %s131, %s147
    %p149 = scmp.eq.s32.totalorder %s18, 0
    %p150 = por %p148, %p149
    %s151 = smul.u32 %s19, 2
    %s152 = sadd.s32 %s151, %s20
    %s153 = smul.u32 %s31, 2
    %s154 = sadd.s32 %s153, %s27
    %s155 = ssub.s32 %s152, %s154
    %p156 = scmp.eq.s32.totalorder %s155, 0
    %s158 = sadd.s32 %s157, 1
    %s159 = scalar_select %p156, %s157, %s158
    %p162 = pneg %p156
    %p163 = scmp.eq.s32.totalorder %s12, 3
    %p164 = por %p162, %p163
    %p165 = scmp.ne.s32.totalorder %s157, %s160
    %p166 = scmp.eq.s32.totalorder %s12, 0
    %p167 = por %p165, %p166
    %p168 = scmp.ne.s32.totalorder %s157, %s160
    %p169 = scmp.eq.s32.totalorder %s17, 3
    %p170 = por %p168, %p169
    %p171 = scmp.ne.s32.totalorder %s160, %s161
    %p172 = scmp.eq.s32.totalorder %s17, 0
    %p173 = por %p171, %p172
    %p174 = scmp.ne.s32.totalorder %s160, %s161
    %p175 = scmp.eq.s32.totalorder %s18, 3
    %p176 = por %p174, %p175
    %p178 = scmp.ne.s32.totalorder %s161, %s177
    %p179 = scmp.eq.s32.totalorder %s18, 0
    %p180 = por %p178, %p179
    %p181 = scmp.le.s32.totalorder 1, %s12
    %p182 = scmp.lt.s32.totalorder %s12, 5
    %p183 = pnand %p181, %p182
    %p184 = pneg %p183
    // Predicated region
    $region9: #{inception_forward.4} parent=5 // pred_check
      _
    $region10: #{inception_forward.4} parent=5 // pred_check_branch
      %186 = sbr.rel (%p183) target = $region12
    $region11: #{inception_forward.4} parent=5 // pred_region
      %s187 = ssub.s32 %s12, 1
      // Predicated region
      $region13: #{inception_forward.4} parent=11 // pred_check
        %p188 = pneg %p71
      $region14: #{inception_forward.4} parent=11 // pred_check_branch
        %190 = sbr.rel (%p188) target = $region16
      $region15: #{inception_forward.4} parent=11 // pred_region
        _
      $region16: #{inception_forward.4} parent=11 // pred_fallthru
        _
      // Predicated region
      $region17: #{inception_forward.4} parent=11 // pred_check
        %p191 = pneg %p92
      $region18: #{inception_forward.4} parent=11 // pred_check_branch
        %193 = sbr.rel (%p191) target = $region20
      $region19: #{inception_forward.4} parent=11 // pred_region
        _
      $region20: #{inception_forward.4} parent=11 // pred_fallthru
        _
      // Predicated region
      $region21: #{inception_forward.4} parent=11 // pred_check
        %p194 = pneg %p113
      $region22: #{inception_forward.4} parent=11 // pred_check_branch
        %196 = sbr.rel (%p194) target = $region24
      $region23: #{inception_forward.4} parent=11 // pred_region
        _
      $region24: #{inception_forward.4} parent=11 // pred_fallthru
        _
    $region12: #{inception_forward.4} parent=5 // pred_fallthru
      _
    %p197 = scmp.lt.s32.totalorder %s12, 4
    // Predicated region
    $region25: #{inception_forward.4} parent=5 // pred_check
      %p198 = pneg %p197
    $region26: #{inception_forward.4} parent=5 // pred_check_branch
      %200 = sbr.rel (%p198) target = $region28
    $region27: #{inception_forward.4} parent=5 // pred_region
      // Predicated region
      $region29: #{inception_forward.4} parent=27 // pred_check
        %p201 = pneg %p44
      $region30: #{inception_forward.4} parent=27 // pred_check_branch
        %203 = sbr.rel (%p201) target = $region32
      $region31: #{inception_forward.4} parent=27 // pred_region
        %p204 = scmp.lt.s32.totalorder %s19, 1
        %s205 = scalar_select %p204, %s19, 1
        %s206 = smul.addr %s205, 32
        %s207 = smul.addr %s206, 8
        %s208 = scalar_lea.vmem %s0, %s207
      $region32: #{inception_forward.4} parent=27 // pred_fallthru
        _
    $region28: #{inception_forward.4} parent=5 // pred_fallthru
      _
    %p209 = scmp.le.s32.totalorder 1, %s12
    %p210 = scmp.lt.s32.totalorder %s12, 5
    %p211 = pnand %p209, %p210
    %p212 = pneg %p211
    // Predicated region
    $region33: #{inception_forward.4} parent=5 // pred_check
      _
    $region34: #{inception_forward.4} parent=5 // pred_check_branch
      %214 = sbr.rel (%p211) target = $region36
    $region35: #{inception_forward.4} parent=5 // pred_region
      %s215 = ssub.s32 %s12, 1
      %p216 = scmp.lt.s32.totalorder %s21, 1
      %s217 = scalar_select %p216, %s21, 1
      %s218 = smul.addr %s217, 32
      %s219 = smul.addr %s218, 8
      %s220 = scalar_lea.vmem %s0, %s219
      %p221 = pneg %p50
      %p222 = pneg %p47
      %p223 = pneg %p71
      %p224 = pneg %p68
      %p225 = pneg %p92
      %p226 = pneg %p89
      %p227 = pneg %p113
      %p228 = pneg %p110
      %p229 = pneg %p143
      %p230 = pneg %p140
      %s231 = smul.u32 %s21, 2
      %s232 = sadd.s32 %s231, %s22
      %s233 = smul.u32 16, %s232
      %p234 = scmp.lt.s32.totalorder %s233, 63
      %s235 = scalar_select %p234, %s233, 63
      %s236 = smul.addr %s235, 2
      %s237 = smul.addr %s236, 4
      %s238 = scalar_lea.vmem %s4, %s237
      %p239 = pneg %p173
      %p240 = pneg %p170
      %s241 = smul.u32 %s21, 2
      %s242 = sadd.s32 %s241, %s22
      %p243 = scmp.lt.s32.totalorder %s242, 3
      %s244 = scalar_select %p243, %s242, 3
      %s245 = smul.addr %s244, 2
      %s246 = smul.addr %s245, 8
      %s247 = scalar_lea.vmem %s5, %s246
      %p248 = scmp.lt.s32.totalorder %s21, 1
      %s249 = scalar_select %p248, %s21, 1
      %s250 = smul.addr %s249, 32
      %s251 = smul.addr %s250, 8
      %s252 = scalar_lea.vmem %s0, %s251
      %s253 = smul.u32 %s21, 2
      %s254 = sadd.s32 %s253, %s22
      %s255 = smul.u32 16, %s254
      %p256 = scmp.lt.s32.totalorder %s255, 63
      %s257 = scalar_select %p256, %s255, 63
      %s258 = smul.addr %s257, 2
      %s259 = smul.addr %s258, 4
      %s260 = scalar_lea.vmem %s4, %s259
      %s261 = smul.u32 %s21, 2
      %s262 = sadd.s32 %s261, %s22
      %s263 = smul.u32 16, %s262
      %s264 = smul.u32 %s21, 2
      %s265 = sadd.s32 %s264, %s22
      %p266 = scmp.lt.s32.totalorder %s265, 3
      %s267 = scalar_select %p266, %s265, 3
      %s268 = smul.addr %s267, 2
      %s269 = smul.addr %s268, 8
      %s270 = scalar_lea.vmem %s5, %s269
      %s271 = smul.u32 %s21, 2
      %s272 = sadd.s32 %s271, %s22
      %p274 = scmp.eq.s32.totalorder %s22, 0
      // Predicated region
      $region37: #{inception_forward.4} parent=35 // pred_check
        %p275 = pneg %p274
      $region38: #{inception_forward.4} parent=35 // pred_check_branch
        %277 = sbr.rel (%p275) target = $region40
      $region39: #{inception_forward.4} parent=35 // pred_region
        %278 = vst [vmem:[#allocation2] sm:$0xff] 0.0
        %279 = vst [vmem:[#allocation2 + $0x8] sm:$0xff] 0.0
        %280 = vst [vmem:[#allocation2 + $0x10] sm:$0xf] 0.0
        %281 = vst [vmem:[#allocation2 + $0x18] sm:$0xff] 0.0
        %282 = vst [vmem:[#allocation2 + $0x20] sm:$0xff] 0.0
        %283 = vst [vmem:[#allocation2 + $0x28] sm:$0xf] 0.0
        %284 = vst [vmem:[#allocation2 + $0x30] sm:$0xff] 0.0
        %285 = vst [vmem:[#allocation2 + $0x38] sm:$0xff] 0.0
        %286 = vst [vmem:[#allocation2 + $0x40] sm:$0xf] 0.0
        %287 = vst [vmem:[#allocation2 + $0x48] sm:$0xff] 0.0
        %288 = vst [vmem:[#allocation2 + $0x50] sm:$0xff] 0.0
        %289 = vst [vmem:[#allocation2 + $0x58] sm:$0xf] 0.0
        %290 = vst [vmem:[#allocation2 + $0x60] sm:$0xff] 0.0
        %291 = vst [vmem:[#allocation2 + $0x68] sm:$0xff] 0.0
        %292 = vst [vmem:[#allocation2 + $0x70] sm:$0xf] 0.0
        %293 = vst [vmem:[#allocation2 + $0x78] sm:$0xff] 0.0
        %294 = vst [vmem:[#allocation2 + $0x80] sm:$0xff] 0.0
        %295 = vst [vmem:[#allocation2 + $0x88] sm:$0xf] 0.0
        %296 = vst [vmem:[#allocation2 + $0x90] sm:$0xff] 0.0
        %297 = vst [vmem:[#allocation2 + $0x98] sm:$0xff] 0.0
        %298 = vst [vmem:[#allocation2 + $0xa0] sm:$0xf] 0.0
        %299 = vst [vmem:[#allocation2 + $0xa8] sm:$0xff] 0.0
        %300 = vst [vmem:[#allocation2 + $0xb0] sm:$0xff] 0.0
        %301 = vst [vmem:[#allocation2 + $0xb8] sm:$0xf] 0.0
        %302 = vst [vmem:[#allocation2 + $0xc0] sm:$0xff] 0.0
        %303 = vst [vmem:[#allocation2 + $0xc8] sm:$0xff] 0.0
        %304 = vst [vmem:[#allocation2 + $0xd0] sm:$0xf] 0.0
        %305 = vst [vmem:[#allocation2 + $0xd8] sm:$0xff] 0.0
        %306 = vst [vmem:[#allocation2 + $0xe0] sm:$0xff] 0.0
        %307 = vst [vmem:[#allocation2 + $0xe8] sm:$0xf] 0.0
        %308 = vst [vmem:[#allocation2 + $0xf0] sm:$0xff] 0.0
        %309 = vst [vmem:[#allocation2 + $0xf8] sm:$0xff] 0.0
        %310 = vst [vmem:[#allocation2 + $0x100] sm:$0xf] 0.0
        %311 = vst [vmem:[#allocation2 + $0x108] sm:$0xff] 0.0
        %312 = vst [vmem:[#allocation2 + $0x110] sm:$0xff] 0.0
        %313 = vst [vmem:[#allocation2 + $0x118] sm:$0xf] 0.0
        %314 = vst [vmem:[#allocation2 + $0x120] sm:$0xff] 0.0
        %315 = vst [vmem:[#allocation2 + $0x128] sm:$0xff] 0.0
        %316 = vst [vmem:[#allocation2 + $0x130] sm:$0xf] 0.0
        %317 = vst [vmem:[#allocation2 + $0x138] sm:$0xff] 0.0
        %318 = vst [vmem:[#allocation2 + $0x140] sm:$0xff] 0.0
        %319 = vst [vmem:[#allocation2 + $0x148] sm:$0xf] 0.0
        %320 = vst [vmem:[#allocation2 + $0x150] sm:$0xff] 0.0
        %321 = vst [vmem:[#allocation2 + $0x158] sm:$0xff] 0.0
        %322 = vst [vmem:[#allocation2 + $0x160] sm:$0xf] 0.0
        %323 = vst [vmem:[#allocation2 + $0x168] sm:$0xff] 0.0
        %324 = vst [vmem:[#allocation2 + $0x170] sm:$0xff] 0.0
        %325 = vst [vmem:[#allocation2 + $0x178] sm:$0xf] 0.0
        %326 = vst [vmem:[#allocation2 + $0x180] sm:$0xff] 0.0
        %327 = vst [vmem:[#allocation2 + $0x188] sm:$0xff] 0.0
        %328 = vst [vmem:[#allocation2 + $0x190] sm:$0xf] 0.0
        %329 = vst [vmem:[#allocation2 + $0x198] sm:$0xff] 0.0
        %330 = vst [vmem:[#allocation2 + $0x1a0] sm:$0xff] 0.0
        %331 = vst [vmem:[#allocation2 + $0x1a8] sm:$0xf] 0.0
        %332 = vst [vmem:[#allocation2 + $0x1b0] sm:$0xff] 0.0
        %333 = vst [vmem:[#allocation2 + $0x1b8] sm:$0xff] 0.0
        %334 = vst [vmem:[#allocation2 + $0x1c0] sm:$0xf] 0.0
        %335 = vst [vmem:[#allocation2 + $0x1c8] sm:$0xff] 0.0
        %336 = vst [vmem:[#allocation2 + $0x1d0] sm:$0xff] 0.0
        %337 = vst [vmem:[#allocation2 + $0x1d8] sm:$0xf] 0.0
        %v338 = vld [vmem:[%s252] sm:$0xff]
        %v339 = vld [vmem:[%s252 + $0x8] sm:$0xff]
        %v340 = vld [vmem:[%s252 + $0x10] sm:$0xff]
        %v341 = vld [vmem:[%s252 + $0x18] sm:$0xff]
        %v342 = vld [vmem:[%s252 + $0x20] sm:$0xff]
        %v343 = vld [vmem:[%s252 + $0x28] sm:$0xff]
        %v344 = vld [vmem:[%s252 + $0x30] sm:$0xff]
        %v345 = vld [vmem:[%s252 + $0x38] sm:$0xff]
        %v346 = vld [vmem:[%s252 + $0x40] sm:$0xff]
        %v347 = vld [vmem:[%s252 + $0x48] sm:$0xff]
        %v348 = vld [vmem:[%s252 + $0x50] sm:$0xff]
        %v349 = vld [vmem:[%s252 + $0x58] sm:$0xff]
        %v350 = vld [vmem:[%s252 + $0x60] sm:$0xff]
        %v351 = vld [vmem:[%s252 + $0x68] sm:$0xff]
        %v352 = vld [vmem:[%s252 + $0x70] sm:$0xff]
        %v353 = vld [vmem:[%s252 + $0x78] sm:$0xff]
        %v354 = vld [vmem:[%s252 + $0x80] sm:$0xff]
        %v355 = vld [vmem:[%s252 + $0x88] sm:$0xff]
        %v356 = vld [vmem:[%s252 + $0x90] sm:$0xff]
        %v357 = vld [vmem:[%s252 + $0x98] sm:$0xff]
        %v358 = vld [vmem:[%s252 + $0xa0] sm:$0xff]
        %v359 = vld [vmem:[%s252 + $0xa8] sm:$0xff]
        %v360 = vld [vmem:[%s252 + $0xb0] sm:$0xff]
        %v361 = vld [vmem:[%s252 + $0xb8] sm:$0xff]
        %v362 = vld [vmem:[%s252 + $0xc0] sm:$0xff]
        %v363 = vld [vmem:[%s252 + $0xc8] sm:$0xff]
        %v364 = vld [vmem:[%s252 + $0xd0] sm:$0xff]
        %v365 = vld [vmem:[%s252 + $0xd8] sm:$0xff]
        %v366 = vld [vmem:[%s252 + $0xe0] sm:$0xff]
        %v367 = vld [vmem:[%s252 + $0xe8] sm:$0xff]
        %v368 = vld [vmem:[%s252 + $0xf0] sm:$0xff]
        %v369 = vld [vmem:[%s252 + $0xf8] sm:$0xff]
        %v370 = vld [vmem:[%s1] sm:$0x1]
        %v372 = vlaneseq
        %v373 = vshrl.u32 %v372, 7
        %v374 = vsub.s32 0, %v373
        %v375 = vrot.slane %v370, %v374
        %v377 = vmul.f32 %v338, %v375
        %v378 = vmul.f32 %v339, %v375
        %v379 = vmul.f32 %v340, %v375
        %v380 = vmul.f32 %v341, %v375
        %v381 = vmul.f32 %v342, %v375
        %v382 = vmul.f32 %v343, %v375
        %v383 = vmul.f32 %v344, %v375
        %v384 = vmul.f32 %v345, %v375
        %v385 = vmul.f32 %v346, %v375
        %v386 = vmul.f32 %v347, %v375
        %v387 = vmul.f32 %v348, %v375
        %v388 = vmul.f32 %v349, %v375
        %v389 = vmul.f32 %v350, %v375
        %v390 = vmul.f32 %v351, %v375
        %v391 = vmul.f32 %v352, %v375
        %v392 = vmul.f32 %v353, %v375
        %v393 = vmul.f32 %v354, %v375
        %v394 = vmul.f32 %v355, %v375
        %v395 = vmul.f32 %v356, %v375
        %v396 = vmul.f32 %v357, %v375
        %v397 = vmul.f32 %v358, %v375
        %v398 = vmul.f32 %v359, %v375
        %v399 = vmul.f32 %v360, %v375
        %v400 = vmul.f32 %v361, %v375
        %v401 = vmul.f32 %v362, %v375
        %v402 = vmul.f32 %v363, %v375
        %v403 = vmul.f32 %v364, %v375
        %v404 = vmul.f32 %v365, %v375
        %v405 = vmul.f32 %v366, %v375
        %v406 = vmul.f32 %v367, %v375
        %v407 = vmul.f32 %v368, %v375
        %v408 = vmul.f32 %v369, %v375
        %v409 = vld [vmem:[%s2] sm:$0x1]
        %v411 = vlaneseq
        %v412 = vshrl.u32 %v411, 7
        %v413 = vsub.s32 0, %v412
        %v414 = vrot.slane %v409, %v413
        %v416 = vadd.f32 %v377, %v414
        %v417 = vadd.f32 %v378, %v414
        %v418 = vadd.f32 %v379, %v414
        %v419 = vadd.f32 %v380, %v414
        %v420 = vadd.f32 %v381, %v414
        %v421 = vadd.f32 %v382, %v414
        %v422 = vadd.f32 %v383, %v414
        %v423 = vadd.f32 %v384, %v414
        %v424 = vadd.f32 %v385, %v414
        %v425 = vadd.f32 %v386, %v414
        %v426 = vadd.f32 %v387, %v414
        %v427 = vadd.f32 %v388, %v414
        %v428 = vadd.f32 %v389, %v414
        %v429 = vadd.f32 %v390, %v414
        %v430 = vadd.f32 %v391, %v414
        %v431 = vadd.f32 %v392, %v414
        %v432 = vadd.f32 %v393, %v414
        %v433 = vadd.f32 %v394, %v414
        %v434 = vadd.f32 %v395, %v414
        %v435 = vadd.f32 %v396, %v414
        %v436 = vadd.f32 %v397, %v414
        %v437 = vadd.f32 %v398, %v414
        %v438 = vadd.f32 %v399, %v414
        %v439 = vadd.f32 %v400, %v414
        %v440 = vadd.f32 %v401, %v414
        %v441 = vadd.f32 %v402, %v414
        %v442 = vadd.f32 %v403, %v414
        %v443 = vadd.f32 %v404, %v414
        %v444 = vadd.f32 %v405, %v414
        %v445 = vadd.f32 %v406, %v414
        %v446 = vadd.f32 %v407, %v414
        %v447 = vadd.f32 %v408, %v414
        %v448 = vmax.f32 %v416, 0.0
        %v449 = vmax.f32 %v417, 0.0
        %v450 = vmax.f32 %v418, 0.0
        %v451 = vmax.f32 %v419, 0.0
        %v452 = vmax.f32 %v420, 0.0
        %v453 = vmax.f32 %v421, 0.0
        %v454 = vmax.f32 %v422, 0.0
        %v455 = vmax.f32 %v423, 0.0
        %v456 = vmax.f32 %v424, 0.0
        %v457 = vmax.f32 %v425, 0.0
        %v458 = vmax.f32 %v426, 0.0
        %v459 = vmax.f32 %v427, 0.0
        %v460 = vmax.f32 %v428, 0.0
        %v461 = vmax.f32 %v429, 0.0
        %v462 = vmax.f32 %v430, 0.0
        %v463 = vmax.f32 %v431, 0.0
        %v464 = vmax.f32 %v432, 0.0
        %v465 = vmax.f32 %v433, 0.0
        %v466 = vmax.f32 %v434, 0.0
        %v467 = vmax.f32 %v435, 0.0
        %v468 = vmax.f32 %v436, 0.0
        %v469 = vmax.f32 %v437, 0.0
        %v470 = vmax.f32 %v438, 0.0
        %v471 = vmax.f32 %v439, 0.0
        %v472 = vmax.f32 %v440, 0.0
        %v473 = vmax.f32 %v441, 0.0
        %v474 = vmax.f32 %v442, 0.0
        %v475 = vmax.f32 %v443, 0.0
        %v476 = vmax.f32 %v444, 0.0
        %v477 = vmax.f32 %v445, 0.0
        %v478 = vmax.f32 %v446, 0.0
        %v479 = vmax.f32 %v447, 0.0
        %s480 = scalar_lea.vmem [#allocation2], 48
        %481 = vst [vmem:[%s480 + $0x2] sm:$0xff] %v448
        %482 = vst [vmem:[%s480 + $0xa] sm:$0xff] %v449
        %483 = vst [vmem:[%s480 + $0x1a] sm:$0xff] %v450
        %484 = vst [vmem:[%s480 + $0x22] sm:$0xff] %v451
        %485 = vst [vmem:[%s480 + $0x32] sm:$0xff] %v452
        %486 = vst [vmem:[%s480 + $0x3a] sm:$0xff] %v453
        %487 = vst [vmem:[%s480 + $0x4a] sm:$0xff] %v454
        %488 = vst [vmem:[%s480 + $0x52] sm:$0xff] %v455
        %489 = vst [vmem:[%s480 + $0x62] sm:$0xff] %v456
        %490 = vst [vmem:[%s480 + $0x6a] sm:$0xff] %v457
        %491 = vst [vmem:[%s480 + $0x7a] sm:$0xff] %v458
        %492 = vst [vmem:[%s480 + $0x82] sm:$0xff] %v459
        %493 = vst [vmem:[%s480 + $0x92] sm:$0xff] %v460
        %494 = vst [vmem:[%s480 + $0x9a] sm:$0xff] %v461
        %495 = vst [vmem:[%s480 + $0xaa] sm:$0xff] %v462
        %496 = vst [vmem:[%s480 + $0xb2] sm:$0xff] %v463
        %497 = vst [vmem:[%s480 + $0xc2] sm:$0xff] %v464
        %498 = vst [vmem:[%s480 + $0xca] sm:$0xff] %v465
        %499 = vst [vmem:[%s480 + $0xda] sm:$0xff] %v466
        %500 = vst [vmem:[%s480 + $0xe2] sm:$0xff] %v467
        %501 = vst [vmem:[%s480 + $0xf2] sm:$0xff] %v468
        %502 = vst [vmem:[%s480 + $0xfa] sm:$0xff] %v469
        %503 = vst [vmem:[%s480 + $0x10a] sm:$0xff] %v470
        %504 = vst [vmem:[%s480 + $0x112] sm:$0xff] %v471
        %505 = vst [vmem:[%s480 + $0x122] sm:$0xff] %v472
        %506 = vst [vmem:[%s480 + $0x12a] sm:$0xff] %v473
        %507 = vst [vmem:[%s480 + $0x13a] sm:$0xff] %v474
        %508 = vst [vmem:[%s480 + $0x142] sm:$0xff] %v475
        %509 = vst [vmem:[%s480 + $0x152] sm:$0xff] %v476
        %510 = vst [vmem:[%s480 + $0x15a] sm:$0xff] %v477
        %511 = vst [vmem:[%s480 + $0x16a] sm:$0xff] %v478
        %512 = vst [vmem:[%s480 + $0x172] sm:$0xff] %v479
      $region40: #{inception_forward.4} parent=35 // pred_fallthru
        _
      %s513 = smul.u32 %s22, 8
      %s514 = smul.u32 %s513, 24
      %s515 = scalar_lea.vmem [#allocation2], %s514
      %v516 = vld [vmem:[%s515] sm:$0xff]
      %v517 = vld [vmem:[%s515 + $0x8] sm:$0xff]
      %v518 = vld [vmem:[%s515 + $0x18] sm:$0xff]
      %v519 = vld [vmem:[%s515 + $0x20] sm:$0xff]
      %v520 = vld [vmem:[%s515 + $0x30] sm:$0xff]
      %v521 = vld [vmem:[%s515 + $0x38] sm:$0xff]
      %v522 = vld [vmem:[%s515 + $0x48] sm:$0xff]
      %v523 = vld [vmem:[%s515 + $0x50] sm:$0xff]
      %v524 = vld [vmem:[%s515 + $0x60] sm:$0xff]
      %v525 = vld [vmem:[%s515 + $0x68] sm:$0xff]
      %v526 = vld [vmem:[%s515 + $0x78] sm:$0xff]
      %v527 = vld [vmem:[%s515 + $0x80] sm:$0xff]
      %v528 = vld [vmem:[%s515 + $0x90] sm:$0xff]
      %v529 = vld [vmem:[%s515 + $0x98] sm:$0xff]
      %v530 = vld [vmem:[%s515 + $0xa8] sm:$0xff]
      %v531 = vld [vmem:[%s515 + $0xb0] sm:$0xff]
      %v532 = vpack.c.bf16 %v517, %v516
      %v533 = vpack.c.bf16 %v519, %v518
      %v534 = vpack.c.bf16 %v521, %v520
      %v535 = vpack.c.bf16 %v523, %v522
      %v536 = vpack.c.bf16 %v525, %v524
      %v537 = vpack.c.bf16 %v527, %v526
      %v538 = vpack.c.bf16 %v529, %v528
      %v539 = vpack.c.bf16 %v531, %v530
      %540 = vst [vmem:[#allocation3] sm:$0xff] %v532
      %541 = vst [vmem:[#allocation3 + $0xc8] sm:$0xff] %v533
      %542 = vst [vmem:[#allocation3 + $0x190] sm:$0xff] %v534
      %543 = vst [vmem:[#allocation3 + $0x258] sm:$0xff] %v535
      %544 = vst [vmem:[#allocation3 + $0x320] sm:$0xff] %v536
      %545 = vst [vmem:[#allocation3 + $0x3e8] sm:$0xff] %v537
      %546 = vst [vmem:[#allocation3 + $0x4b0] sm:$0xff] %v538
      %547 = vst [vmem:[#allocation3 + $0x578] sm:$0xff] %v539
      %v548 = vld [vmem:[%s515 + $0x1] sm:$0xff]
      %v549 = vld [vmem:[%s515 + $0x9] sm:$0xff]
      %v550 = vld [vmem:[%s515 + $0x19] sm:$0xff]
      %v551 = vld [vmem:[%s515 + $0x21] sm:$0xff]
      %v552 = vld [vmem:[%s515 + $0x31] sm:$0xff]
      %v553 = vld [vmem:[%s515 + $0x39] sm:$0xff]
      %v554 = vld [vmem:[%s515 + $0x49] sm:$0xff]
      %v555 = vld [vmem:[%s515 + $0x51] sm:$0xff]
      %v556 = vld [vmem:[%s515 + $0x61] sm:$0xff]
      %v557 = vld [vmem:[%s515 + $0x69] sm:$0xff]
      %v558 = vld [vmem:[%s515 + $0x79] sm:$0xff]
      %v559 = vld [vmem:[%s515 + $0x81] sm:$0xff]
      %v560 = vld [vmem:[%s515 + $0x91] sm:$0xff]
      %v561 = vld [vmem:[%s515 + $0x99] sm:$0xff]
      %v562 = vld [vmem:[%s515 + $0xa9] sm:$0xff]
      %v563 = vld [vmem:[%s515 + $0xb1] sm:$0xff]
      %v564 = vpack.c.bf16 %v549, %v548
      %v565 = vpack.c.bf16 %v551, %v550
      %v566 = vpack.c.bf16 %v553, %v552
      %v567 = vpack.c.bf16 %v555, %v554
      %v568 = vpack.c.bf16 %v557, %v556
      %v569 = vpack.c.bf16 %v559, %v558
      %v570 = vpack.c.bf16 %v561, %v560
      %v571 = vpack.c.bf16 %v563, %v562
      %572 = vst [vmem:[#allocation3 + $0x8] sm:$0xff] %v564
      %573 = vst [vmem:[#allocation3 + $0xd0] sm:$0xff] %v565
      %574 = vst [vmem:[#allocation3 + $0x198] sm:$0xff] %v566
      %575 = vst [vmem:[#allocation3 + $0x260] sm:$0xff] %v567
      %576 = vst [vmem:[#allocation3 + $0x328] sm:$0xff] %v568
      %577 = vst [vmem:[#allocation3 + $0x3f0] sm:$0xff] %v569
      %578 = vst [vmem:[#allocation3 + $0x4b8] sm:$0xff] %v570
      %579 = vst [vmem:[#allocation3 + $0x580] sm:$0xff] %v571
      %v580 = vld [vmem:[%s515 + $0x2] sm:$0xff]
      %v581 = vld [vmem:[%s515 + $0xa] sm:$0xff]
      %v582 = vld [vmem:[%s515 + $0x1a] sm:$0xff]
      %v583 = vld [vmem:[%s515 + $0x22] sm:$0xff]
      %v584 = vld [vmem:[%s515 + $0x32] sm:$0xff]
      %v585 = vld [vmem:[%s515 + $0x3a] sm:$0xff]
      %v586 = vld [vmem:[%s515 + $0x4a] sm:$0xff]
      %v587 = vld [vmem:[%s515 + $0x52] sm:$0xff]
      %v588 = vld [vmem:[%s515 + $0x62] sm:$0xff]
      %v589 = vld [vmem:[%s515 + $0x6a] sm:$0xff]
      %v590 = vld [vmem:[%s515 + $0x7a] sm:$0xff]
      %v591 = vld [vmem:[%s515 + $0x82] sm:$0xff]
      %v592 = vld [vmem:[%s515 + $0x92] sm:$0xff]
      %v593 = vld [vmem:[%s515 + $0x9a] sm:$0xff]
      %v594 = vld [vmem:[%s515 + $0xaa] sm:$0xff]
      %v595 = vld [vmem:[%s515 + $0xb2] sm:$0xff]
      %v596 = vpack.c.bf16 %v581, %v580
      %v597 = vpack.c.bf16 %v583, %v582
      %v598 = vpack.c.bf16 %v585, %v584
      %v599 = vpack.c.bf16 %v587, %v586
      %v600 = vpack.c.bf16 %v589, %v588
      %v601 = vpack.c.bf16 %v591, %v590
      %v602 = vpack.c.bf16 %v593, %v592
      %v603 = vpack.c.bf16 %v595, %v594
      %604 = vst [vmem:[#allocation3 + $0x10] sm:$0xff] %v596
      %605 = vst [vmem:[#allocation3 + $0xd8] sm:$0xff] %v597
      %606 = vst [vmem:[#allocation3 + $0x1a0] sm:$0xff] %v598
      %607 = vst [vmem:[#allocation3 + $0x268] sm:$0xff] %v599
      %608 = vst [vmem:[#allocation3 + $0x330] sm:$0xff] %v600
      %609 = vst [vmem:[#allocation3 + $0x3f8] sm:$0xff] %v601
      %610 = vst [vmem:[#allocation3 + $0x4c0] sm:$0xff] %v602
      %611 = vst [vmem:[#allocation3 + $0x588] sm:$0xff] %v603
      %v612 = vld [vmem:[%s515 + $0x3] sm:$0xff]
      %v613 = vld [vmem:[%s515 + $0xb] sm:$0xff]
      %v614 = vld [vmem:[%s515 + $0x1b] sm:$0xff]
      %v615 = vld [vmem:[%s515 + $0x23] sm:$0xff]
      %v616 = vld [vmem:[%s515 + $0x33] sm:$0xff]
      %v617 = vld [vmem:[%s515 + $0x3b] sm:$0xff]
      %v618 = vld [vmem:[%s515 + $0x4b] sm:$0xff]
      %v619 = vld [vmem:[%s515 + $0x53] sm:$0xff]
      %v620 = vld [vmem:[%s515 + $0x63] sm:$0xff]
      %v621 = vld [vmem:[%s515 + $0x6b] sm:$0xff]
      %v622 = vld [vmem:[%s515 + $0x7b] sm:$0xff]
      %v623 = vld [vmem:[%s515 + $0x83] sm:$0xff]
      %v624 = vld [vmem:[%s515 + $0x93] sm:$0xff]
      %v625 = vld [vmem:[%s515 + $0x9b] sm:$0xff]
      %v626 = vld [vmem:[%s515 + $0xab] sm:$0xff]
      %v627 = vld [vmem:[%s515 + $0xb3] sm:$0xff]
      %v628 = vpack.c.bf16 %v613, %v612
      %v629 = vpack.c.bf16 %v615, %v614
      %v630 = vpack.c.bf16 %v617, %v616
      %v631 = vpack.c.bf16 %v619, %v618
      %v632 = vpack.c.bf16 %v621, %v620
      %v633 = vpack.c.bf16 %v623, %v622
      %v634 = vpack.c.bf16 %v625, %v624
      %v635 = vpack.c.bf16 %v627, %v626
      %636 = vst [vmem:[#allocation3 + $0x18] sm:$0xff] %v628
      %637 = vst [vmem:[#allocation3 + $0xe0] sm:$0xff] %v629
      %638 = vst [vmem:[#allocation3 + $0x1a8] sm:$0xff] %v630
      %639 = vst [vmem:[#allocation3 + $0x270] sm:$0xff] %v631
      %640 = vst [vmem:[#allocation3 + $0x338] sm:$0xff] %v632
      %641 = vst [vmem:[#allocation3 + $0x400] sm:$0xff] %v633
      %642 = vst [vmem:[#allocation3 + $0x4c8] sm:$0xff] %v634
      %643 = vst [vmem:[#allocation3 + $0x590] sm:$0xff] %v635
      %v644 = vld [vmem:[%s515 + $0x4] sm:$0xff]
      %v645 = vld [vmem:[%s515 + $0xc] sm:$0xff]
      %v646 = vld [vmem:[%s515 + $0x1c] sm:$0xff]
      %v647 = vld [vmem:[%s515 + $0x24] sm:$0xff]
      %v648 = vld [vmem:[%s515 + $0x34] sm:$0xff]
      %v649 = vld [vmem:[%s515 + $0x3c] sm:$0xff]
      %v650 = vld [vmem:[%s515 + $0x4c] sm:$0xff]
      %v651 = vld [vmem:[%s515 + $0x54] sm:$0xff]
      %v652 = vld [vmem:[%s515 + $0x64] sm:$0xff]
      %v653 = vld [vmem:[%s515 + $0x6c] sm:$0xff]
      %v654 = vld [vmem:[%s515 + $0x7c] sm:$0xff]
      %v655 = vld [vmem:[%s515 + $0x84] sm:$0xff]
      %v656 = vld [vmem:[%s515 + $0x94] sm:$0xff]
      %v657 = vld [vmem:[%s515 + $0x9c] sm:$0xff]
      %v658 = vld [vmem:[%s515 + $0xac] sm:$0xff]
      %v659 = vld [vmem:[%s515 + $0xb4] sm:$0xff]
      %v660 = vpack.c.bf16 %v645, %v644
      %v661 = vpack.c.bf16 %v647, %v646
      %v662 = vpack.c.bf16 %v649, %v648
      %v663 = vpack.c.bf16 %v651, %v650
      %v664 = vpack.c.bf16 %v653, %v652
      %v665 = vpack.c.bf16 %v655, %v654
      %v666 = vpack.c.bf16 %v657, %v656
      %v667 = vpack.c.bf16 %v659, %v658
      %668 = vst [vmem:[#allocation3 + $0x20] sm:$0xff] %v660
      %669 = vst [vmem:[#allocation3 + $0xe8] sm:$0xff] %v661
      %670 = vst [vmem:[#allocation3 + $0x1b0] sm:$0xff] %v662
      %671 = vst [vmem:[#allocation3 + $0x278] sm:$0xff] %v663
      %672 = vst [vmem:[#allocation3 + $0x340] sm:$0xff] %v664
      %673 = vst [vmem:[#allocation3 + $0x408] sm:$0xff] %v665
      %674 = vst [vmem:[#allocation3 + $0x4d0] sm:$0xff] %v666
      %675 = vst [vmem:[#allocation3 + $0x598] sm:$0xff] %v667
      %s676 = sadd.s32 %s513, 1
      %s677 = smul.u32 %s676, 24
      %s678 = scalar_lea.vmem [#allocation2], %s677
      %v679 = vld [vmem:[%s678] sm:$0xff]
      %v680 = vld [vmem:[%s678 + $0x8] sm:$0xff]
      %v681 = vld [vmem:[%s678 + $0x18] sm:$0xff]
      %v682 = vld [vmem:[%s678 + $0x20] sm:$0xff]
      %v683 = vld [vmem:[%s678 + $0x30] sm:$0xff]
      %v684 = vld [vmem:[%s678 + $0x38] sm:$0xff]
      %v685 = vld [vmem:[%s678 + $0x48] sm:$0xff]
      %v686 = vld [vmem:[%s678 + $0x50] sm:$0xff]
      %v687 = vld [vmem:[%s678 + $0x60] sm:$0xff]
      %v688 = vld [vmem:[%s678 + $0x68] sm:$0xff]
      %v689 = vld [vmem:[%s678 + $0x78] sm:$0xff]
      %v690 = vld [vmem:[%s678 + $0x80] sm:$0xff]
      %v691 = vld [vmem:[%s678 + $0x90] sm:$0xff]
      %v692 = vld [vmem:[%s678 + $0x98] sm:$0xff]
      %v693 = vld [vmem:[%s678 + $0xa8] sm:$0xff]
      %v694 = vld [vmem:[%s678 + $0xb0] sm:$0xff]
      %v695 = vpack.c.bf16 %v680, %v679
      %v696 = vpack.c.bf16 %v682, %v681
      %v697 = vpack.c.bf16 %v684, %v683
      %v698 = vpack.c.bf16 %v686, %v685
      %v699 = vpack.c.bf16 %v688, %v687
      %v700 = vpack.c.bf16 %v690, %v689
      %v701 = vpack.c.bf16 %v692, %v691
      %v702 = vpack.c.bf16 %v694, %v693
      %703 = vst [vmem:[#allocation3 + $0x28] sm:$0xff] %v695
      %704 = vst [vmem:[#allocation3 + $0xf0] sm:$0xff] %v696
      %705 = vst [vmem:[#allocation3 + $0x1b8] sm:$0xff] %v697
      %706 = vst [vmem:[#allocation3 + $0x280] sm:$0xff] %v698
      %707 = vst [vmem:[#allocation3 + $0x348] sm:$0xff] %v699
      %708 = vst [vmem:[#allocation3 + $0x410] sm:$0xff] %v700
      %709 = vst [vmem:[#allocation3 + $0x4d8] sm:$0xff] %v701
      %710 = vst [vmem:[#allocation3 + $0x5a0] sm:$0xff] %v702
      %v711 = vld [vmem:[%s678 + $0x1] sm:$0xff]
      %v712 = vld [vmem:[%s678 + $0x9] sm:$0xff]
      %v713 = vld [vmem:[%s678 + $0x19] sm:$0xff]
      %v714 = vld [vmem:[%s678 + $0x21] sm:$0xff]
      %v715 = vld [vmem:[%s678 + $0x31] sm:$0xff]
      %v716 = vld [vmem:[%s678 + $0x39] sm:$0xff]
      %v717 = vld [vmem:[%s678 + $0x49] sm:$0xff]
      %v718 = vld [vmem:[%s678 + $0x51] sm:$0xff]
      %v719 = vld [vmem:[%s678 + $0x61] sm:$0xff]
      %v720 = vld [vmem:[%s678 + $0x69] sm:$0xff]
      %v721 = vld [vmem:[%s678 + $0x79] sm:$0xff]
      %v722 = vld [vmem:[%s678 + $0x81] sm:$0xff]
      %v723 = vld [vmem:[%s678 + $0x91] sm:$0xff]
      %v724 = vld [vmem:[%s678 + $0x99] sm:$0xff]
      %v725 = vld [vmem:[%s678 + $0xa9] sm:$0xff]
      %v726 = vld [vmem:[%s678 + $0xb1] sm:$0xff]
      %v727 = vpack.c.bf16 %v712, %v711
      %v728 = vpack.c.bf16 %v714, %v713
      %v729 = vpack.c.bf16 %v716, %v715
      %v730 = vpack.c.bf16 %v718, %v717
      %v731 = vpack.c.bf16 %v720, %v719
      %v732 = vpack.c.bf16 %v722, %v721
      %v733 = vpack.c.bf16 %v724, %v723
      %v734 = vpack.c.bf16 %v726, %v725
      %735 = vst [vmem:[#allocation3 + $0x30] sm:$0xff] %v727
      %736 = vst [vmem:[#allocation3 + $0xf8] sm:$0xff] %v728
      %737 = vst [vmem:[#allocation3 + $0x1c0] sm:$0xff] %v729
      %738 = vst [vmem:[#allocation3 + $0x288] sm:$0xff] %v730
      %739 = vst [vmem:[#allocation3 + $0x350] sm:$0xff] %v731
      %740 = vst [vmem:[#allocation3 + $0x418] sm:$0xff] %v732
      %741 = vst [vmem:[#allocation3 + $0x4e0] sm:$0xff] %v733
      %742 = vst [vmem:[#allocation3 + $0x5a8] sm:$0xff] %v734
      %v743 = vld [vmem:[%s678 + $0x2] sm:$0xff]
      %v744 = vld [vmem:[%s678 + $0xa] sm:$0xff]
      %v745 = vld [vmem:[%s678 + $0x1a] sm:$0xff]
      %v746 = vld [vmem:[%s678 + $0x22] sm:$0xff]
      %v747 = vld [vmem:[%s678 + $0x32] sm:$0xff]
      %v748 = vld [vmem:[%s678 + $0x3a] sm:$0xff]
      %v749 = vld [vmem:[%s678 + $0x4a] sm:$0xff]
      %v750 = vld [vmem:[%s678 + $0x52] sm:$0xff]
      %v751 = vld [vmem:[%s678 + $0x62] sm:$0xff]
      %v752 = vld [vmem:[%s678 + $0x6a] sm:$0xff]
      %v753 = vld [vmem:[%s678 + $0x7a] sm:$0xff]
      %v754 = vld [vmem:[%s678 + $0x82] sm:$0xff]
      %v755 = vld [vmem:[%s678 + $0x92] sm:$0xff]
      %v756 = vld [vmem:[%s678 + $0x9a] sm:$0xff]
      %v757 = vld [vmem:[%s678 + $0xaa] sm:$0xff]
      %v758 = vld [vmem:[%s678 + $0xb2] sm:$0xff]
      %v759 = vpack.c.bf16 %v744, %v743
      %v760 = vpack.c.bf16 %v746, %v745
      %v761 = vpack.c.bf16 %v748, %v747
      %v762 = vpack.c.bf16 %v750, %v749
      %v763 = vpack.c.bf16 %v752, %v751
      %v764 = vpack.c.bf16 %v754, %v753
      %v765 = vpack.c.bf16 %v756, %v755
      %v766 = vpack.c.bf16 %v758, %v757
      %767 = vst [vmem:[#allocation3 + $0x38] sm:$0xff] %v759
      %768 = vst [vmem:[#allocation3 + $0x100] sm:$0xff] %v760
      %769 = vst [vmem:[#allocation3 + $0x1c8] sm:$0xff] %v761
      %770 = vst [vmem:[#allocation3 + $0x290] sm:$0xff] %v762
      %771 = vst [vmem:[#allocation3 + $0x358] sm:$0xff] %v763
      %772 = vst [vmem:[#allocation3 + $0x420] sm:$0xff] %v764
      %773 = vst [vmem:[#allocation3 + $0x4e8] sm:$0xff] %v765
      %774 = vst [vmem:[#allocation3 + $0x5b0] sm:$0xff] %v766
      %v775 = vld [vmem:[%s678 + $0x3] sm:$0xff]
      %v776 = vld [vmem:[%s678 + $0xb] sm:$0xff]
      %v777 = vld [vmem:[%s678 + $0x1b] sm:$0xff]
      %v778 = vld [vmem:[%s678 + $0x23] sm:$0xff]
      %v779 = vld [vmem:[%s678 + $0x33] sm:$0xff]
      %v780 = vld [vmem:[%s678 + $0x3b] sm:$0xff]
      %v781 = vld [vmem:[%s678 + $0x4b] sm:$0xff]
      %v782 = vld [vmem:[%s678 + $0x53] sm:$0xff]
      %v783 = vld [vmem:[%s678 + $0x63] sm:$0xff]
      %v784 = vld [vmem:[%s678 + $0x6b] sm:$0xff]
      %v785 = vld [vmem:[%s678 + $0x7b] sm:$0xff]
      %v786 = vld [vmem:[%s678 + $0x83] sm:$0xff]
      %v787 = vld [vmem:[%s678 + $0x93] sm:$0xff]
      %v788 = vld [vmem:[%s678 + $0x9b] sm:$0xff]
      %v789 = vld [vmem:[%s678 + $0xab] sm:$0xff]
      %v790 = vld [vmem:[%s678 + $0xb3] sm:$0xff]
      %v791 = vpack.c.bf16 %v776, %v775
      %v792 = vpack.c.bf16 %v778, %v777
      %v793 = vpack.c.bf16 %v780, %v779
      %v794 = vpack.c.bf16 %v782, %v781
      %v795 = vpack.c.bf16 %v784, %v783
      %v796 = vpack.c.bf16 %v786, %v785
      %v797 = vpack.c.bf16 %v788, %v787
      %v798 = vpack.c.bf16 %v790, %v789
      %799 = vst [vmem:[#allocation3 + $0x40] sm:$0xff] %v791
      %800 = vst [vmem:[#allocation3 + $0x108] sm:$0xff] %v792
      %801 = vst [vmem:[#allocation3 + $0x1d0] sm:$0xff] %v793
      %802 = vst [vmem:[#allocation3 + $0x298] sm:$0xff] %v794
      %803 = vst [vmem:[#allocation3 + $0x360] sm:$0xff] %v795
      %804 = vst [vmem:[#allocation3 + $0x428] sm:$0xff] %v796
      %805 = vst [vmem:[#allocation3 + $0x4f0] sm:$0xff] %v797
      %806 = vst [vmem:[#allocation3 + $0x5b8] sm:$0xff] %v798
      %v807 = vld [vmem:[%s678 + $0x4] sm:$0xff]
      %v808 = vld [vmem:[%s678 + $0xc] sm:$0xff]
      %v809 = vld [vmem:[%s678 + $0x1c] sm:$0xff]
      %v810 = vld [vmem:[%s678 + $0x24] sm:$0xff]
      %v811 = vld [vmem:[%s678 + $0x34] sm:$0xff]
      %v812 = vld [vmem:[%s678 + $0x3c] sm:$0xff]
      %v813 = vld [vmem:[%s678 + $0x4c] sm:$0xff]
      %v814 = vld [vmem:[%s678 + $0x54] sm:$0xff]
      %v815 = vld [vmem:[%s678 + $0x64] sm:$0xff]
      %v816 = vld [vmem:[%s678 + $0x6c] sm:$0xff]
      %v817 = vld [vmem:[%s678 + $0x7c] sm:$0xff]
      %v818 = vld [vmem:[%s678 + $0x84] sm:$0xff]
      %v819 = vld [vmem:[%s678 + $0x94] sm:$0xff]
      %v820 = vld [vmem:[%s678 + $0x9c] sm:$0xff]
      %v821 = vld [vmem:[%s678 + $0xac] sm:$0xff]
      %v822 = vld [vmem:[%s678 + $0xb4] sm:$0xff]
      %v823 = vpack.c.bf16 %v808, %v807
      %v824 = vpack.c.bf16 %v810, %v809
      %v825 = vpack.c.bf16 %v812, %v811
      %v826 = vpack.c.bf16 %v814, %v813
      %v827 = vpack.c.bf16 %v816, %v815
      %v828 = vpack.c.bf16 %v818, %v817
      %v829 = vpack.c.bf16 %v820, %v819
      %v830 = vpack.c.bf16 %v822, %v821
      %831 = vst [vmem:[#allocation3 + $0x48] sm:$0xff] %v823
      %832 = vst [vmem:[#allocation3 + $0x110] sm:$0xff] %v824
      %833 = vst [vmem:[#allocation3 + $0x1d8] sm:$0xff] %v825
      %834 = vst [vmem:[#allocation3 + $0x2a0] sm:$0xff] %v826
      %835 = vst [vmem:[#allocation3 + $0x368] sm:$0xff] %v827
      %836 = vst [vmem:[#allocation3 + $0x430] sm:$0xff] %v828
      %837 = vst [vmem:[#allocation3 + $0x4f8] sm:$0xff] %v829
      %838 = vst [vmem:[#allocation3 + $0x5c0] sm:$0xff] %v830
      %s839 = sadd.s32 %s513, 2
      %s840 = smul.u32 %s839, 24
      %s841 = scalar_lea.vmem [#allocation2], %s840
      %v842 = vld [vmem:[%s841] sm:$0xff]
      %v843 = vld [vmem:[%s841 + $0x8] sm:$0xff]
      %v844 = vld [vmem:[%s841 + $0x18] sm:$0xff]
      %v845 = vld [vmem:[%s841 + $0x20] sm:$0xff]
      %v846 = vld [vmem:[%s841 + $0x30] sm:$0xff]
      %v847 = vld [vmem:[%s841 + $0x38] sm:$0xff]
      %v848 = vld [vmem:[%s841 + $0x48] sm:$0xff]
      %v849 = vld [vmem:[%s841 + $0x50] sm:$0xff]
      %v850 = vld [vmem:[%s841 + $0x60] sm:$0xff]
      %v851 = vld [vmem:[%s841 + $0x68] sm:$0xff]
      %v852 = vld [vmem:[%s841 + $0x78] sm:$0xff]
      %v853 = vld [vmem:[%s841 + $0x80] sm:$0xff]
      %v854 = vld [vmem:[%s841 + $0x90] sm:$0xff]
      %v855 = vld [vmem:[%s841 + $0x98] sm:$0xff]
      %v856 = vld [vmem:[%s841 + $0xa8] sm:$0xff]
      %v857 = vld [vmem:[%s841 + $0xb0] sm:$0xff]
      %v858 = vpack.c.bf16 %v843, %v842
      %v859 = vpack.c.bf16 %v845, %v844
      %v860 = vpack.c.bf16 %v847, %v846
      %v861 = vpack.c.bf16 %v849, %v848
      %v862 = vpack.c.bf16 %v851, %v850
      %v863 = vpack.c.bf16 %v853, %v852
      %v864 = vpack.c.bf16 %v855, %v854
      %v865 = vpack.c.bf16 %v857, %v856
      %866 = vst [vmem:[#allocation3 + $0x50] sm:$0xff] %v858
      %867 = vst [vmem:[#allocation3 + $0x118] sm:$0xff] %v859
      %868 = vst [vmem:[#allocation3 + $0x1e0] sm:$0xff] %v860
      %869 = vst [vmem:[#allocation3 + $0x2a8] sm:$0xff] %v861
      %870 = vst [vmem:[#allocation3 + $0x370] sm:$0xff] %v862
      %871 = vst [vmem:[#allocation3 + $0x438] sm:$0xff] %v863
      %872 = vst [vmem:[#allocation3 + $0x500] sm:$0xff] %v864
      %873 = vst [vmem:[#allocation3 + $0x5c8] sm:$0xff] %v865
      %v874 = vld [vmem:[%s841 + $0x1] sm:$0xff]
      %v875 = vld [vmem:[%s841 + $0x9] sm:$0xff]
      %v876 = vld [vmem:[%s841 + $0x19] sm:$0xff]
      %v877 = vld [vmem:[%s841 + $0x21] sm:$0xff]
      %v878 = vld [vmem:[%s841 + $0x31] sm:$0xff]
      %v879 = vld [vmem:[%s841 + $0x39] sm:$0xff]
      %v880 = vld [vmem:[%s841 + $0x49] sm:$0xff]
      %v881 = vld [vmem:[%s841 + $0x51] sm:$0xff]
      %v882 = vld [vmem:[%s841 + $0x61] sm:$0xff]
      %v883 = vld [vmem:[%s841 + $0x69] sm:$0xff]
      %v884 = vld [vmem:[%s841 + $0x79] sm:$0xff]
      %v885 = vld [vmem:[%s841 + $0x81] sm:$0xff]
      %v886 = vld [vmem:[%s841 + $0x91] sm:$0xff]
      %v887 = vld [vmem:[%s841 + $0x99] sm:$0xff]
      %v888 = vld [vmem:[%s841 + $0xa9] sm:$0xff]
      %v889 = vld [vmem:[%s841 + $0xb1] sm:$0xff]
      %v890 = vpack.c.bf16 %v875, %v874
      %v891 = vpack.c.bf16 %v877, %v876
      %v892 = vpack.c.bf16 %v879, %v878
      %v893 = vpack.c.bf16 %v881, %v880
      %v894 = vpack.c.bf16 %v883, %v882
      %v895 = vpack.c.bf16 %v885, %v884
      %v896 = vpack.c.bf16 %v887, %v886
      %v897 = vpack.c.bf16 %v889, %v888
      %898 = vst [vmem:[#allocation3 + $0x58] sm:$0xff] %v890
      %899 = vst [vmem:[#allocation3 + $0x120] sm:$0xff] %v891
      %900 = vst [vmem:[#allocation3 + $0x1e8] sm:$0xff] %v892
      %901 = vst [vmem:[#allocation3 + $0x2b0] sm:$0xff] %v893
      %902 = vst [vmem:[#allocation3 + $0x378] sm:$0xff] %v894
      %903 = vst [vmem:[#allocation3 + $0x440] sm:$0xff] %v895
      %904 = vst [vmem:[#allocation3 + $0x508] sm:$0xff] %v896
      %905 = vst [vmem:[#allocation3 + $0x5d0] sm:$0xff] %v897
      %v906 = vld [vmem:[%s841 + $0x2] sm:$0xff]
      %v907 = vld [vmem:[%s841 + $0xa] sm:$0xff]
      %v908 = vld [vmem:[%s841 + $0x1a] sm:$0xff]
      %v909 = vld [vmem:[%s841 + $0x22] sm:$0xff]
      %v910 = vld [vmem:[%s841 + $0x32] sm:$0xff]
      %v911 = vld [vmem:[%s841 + $0x3a] sm:$0xff]
      %v912 = vld [vmem:[%s841 + $0x4a] sm:$0xff]
      %v913 = vld [vmem:[%s841 + $0x52] sm:$0xff]
      %v914 = vld [vmem:[%s841 + $0x62] sm:$0xff]
      %v915 = vld [vmem:[%s841 + $0x6a] sm:$0xff]
      %v916 = vld [vmem:[%s841 + $0x7a] sm:$0xff]
      %v917 = vld [vmem:[%s841 + $0x82] sm:$0xff]
      %v918 = vld [vmem:[%s841 + $0x92] sm:$0xff]
      %v919 = vld [vmem:[%s841 + $0x9a] sm:$0xff]
      %v920 = vld [vmem:[%s841 + $0xaa] sm:$0xff]
      %v921 = vld [vmem:[%s841 + $0xb2] sm:$0xff]
      %v922 = vpack.c.bf16 %v907, %v906
      %v923 = vpack.c.bf16 %v909, %v908
      %v924 = vpack.c.bf16 %v911, %v910
      %v925 = vpack.c.bf16 %v913, %v912
      %v926 = vpack.c.bf16 %v915, %v914
      %v927 = vpack.c.bf16 %v917, %v916
      %v928 = vpack.c.bf16 %v919, %v918
      %v929 = vpack.c.bf16 %v921, %v920
      %930 = vst [vmem:[#allocation3 + $0x60] sm:$0xff] %v922
      %931 = vst [vmem:[#allocation3 + $0x128] sm:$0xff] %v923
      %932 = vst [vmem:[#allocation3 + $0x1f0] sm:$0xff] %v924
      %933 = vst [vmem:[#allocation3 + $0x2b8] sm:$0xff] %v925
      %934 = vst [vmem:[#allocation3 + $0x380] sm:$0xff] %v926
      %935 = vst [vmem:[#allocation3 + $0x448] sm:$0xff] %v927
      %936 = vst [vmem:[#allocation3 + $0x510] sm:$0xff] %v928
      %937 = vst [vmem:[#allocation3 + $0x5d8] sm:$0xff] %v929
      %v938 = vld [vmem:[%s841 + $0x3] sm:$0xff]
      %v939 = vld [vmem:[%s841 + $0xb] sm:$0xff]
      %v940 = vld [vmem:[%s841 + $0x1b] sm:$0xff]
      %v941 = vld [vmem:[%s841 + $0x23] sm:$0xff]
      %v942 = vld [vmem:[%s841 + $0x33] sm:$0xff]
      %v943 = vld [vmem:[%s841 + $0x3b] sm:$0xff]
      %v944 = vld [vmem:[%s841 + $0x4b] sm:$0xff]
      %v945 = vld [vmem:[%s841 + $0x53] sm:$0xff]
      %v946 = vld [vmem:[%s841 + $0x63] sm:$0xff]
      %v947 = vld [vmem:[%s841 + $0x6b] sm:$0xff]
      %v948 = vld [vmem:[%s841 + $0x7b] sm:$0xff]
      %v949 = vld [vmem:[%s841 + $0x83] sm:$0xff]
      %v950 = vld [vmem:[%s841 + $0x93] sm:$0xff]
      %v951 = vld [vmem:[%s841 + $0x9b] sm:$0xff]
      %v952 = vld [vmem:[%s841 + $0xab] sm:$0xff]
      %v953 = vld [vmem:[%s841 + $0xb3] sm:$0xff]
      %v954 = vpack.c.bf16 %v939, %v938
      %v955 = vpack.c.bf16 %v941, %v940
      %v956 = vpack.c.bf16 %v943, %v942
      %v957 = vpack.c.bf16 %v945, %v944
      %v958 = vpack.c.bf16 %v947, %v946
      %v959 = vpack.c.bf16 %v949, %v948
      %v960 = vpack.c.bf16 %v951, %v950
      %v961 = vpack.c.bf16 %v953, %v952
      %962 = vst [vmem:[#allocation3 + $0x68] sm:$0xff] %v954
      %963 = vst [vmem:[#allocation3 + $0x130] sm:$0xff] %v955
      %964 = vst [vmem:[#allocation3 + $0x1f8] sm:$0xff] %v956
      %965 = vst [vmem:[#allocation3 + $0x2c0] sm:$0xff] %v957
      %966 = vst [vmem:[#allocation3 + $0x388] sm:$0xff] %v958
      %967 = vst [vmem:[#allocation3 + $0x450] sm:$0xff] %v959
      %968 = vst [vmem:[#allocation3 + $0x518] sm:$0xff] %v960
      %969 = vst [vmem:[#allocation3 + $0x5e0] sm:$0xff] %v961
      %v970 = vld [vmem:[%s841 + $0x4] sm:$0xff]
      %v971 = vld [vmem:[%s841 + $0xc] sm:$0xff]
      %v972 = vld [vmem:[%s841 + $0x1c] sm:$0xff]
      %v973 = vld [vmem:[%s841 + $0x24] sm:$0xff]
      %v974 = vld [vmem:[%s841 + $0x34] sm:$0xff]
      %v975 = vld [vmem:[%s841 + $0x3c] sm:$0xff]
      %v976 = vld [vmem:[%s841 + $0x4c] sm:$0xff]
      %v977 = vld [vmem:[%s841 + $0x54] sm:$0xff]
      %v978 = vld [vmem:[%s841 + $0x64] sm:$0xff]
      %v979 = vld [vmem:[%s841 + $0x6c] sm:$0xff]
      %v980 = vld [vmem:[%s841 + $0x7c] sm:$0xff]
      %v981 = vld [vmem:[%s841 + $0x84] sm:$0xff]
      %v982 = vld [vmem:[%s841 + $0x94] sm:$0xff]
      %v983 = vld [vmem:[%s841 + $0x9c] sm:$0xff]
      %v984 = vld [vmem:[%s841 + $0xac] sm:$0xff]
      %v985 = vld [vmem:[%s841 + $0xb4] sm:$0xff]
      %v986 = vpack.c.bf16 %v971, %v970
      %v987 = vpack.c.bf16 %v973, %v972
      %v988 = vpack.c.bf16 %v975, %v974
      %v989 = vpack.c.bf16 %v977, %v976
      %v990 = vpack.c.bf16 %v979, %v978
      %v991 = vpack.c.bf16 %v981, %v980
      %v992 = vpack.c.bf16 %v983, %v982
      %v993 = vpack.c.bf16 %v985, %v984
      %994 = vst [vmem:[#allocation3 + $0x70] sm:$0xff] %v986
      %995 = vst [vmem:[#allocation3 + $0x138] sm:$0xff] %v987
      %996 = vst [vmem:[#allocation3 + $0x200] sm:$0xff] %v988
      %997 = vst [vmem:[#allocation3 + $0x2c8] sm:$0xff] %v989
      %998 = vst [vmem:[#allocation3 + $0x390] sm:$0xff] %v990
      %999 = vst [vmem:[#allocation3 + $0x458] sm:$0xff] %v991
      %1000 = vst [vmem:[#allocation3 + $0x520] sm:$0xff] %v992
      %1001 = vst [vmem:[#allocation3 + $0x5e8] sm:$0xff] %v993
      %s1002 = sadd.s32 %s513, 3
      %s1003 = smul.u32 %s1002, 24
      %s1004 = scalar_lea.vmem [#allocation2], %s1003
      %v1005 = vld [vmem:[%s1004] sm:$0xff]
      %v1006 = vld [vmem:[%s1004 + $0x8] sm:$0xff]
      %v1007 = vld [vmem:[%s1004 + $0x18] sm:$0xff]
      %v1008 = vld [vmem:[%s1004 + $0x20] sm:$0xff]
      %v1009 = vld [vmem:[%s1004 + $0x30] sm:$0xff]
      %v1010 = vld [vmem:[%s1004 + $0x38] sm:$0xff]
      %v1011 = vld [vmem:[%s1004 + $0x48] sm:$0xff]
      %v1012 = vld [vmem:[%s1004 + $0x50] sm:$0xff]
      %v1013 = vld [vmem:[%s1004 + $0x60] sm:$0xff]
      %v1014 = vld [vmem:[%s1004 + $0x68] sm:$0xff]
      %v1015 = vld [vmem:[%s1004 + $0x78] sm:$0xff]
      %v1016 = vld [vmem:[%s1004 + $0x80] sm:$0xff]
      %v1017 = vld [vmem:[%s1004 + $0x90] sm:$0xff]
      %v1018 = vld [vmem:[%s1004 + $0x98] sm:$0xff]
      %v1019 = vld [vmem:[%s1004 + $0xa8] sm:$0xff]
      %v1020 = vld [vmem:[%s1004 + $0xb0] sm:$0xff]
      %v1021 = vpack.c.bf16 %v1006, %v1005
      %v1022 = vpack.c.bf16 %v1008, %v1007
      %v1023 = vpack.c.bf16 %v1010, %v1009
      %v1024 = vpack.c.bf16 %v1012, %v1011
      %v1025 = vpack.c.bf16 %v1014, %v1013
      %v1026 = vpack.c.bf16 %v1016, %v1015
      %v1027 = vpack.c.bf16 %v1018, %v1017
      %v1028 = vpack.c.bf16 %v1020, %v1019
      %1029 = vst [vmem:[#allocation3 + $0x78] sm:$0xff] %v1021
      %1030 = vst [vmem:[#allocation3 + $0x140] sm:$0xff] %v1022
      %1031 = vst [vmem:[#allocation3 + $0x208] sm:$0xff] %v1023
      %1032 = vst [vmem:[#allocation3 + $0x2d0] sm:$0xff] %v1024
      %1033 = vst [vmem:[#allocation3 + $0x398] sm:$0xff] %v1025
      %1034 = vst [vmem:[#allocation3 + $0x460] sm:$0xff] %v1026
      %1035 = vst [vmem:[#allocation3 + $0x528] sm:$0xff] %v1027
      %1036 = vst [vmem:[#allocation3 + $0x5f0] sm:$0xff] %v1028
      %v1037 = vld [vmem:[%s1004 + $0x1] sm:$0xff]
      %v1038 = vld [vmem:[%s1004 + $0x9] sm:$0xff]
      %v1039 = vld [vmem:[%s1004 + $0x19] sm:$0xff]
      %v1040 = vld [vmem:[%s1004 + $0x21] sm:$0xff]
      %v1041 = vld [vmem:[%s1004 + $0x31] sm:$0xff]
      %v1042 = vld [vmem:[%s1004 + $0x39] sm:$0xff]
      %v1043 = vld [vmem:[%s1004 + $0x49] sm:$0xff]
      %v1044 = vld [vmem:[%s1004 + $0x51] sm:$0xff]
      %v1045 = vld [vmem:[%s1004 + $0x61] sm:$0xff]
      %v1046 = vld [vmem:[%s1004 + $0x69] sm:$0xff]
      %v1047 = vld [vmem:[%s1004 + $0x79] sm:$0xff]
      %v1048 = vld [vmem:[%s1004 + $0x81] sm:$0xff]
      %v1049 = vld [vmem:[%s1004 + $0x91] sm:$0xff]
      %v1050 = vld [vmem:[%s1004 + $0x99] sm:$0xff]
      %v1051 = vld [vmem:[%s1004 + $0xa9] sm:$0xff]
      %v1052 = vld [vmem:[%s1004 + $0xb1] sm:$0xff]
      %v1053 = vpack.c.bf16 %v1038, %v1037
      %v1054 = vpack.c.bf16 %v1040, %v1039
      %v1055 = vpack.c.bf16 %v1042, %v1041
      %v1056 = vpack.c.bf16 %v1044, %v1043
      %v1057 = vpack.c.bf16 %v1046, %v1045
      %v1058 = vpack.c.bf16 %v1048, %v1047
      %v1059 = vpack.c.bf16 %v1050, %v1049
      %v1060 = vpack.c.bf16 %v1052, %v1051
      %1061 = vst [vmem:[#allocation3 + $0x80] sm:$0xff] %v1053
      %1062 = vst [vmem:[#allocation3 + $0x148] sm:$0xff] %v1054
      %1063 = vst [vmem:[#allocation3 + $0x210] sm:$0xff] %v1055
      %1064 = vst [vmem:[#allocation3 + $0x2d8] sm:$0xff] %v1056
      %1065 = vst [vmem:[#allocation3 + $0x3a0] sm:$0xff] %v1057
      %1066 = vst [vmem:[#allocation3 + $0x468] sm:$0xff] %v1058
      %1067 = vst [vmem:[#allocation3 + $0x530] sm:$0xff] %v1059
      %1068 = vst [vmem:[#allocation3 + $0x5f8] sm:$0xff] %v1060
      %v1069 = vld [vmem:[%s1004 + $0x2] sm:$0xff]
      %v1070 = vld [vmem:[%s1004 + $0xa] sm:$0xff]
      %v1071 = vld [vmem:[%s1004 + $0x1a] sm:$0xff]
      %v1072 = vld [vmem:[%s1004 + $0x22] sm:$0xff]
      %v1073 = vld [vmem:[%s1004 + $0x32] sm:$0xff]
      %v1074 = vld [vmem:[%s1004 + $0x3a] sm:$0xff]
      %v1075 = vld [vmem:[%s1004 + $0x4a] sm:$0xff]
      %v1076 = vld [vmem:[%s1004 + $0x52] sm:$0xff]
      %v1077 = vld [vmem:[%s1004 + $0x62] sm:$0xff]
      %v1078 = vld [vmem:[%s1004 + $0x6a] sm:$0xff]
      %v1079 = vld [vmem:[%s1004 + $0x7a] sm:$0xff]
      %v1080 = vld [vmem:[%s1004 + $0x82] sm:$0xff]
      %v1081 = vld [vmem:[%s1004 + $0x92] sm:$0xff]
      %v1082 = vld [vmem:[%s1004 + $0x9a] sm:$0xff]
      %v1083 = vld [vmem:[%s1004 + $0xaa] sm:$0xff]
      %v1084 = vld [vmem:[%s1004 + $0xb2] sm:$0xff]
      %v1085 = vpack.c.bf16 %v1070, %v1069
      %v1086 = vpack.c.bf16 %v1072, %v1071
      %v1087 = vpack.c.bf16 %v1074, %v1073
      %v1088 = vpack.c.bf16 %v1076, %v1075
      %v1089 = vpack.c.bf16 %v1078, %v1077
      %v1090 = vpack.c.bf16 %v1080, %v1079
      %v1091 = vpack.c.bf16 %v1082, %v1081
      %v1092 = vpack.c.bf16 %v1084, %v1083
      %1093 = vst [vmem:[#allocation3 + $0x88] sm:$0xff] %v1085
      %1094 = vst [vmem:[#allocation3 + $0x150] sm:$0xff] %v1086
      %1095 = vst [vmem:[#allocation3 + $0x218] sm:$0xff] %v1087
      %1096 = vst [vmem:[#allocation3 + $0x2e0] sm:$0xff] %v1088
      %1097 = vst [vmem:[#allocation3 + $0x3a8] sm:$0xff] %v1089
      %1098 = vst [vmem:[#allocation3 + $0x470] sm:$0xff] %v1090
      %1099 = vst [vmem:[#allocation3 + $0x538] sm:$0xff] %v1091
      %1100 = vst [vmem:[#allocation3 + $0x600] sm:$0xff] %v1092
      %v1101 = vld [vmem:[%s1004 + $0x3] sm:$0xff]
      %v1102 = vld [vmem:[%s1004 + $0xb] sm:$0xff]
      %v1103 = vld [vmem:[%s1004 + $0x1b] sm:$0xff]
      %v1104 = vld [vmem:[%s1004 + $0x23] sm:$0xff]
      %v1105 = vld [vmem:[%s1004 + $0x33] sm:$0xff]
      %v1106 = vld [vmem:[%s1004 + $0x3b] sm:$0xff]
      %v1107 = vld [vmem:[%s1004 + $0x4b] sm:$0xff]
      %v1108 = vld [vmem:[%s1004 + $0x53] sm:$0xff]
      %v1109 = vld [vmem:[%s1004 + $0x63] sm:$0xff]
      %v1110 = vld [vmem:[%s1004 + $0x6b] sm:$0xff]
      %v1111 = vld [vmem:[%s1004 + $0x7b] sm:$0xff]
      %v1112 = vld [vmem:[%s1004 + $0x83] sm:$0xff]
      %v1113 = vld [vmem:[%s1004 + $0x93] sm:$0xff]
      %v1114 = vld [vmem:[%s1004 + $0x9b] sm:$0xff]
      %v1115 = vld [vmem:[%s1004 + $0xab] sm:$0xff]
      %v1116 = vld [vmem:[%s1004 + $0xb3] sm:$0xff]
      %v1117 = vpack.c.bf16 %v1102, %v1101
      %v1118 = vpack.c.bf16 %v1104, %v1103
      %v1119 = vpack.c.bf16 %v1106, %v1105
      %v1120 = vpack.c.bf16 %v1108, %v1107
      %v1121 = vpack.c.bf16 %v1110, %v1109
      %v1122 = vpack.c.bf16 %v1112, %v1111
      %v1123 = vpack.c.bf16 %v1114, %v1113
      %v1124 = vpack.c.bf16 %v1116, %v1115
      %1125 = vst [vmem:[#allocation3 + $0x90] sm:$0xff] %v1117
      %1126 = vst [vmem:[#allocation3 + $0x158] sm:$0xff] %v1118
      %1127 = vst [vmem:[#allocation3 + $0x220] sm:$0xff] %v1119
      %1128 = vst [vmem:[#allocation3 + $0x2e8] sm:$0xff] %v1120
      %1129 = vst [vmem:[#allocation3 + $0x3b0] sm:$0xff] %v1121
      %1130 = vst [vmem:[#allocation3 + $0x478] sm:$0xff] %v1122
      %1131 = vst [vmem:[#allocation3 + $0x540] sm:$0xff] %v1123
      %1132 = vst [vmem:[#allocation3 + $0x608] sm:$0xff] %v1124
      %v1133 = vld [vmem:[%s1004 + $0x4] sm:$0xff]
      %v1134 = vld [vmem:[%s1004 + $0xc] sm:$0xff]
      %v1135 = vld [vmem:[%s1004 + $0x1c] sm:$0xff]
      %v1136 = vld [vmem:[%s1004 + $0x24] sm:$0xff]
      %v1137 = vld [vmem:[%s1004 + $0x34] sm:$0xff]
      %v1138 = vld [vmem:[%s1004 + $0x3c] sm:$0xff]
      %v1139 = vld [vmem:[%s1004 + $0x4c] sm:$0xff]
      %v1140 = vld [vmem:[%s1004 + $0x54] sm:$0xff]
      %v1141 = vld [vmem:[%s1004 + $0x64] sm:$0xff]
      %v1142 = vld [vmem:[%s1004 + $0x6c] sm:$0xff]
      %v1143 = vld [vmem:[%s1004 + $0x7c] sm:$0xff]
      %v1144 = vld [vmem:[%s1004 + $0x84] sm:$0xff]
      %v1145 = vld [vmem:[%s1004 + $0x94] sm:$0xff]
      %v1146 = vld [vmem:[%s1004 + $0x9c] sm:$0xff]
      %v1147 = vld [vmem:[%s1004 + $0xac] sm:$0xff]
      %v1148 = vld [vmem:[%s1004 + $0xb4] sm:$0xff]
      %v1149 = vpack.c.bf16 %v1134, %v1133
      %v1150 = vpack.c.bf16 %v1136, %v1135
      %v1151 = vpack.c.bf16 %v1138, %v1137
      %v1152 = vpack.c.bf16 %v1140, %v1139
      %v1153 = vpack.c.bf16 %v1142, %v1141
      %v1154 = vpack.c.bf16 %v1144, %v1143
      %v1155 = vpack.c.bf16 %v1146, %v1145
      %v1156 = vpack.c.bf16 %v1148, %v1147
      %1157 = vst [vmem:[#allocation3 + $0x98] sm:$0xff] %v1149
      %1158 = vst [vmem:[#allocation3 + $0x160] sm:$0xff] %v1150
      %1159 = vst [vmem:[#allocation3 + $0x228] sm:$0xff] %v1151
      %1160 = vst [vmem:[#allocation3 + $0x2f0] sm:$0xff] %v1152
      %1161 = vst [vmem:[#allocation3 + $0x3b8] sm:$0xff] %v1153
      %1162 = vst [vmem:[#allocation3 + $0x480] sm:$0xff] %v1154
      %1163 = vst [vmem:[#allocation3 + $0x548] sm:$0xff] %v1155
      %1164 = vst [vmem:[#allocation3 + $0x610] sm:$0xff] %v1156
      %s1165 = sadd.s32 %s513, 4
      %s1166 = smul.u32 %s1165, 24
      %s1167 = scalar_lea.vmem [#allocation2], %s1166
      %v1168 = vld [vmem:[%s1167] sm:$0xff]
      %v1169 = vld [vmem:[%s1167 + $0x8] sm:$0xff]
      %v1170 = vld [vmem:[%s1167 + $0x18] sm:$0xff]
      %v1171 = vld [vmem:[%s1167 + $0x20] sm:$0xff]
      %v1172 = vld [vmem:[%s1167 + $0x30] sm:$0xff]
      %v1173 = vld [vmem:[%s1167 + $0x38] sm:$0xff]
      %v1174 = vld [vmem:[%s1167 + $0x48] sm:$0xff]
      %v1175 = vld [vmem:[%s1167 + $0x50] sm:$0xff]
      %v1176 = vld [vmem:[%s1167 + $0x60] sm:$0xff]
      %v1177 = vld [vmem:[%s1167 + $0x68] sm:$0xff]
      %v1178 = vld [vmem:[%s1167 + $0x78] sm:$0xff]
      %v1179 = vld [vmem:[%s1167 + $0x80] sm:$0xff]
      %v1180 = vld [vmem:[%s1167 + $0x90] sm:$0xff]
      %v1181 = vld [vmem:[%s1167 + $0x98] sm:$0xff]
      %v1182 = vld [vmem:[%s1167 + $0xa8] sm:$0xff]
      %v1183 = vld [vmem:[%s1167 + $0xb0] sm:$0xff]
      %v1184 = vpack.c.bf16 %v1169, %v1168
      %v1185 = vpack.c.bf16 %v1171, %v1170
      %v1186 = vpack.c.bf16 %v1173, %v1172
      %v1187 = vpack.c.bf16 %v1175, %v1174
      %v1188 = vpack.c.bf16 %v1177, %v1176
      %v1189 = vpack.c.bf16 %v1179, %v1178
      %v1190 = vpack.c.bf16 %v1181, %v1180
      %v1191 = vpack.c.bf16 %v1183, %v1182
      %1192 = vst [vmem:[#allocation3 + $0xa0] sm:$0xff] %v1184
      %1193 = vst [vmem:[#allocation3 + $0x168] sm:$0xff] %v1185
      %1194 = vst [vmem:[#allocation3 + $0x230] sm:$0xff] %v1186
      %1195 = vst [vmem:[#allocation3 + $0x2f8] sm:$0xff] %v1187
      %1196 = vst [vmem:[#allocation3 + $0x3c0] sm:$0xff] %v1188
      %1197 = vst [vmem:[#allocation3 + $0x488] sm:$0xff] %v1189
      %1198 = vst [vmem:[#allocation3 + $0x550] sm:$0xff] %v1190
      %1199 = vst [vmem:[#allocation3 + $0x618] sm:$0xff] %v1191
      %v1200 = vld [vmem:[%s1167 + $0x1] sm:$0xff]
      %v1201 = vld [vmem:[%s1167 + $0x9] sm:$0xff]
      %v1202 = vld [vmem:[%s1167 + $0x19] sm:$0xff]
      %v1203 = vld [vmem:[%s1167 + $0x21] sm:$0xff]
      %v1204 = vld [vmem:[%s1167 + $0x31] sm:$0xff]
      %v1205 = vld [vmem:[%s1167 + $0x39] sm:$0xff]
      %v1206 = vld [vmem:[%s1167 + $0x49] sm:$0xff]
      %v1207 = vld [vmem:[%s1167 + $0x51] sm:$0xff]
      %v1208 = vld [vmem:[%s1167 + $0x61] sm:$0xff]
      %v1209 = vld [vmem:[%s1167 + $0x69] sm:$0xff]
      %v1210 = vld [vmem:[%s1167 + $0x79] sm:$0xff]
      %v1211 = vld [vmem:[%s1167 + $0x81] sm:$0xff]
      %v1212 = vld [vmem:[%s1167 + $0x91] sm:$0xff]
      %v1213 = vld [vmem:[%s1167 + $0x99] sm:$0xff]
      %v1214 = vld [vmem:[%s1167 + $0xa9] sm:$0xff]
      %v1215 = vld [vmem:[%s1167 + $0xb1] sm:$0xff]
      %v1216 = vpack.c.bf16 %v1201, %v1200
      %v1217 = vpack.c.bf16 %v1203, %v1202
      %v1218 = vpack.c.bf16 %v1205, %v1204
      %v1219 = vpack.c.bf16 %v1207, %v1206
      %v1220 = vpack.c.bf16 %v1209, %v1208
      %v1221 = vpack.c.bf16 %v1211, %v1210
      %v1222 = vpack.c.bf16 %v1213, %v1212
      %v1223 = vpack.c.bf16 %v1215, %v1214
      %1224 = vst [vmem:[#allocation3 + $0xa8] sm:$0xff] %v1216
      %1225 = vst [vmem:[#allocation3 + $0x170] sm:$0xff] %v1217
      %1226 = vst [vmem:[#allocation3 + $0x238] sm:$0xff] %v1218
      %1227 = vst [vmem:[#allocation3 + $0x300] sm:$0xff] %v1219
      %1228 = vst [vmem:[#allocation3 + $0x3c8] sm:$0xff] %v1220
      %1229 = vst [vmem:[#allocation3 + $0x490] sm:$0xff] %v1221
      %1230 = vst [vmem:[#allocation3 + $0x558] sm:$0xff] %v1222
      %1231 = vst [vmem:[#allocation3 + $0x620] sm:$0xff] %v1223
      %v1232 = vld [vmem:[%s1167 + $0x2] sm:$0xff]
      %v1233 = vld [vmem:[%s1167 + $0xa] sm:$0xff]
      %v1234 = vld [vmem:[%s1167 + $0x1a] sm:$0xff]
      %v1235 = vld [vmem:[%s1167 + $0x22] sm:$0xff]
      %v1236 = vld [vmem:[%s1167 + $0x32] sm:$0xff]
      %v1237 = vld [vmem:[%s1167 + $0x3a] sm:$0xff]
      %v1238 = vld [vmem:[%s1167 + $0x4a] sm:$0xff]
      %v1239 = vld [vmem:[%s1167 + $0x52] sm:$0xff]
      %v1240 = vld [vmem:[%s1167 + $0x62] sm:$0xff]
      %v1241 = vld [vmem:[%s1167 + $0x6a] sm:$0xff]
      %v1242 = vld [vmem:[%s1167 + $0x7a] sm:$0xff]
      %v1243 = vld [vmem:[%s1167 + $0x82] sm:$0xff]
      %v1244 = vld [vmem:[%s1167 + $0x92] sm:$0xff]
      %v1245 = vld [vmem:[%s1167 + $0x9a] sm:$0xff]
      %v1246 = vld [vmem:[%s1167 + $0xaa] sm:$0xff]
      %v1247 = vld [vmem:[%s1167 + $0xb2] sm:$0xff]
      %v1248 = vpack.c.bf16 %v1233, %v1232
      %v1249 = vpack.c.bf16 %v1235, %v1234
      %v1250 = vpack.c.bf16 %v1237, %v1236
      %v1251 = vpack.c.bf16 %v1239, %v1238
      %v1252 = vpack.c.bf16 %v1241, %v1240
      %v1253 = vpack.c.bf16 %v1243, %v1242
      %v1254 = vpack.c.bf16 %v1245, %v1244
      %v1255 = vpack.c.bf16 %v1247, %v1246
      %1256 = vst [vmem:[#allocation3 + $0xb0] sm:$0xff] %v1248
      %1257 = vst [vmem:[#allocation3 + $0x178] sm:$0xff] %v1249
      %1258 = vst [vmem:[#allocation3 + $0x240] sm:$0xff] %v1250
      %1259 = vst [vmem:[#allocation3 + $0x308] sm:$0xff] %v1251
      %1260 = vst [vmem:[#allocation3 + $0x3d0] sm:$0xff] %v1252
      %1261 = vst [vmem:[#allocation3 + $0x498] sm:$0xff] %v1253
      %1262 = vst [vmem:[#allocation3 + $0x560] sm:$0xff] %v1254
      %1263 = vst [vmem:[#allocation3 + $0x628] sm:$0xff] %v1255
      %v1264 = vld [vmem:[%s1167 + $0x3] sm:$0xff]
      %v1265 = vld [vmem:[%s1167 + $0xb] sm:$0xff]
      %v1266 = vld [vmem:[%s1167 + $0x1b] sm:$0xff]
      %v1267 = vld [vmem:[%s1167 + $0x23] sm:$0xff]
      %v1268 = vld [vmem:[%s1167 + $0x33] sm:$0xff]
      %v1269 = vld [vmem:[%s1167 + $0x3b] sm:$0xff]
      %v1270 = vld [vmem:[%s1167 + $0x4b] sm:$0xff]
      %v1271 = vld [vmem:[%s1167 + $0x53] sm:$0xff]
      %v1272 = vld [vmem:[%s1167 + $0x63] sm:$0xff]
      %v1273 = vld [vmem:[%s1167 + $0x6b] sm:$0xff]
      %v1274 = vld [vmem:[%s1167 + $0x7b] sm:$0xff]
      %v1275 = vld [vmem:[%s1167 + $0x83] sm:$0xff]
      %v1276 = vld [vmem:[%s1167 + $0x93] sm:$0xff]
      %v1277 = vld [vmem:[%s1167 + $0x9b] sm:$0xff]
      %v1278 = vld [vmem:[%s1167 + $0xab] sm:$0xff]
      %v1279 = vld [vmem:[%s1167 + $0xb3] sm:$0xff]
      %v1280 = vpack.c.bf16 %v1265, %v1264
      %v1281 = vpack.c.bf16 %v1267, %v1266
      %v1282 = vpack.c.bf16 %v1269, %v1268
      %v1283 = vpack.c.bf16 %v1271, %v1270
      %v1284 = vpack.c.bf16 %v1273, %v1272
      %v1285 = vpack.c.bf16 %v1275, %v1274
      %v1286 = vpack.c.bf16 %v1277, %v1276
      %v1287 = vpack.c.bf16 %v1279, %v1278
      %1288 = vst [vmem:[#allocation3 + $0xb8] sm:$0xff] %v1280
      %1289 = vst [vmem:[#allocation3 + $0x180] sm:$0xff] %v1281
      %1290 = vst [vmem:[#allocation3 + $0x248] sm:$0xff] %v1282
      %1291 = vst [vmem:[#allocation3 + $0x310] sm:$0xff] %v1283
      %1292 = vst [vmem:[#allocation3 + $0x3d8] sm:$0xff] %v1284
      %1293 = vst [vmem:[#allocation3 + $0x4a0] sm:$0xff] %v1285
      %1294 = vst [vmem:[#allocation3 + $0x568] sm:$0xff] %v1286
      %1295 = vst [vmem:[#allocation3 + $0x630] sm:$0xff] %v1287
      %v1296 = vld [vmem:[%s1167 + $0x4] sm:$0xff]
      %v1297 = vld [vmem:[%s1167 + $0xc] sm:$0xff]
      %v1298 = vld [vmem:[%s1167 + $0x1c] sm:$0xff]
      %v1299 = vld [vmem:[%s1167 + $0x24] sm:$0xff]
      %v1300 = vld [vmem:[%s1167 + $0x34] sm:$0xff]
      %v1301 = vld [vmem:[%s1167 + $0x3c] sm:$0xff]
      %v1302 = vld [vmem:[%s1167 + $0x4c] sm:$0xff]
      %v1303 = vld [vmem:[%s1167 + $0x54] sm:$0xff]
      %v1304 = vld [vmem:[%s1167 + $0x64] sm:$0xff]
      %v1305 = vld [vmem:[%s1167 + $0x6c] sm:$0xff]
      %v1306 = vld [vmem:[%s1167 + $0x7c] sm:$0xff]
      %v1307 = vld [vmem:[%s1167 + $0x84] sm:$0xff]
      %v1308 = vld [vmem:[%s1167 + $0x94] sm:$0xff]
      %v1309 = vld [vmem:[%s1167 + $0x9c] sm:$0xff]
      %v1310 = vld [vmem:[%s1167 + $0xac] sm:$0xff]
      %v1311 = vld [vmem:[%s1167 + $0xb4] sm:$0xff]
      %v1312 = vpack.c.bf16 %v1297, %v1296
      %v1313 = vpack.c.bf16 %v1299, %v1298
      %v1314 = vpack.c.bf16 %v1301, %v1300
      %v1315 = vpack.c.bf16 %v1303, %v1302
      %v1316 = vpack.c.bf16 %v1305, %v1304
      %v1317 = vpack.c.bf16 %v1307, %v1306
      %v1318 = vpack.c.bf16 %v1309, %v1308
      %v1319 = vpack.c.bf16 %v1311, %v1310
      %1320 = vst [vmem:[#allocation3 + $0xc0] sm:$0xff] %v1312
      %1321 = vst [vmem:[#allocation3 + $0x188] sm:$0xff] %v1313
      %1322 = vst [vmem:[#allocation3 + $0x250] sm:$0xff] %v1314
      %1323 = vst [vmem:[#allocation3 + $0x318] sm:$0xff] %v1315
      %1324 = vst [vmem:[#allocation3 + $0x3e0] sm:$0xff] %v1316
      %1325 = vst [vmem:[#allocation3 + $0x4a8] sm:$0xff] %v1317
      %1326 = vst [vmem:[#allocation3 + $0x570] sm:$0xff] %v1318
      %1327 = vst [vmem:[#allocation3 + $0x638] sm:$0xff] %v1319
      %v1328 = vld [vmem:[#allocation3] sm:$0xff]
      %v1329 = vld [vmem:[#allocation3 + $0x8] sm:$0xff]
      %v1330 = vld [vmem:[#allocation3 + $0x10] sm:$0xff]
      %v1331 = vld [vmem:[#allocation3 + $0x18] sm:$0xff]
      %v1332 = vld [vmem:[#allocation3 + $0x20] sm:$0xff]
      %v1333 = vld [vmem:[#allocation3 + $0x28] sm:$0xff]
      %v1334 = vld [vmem:[#allocation3 + $0x30] sm:$0xff]
      %v1335 = vld [vmem:[#allocation3 + $0x38] sm:$0xff]
      %v1336 = vld [vmem:[#allocation3 + $0x40] sm:$0xff]
      %v1337 = vld [vmem:[#allocation3 + $0x48] sm:$0xff]
      %v1338 = vld [vmem:[#allocation3 + $0x50] sm:$0xff]
      %v1339 = vld [vmem:[#allocation3 + $0x58] sm:$0xff]
      %v1340 = vld [vmem:[#allocation3 + $0x60] sm:$0xff]
      %v1341 = vld [vmem:[#allocation3 + $0x68] sm:$0xff]
      %v1342 = vld [vmem:[#allocation3 + $0x70] sm:$0xff]
      %v1343 = vld [vmem:[#allocation3 + $0x78] sm:$0xff]
      %v1344 = vld [vmem:[#allocation3 + $0x80] sm:$0xff]
      %v1345 = vld [vmem:[#allocation3 + $0x88] sm:$0xff]
      %v1346 = vld [vmem:[#allocation3 + $0x90] sm:$0xff]
      %v1347 = vld [vmem:[#allocation3 + $0x98] sm:$0xff]
      %v1348 = vld [vmem:[#allocation3 + $0xa0] sm:$0xff]
      %v1349 = vld [vmem:[#allocation3 + $0xa8] sm:$0xff]
      %v1350 = vld [vmem:[#allocation3 + $0xb0] sm:$0xff]
      %v1351 = vld [vmem:[#allocation3 + $0xb8] sm:$0xff]
      %v1352 = vld [vmem:[#allocation3 + $0xc0] sm:$0xff]
      %v1353 = vld [vmem:[#allocation3 + $0xc8] sm:$0xff]
      %v1354 = vld [vmem:[#allocation3 + $0xd0] sm:$0xff]
      %v1355 = vld [vmem:[#allocation3 + $0xd8] sm:$0xff]
      %v1356 = vld [vmem:[#allocation3 + $0xe0] sm:$0xff]
      %v1357 = vld [vmem:[#allocation3 + $0xe8] sm:$0xff]
      %v1358 = vld [vmem:[#allocation3 + $0xf0] sm:$0xff]
      %v1359 = vld [vmem:[#allocation3 + $0xf8] sm:$0xff]
      %v1360 = vld [vmem:[#allocation3 + $0x100] sm:$0xff]
      %v1361 = vld [vmem:[#allocation3 + $0x108] sm:$0xff]
      %v1362 = vld [vmem:[#allocation3 + $0x110] sm:$0xff]
      %v1363 = vld [vmem:[#allocation3 + $0x118] sm:$0xff]
      %v1364 = vld [vmem:[#allocation3 + $0x120] sm:$0xff]
      %v1365 = vld [vmem:[#allocation3 + $0x128] sm:$0xff]
      %v1366 = vld [vmem:[#allocation3 + $0x130] sm:$0xff]
      %v1367 = vld [vmem:[#allocation3 + $0x138] sm:$0xff]
      %v1368 = vld [vmem:[#allocation3 + $0x140] sm:$0xff]
      %v1369 = vld [vmem:[#allocation3 + $0x148] sm:$0xff]
      %v1370 = vld [vmem:[#allocation3 + $0x150] sm:$0xff]
      %v1371 = vld [vmem:[#allocation3 + $0x158] sm:$0xff]
      %v1372 = vld [vmem:[#allocation3 + $0x160] sm:$0xff]
      %v1373 = vld [vmem:[#allocation3 + $0x168] sm:$0xff]
      %v1374 = vld [vmem:[#allocation3 + $0x170] sm:$0xff]
      %v1375 = vld [vmem:[#allocation3 + $0x178] sm:$0xff]
      %v1376 = vld [vmem:[#allocation3 + $0x180] sm:$0xff]
      %v1377 = vld [vmem:[#allocation3 + $0x188] sm:$0xff]
      %v1378 = vld [vmem:[#allocation3 + $0x190] sm:$0xff]
      %v1379 = vld [vmem:[#allocation3 + $0x198] sm:$0xff]
      %v1380 = vld [vmem:[#allocation3 + $0x1a0] sm:$0xff]
      %v1381 = vld [vmem:[#allocation3 + $0x1a8] sm:$0xff]
      %v1382 = vld [vmem:[#allocation3 + $0x1b0] sm:$0xff]
      %v1383 = vld [vmem:[#allocation3 + $0x1b8] sm:$0xff]
      %v1384 = vld [vmem:[#allocation3 + $0x1c0] sm:$0xff]
      %v1385 = vld [vmem:[#allocation3 + $0x1c8] sm:$0xff]
      %v1386 = vld [vmem:[#allocation3 + $0x1d0] sm:$0xff]
      %v1387 = vld [vmem:[#allocation3 + $0x1d8] sm:$0xff]
      %v1388 = vld [vmem:[#allocation3 + $0x1e0] sm:$0xff]
      %v1389 = vld [vmem:[#allocation3 + $0x1e8] sm:$0xff]
      %v1390 = vld [vmem:[#allocation3 + $0x1f0] sm:$0xff]
      %v1391 = vld [vmem:[#allocation3 + $0x1f8] sm:$0xff]
      %v1392 = vld [vmem:[#allocation3 + $0x200] sm:$0xff]
      %v1393 = vld [vmem:[#allocation3 + $0x208] sm:$0xff]
      %v1394 = vld [vmem:[#allocation3 + $0x210] sm:$0xff]
      %v1395 = vld [vmem:[#allocation3 + $0x218] sm:$0xff]
      %v1396 = vld [vmem:[#allocation3 + $0x220] sm:$0xff]
      %v1397 = vld [vmem:[#allocation3 + $0x228] sm:$0xff]
      %v1398 = vld [vmem:[#allocation3 + $0x230] sm:$0xff]
      %v1399 = vld [vmem:[#allocation3 + $0x238] sm:$0xff]
      %v1400 = vld [vmem:[#allocation3 + $0x240] sm:$0xff]
      %v1401 = vld [vmem:[#allocation3 + $0x248] sm:$0xff]
      %v1402 = vld [vmem:[#allocation3 + $0x250] sm:$0xff]
      %v1403 = vld [vmem:[#allocation3 + $0x258] sm:$0xff]
      %v1404 = vld [vmem:[#allocation3 + $0x260] sm:$0xff]
      %v1405 = vld [vmem:[#allocation3 + $0x268] sm:$0xff]
      %v1406 = vld [vmem:[#allocation3 + $0x270] sm:$0xff]
      %v1407 = vld [vmem:[#allocation3 + $0x278] sm:$0xff]
      %v1408 = vld [vmem:[#allocation3 + $0x280] sm:$0xff]
      %v1409 = vld [vmem:[#allocation3 + $0x288] sm:$0xff]
      %v1410 = vld [vmem:[#allocation3 + $0x290] sm:$0xff]
      %v1411 = vld [vmem:[#allocation3 + $0x298] sm:$0xff]
      %v1412 = vld [vmem:[#allocation3 + $0x2a0] sm:$0xff]
      %v1413 = vld [vmem:[#allocation3 + $0x2a8] sm:$0xff]
      %v1414 = vld [vmem:[#allocation3 + $0x2b0] sm:$0xff]
      %v1415 = vld [vmem:[#allocation3 + $0x2b8] sm:$0xff]
      %v1416 = vld [vmem:[#allocation3 + $0x2c0] sm:$0xff]
      %v1417 = vld [vmem:[#allocation3 + $0x2c8] sm:$0xff]
      %v1418 = vld [vmem:[#allocation3 + $0x2d0] sm:$0xff]
      %v1419 = vld [vmem:[#allocation3 + $0x2d8] sm:$0xff]
      %v1420 = vld [vmem:[#allocation3 + $0x2e0] sm:$0xff]
      %v1421 = vld [vmem:[#allocation3 + $0x2e8] sm:$0xff]
      %v1422 = vld [vmem:[#allocation3 + $0x2f0] sm:$0xff]
      %v1423 = vld [vmem:[#allocation3 + $0x2f8] sm:$0xff]
      %v1424 = vld [vmem:[#allocation3 + $0x300] sm:$0xff]
      %v1425 = vld [vmem:[#allocation3 + $0x308] sm:$0xff]
      %v1426 = vld [vmem:[#allocation3 + $0x310] sm:$0xff]
      %v1427 = vld [vmem:[#allocation3 + $0x318] sm:$0xff]
      %v1428 = vld [vmem:[#allocation3 + $0x320] sm:$0xff]
      %v1429 = vld [vmem:[#allocation3 + $0x328] sm:$0xff]
      %v1430 = vld [vmem:[#allocation3 + $0x330] sm:$0xff]
      %v1431 = vld [vmem:[#allocation3 + $0x338] sm:$0xff]
      %v1432 = vld [vmem:[#allocation3 + $0x340] sm:$0xff]
      %v1433 = vld [vmem:[#allocation3 + $0x348] sm:$0xff]
      %v1434 = vld [vmem:[#allocation3 + $0x350] sm:$0xff]
      %v1435 = vld [vmem:[#allocation3 + $0x358] sm:$0xff]
      %v1436 = vld [vmem:[#allocation3 + $0x360] sm:$0xff]
      %v1437 = vld [vmem:[#allocation3 + $0x368] sm:$0xff]
      %v1438 = vld [vmem:[#allocation3 + $0x370] sm:$0xff]
      %v1439 = vld [vmem:[#allocation3 + $0x378] sm:$0xff]
      %v1440 = vld [vmem:[#allocation3 + $0x380] sm:$0xff]
      %v1441 = vld [vmem:[#allocation3 + $0x388] sm:$0xff]
      %v1442 = vld [vmem:[#allocation3 + $0x390] sm:$0xff]
      %v1443 = vld [vmem:[#allocation3 + $0x398] sm:$0xff]
      %v1444 = vld [vmem:[#allocation3 + $0x3a0] sm:$0xff]
      %v1445 = vld [vmem:[#allocation3 + $0x3a8] sm:$0xff]
      %v1446 = vld [vmem:[#allocation3 + $0x3b0] sm:$0xff]
      %v1447 = vld [vmem:[#allocation3 + $0x3b8] sm:$0xff]
      %v1448 = vld [vmem:[#allocation3 + $0x3c0] sm:$0xff]
      %v1449 = vld [vmem:[#allocation3 + $0x3c8] sm:$0xff]
      %v1450 = vld [vmem:[#allocation3 + $0x3d0] sm:$0xff]
      %v1451 = vld [vmem:[#allocation3 + $0x3d8] sm:$0xff]
      %v1452 = vld [vmem:[#allocation3 + $0x3e0] sm:$0xff]
      %v1453 = vld [vmem:[#allocation3 + $0x3e8] sm:$0xff]
      %v1454 = vld [vmem:[#allocation3 + $0x3f0] sm:$0xff]
      %v1455 = vld [vmem:[#allocation3 + $0x3f8] sm:$0xff]
      %v1456 = vld [vmem:[#allocation3 + $0x400] sm:$0xff]
      %v1457 = vld [vmem:[#allocation3 + $0x408] sm:$0xff]
      %v1458 = vld [vmem:[#allocation3 + $0x410] sm:$0xff]
      %v1459 = vld [vmem:[#allocation3 + $0x418] sm:$0xff]
      %v1460 = vld [vmem:[#allocation3 + $0x420] sm:$0xff]
      %v1461 = vld [vmem:[#allocation3 + $0x428] sm:$0xff]
      %v1462 = vld [vmem:[#allocation3 + $0x430] sm:$0xff]
      %v1463 = vld [vmem:[#allocation3 + $0x438] sm:$0xff]
      %v1464 = vld [vmem:[#allocation3 + $0x440] sm:$0xff]
      %v1465 = vld [vmem:[#allocation3 + $0x448] sm:$0xff]
      %v1466 = vld [vmem:[#allocation3 + $0x450] sm:$0xff]
      %v1467 = vld [vmem:[#allocation3 + $0x458] sm:$0xff]
      %v1468 = vld [vmem:[#allocation3 + $0x460] sm:$0xff]
      %v1469 = vld [vmem:[#allocation3 + $0x468] sm:$0xff]
      %v1470 = vld [vmem:[#allocation3 + $0x470] sm:$0xff]
      %v1471 = vld [vmem:[#allocation3 + $0x478] sm:$0xff]
      %v1472 = vld [vmem:[#allocation3 + $0x480] sm:$0xff]
      %v1473 = vld [vmem:[#allocation3 + $0x488] sm:$0xff]
      %v1474 = vld [vmem:[#allocation3 + $0x490] sm:$0xff]
      %v1475 = vld [vmem:[#allocation3 + $0x498] sm:$0xff]
      %v1476 = vld [vmem:[#allocation3 + $0x4a0] sm:$0xff]
      %v1477 = vld [vmem:[#allocation3 + $0x4a8] sm:$0xff]
      %v1478 = vld [vmem:[#allocation3 + $0x4b0] sm:$0xff]
      %v1479 = vld [vmem:[#allocation3 + $0x4b8] sm:$0xff]
      %v1480 = vld [vmem:[#allocation3 + $0x4c0] sm:$0xff]
      %v1481 = vld [vmem:[#allocation3 + $0x4c8] sm:$0xff]
      %v1482 = vld [vmem:[#allocation3 + $0x4d0] sm:$0xff]
      %v1483 = vld [vmem:[#allocation3 + $0x4d8] sm:$0xff]
      %v1484 = vld [vmem:[#allocation3 + $0x4e0] sm:$0xff]
      %v1485 = vld [vmem:[#allocation3 + $0x4e8] sm:$0xff]
      %v1486 = vld [vmem:[#allocation3 + $0x4f0] sm:$0xff]
      %v1487 = vld [vmem:[#allocation3 + $0x4f8] sm:$0xff]
      %v1488 = vld [vmem:[#allocation3 + $0x500] sm:$0xff]
      %v1489 = vld [vmem:[#allocation3 + $0x508] sm:$0xff]
      %v1490 = vld [vmem:[#allocation3 + $0x510] sm:$0xff]
      %v1491 = vld [vmem:[#allocation3 + $0x518] sm:$0xff]
      %v1492 = vld [vmem:[#allocation3 + $0x520] sm:$0xff]
      %v1493 = vld [vmem:[#allocation3 + $0x528] sm:$0xff]
      %v1494 = vld [vmem:[#allocation3 + $0x530] sm:$0xff]
      %v1495 = vld [vmem:[#allocation3 + $0x538] sm:$0xff]
      %v1496 = vld [vmem:[#allocation3 + $0x540] sm:$0xff]
      %v1497 = vld [vmem:[#allocation3 + $0x548] sm:$0xff]
      %v1498 = vld [vmem:[#allocation3 + $0x550] sm:$0xff]
      %v1499 = vld [vmem:[#allocation3 + $0x558] sm:$0xff]
      %v1500 = vld [vmem:[#allocation3 + $0x560] sm:$0xff]
      %v1501 = vld [vmem:[#allocation3 + $0x568] sm:$0xff]
      %v1502 = vld [vmem:[#allocation3 + $0x570] sm:$0xff]
      %v1503 = vld [vmem:[#allocation3 + $0x578] sm:$0xff]
      %v1504 = vld [vmem:[#allocation3 + $0x580] sm:$0xff]
      %v1505 = vld [vmem:[#allocation3 + $0x588] sm:$0xff]
      %v1506 = vld [vmem:[#allocation3 + $0x590] sm:$0xff]
      %v1507 = vld [vmem:[#allocation3 + $0x598] sm:$0xff]
      %v1508 = vld [vmem:[#allocation3 + $0x5a0] sm:$0xff]
      %v1509 = vld [vmem:[#allocation3 + $0x5a8] sm:$0xff]
      %v1510 = vld [vmem:[#allocation3 + $0x5b0] sm:$0xff]
      %v1511 = vld [vmem:[#allocation3 + $0x5b8] sm:$0xff]
      %v1512 = vld [vmem:[#allocation3 + $0x5c0] sm:$0xff]
      %v1513 = vld [vmem:[#allocation3 + $0x5c8] sm:$0xff]
      %v1514 = vld [vmem:[#allocation3 + $0x5d0] sm:$0xff]
      %v1515 = vld [vmem:[#allocation3 + $0x5d8] sm:$0xff]
      %v1516 = vld [vmem:[#allocation3 + $0x5e0] sm:$0xff]
      %v1517 = vld [vmem:[#allocation3 + $0x5e8] sm:$0xff]
      %v1518 = vld [vmem:[#allocation3 + $0x5f0] sm:$0xff]
      %v1519 = vld [vmem:[#allocation3 + $0x5f8] sm:$0xff]
      %v1520 = vld [vmem:[#allocation3 + $0x600] sm:$0xff]
      %v1521 = vld [vmem:[#allocation3 + $0x608] sm:$0xff]
      %v1522 = vld [vmem:[#allocation3 + $0x610] sm:$0xff]
      %v1523 = vld [vmem:[#allocation3 + $0x618] sm:$0xff]
      %v1524 = vld [vmem:[#allocation3 + $0x620] sm:$0xff]
      %v1525 = vld [vmem:[#allocation3 + $0x628] sm:$0xff]
      %v1526 = vld [vmem:[#allocation3 + $0x630] sm:$0xff]
      %v1527 = vld [vmem:[#allocation3 + $0x638] sm:$0xff]
      %v1528 = vld [vmem:[%s3] sm:$0xff]
      %v1529 = vld [vmem:[%s3 + $0x8] sm:$0xff]
      %v1530 = vld [vmem:[%s3 + $0x10] sm:$0xff]
      %v1531 = vld [vmem:[%s3 + $0x18] sm:$0xff]
      %v1532 = vld [vmem:[%s3 + $0x20] sm:$0xff]
      %v1533 = vld [vmem:[%s3 + $0x28] sm:$0xff]
      %v1534 = vld [vmem:[%s3 + $0x30] sm:$0xff]
      %v1535 = vld [vmem:[%s3 + $0x38] sm:$0xff]
      %v1536 = vld [vmem:[%s3 + $0x40] sm:$0xff]
      %v1537 = vld [vmem:[%s3 + $0x48] sm:$0xff]
      %v1538 = vld [vmem:[%s3 + $0x50] sm:$0xff]
      %v1539 = vld [vmem:[%s3 + $0x58] sm:$0xff]
      %v1540 = vld [vmem:[%s3 + $0x60] sm:$0xff]
      %v1541 = vld [vmem:[%s3 + $0x68] sm:$0xff]
      %v1542 = vld [vmem:[%s3 + $0x70] sm:$0xff]
      %v1543 = vld [vmem:[%s3 + $0x78] sm:$0xff]
      %v1544 = vld [vmem:[%s3 + $0x80] sm:$0xff]
      %v1545 = vld [vmem:[%s3 + $0x88] sm:$0xff]
      %v1546 = vld [vmem:[%s3 + $0x90] sm:$0xff]
      %v1547 = vld [vmem:[%s3 + $0x98] sm:$0xff]
      %v1548 = vld [vmem:[%s3 + $0xa0] sm:$0xff]
      %v1549 = vld [vmem:[%s3 + $0xa8] sm:$0xff]
      %v1550 = vld [vmem:[%s3 + $0xb0] sm:$0xff]
      %v1551 = vld [vmem:[%s3 + $0xb8] sm:$0xff]
      %v1552 = vld [vmem:[%s3 + $0xc0] sm:$0xff]
      %v1553 = vld [vmem:[%s3 + $0xc8] sm:$0xff]
      %v1554 = vld [vmem:[%s3 + $0xd0] sm:$0xff]
      %v1555 = vld [vmem:[%s3 + $0xd8] sm:$0xff]
      %v1556 = vld [vmem:[%s3 + $0xe0] sm:$0xff]
      %v1557 = vld [vmem:[%s3 + $0xe8] sm:$0xff]
      %v1558 = vld [vmem:[%s3 + $0xf0] sm:$0xff]
      %v1559 = vld [vmem:[%s3 + $0xf8] sm:$0xff]
      %v1560 = vld [vmem:[%s3 + $0x100] sm:$0xff]
      %v1561 = vld [vmem:[%s3 + $0x108] sm:$0xff]
      %v1562 = vld [vmem:[%s3 + $0x110] sm:$0xff]
      %v1563 = vld [vmem:[%s3 + $0x118] sm:$0xff]
      %v1564 = vld [vmem:[%s3 + $0x120] sm:$0xff]
      %v1565 = vld [vmem:[%s3 + $0x128] sm:$0xff]
      %v1566 = vld [vmem:[%s3 + $0x130] sm:$0xff]
      %v1567 = vld [vmem:[%s3 + $0x138] sm:$0xff]
      %v1568 = vld [vmem:[%s3 + $0x140] sm:$0xff]
      %v1569 = vld [vmem:[%s3 + $0x148] sm:$0xff]
      %v1570 = vld [vmem:[%s3 + $0x150] sm:$0xff]
      %v1571 = vld [vmem:[%s3 + $0x158] sm:$0xff]
      %v1572 = vld [vmem:[%s3 + $0x160] sm:$0xff]
      %v1573 = vld [vmem:[%s3 + $0x168] sm:$0xff]
      %v1574 = vld [vmem:[%s3 + $0x170] sm:$0xff]
      %v1575 = vld [vmem:[%s3 + $0x178] sm:$0xff]
      %v1576 = vld [vmem:[%s3 + $0x180] sm:$0xff]
      %v1577 = vld [vmem:[%s3 + $0x188] sm:$0xff]
      %v1578 = vld [vmem:[%s3 + $0x190] sm:$0xff]
      %v1579 = vld [vmem:[%s3 + $0x198] sm:$0xff]
      %v1580 = vld [vmem:[%s3 + $0x1a0] sm:$0xff]
      %v1581 = vld [vmem:[%s3 + $0x1a8] sm:$0xff]
      %v1582 = vld [vmem:[%s3 + $0x1b0] sm:$0xff]
      %v1583 = vld [vmem:[%s3 + $0x1b8] sm:$0xff]
      %v1584 = vld [vmem:[%s3 + $0x1c0] sm:$0xff]
      %v1585 = vld [vmem:[%s3 + $0x1c8] sm:$0xff]
      %v1586 = vld [vmem:[%s3 + $0x1d0] sm:$0xff]
      %v1587 = vld [vmem:[%s3 + $0x1d8] sm:$0xff]
      %v1588 = vld [vmem:[%s3 + $0x1e0] sm:$0xff]
      %v1589 = vld [vmem:[%s3 + $0x1e8] sm:$0xff]
      %v1590 = vld [vmem:[%s3 + $0x1f0] sm:$0xff]
      %v1591 = vld [vmem:[%s3 + $0x1f8] sm:$0xff]
      %v1592 = vld [vmem:[%s3 + $0x200] sm:$0xff]
      %v1593 = vld [vmem:[%s3 + $0x208] sm:$0xff]
      %v1594 = vld [vmem:[%s3 + $0x210] sm:$0xff]
      %v1595 = vld [vmem:[%s3 + $0x218] sm:$0xff]
      %v1596 = vld [vmem:[%s3 + $0x220] sm:$0xff]
      %v1597 = vld [vmem:[%s3 + $0x228] sm:$0xff]
      %v1598 = vld [vmem:[%s3 + $0x230] sm:$0xff]
      %v1599 = vld [vmem:[%s3 + $0x238] sm:$0xff]
      %v1600 = vld [vmem:[%s3 + $0x240] sm:$0xff]
      %v1601 = vld [vmem:[%s3 + $0x248] sm:$0xff]
      %v1602 = vld [vmem:[%s3 + $0x250] sm:$0xff]
      %v1603 = vld [vmem:[%s3 + $0x258] sm:$0xff]
      %v1604 = vld [vmem:[%s3 + $0x260] sm:$0xff]
      %v1605 = vld [vmem:[%s3 + $0x268] sm:$0xff]
      %v1606 = vld [vmem:[%s3 + $0x270] sm:$0xff]
      %v1607 = vld [vmem:[%s3 + $0x278] sm:$0xff]
      %v1608 = vld [vmem:[%s3 + $0x280] sm:$0xff]
      %v1609 = vld [vmem:[%s3 + $0x288] sm:$0xff]
      %v1610 = vld [vmem:[%s3 + $0x290] sm:$0xff]
      %v1611 = vld [vmem:[%s3 + $0x298] sm:$0xff]
      %v1612 = vld [vmem:[%s3 + $0x2a0] sm:$0xff]
      %v1613 = vld [vmem:[%s3 + $0x2a8] sm:$0xff]
      %v1614 = vld [vmem:[%s3 + $0x2b0] sm:$0xff]
      %v1615 = vld [vmem:[%s3 + $0x2b8] sm:$0xff]
      %v1616 = vld [vmem:[%s3 + $0x2c0] sm:$0xff]
      %v1617 = vld [vmem:[%s3 + $0x2c8] sm:$0xff]
      %v1618 = vld [vmem:[%s3 + $0x2d0] sm:$0xff]
      %v1619 = vld [vmem:[%s3 + $0x2d8] sm:$0xff]
      %v1620 = vld [vmem:[%s3 + $0x2e0] sm:$0xff]
      %v1621 = vld [vmem:[%s3 + $0x2e8] sm:$0xff]
      %v1622 = vld [vmem:[%s3 + $0x2f0] sm:$0xff]
      %v1623 = vld [vmem:[%s3 + $0x2f8] sm:$0xff]
      %v1624 = vld [vmem:[%s3 + $0x300] sm:$0xff]
      %v1625 = vld [vmem:[%s3 + $0x308] sm:$0xff]
      %v1626 = vld [vmem:[%s3 + $0x310] sm:$0xff]
      %v1627 = vld [vmem:[%s3 + $0x318] sm:$0xff]
      %v1628 = vld [vmem:[%s3 + $0x320] sm:$0xff]
      %v1629 = vld [vmem:[%s3 + $0x328] sm:$0xff]
      %v1630 = vld [vmem:[%s3 + $0x330] sm:$0xff]
      %v1631 = vld [vmem:[%s3 + $0x338] sm:$0xff]
      %v1632 = vld [vmem:[%s3 + $0x340] sm:$0xff]
      %v1633 = vld [vmem:[%s3 + $0x348] sm:$0xff]
      %v1634 = vld [vmem:[%s3 + $0x350] sm:$0xff]
      %v1635 = vld [vmem:[%s3 + $0x358] sm:$0xff]
      %v1636 = vld [vmem:[%s3 + $0x360] sm:$0xff]
      %v1637 = vld [vmem:[%s3 + $0x368] sm:$0xff]
      %v1638 = vld [vmem:[%s3 + $0x370] sm:$0xff]
      %v1639 = vld [vmem:[%s3 + $0x378] sm:$0xff]
      %v1640 = vld [vmem:[%s3 + $0x380] sm:$0xff]
      %v1641 = vld [vmem:[%s3 + $0x388] sm:$0xff]
      %v1642 = vld [vmem:[%s3 + $0x390] sm:$0xff]
      %v1643 = vld [vmem:[%s3 + $0x398] sm:$0xff]
      %v1644 = vld [vmem:[%s3 + $0x3a0] sm:$0xff]
      %v1645 = vld [vmem:[%s3 + $0x3a8] sm:$0xff]
      %v1646 = vld [vmem:[%s3 + $0x3b0] sm:$0xff]
      %v1647 = vld [vmem:[%s3 + $0x3b8] sm:$0xff]
      %v1648 = vld [vmem:[%s3 + $0x3c0] sm:$0xff]
      %v1649 = vld [vmem:[%s3 + $0x3c8] sm:$0xff]
      %v1650 = vld [vmem:[%s3 + $0x3d0] sm:$0xff]
      %v1651 = vld [vmem:[%s3 + $0x3d8] sm:$0xff]
      %v1652 = vld [vmem:[%s3 + $0x3e0] sm:$0xff]
      %v1653 = vld [vmem:[%s3 + $0x3e8] sm:$0xff]
      %v1654 = vld [vmem:[%s3 + $0x3f0] sm:$0xff]
      %v1655 = vld [vmem:[%s3 + $0x3f8] sm:$0xff]
      %v1656 = vld [vmem:[%s3 + $0x400] sm:$0xff]
      %v1657 = vld [vmem:[%s3 + $0x408] sm:$0xff]
      %v1658 = vld [vmem:[%s3 + $0x410] sm:$0xff]
      %v1659 = vld [vmem:[%s3 + $0x418] sm:$0xff]
      %v1660 = vld [vmem:[%s3 + $0x420] sm:$0xff]
      %v1661 = vld [vmem:[%s3 + $0x428] sm:$0xff]
      %v1662 = vld [vmem:[%s3 + $0x430] sm:$0xff]
      %v1663 = vld [vmem:[%s3 + $0x438] sm:$0xff]
      %v1664 = vld [vmem:[%s3 + $0x440] sm:$0xff]
      %v1665 = vld [vmem:[%s3 + $0x448] sm:$0xff]
      %v1666 = vld [vmem:[%s3 + $0x450] sm:$0xff]
      %v1667 = vld [vmem:[%s3 + $0x458] sm:$0xff]
      %v1668 = vld [vmem:[%s3 + $0x460] sm:$0xff]
      %v1669 = vld [vmem:[%s3 + $0x468] sm:$0xff]
      %v1670 = vld [vmem:[%s3 + $0x470] sm:$0xff]
      %v1671 = vld [vmem:[%s3 + $0x478] sm:$0xff]
      %v1672 = vld [vmem:[%s3 + $0x480] sm:$0xff]
      %v1673 = vld [vmem:[%s3 + $0x488] sm:$0xff]
      %v1674 = vld [vmem:[%s3 + $0x490] sm:$0xff]
      %v1675 = vld [vmem:[%s3 + $0x498] sm:$0xff]
      %v1676 = vld [vmem:[%s3 + $0x4a0] sm:$0xff]
      %v1677 = vld [vmem:[%s3 + $0x4a8] sm:$0xff]
      %v1678 = vld [vmem:[%s3 + $0x4b0] sm:$0xff]
      %v1679 = vld [vmem:[%s3 + $0x4b8] sm:$0xff]
      %v1680 = vld [vmem:[%s3 + $0x4c0] sm:$0xff]
      %v1681 = vld [vmem:[%s3 + $0x4c8] sm:$0xff]
      %v1682 = vld [vmem:[%s3 + $0x4d0] sm:$0xff]
      %v1683 = vld [vmem:[%s3 + $0x4d8] sm:$0xff]
      %v1684 = vld [vmem:[%s3 + $0x4e0] sm:$0xff]
      %v1685 = vld [vmem:[%s3 + $0x4e8] sm:$0xff]
      %v1686 = vld [vmem:[%s3 + $0x4f0] sm:$0xff]
      %v1687 = vld [vmem:[%s3 + $0x4f8] sm:$0xff]
      %v1688 = vld [vmem:[%s3 + $0x500] sm:$0xff]
      %v1689 = vld [vmem:[%s3 + $0x508] sm:$0xff]
      %v1690 = vld [vmem:[%s3 + $0x510] sm:$0xff]
      %v1691 = vld [vmem:[%s3 + $0x518] sm:$0xff]
      %v1692 = vld [vmem:[%s3 + $0x520] sm:$0xff]
      %v1693 = vld [vmem:[%s3 + $0x528] sm:$0xff]
      %v1694 = vld [vmem:[%s3 + $0x530] sm:$0xff]
      %v1695 = vld [vmem:[%s3 + $0x538] sm:$0xff]
      %v1696 = vld [vmem:[%s3 + $0x540] sm:$0xff]
      %v1697 = vld [vmem:[%s3 + $0x548] sm:$0xff]
      %v1698 = vld [vmem:[%s3 + $0x550] sm:$0xff]
      %v1699 = vld [vmem:[%s3 + $0x558] sm:$0xff]
      %v1700 = vld [vmem:[%s3 + $0x560] sm:$0xff]
      %v1701 = vld [vmem:[%s3 + $0x568] sm:$0xff]
      %v1702 = vld [vmem:[%s3 + $0x570] sm:$0xff]
      %v1703 = vld [vmem:[%s3 + $0x578] sm:$0xff]
      %v1704 = vld [vmem:[%s3 + $0x580] sm:$0xff]
      %v1705 = vld [vmem:[%s3 + $0x588] sm:$0xff]
      %v1706 = vld [vmem:[%s3 + $0x590] sm:$0xff]
      %v1707 = vld [vmem:[%s3 + $0x598] sm:$0xff]
      %v1708 = vld [vmem:[%s3 + $0x5a0] sm:$0xff]
      %v1709 = vld [vmem:[%s3 + $0x5a8] sm:$0xff]
      %v1710 = vld [vmem:[%s3 + $0x5b0] sm:$0xff]
      %v1711 = vld [vmem:[%s3 + $0x5b8] sm:$0xff]
      %v1712 = vld [vmem:[%s3 + $0x5c0] sm:$0xff]
      %v1713 = vld [vmem:[%s3 + $0x5c8] sm:$0xff]
      %v1714 = vld [vmem:[%s3 + $0x5d0] sm:$0xff]
      %v1715 = vld [vmem:[%s3 + $0x5d8] sm:$0xff]
      %v1716 = vld [vmem:[%s3 + $0x5e0] sm:$0xff]
      %v1717 = vld [vmem:[%s3 + $0x5e8] sm:$0xff]
      %v1718 = vld [vmem:[%s3 + $0x5f0] sm:$0xff]
      %v1719 = vld [vmem:[%s3 + $0x5f8] sm:$0xff]
      %v1720 = vld [vmem:[%s3 + $0x600] sm:$0xff]
      %v1721 = vld [vmem:[%s3 + $0x608] sm:$0xff]
      %v1722 = vld [vmem:[%s3 + $0x610] sm:$0xff]
      %v1723 = vld [vmem:[%s3 + $0x618] sm:$0xff]
      %v1724 = vld [vmem:[%s3 + $0x620] sm:$0xff]
      %v1725 = vld [vmem:[%s3 + $0x628] sm:$0xff]
      %v1726 = vld [vmem:[%s3 + $0x630] sm:$0xff]
      %v1727 = vld [vmem:[%s3 + $0x638] sm:$0xff]
      %v1728 = vld [vmem:[%s3 + $0x640] sm:$0xff]
      %v1729 = vld [vmem:[%s3 + $0x648] sm:$0xff]
      %v1730 = vld [vmem:[%s3 + $0x650] sm:$0xff]
      %v1731 = vld [vmem:[%s3 + $0x658] sm:$0xff]
      %v1732 = vld [vmem:[%s3 + $0x660] sm:$0xff]
      %v1733 = vld [vmem:[%s3 + $0x668] sm:$0xff]
      %v1734 = vld [vmem:[%s3 + $0x670] sm:$0xff]
      %v1735 = vld [vmem:[%s3 + $0x678] sm:$0xff]
      %v1736 = vld [vmem:[%s3 + $0x680] sm:$0xff]
      %v1737 = vld [vmem:[%s3 + $0x688] sm:$0xff]
      %v1738 = vld [vmem:[%s3 + $0x690] sm:$0xff]
      %v1739 = vld [vmem:[%s3 + $0x698] sm:$0xff]
      %v1740 = vld [vmem:[%s3 + $0x6a0] sm:$0xff]
      %v1741 = vld [vmem:[%s3 + $0x6a8] sm:$0xff]
      %v1742 = vld [vmem:[%s3 + $0x6b0] sm:$0xff]
      %v1743 = vld [vmem:[%s3 + $0x6b8] sm:$0xff]
      %v1744 = vld [vmem:[%s3 + $0x6c0] sm:$0xff]
      %v1745 = vld [vmem:[%s3 + $0x6c8] sm:$0xff]
      %v1746 = vld [vmem:[%s3 + $0x6d0] sm:$0xff]
      %v1747 = vld [vmem:[%s3 + $0x6d8] sm:$0xff]
      %v1748 = vld [vmem:[%s3 + $0x6e0] sm:$0xff]
      %v1749 = vld [vmem:[%s3 + $0x6e8] sm:$0xff]
      %v1750 = vld [vmem:[%s3 + $0x6f0] sm:$0xff]
      %v1751 = vld [vmem:[%s3 + $0x6f8] sm:$0xff]
      %v1752 = vld [vmem:[%s3 + $0x700] sm:$0xff]
      %v1753 = vld [vmem:[%s3 + $0x708] sm:$0xff]
      %v1754 = vld [vmem:[%s3 + $0x710] sm:$0xff]
      %v1755 = vld [vmem:[%s3 + $0x718] sm:$0xff]
      %v1756 = vld [vmem:[%s3 + $0x720] sm:$0xff]
      %v1757 = vld [vmem:[%s3 + $0x728] sm:$0xff]
      %v1758 = vld [vmem:[%s3 + $0x730] sm:$0xff]
      %v1759 = vld [vmem:[%s3 + $0x738] sm:$0xff]
      %v1760 = vld [vmem:[%s3 + $0x740] sm:$0xff]
      %v1761 = vld [vmem:[%s3 + $0x748] sm:$0xff]
      %v1762 = vld [vmem:[%s3 + $0x750] sm:$0xff]
      %v1763 = vld [vmem:[%s3 + $0x758] sm:$0xff]
      %v1764 = vld [vmem:[%s3 + $0x760] sm:$0xff]
      %v1765 = vld [vmem:[%s3 + $0x768] sm:$0xff]
      %v1766 = vld [vmem:[%s3 + $0x770] sm:$0xff]
      %v1767 = vld [vmem:[%s3 + $0x778] sm:$0xff]
      %v1768 = vld [vmem:[%s3 + $0x780] sm:$0xff]
      %v1769 = vld [vmem:[%s3 + $0x788] sm:$0xff]
      %v1770 = vld [vmem:[%s3 + $0x790] sm:$0xff]
      %v1771 = vld [vmem:[%s3 + $0x798] sm:$0xff]
      %v1772 = vld [vmem:[%s3 + $0x7a0] sm:$0xff]
      %v1773 = vld [vmem:[%s3 + $0x7a8] sm:$0xff]
      %v1774 = vld [vmem:[%s3 + $0x7b0] sm:$0xff]
      %v1775 = vld [vmem:[%s3 + $0x7b8] sm:$0xff]
      %v1776 = vld [vmem:[%s3 + $0x7c0] sm:$0xff]
      %v1777 = vld [vmem:[%s3 + $0x7c8] sm:$0xff]
      %v1778 = vld [vmem:[%s3 + $0x7d0] sm:$0xff]
      %v1779 = vld [vmem:[%s3 + $0x7d8] sm:$0xff]
      %v1780 = vld [vmem:[%s3 + $0x7e0] sm:$0xff]
      %v1781 = vld [vmem:[%s3 + $0x7e8] sm:$0xff]
      %v1782 = vld [vmem:[%s3 + $0x7f0] sm:$0xff]
      %v1783 = vld [vmem:[%s3 + $0x7f8] sm:$0xff]
      %v1784 = vld [vmem:[%s3 + $0x800] sm:$0xff]
      %v1785 = vld [vmem:[%s3 + $0x808] sm:$0xff]
      %v1786 = vld [vmem:[%s3 + $0x810] sm:$0xff]
      %v1787 = vld [vmem:[%s3 + $0x818] sm:$0xff]
      %v1788 = vld [vmem:[%s3 + $0x820] sm:$0xff]
      %v1789 = vld [vmem:[%s3 + $0x828] sm:$0xff]
      %v1790 = vld [vmem:[%s3 + $0x830] sm:$0xff]
      %v1791 = vld [vmem:[%s3 + $0x838] sm:$0xff]
      %v1792 = vld [vmem:[%s3 + $0x840] sm:$0xff]
      %v1793 = vld [vmem:[%s3 + $0x848] sm:$0xff]
      %v1794 = vld [vmem:[%s3 + $0x850] sm:$0xff]
      %v1795 = vld [vmem:[%s3 + $0x858] sm:$0xff]
      %v1796 = vld [vmem:[%s3 + $0x860] sm:$0xff]
      %v1797 = vld [vmem:[%s3 + $0x868] sm:$0xff]
      %v1798 = vld [vmem:[%s3 + $0x870] sm:$0xff]
      %v1799 = vld [vmem:[%s3 + $0x878] sm:$0xff]
      %v1800 = vld [vmem:[%s3 + $0x880] sm:$0xff]
      %v1801 = vld [vmem:[%s3 + $0x888] sm:$0xff]
      %v1802 = vld [vmem:[%s3 + $0x890] sm:$0xff]
      %v1803 = vld [vmem:[%s3 + $0x898] sm:$0xff]
      %v1804 = vld [vmem:[%s3 + $0x8a0] sm:$0xff]
      %v1805 = vld [vmem:[%s3 + $0x8a8] sm:$0xff]
      %v1806 = vld [vmem:[%s3 + $0x8b0] sm:$0xff]
      %v1807 = vld [vmem:[%s3 + $0x8b8] sm:$0xff]
      %v1808 = vld [vmem:[%s3 + $0x8c0] sm:$0xff]
      %v1809 = vld [vmem:[%s3 + $0x8c8] sm:$0xff]
      %v1810 = vld [vmem:[%s3 + $0x8d0] sm:$0xff]
      %v1811 = vld [vmem:[%s3 + $0x8d8] sm:$0xff]
      %v1812 = vld [vmem:[%s3 + $0x8e0] sm:$0xff]
      %v1813 = vld [vmem:[%s3 + $0x8e8] sm:$0xff]
      %v1814 = vld [vmem:[%s3 + $0x8f0] sm:$0xff]
      %v1815 = vld [vmem:[%s3 + $0x8f8] sm:$0xff]
      %v1816 = vld [vmem:[%s3 + $0x900] sm:$0xff]
      %v1817 = vld [vmem:[%s3 + $0x908] sm:$0xff]
      %v1818 = vld [vmem:[%s3 + $0x910] sm:$0xff]
      %v1819 = vld [vmem:[%s3 + $0x918] sm:$0xff]
      %v1820 = vld [vmem:[%s3 + $0x920] sm:$0xff]
      %v1821 = vld [vmem:[%s3 + $0x928] sm:$0xff]
      %v1822 = vld [vmem:[%s3 + $0x930] sm:$0xff]
      %v1823 = vld [vmem:[%s3 + $0x938] sm:$0xff]
      %v1824 = vld [vmem:[%s3 + $0x940] sm:$0xff]
      %v1825 = vld [vmem:[%s3 + $0x948] sm:$0xff]
      %v1826 = vld [vmem:[%s3 + $0x950] sm:$0xff]
      %v1827 = vld [vmem:[%s3 + $0x958] sm:$0xff]
      %v1828 = vld [vmem:[%s3 + $0x960] sm:$0xff]
      %v1829 = vld [vmem:[%s3 + $0x968] sm:$0xff]
      %v1830 = vld [vmem:[%s3 + $0x970] sm:$0xff]
      %v1831 = vld [vmem:[%s3 + $0x978] sm:$0xff]
      %v1832 = vld [vmem:[%s3 + $0x980] sm:$0xff]
      %v1833 = vld [vmem:[%s3 + $0x988] sm:$0xff]
      %v1834 = vld [vmem:[%s3 + $0x990] sm:$0xff]
      %v1835 = vld [vmem:[%s3 + $0x998] sm:$0xff]
      %v1836 = vld [vmem:[%s3 + $0x9a0] sm:$0xff]
      %v1837 = vld [vmem:[%s3 + $0x9a8] sm:$0xff]
      %v1838 = vld [vmem:[%s3 + $0x9b0] sm:$0xff]
      %v1839 = vld [vmem:[%s3 + $0x9b8] sm:$0xff]
      %v1840 = vld [vmem:[%s3 + $0x9c0] sm:$0xff]
      %v1841 = vld [vmem:[%s3 + $0x9c8] sm:$0xff]
      %v1842 = vld [vmem:[%s3 + $0x9d0] sm:$0xff]
      %v1843 = vld [vmem:[%s3 + $0x9d8] sm:$0xff]
      %v1844 = vld [vmem:[%s3 + $0x9e0] sm:$0xff]
      %v1845 = vld [vmem:[%s3 + $0x9e8] sm:$0xff]
      %v1846 = vld [vmem:[%s3 + $0x9f0] sm:$0xff]
      %v1847 = vld [vmem:[%s3 + $0x9f8] sm:$0xff]
      %v1848 = vld [vmem:[%s3 + $0xa00] sm:$0xff]
      %v1849 = vld [vmem:[%s3 + $0xa08] sm:$0xff]
      %v1850 = vld [vmem:[%s3 + $0xa10] sm:$0xff]
      %v1851 = vld [vmem:[%s3 + $0xa18] sm:$0xff]
      %v1852 = vld [vmem:[%s3 + $0xa20] sm:$0xff]
      %v1853 = vld [vmem:[%s3 + $0xa28] sm:$0xff]
      %v1854 = vld [vmem:[%s3 + $0xa30] sm:$0xff]
      %v1855 = vld [vmem:[%s3 + $0xa38] sm:$0xff]
      %v1856 = vld [vmem:[%s3 + $0xa40] sm:$0xff]
      %v1857 = vld [vmem:[%s3 + $0xa48] sm:$0xff]
      %v1858 = vld [vmem:[%s3 + $0xa50] sm:$0xff]
      %v1859 = vld [vmem:[%s3 + $0xa58] sm:$0xff]
      %v1860 = vld [vmem:[%s3 + $0xa60] sm:$0xff]
      %v1861 = vld [vmem:[%s3 + $0xa68] sm:$0xff]
      %v1862 = vld [vmem:[%s3 + $0xa70] sm:$0xff]
      %v1863 = vld [vmem:[%s3 + $0xa78] sm:$0xff]
      %v1864 = vld [vmem:[%s3 + $0xa80] sm:$0xff]
      %v1865 = vld [vmem:[%s3 + $0xa88] sm:$0xff]
      %v1866 = vld [vmem:[%s3 + $0xa90] sm:$0xff]
      %v1867 = vld [vmem:[%s3 + $0xa98] sm:$0xff]
      %v1868 = vld [vmem:[%s3 + $0xaa0] sm:$0xff]
      %v1869 = vld [vmem:[%s3 + $0xaa8] sm:$0xff]
      %v1870 = vld [vmem:[%s3 + $0xab0] sm:$0xff]
      %v1871 = vld [vmem:[%s3 + $0xab8] sm:$0xff]
      %v1872 = vld [vmem:[%s3 + $0xac0] sm:$0xff]
      %v1873 = vld [vmem:[%s3 + $0xac8] sm:$0xff]
      %v1874 = vld [vmem:[%s3 + $0xad0] sm:$0xff]
      %v1875 = vld [vmem:[%s3 + $0xad8] sm:$0xff]
      %v1876 = vld [vmem:[%s3 + $0xae0] sm:$0xff]
      %v1877 = vld [vmem:[%s3 + $0xae8] sm:$0xff]
      %v1878 = vld [vmem:[%s3 + $0xaf0] sm:$0xff]
      %v1879 = vld [vmem:[%s3 + $0xaf8] sm:$0xff]
      %v1880 = vld [vmem:[%s3 + $0xb00] sm:$0xff]
      %v1881 = vld [vmem:[%s3 + $0xb08] sm:$0xff]
      %v1882 = vld [vmem:[%s3 + $0xb10] sm:$0xff]
      %v1883 = vld [vmem:[%s3 + $0xb18] sm:$0xff]
      %v1884 = vld [vmem:[%s3 + $0xb20] sm:$0xff]
      %v1885 = vld [vmem:[%s3 + $0xb28] sm:$0xff]
      %v1886 = vld [vmem:[%s3 + $0xb30] sm:$0xff]
      %v1887 = vld [vmem:[%s3 + $0xb38] sm:$0xff]
      %v1888 = vld [vmem:[%s3 + $0xb40] sm:$0xff]
      %v1889 = vld [vmem:[%s3 + $0xb48] sm:$0xff]
      %v1890 = vld [vmem:[%s3 + $0xb50] sm:$0xff]
      %v1891 = vld [vmem:[%s3 + $0xb58] sm:$0xff]
      %v1892 = vld [vmem:[%s3 + $0xb60] sm:$0xff]
      %v1893 = vld [vmem:[%s3 + $0xb68] sm:$0xff]
      %v1894 = vld [vmem:[%s3 + $0xb70] sm:$0xff]
      %v1895 = vld [vmem:[%s3 + $0xb78] sm:$0xff]
      %v1896 = vld [vmem:[%s3 + $0xb80] sm:$0xff]
      %v1897 = vld [vmem:[%s3 + $0xb88] sm:$0xff]
      %v1898 = vld [vmem:[%s3 + $0xb90] sm:$0xff]
      %v1899 = vld [vmem:[%s3 + $0xb98] sm:$0xff]
      %v1900 = vld [vmem:[%s3 + $0xba0] sm:$0xff]
      %v1901 = vld [vmem:[%s3 + $0xba8] sm:$0xff]
      %v1902 = vld [vmem:[%s3 + $0xbb0] sm:$0xff]
      %v1903 = vld [vmem:[%s3 + $0xbb8] sm:$0xff]
      %v1904 = vld [vmem:[%s3 + $0xbc0] sm:$0xff]
      %v1905 = vld [vmem:[%s3 + $0xbc8] sm:$0xff]
      %v1906 = vld [vmem:[%s3 + $0xbd0] sm:$0xff]
      %v1907 = vld [vmem:[%s3 + $0xbd8] sm:$0xff]
      %v1908 = vld [vmem:[%s3 + $0xbe0] sm:$0xff]
      %v1909 = vld [vmem:[%s3 + $0xbe8] sm:$0xff]
      %v1910 = vld [vmem:[%s3 + $0xbf0] sm:$0xff]
      %v1911 = vld [vmem:[%s3 + $0xbf8] sm:$0xff]
      %v1912 = vld [vmem:[%s3 + $0xc00] sm:$0xff]
      %v1913 = vld [vmem:[%s3 + $0xc08] sm:$0xff]
      %v1914 = vld [vmem:[%s3 + $0xc10] sm:$0xff]
      %v1915 = vld [vmem:[%s3 + $0xc18] sm:$0xff]
      %v1916 = vld [vmem:[%s3 + $0xc20] sm:$0xff]
      %v1917 = vld [vmem:[%s3 + $0xc28] sm:$0xff]
      %v1918 = vld [vmem:[%s3 + $0xc30] sm:$0xff]
      %v1919 = vld [vmem:[%s3 + $0xc38] sm:$0xff]
      %v1920 = vld [vmem:[%s3 + $0xc40] sm:$0xff]
      %v1921 = vld [vmem:[%s3 + $0xc48] sm:$0xff]
      %v1922 = vld [vmem:[%s3 + $0xc50] sm:$0xff]
      %v1923 = vld [vmem:[%s3 + $0xc58] sm:$0xff]
      %v1924 = vld [vmem:[%s3 + $0xc60] sm:$0xff]
      %v1925 = vld [vmem:[%s3 + $0xc68] sm:$0xff]
      %v1926 = vld [vmem:[%s3 + $0xc70] sm:$0xff]
      %v1927 = vld [vmem:[%s3 + $0xc78] sm:$0xff]
      %v2328 = vunpack.c.l.b16 %v1528
      %v2329 = vunpack.c.h.b16 %v1528
      %v2330 = vunpack.c.l.b16 %v1529
      %v2331 = vunpack.c.h.b16 %v1529
      %v2332 = vunpack.c.l.b16 %v1530
      %v2333 = vunpack.c.h.b16 %v1530
      %v2334 = vunpack.c.l.b16 %v1531
      %v2335 = vunpack.c.h.b16 %v1531
      %v2336 = vunpack.c.l.b16 %v1532
      %v2337 = vunpack.c.h.b16 %v1532
      %v2338 = vunpack.c.l.b16 %v1533
      %v2339 = vunpack.c.h.b16 %v1533
      %v2340 = vunpack.c.l.b16 %v1534
      %v2341 = vunpack.c.h.b16 %v1534
      %v2342 = vunpack.c.l.b16 %v1535
      %v2343 = vunpack.c.h.b16 %v1535
      %v2344 = vunpack.c.l.b16 %v1536
      %v2345 = vunpack.c.h.b16 %v1536
      %v2346 = vunpack.c.l.b16 %v1537
      %v2347 = vunpack.c.h.b16 %v1537
      %v2348 = vunpack.c.l.b16 %v1538
      %v2349 = vunpack.c.h.b16 %v1538
      %v2350 = vunpack.c.l.b16 %v1539
      %v2351 = vunpack.c.h.b16 %v1539
      %v2352 = vunpack.c.l.b16 %v1540
      %v2353 = vunpack.c.h.b16 %v1540
      %v2354 = vunpack.c.l.b16 %v1541
      %v2355 = vunpack.c.h.b16 %v1541
      %v2356 = vunpack.c.l.b16 %v1542
      %v2357 = vunpack.c.h.b16 %v1542
      %v2358 = vunpack.c.l.b16 %v1543
      %v2359 = vunpack.c.h.b16 %v1543
      %v2360 = vunpack.c.l.b16 %v1544
      %v2361 = vunpack.c.h.b16 %v1544
      %v2362 = vunpack.c.l.b16 %v1545
      %v2363 = vunpack.c.h.b16 %v1545
      %v2364 = vunpack.c.l.b16 %v1546
      %v2365 = vunpack.c.h.b16 %v1546
      %v2366 = vunpack.c.l.b16 %v1547
      %v2367 = vunpack.c.h.b16 %v1547
      %v2368 = vunpack.c.l.b16 %v1548
      %v2369 = vunpack.c.h.b16 %v1548
      %v2370 = vunpack.c.l.b16 %v1549
      %v2371 = vunpack.c.h.b16 %v1549
      %v2372 = vunpack.c.l.b16 %v1550
      %v2373 = vunpack.c.h.b16 %v1550
      %v2374 = vunpack.c.l.b16 %v1551
      %v2375 = vunpack.c.h.b16 %v1551
      %v2376 = vunpack.c.l.b16 %v1552
      %v2377 = vunpack.c.h.b16 %v1552
      %v2378 = vunpack.c.l.b16 %v1553
      %v2379 = vunpack.c.h.b16 %v1553
      %v2380 = vunpack.c.l.b16 %v1554
      %v2381 = vunpack.c.h.b16 %v1554
      %v2382 = vunpack.c.l.b16 %v1555
      %v2383 = vunpack.c.h.b16 %v1555
      %v2384 = vunpack.c.l.b16 %v1556
      %v2385 = vunpack.c.h.b16 %v1556
      %v2386 = vunpack.c.l.b16 %v1557
      %v2387 = vunpack.c.h.b16 %v1557
      %v2388 = vunpack.c.l.b16 %v1558
      %v2389 = vunpack.c.h.b16 %v1558
      %v2390 = vunpack.c.l.b16 %v1559
      %v2391 = vunpack.c.h.b16 %v1559
      %v2392 = vunpack.c.l.b16 %v1560
      %v2393 = vunpack.c.h.b16 %v1560
      %v2394 = vunpack.c.l.b16 %v1561
      %v2395 = vunpack.c.h.b16 %v1561
      %v2396 = vunpack.c.l.b16 %v1562
      %v2397 = vunpack.c.h.b16 %v1562
      %v2398 = vunpack.c.l.b16 %v1563
      %v2399 = vunpack.c.h.b16 %v1563
      %v2400 = vunpack.c.l.b16 %v1564
      %v2401 = vunpack.c.h.b16 %v1564
      %v2402 = vunpack.c.l.b16 %v1565
      %v2403 = vunpack.c.h.b16 %v1565
      %v2404 = vunpack.c.l.b16 %v1566
      %v2405 = vunpack.c.h.b16 %v1566
      %v2406 = vunpack.c.l.b16 %v1567
      %v2407 = vunpack.c.h.b16 %v1567
      %v2408 = vunpack.c.l.b16 %v1568
      %v2409 = vunpack.c.h.b16 %v1568
      %v2410 = vunpack.c.l.b16 %v1569
      %v2411 = vunpack.c.h.b16 %v1569
      %v2412 = vunpack.c.l.b16 %v1570
      %v2413 = vunpack.c.h.b16 %v1570
      %v2414 = vunpack.c.l.b16 %v1571
      %v2415 = vunpack.c.h.b16 %v1571
      %v2416 = vunpack.c.l.b16 %v1572
      %v2417 = vunpack.c.h.b16 %v1572
      %v2418 = vunpack.c.l.b16 %v1573
      %v2419 = vunpack.c.h.b16 %v1573
      %v2420 = vunpack.c.l.b16 %v1574
      %v2421 = vunpack.c.h.b16 %v1574
      %v2422 = vunpack.c.l.b16 %v1575
      %v2423 = vunpack.c.h.b16 %v1575
      %v2424 = vunpack.c.l.b16 %v1576
      %v2425 = vunpack.c.h.b16 %v1576
      %v2426 = vunpack.c.l.b16 %v1577
      %v2427 = vunpack.c.h.b16 %v1577
      %v2428 = vunpack.c.l.b16 %v1578
      %v2429 = vunpack.c.h.b16 %v1578
      %v2430 = vunpack.c.l.b16 %v1579
      %v2431 = vunpack.c.h.b16 %v1579
      %v2432 = vunpack.c.l.b16 %v1580
      %v2433 = vunpack.c.h.b16 %v1580
      %v2434 = vunpack.c.l.b16 %v1581
      %v2435 = vunpack.c.h.b16 %v1581
      %v2436 = vunpack.c.l.b16 %v1582
      %v2437 = vunpack.c.h.b16 %v1582
      %v2438 = vunpack.c.l.b16 %v1583
      %v2439 = vunpack.c.h.b16 %v1583
      %v2440 = vunpack.c.l.b16 %v1584
      %v2441 = vunpack.c.h.b16 %v1584
      %v2442 = vunpack.c.l.b16 %v1585
      %v2443 = vunpack.c.h.b16 %v1585
      %v2444 = vunpack.c.l.b16 %v1586
      %v2445 = vunpack.c.h.b16 %v1586
      %v2446 = vunpack.c.l.b16 %v1587
      %v2447 = vunpack.c.h.b16 %v1587
      %v2448 = vunpack.c.l.b16 %v1588
      %v2449 = vunpack.c.h.b16 %v1588
      %v2450 = vunpack.c.l.b16 %v1589
      %v2451 = vunpack.c.h.b16 %v1589
      %v2452 = vunpack.c.l.b16 %v1590
      %v2453 = vunpack.c.h.b16 %v1590
      %v2454 = vunpack.c.l.b16 %v1591
      %v2455 = vunpack.c.h.b16 %v1591
      %v2456 = vunpack.c.l.b16 %v1592
      %v2457 = vunpack.c.h.b16 %v1592
      %v2458 = vunpack.c.l.b16 %v1593
      %v2459 = vunpack.c.h.b16 %v1593
      %v2460 = vunpack.c.l.b16 %v1594
      %v2461 = vunpack.c.h.b16 %v1594
      %v2462 = vunpack.c.l.b16 %v1595
      %v2463 = vunpack.c.h.b16 %v1595
      %v2464 = vunpack.c.l.b16 %v1596
      %v2465 = vunpack.c.h.b16 %v1596
      %v2466 = vunpack.c.l.b16 %v1597
      %v2467 = vunpack.c.h.b16 %v1597
      %v2468 = vunpack.c.l.b16 %v1598
      %v2469 = vunpack.c.h.b16 %v1598
      %v2470 = vunpack.c.l.b16 %v1599
      %v2471 = vunpack.c.h.b16 %v1599
      %v2472 = vunpack.c.l.b16 %v1600
      %v2473 = vunpack.c.h.b16 %v1600
      %v2474 = vunpack.c.l.b16 %v1601
      %v2475 = vunpack.c.h.b16 %v1601
      %v2476 = vunpack.c.l.b16 %v1602
      %v2477 = vunpack.c.h.b16 %v1602
      %v2478 = vunpack.c.l.b16 %v1603
      %v2479 = vunpack.c.h.b16 %v1603
      %v2480 = vunpack.c.l.b16 %v1604
      %v2481 = vunpack.c.h.b16 %v1604
      %v2482 = vunpack.c.l.b16 %v1605
      %v2483 = vunpack.c.h.b16 %v1605
      %v2484 = vunpack.c.l.b16 %v1606
      %v2485 = vunpack.c.h.b16 %v1606
      %v2486 = vunpack.c.l.b16 %v1607
      %v2487 = vunpack.c.h.b16 %v1607
      %v2488 = vunpack.c.l.b16 %v1608
      %v2489 = vunpack.c.h.b16 %v1608
      %v2490 = vunpack.c.l.b16 %v1609
      %v2491 = vunpack.c.h.b16 %v1609
      %v2492 = vunpack.c.l.b16 %v1610
      %v2493 = vunpack.c.h.b16 %v1610
      %v2494 = vunpack.c.l.b16 %v1611
      %v2495 = vunpack.c.h.b16 %v1611
      %v2496 = vunpack.c.l.b16 %v1612
      %v2497 = vunpack.c.h.b16 %v1612
      %v2498 = vunpack.c.l.b16 %v1613
      %v2499 = vunpack.c.h.b16 %v1613
      %v2500 = vunpack.c.l.b16 %v1614
      %v2501 = vunpack.c.h.b16 %v1614
      %v2502 = vunpack.c.l.b16 %v1615
      %v2503 = vunpack.c.h.b16 %v1615
      %v2504 = vunpack.c.l.b16 %v1616
      %v2505 = vunpack.c.h.b16 %v1616
      %v2506 = vunpack.c.l.b16 %v1617
      %v2507 = vunpack.c.h.b16 %v1617
      %v2508 = vunpack.c.l.b16 %v1618
      %v2509 = vunpack.c.h.b16 %v1618
      %v2510 = vunpack.c.l.b16 %v1619
      %v2511 = vunpack.c.h.b16 %v1619
      %v2512 = vunpack.c.l.b16 %v1620
      %v2513 = vunpack.c.h.b16 %v1620
      %v2514 = vunpack.c.l.b16 %v1621
      %v2515 = vunpack.c.h.b16 %v1621
      %v2516 = vunpack.c.l.b16 %v1622
      %v2517 = vunpack.c.h.b16 %v1622
      %v2518 = vunpack.c.l.b16 %v1623
      %v2519 = vunpack.c.h.b16 %v1623
      %v2520 = vunpack.c.l.b16 %v1624
      %v2521 = vunpack.c.h.b16 %v1624
      %v2522 = vunpack.c.l.b16 %v1625
      %v2523 = vunpack.c.h.b16 %v1625
      %v2524 = vunpack.c.l.b16 %v1626
      %v2525 = vunpack.c.h.b16 %v1626
      %v2526 = vunpack.c.l.b16 %v1627
      %v2527 = vunpack.c.h.b16 %v1627
      %v2528 = vunpack.c.l.b16 %v1628
      %v2529 = vunpack.c.h.b16 %v1628
      %v2530 = vunpack.c.l.b16 %v1629
      %v2531 = vunpack.c.h.b16 %v1629
      %v2532 = vunpack.c.l.b16 %v1630
      %v2533 = vunpack.c.h.b16 %v1630
      %v2534 = vunpack.c.l.b16 %v1631
      %v2535 = vunpack.c.h.b16 %v1631
      %v2536 = vunpack.c.l.b16 %v1632
      %v2537 = vunpack.c.h.b16 %v1632
      %v2538 = vunpack.c.l.b16 %v1633
      %v2539 = vunpack.c.h.b16 %v1633
      %v2540 = vunpack.c.l.b16 %v1634
      %v2541 = vunpack.c.h.b16 %v1634
      %v2542 = vunpack.c.l.b16 %v1635
      %v2543 = vunpack.c.h.b16 %v1635
      %v2544 = vunpack.c.l.b16 %v1636
      %v2545 = vunpack.c.h.b16 %v1636
      %v2546 = vunpack.c.l.b16 %v1637
      %v2547 = vunpack.c.h.b16 %v1637
      %v2548 = vunpack.c.l.b16 %v1638
      %v2549 = vunpack.c.h.b16 %v1638
      %v2550 = vunpack.c.l.b16 %v1639
      %v2551 = vunpack.c.h.b16 %v1639
      %v2552 = vunpack.c.l.b16 %v1640
      %v2553 = vunpack.c.h.b16 %v1640
      %v2554 = vunpack.c.l.b16 %v1641
      %v2555 = vunpack.c.h.b16 %v1641
      %v2556 = vunpack.c.l.b16 %v1642
      %v2557 = vunpack.c.h.b16 %v1642
      %v2558 = vunpack.c.l.b16 %v1643
      %v2559 = vunpack.c.h.b16 %v1643
      %v2560 = vunpack.c.l.b16 %v1644
      %v2561 = vunpack.c.h.b16 %v1644
      %v2562 = vunpack.c.l.b16 %v1645
      %v2563 = vunpack.c.h.b16 %v1645
      %v2564 = vunpack.c.l.b16 %v1646
      %v2565 = vunpack.c.h.b16 %v1646
      %v2566 = vunpack.c.l.b16 %v1647
      %v2567 = vunpack.c.h.b16 %v1647
      %v2568 = vunpack.c.l.b16 %v1648
      %v2569 = vunpack.c.h.b16 %v1648
      %v2570 = vunpack.c.l.b16 %v1649
      %v2571 = vunpack.c.h.b16 %v1649
      %v2572 = vunpack.c.l.b16 %v1650
      %v2573 = vunpack.c.h.b16 %v1650
      %v2574 = vunpack.c.l.b16 %v1651
      %v2575 = vunpack.c.h.b16 %v1651
      %v2576 = vunpack.c.l.b16 %v1652
      %v2577 = vunpack.c.h.b16 %v1652
      %v2578 = vunpack.c.l.b16 %v1653
      %v2579 = vunpack.c.h.b16 %v1653
      %v2580 = vunpack.c.l.b16 %v1654
      %v2581 = vunpack.c.h.b16 %v1654
      %v2582 = vunpack.c.l.b16 %v1655
      %v2583 = vunpack.c.h.b16 %v1655
      %v2584 = vunpack.c.l.b16 %v1656
      %v2585 = vunpack.c.h.b16 %v1656
      %v2586 = vunpack.c.l.b16 %v1657
      %v2587 = vunpack.c.h.b16 %v1657
      %v2588 = vunpack.c.l.b16 %v1658
      %v2589 = vunpack.c.h.b16 %v1658
      %v2590 = vunpack.c.l.b16 %v1659
      %v2591 = vunpack.c.h.b16 %v1659
      %v2592 = vunpack.c.l.b16 %v1660
      %v2593 = vunpack.c.h.b16 %v1660
      %v2594 = vunpack.c.l.b16 %v1661
      %v2595 = vunpack.c.h.b16 %v1661
      %v2596 = vunpack.c.l.b16 %v1662
      %v2597 = vunpack.c.h.b16 %v1662
      %v2598 = vunpack.c.l.b16 %v1663
      %v2599 = vunpack.c.h.b16 %v1663
      %v2600 = vunpack.c.l.b16 %v1664
      %v2601 = vunpack.c.h.b16 %v1664
      %v2602 = vunpack.c.l.b16 %v1665
      %v2603 = vunpack.c.h.b16 %v1665
      %v2604 = vunpack.c.l.b16 %v1666
      %v2605 = vunpack.c.h.b16 %v1666
      %v2606 = vunpack.c.l.b16 %v1667
      %v2607 = vunpack.c.h.b16 %v1667
      %v2608 = vunpack.c.l.b16 %v1668
      %v2609 = vunpack.c.h.b16 %v1668
      %v2610 = vunpack.c.l.b16 %v1669
      %v2611 = vunpack.c.h.b16 %v1669
      %v2612 = vunpack.c.l.b16 %v1670
      %v2613 = vunpack.c.h.b16 %v1670
      %v2614 = vunpack.c.l.b16 %v1671
      %v2615 = vunpack.c.h.b16 %v1671
      %v2616 = vunpack.c.l.b16 %v1672
      %v2617 = vunpack.c.h.b16 %v1672
      %v2618 = vunpack.c.l.b16 %v1673
      %v2619 = vunpack.c.h.b16 %v1673
      %v2620 = vunpack.c.l.b16 %v1674
      %v2621 = vunpack.c.h.b16 %v1674
      %v2622 = vunpack.c.l.b16 %v1675
      %v2623 = vunpack.c.h.b16 %v1675
      %v2624 = vunpack.c.l.b16 %v1676
      %v2625 = vunpack.c.h.b16 %v1676
      %v2626 = vunpack.c.l.b16 %v1677
      %v2627 = vunpack.c.h.b16 %v1677
      %v2628 = vunpack.c.l.b16 %v1678
      %v2629 = vunpack.c.h.b16 %v1678
      %v2630 = vunpack.c.l.b16 %v1679
      %v2631 = vunpack.c.h.b16 %v1679
      %v2632 = vunpack.c.l.b16 %v1680
      %v2633 = vunpack.c.h.b16 %v1680
      %v2634 = vunpack.c.l.b16 %v1681
      %v2635 = vunpack.c.h.b16 %v1681
      %v2636 = vunpack.c.l.b16 %v1682
      %v2637 = vunpack.c.h.b16 %v1682
      %v2638 = vunpack.c.l.b16 %v1683
      %v2639 = vunpack.c.h.b16 %v1683
      %v2640 = vunpack.c.l.b16 %v1684
      %v2641 = vunpack.c.h.b16 %v1684
      %v2642 = vunpack.c.l.b16 %v1685
      %v2643 = vunpack.c.h.b16 %v1685
      %v2644 = vunpack.c.l.b16 %v1686
      %v2645 = vunpack.c.h.b16 %v1686
      %v2646 = vunpack.c.l.b16 %v1687
      %v2647 = vunpack.c.h.b16 %v1687
      %v2648 = vunpack.c.l.b16 %v1688
      %v2649 = vunpack.c.h.b16 %v1688
      %v2650 = vunpack.c.l.b16 %v1689
      %v2651 = vunpack.c.h.b16 %v1689
      %v2652 = vunpack.c.l.b16 %v1690
      %v2653 = vunpack.c.h.b16 %v1690
      %v2654 = vunpack.c.l.b16 %v1691
      %v2655 = vunpack.c.h.b16 %v1691
      %v2656 = vunpack.c.l.b16 %v1692
      %v2657 = vunpack.c.h.b16 %v1692
      %v2658 = vunpack.c.l.b16 %v1693
      %v2659 = vunpack.c.h.b16 %v1693
      %v2660 = vunpack.c.l.b16 %v1694
      %v2661 = vunpack.c.h.b16 %v1694
      %v2662 = vunpack.c.l.b16 %v1695
      %v2663 = vunpack.c.h.b16 %v1695
      %v2664 = vunpack.c.l.b16 %v1696
      %v2665 = vunpack.c.h.b16 %v1696
      %v2666 = vunpack.c.l.b16 %v1697
      %v2667 = vunpack.c.h.b16 %v1697
      %v2668 = vunpack.c.l.b16 %v1698
      %v2669 = vunpack.c.h.b16 %v1698
      %v2670 = vunpack.c.l.b16 %v1699
      %v2671 = vunpack.c.h.b16 %v1699
      %v2672 = vunpack.c.l.b16 %v1700
      %v2673 = vunpack.c.h.b16 %v1700
      %v2674 = vunpack.c.l.b16 %v1701
      %v2675 = vunpack.c.h.b16 %v1701
      %v2676 = vunpack.c.l.b16 %v1702
      %v2677 = vunpack.c.h.b16 %v1702
      %v2678 = vunpack.c.l.b16 %v1703
      %v2679 = vunpack.c.h.b16 %v1703
      %v2680 = vunpack.c.l.b16 %v1704
      %v2681 = vunpack.c.h.b16 %v1704
      %v2682 = vunpack.c.l.b16 %v1705
      %v2683 = vunpack.c.h.b16 %v1705
      %v2684 = vunpack.c.l.b16 %v1706
      %v2685 = vunpack.c.h.b16 %v1706
      %v2686 = vunpack.c.l.b16 %v1707
      %v2687 = vunpack.c.h.b16 %v1707
      %v2688 = vunpack.c.l.b16 %v1708
      %v2689 = vunpack.c.h.b16 %v1708
      %v2690 = vunpack.c.l.b16 %v1709
      %v2691 = vunpack.c.h.b16 %v1709
      %v2692 = vunpack.c.l.b16 %v1710
      %v2693 = vunpack.c.h.b16 %v1710
      %v2694 = vunpack.c.l.b16 %v1711
      %v2695 = vunpack.c.h.b16 %v1711
      %v2696 = vunpack.c.l.b16 %v1712
      %v2697 = vunpack.c.h.b16 %v1712
      %v2698 = vunpack.c.l.b16 %v1713
      %v2699 = vunpack.c.h.b16 %v1713
      %v2700 = vunpack.c.l.b16 %v1714
      %v2701 = vunpack.c.h.b16 %v1714
      %v2702 = vunpack.c.l.b16 %v1715
      %v2703 = vunpack.c.h.b16 %v1715
      %v2704 = vunpack.c.l.b16 %v1716
      %v2705 = vunpack.c.h.b16 %v1716
      %v2706 = vunpack.c.l.b16 %v1717
      %v2707 = vunpack.c.h.b16 %v1717
      %v2708 = vunpack.c.l.b16 %v1718
      %v2709 = vunpack.c.h.b16 %v1718
      %v2710 = vunpack.c.l.b16 %v1719
      %v2711 = vunpack.c.h.b16 %v1719
      %v2712 = vunpack.c.l.b16 %v1720
      %v2713 = vunpack.c.h.b16 %v1720
      %v2714 = vunpack.c.l.b16 %v1721
      %v2715 = vunpack.c.h.b16 %v1721
      %v2716 = vunpack.c.l.b16 %v1722
      %v2717 = vunpack.c.h.b16 %v1722
      %v2718 = vunpack.c.l.b16 %v1723
      %v2719 = vunpack.c.h.b16 %v1723
      %v2720 = vunpack.c.l.b16 %v1724
      %v2721 = vunpack.c.h.b16 %v1724
      %v2722 = vunpack.c.l.b16 %v1725
      %v2723 = vunpack.c.h.b16 %v1725
      %v2724 = vunpack.c.l.b16 %v1726
      %v2725 = vunpack.c.h.b16 %v1726
      %v2726 = vunpack.c.l.b16 %v1727
      %v2727 = vunpack.c.h.b16 %v1727
      %v2728 = vunpack.c.l.b16 %v1728
      %v2729 = vunpack.c.h.b16 %v1728
      %v2730 = vunpack.c.l.b16 %v1729
      %v2731 = vunpack.c.h.b16 %v1729
      %v2732 = vunpack.c.l.b16 %v1730
      %v2733 = vunpack.c.h.b16 %v1730
      %v2734 = vunpack.c.l.b16 %v1731
      %v2735 = vunpack.c.h.b16 %v1731
      %v2736 = vunpack.c.l.b16 %v1732
      %v2737 = vunpack.c.h.b16 %v1732
      %v2738 = vunpack.c.l.b16 %v1733
      %v2739 = vunpack.c.h.b16 %v1733
      %v2740 = vunpack.c.l.b16 %v1734
      %v2741 = vunpack.c.h.b16 %v1734
      %v2742 = vunpack.c.l.b16 %v1735
      %v2743 = vunpack.c.h.b16 %v1735
      %v2744 = vunpack.c.l.b16 %v1736
      %v2745 = vunpack.c.h.b16 %v1736
      %v2746 = vunpack.c.l.b16 %v1737
      %v2747 = vunpack.c.h.b16 %v1737
      %v2748 = vunpack.c.l.b16 %v1738
      %v2749 = vunpack.c.h.b16 %v1738
      %v2750 = vunpack.c.l.b16 %v1739
      %v2751 = vunpack.c.h.b16 %v1739
      %v2752 = vunpack.c.l.b16 %v1740
      %v2753 = vunpack.c.h.b16 %v1740
      %v2754 = vunpack.c.l.b16 %v1741
      %v2755 = vunpack.c.h.b16 %v1741
      %v2756 = vunpack.c.l.b16 %v1742
      %v2757 = vunpack.c.h.b16 %v1742
      %v2758 = vunpack.c.l.b16 %v1743
      %v2759 = vunpack.c.h.b16 %v1743
      %v2760 = vunpack.c.l.b16 %v1744
      %v2761 = vunpack.c.h.b16 %v1744
      %v2762 = vunpack.c.l.b16 %v1745
      %v2763 = vunpack.c.h.b16 %v1745
      %v2764 = vunpack.c.l.b16 %v1746
      %v2765 = vunpack.c.h.b16 %v1746
      %v2766 = vunpack.c.l.b16 %v1747
      %v2767 = vunpack.c.h.b16 %v1747
      %v2768 = vunpack.c.l.b16 %v1748
      %v2769 = vunpack.c.h.b16 %v1748
      %v2770 = vunpack.c.l.b16 %v1749
      %v2771 = vunpack.c.h.b16 %v1749
      %v2772 = vunpack.c.l.b16 %v1750
      %v2773 = vunpack.c.h.b16 %v1750
      %v2774 = vunpack.c.l.b16 %v1751
      %v2775 = vunpack.c.h.b16 %v1751
      %v2776 = vunpack.c.l.b16 %v1752
      %v2777 = vunpack.c.h.b16 %v1752
      %v2778 = vunpack.c.l.b16 %v1753
      %v2779 = vunpack.c.h.b16 %v1753
      %v2780 = vunpack.c.l.b16 %v1754
      %v2781 = vunpack.c.h.b16 %v1754
      %v2782 = vunpack.c.l.b16 %v1755
      %v2783 = vunpack.c.h.b16 %v1755
      %v2784 = vunpack.c.l.b16 %v1756
      %v2785 = vunpack.c.h.b16 %v1756
      %v2786 = vunpack.c.l.b16 %v1757
      %v2787 = vunpack.c.h.b16 %v1757
      %v2788 = vunpack.c.l.b16 %v1758
      %v2789 = vunpack.c.h.b16 %v1758
      %v2790 = vunpack.c.l.b16 %v1759
      %v2791 = vunpack.c.h.b16 %v1759
      %v2792 = vunpack.c.l.b16 %v1760
      %v2793 = vunpack.c.h.b16 %v1760
      %v2794 = vunpack.c.l.b16 %v1761
      %v2795 = vunpack.c.h.b16 %v1761
      %v2796 = vunpack.c.l.b16 %v1762
      %v2797 = vunpack.c.h.b16 %v1762
      %v2798 = vunpack.c.l.b16 %v1763
      %v2799 = vunpack.c.h.b16 %v1763
      %v2800 = vunpack.c.l.b16 %v1764
      %v2801 = vunpack.c.h.b16 %v1764
      %v2802 = vunpack.c.l.b16 %v1765
      %v2803 = vunpack.c.h.b16 %v1765
      %v2804 = vunpack.c.l.b16 %v1766
      %v2805 = vunpack.c.h.b16 %v1766
      %v2806 = vunpack.c.l.b16 %v1767
      %v2807 = vunpack.c.h.b16 %v1767
      %v2808 = vunpack.c.l.b16 %v1768
      %v2809 = vunpack.c.h.b16 %v1768
      %v2810 = vunpack.c.l.b16 %v1769
      %v2811 = vunpack.c.h.b16 %v1769
      %v2812 = vunpack.c.l.b16 %v1770
      %v2813 = vunpack.c.h.b16 %v1770
      %v2814 = vunpack.c.l.b16 %v1771
      %v2815 = vunpack.c.h.b16 %v1771
      %v2816 = vunpack.c.l.b16 %v1772
      %v2817 = vunpack.c.h.b16 %v1772
      %v2818 = vunpack.c.l.b16 %v1773
      %v2819 = vunpack.c.h.b16 %v1773
      %v2820 = vunpack.c.l.b16 %v1774
      %v2821 = vunpack.c.h.b16 %v1774
      %v2822 = vunpack.c.l.b16 %v1775
      %v2823 = vunpack.c.h.b16 %v1775
      %v2824 = vunpack.c.l.b16 %v1776
      %v2825 = vunpack.c.h.b16 %v1776
      %v2826 = vunpack.c.l.b16 %v1777
      %v2827 = vunpack.c.h.b16 %v1777
      %v2828 = vunpack.c.l.b16 %v1778
      %v2829 = vunpack.c.h.b16 %v1778
      %v2830 = vunpack.c.l.b16 %v1779
      %v2831 = vunpack.c.h.b16 %v1779
      %v2832 = vunpack.c.l.b16 %v1780
      %v2833 = vunpack.c.h.b16 %v1780
      %v2834 = vunpack.c.l.b16 %v1781
      %v2835 = vunpack.c.h.b16 %v1781
      %v2836 = vunpack.c.l.b16 %v1782
      %v2837 = vunpack.c.h.b16 %v1782
      %v2838 = vunpack.c.l.b16 %v1783
      %v2839 = vunpack.c.h.b16 %v1783
      %v2840 = vunpack.c.l.b16 %v1784
      %v2841 = vunpack.c.h.b16 %v1784
      %v2842 = vunpack.c.l.b16 %v1785
      %v2843 = vunpack.c.h.b16 %v1785
      %v2844 = vunpack.c.l.b16 %v1786
      %v2845 = vunpack.c.h.b16 %v1786
      %v2846 = vunpack.c.l.b16 %v1787
      %v2847 = vunpack.c.h.b16 %v1787
      %v2848 = vunpack.c.l.b16 %v1788
      %v2849 = vunpack.c.h.b16 %v1788
      %v2850 = vunpack.c.l.b16 %v1789
      %v2851 = vunpack.c.h.b16 %v1789
      %v2852 = vunpack.c.l.b16 %v1790
      %v2853 = vunpack.c.h.b16 %v1790
      %v2854 = vunpack.c.l.b16 %v1791
      %v2855 = vunpack.c.h.b16 %v1791
      %v2856 = vunpack.c.l.b16 %v1792
      %v2857 = vunpack.c.h.b16 %v1792
      %v2858 = vunpack.c.l.b16 %v1793
      %v2859 = vunpack.c.h.b16 %v1793
      %v2860 = vunpack.c.l.b16 %v1794
      %v2861 = vunpack.c.h.b16 %v1794
      %v2862 = vunpack.c.l.b16 %v1795
      %v2863 = vunpack.c.h.b16 %v1795
      %v2864 = vunpack.c.l.b16 %v1796
      %v2865 = vunpack.c.h.b16 %v1796
      %v2866 = vunpack.c.l.b16 %v1797
      %v2867 = vunpack.c.h.b16 %v1797
      %v2868 = vunpack.c.l.b16 %v1798
      %v2869 = vunpack.c.h.b16 %v1798
      %v2870 = vunpack.c.l.b16 %v1799
      %v2871 = vunpack.c.h.b16 %v1799
      %v2872 = vunpack.c.l.b16 %v1800
      %v2873 = vunpack.c.h.b16 %v1800
      %v2874 = vunpack.c.l.b16 %v1801
      %v2875 = vunpack.c.h.b16 %v1801
      %v2876 = vunpack.c.l.b16 %v1802
      %v2877 = vunpack.c.h.b16 %v1802
      %v2878 = vunpack.c.l.b16 %v1803
      %v2879 = vunpack.c.h.b16 %v1803
      %v2880 = vunpack.c.l.b16 %v1804
      %v2881 = vunpack.c.h.b16 %v1804
      %v2882 = vunpack.c.l.b16 %v1805
      %v2883 = vunpack.c.h.b16 %v1805
      %v2884 = vunpack.c.l.b16 %v1806
      %v2885 = vunpack.c.h.b16 %v1806
      %v2886 = vunpack.c.l.b16 %v1807
      %v2887 = vunpack.c.h.b16 %v1807
      %v2888 = vunpack.c.l.b16 %v1808
      %v2889 = vunpack.c.h.b16 %v1808
      %v2890 = vunpack.c.l.b16 %v1809
      %v2891 = vunpack.c.h.b16 %v1809
      %v2892 = vunpack.c.l.b16 %v1810
      %v2893 = vunpack.c.h.b16 %v1810
      %v2894 = vunpack.c.l.b16 %v1811
      %v2895 = vunpack.c.h.b16 %v1811
      %v2896 = vunpack.c.l.b16 %v1812
      %v2897 = vunpack.c.h.b16 %v1812
      %v2898 = vunpack.c.l.b16 %v1813
      %v2899 = vunpack.c.h.b16 %v1813
      %v2900 = vunpack.c.l.b16 %v1814
      %v2901 = vunpack.c.h.b16 %v1814
      %v2902 = vunpack.c.l.b16 %v1815
      %v2903 = vunpack.c.h.b16 %v1815
      %v2904 = vunpack.c.l.b16 %v1816
      %v2905 = vunpack.c.h.b16 %v1816
      %v2906 = vunpack.c.l.b16 %v1817
      %v2907 = vunpack.c.h.b16 %v1817
      %v2908 = vunpack.c.l.b16 %v1818
      %v2909 = vunpack.c.h.b16 %v1818
      %v2910 = vunpack.c.l.b16 %v1819
      %v2911 = vunpack.c.h.b16 %v1819
      %v2912 = vunpack.c.l.b16 %v1820
      %v2913 = vunpack.c.h.b16 %v1820
      %v2914 = vunpack.c.l.b16 %v1821
      %v2915 = vunpack.c.h.b16 %v1821
      %v2916 = vunpack.c.l.b16 %v1822
      %v2917 = vunpack.c.h.b16 %v1822
      %v2918 = vunpack.c.l.b16 %v1823
      %v2919 = vunpack.c.h.b16 %v1823
      %v2920 = vunpack.c.l.b16 %v1824
      %v2921 = vunpack.c.h.b16 %v1824
      %v2922 = vunpack.c.l.b16 %v1825
      %v2923 = vunpack.c.h.b16 %v1825
      %v2924 = vunpack.c.l.b16 %v1826
      %v2925 = vunpack.c.h.b16 %v1826
      %v2926 = vunpack.c.l.b16 %v1827
      %v2927 = vunpack.c.h.b16 %v1827
      %v2928 = vunpack.c.l.b16 %v1828
      %v2929 = vunpack.c.h.b16 %v1828
      %v2930 = vunpack.c.l.b16 %v1829
      %v2931 = vunpack.c.h.b16 %v1829
      %v2932 = vunpack.c.l.b16 %v1830
      %v2933 = vunpack.c.h.b16 %v1830
      %v2934 = vunpack.c.l.b16 %v1831
      %v2935 = vunpack.c.h.b16 %v1831
      %v2936 = vunpack.c.l.b16 %v1832
      %v2937 = vunpack.c.h.b16 %v1832
      %v2938 = vunpack.c.l.b16 %v1833
      %v2939 = vunpack.c.h.b16 %v1833
      %v2940 = vunpack.c.l.b16 %v1834
      %v2941 = vunpack.c.h.b16 %v1834
      %v2942 = vunpack.c.l.b16 %v1835
      %v2943 = vunpack.c.h.b16 %v1835
      %v2944 = vunpack.c.l.b16 %v1836
      %v2945 = vunpack.c.h.b16 %v1836
      %v2946 = vunpack.c.l.b16 %v1837
      %v2947 = vunpack.c.h.b16 %v1837
      %v2948 = vunpack.c.l.b16 %v1838
      %v2949 = vunpack.c.h.b16 %v1838
      %v2950 = vunpack.c.l.b16 %v1839
      %v2951 = vunpack.c.h.b16 %v1839
      %v2952 = vunpack.c.l.b16 %v1840
      %v2953 = vunpack.c.h.b16 %v1840
      %v2954 = vunpack.c.l.b16 %v1841
      %v2955 = vunpack.c.h.b16 %v1841
      %v2956 = vunpack.c.l.b16 %v1842
      %v2957 = vunpack.c.h.b16 %v1842
      %v2958 = vunpack.c.l.b16 %v1843
      %v2959 = vunpack.c.h.b16 %v1843
      %v2960 = vunpack.c.l.b16 %v1844
      %v2961 = vunpack.c.h.b16 %v1844
      %v2962 = vunpack.c.l.b16 %v1845
      %v2963 = vunpack.c.h.b16 %v1845
      %v2964 = vunpack.c.l.b16 %v1846
      %v2965 = vunpack.c.h.b16 %v1846
      %v2966 = vunpack.c.l.b16 %v1847
      %v2967 = vunpack.c.h.b16 %v1847
      %v2968 = vunpack.c.l.b16 %v1848
      %v2969 = vunpack.c.h.b16 %v1848
      %v2970 = vunpack.c.l.b16 %v1849
      %v2971 = vunpack.c.h.b16 %v1849
      %v2972 = vunpack.c.l.b16 %v1850
      %v2973 = vunpack.c.h.b16 %v1850
      %v2974 = vunpack.c.l.b16 %v1851
      %v2975 = vunpack.c.h.b16 %v1851
      %v2976 = vunpack.c.l.b16 %v1852
      %v2977 = vunpack.c.h.b16 %v1852
      %v2978 = vunpack.c.l.b16 %v1853
      %v2979 = vunpack.c.h.b16 %v1853
      %v2980 = vunpack.c.l.b16 %v1854
      %v2981 = vunpack.c.h.b16 %v1854
      %v2982 = vunpack.c.l.b16 %v1855
      %v2983 = vunpack.c.h.b16 %v1855
      %v2984 = vunpack.c.l.b16 %v1856
      %v2985 = vunpack.c.h.b16 %v1856
      %v2986 = vunpack.c.l.b16 %v1857
      %v2987 = vunpack.c.h.b16 %v1857
      %v2988 = vunpack.c.l.b16 %v1858
      %v2989 = vunpack.c.h.b16 %v1858
      %v2990 = vunpack.c.l.b16 %v1859
      %v2991 = vunpack.c.h.b16 %v1859
      %v2992 = vunpack.c.l.b16 %v1860
      %v2993 = vunpack.c.h.b16 %v1860
      %v2994 = vunpack.c.l.b16 %v1861
      %v2995 = vunpack.c.h.b16 %v1861
      %v2996 = vunpack.c.l.b16 %v1862
      %v2997 = vunpack.c.h.b16 %v1862
      %v2998 = vunpack.c.l.b16 %v1863
      %v2999 = vunpack.c.h.b16 %v1863
      %v3000 = vunpack.c.l.b16 %v1864
      %v3001 = vunpack.c.h.b16 %v1864
      %v3002 = vunpack.c.l.b16 %v1865
      %v3003 = vunpack.c.h.b16 %v1865
      %v3004 = vunpack.c.l.b16 %v1866
      %v3005 = vunpack.c.h.b16 %v1866
      %v3006 = vunpack.c.l.b16 %v1867
      %v3007 = vunpack.c.h.b16 %v1867
      %v3008 = vunpack.c.l.b16 %v1868
      %v3009 = vunpack.c.h.b16 %v1868
      %v3010 = vunpack.c.l.b16 %v1869
      %v3011 = vunpack.c.h.b16 %v1869
      %v3012 = vunpack.c.l.b16 %v1870
      %v3013 = vunpack.c.h.b16 %v1870
      %v3014 = vunpack.c.l.b16 %v1871
      %v3015 = vunpack.c.h.b16 %v1871
      %v3016 = vunpack.c.l.b16 %v1872
      %v3017 = vunpack.c.h.b16 %v1872
      %v3018 = vunpack.c.l.b16 %v1873
      %v3019 = vunpack.c.h.b16 %v1873
      %v3020 = vunpack.c.l.b16 %v1874
      %v3021 = vunpack.c.h.b16 %v1874
      %v3022 = vunpack.c.l.b16 %v1875
      %v3023 = vunpack.c.h.b16 %v1875
      %v3024 = vunpack.c.l.b16 %v1876
      %v3025 = vunpack.c.h.b16 %v1876
      %v3026 = vunpack.c.l.b16 %v1877
      %v3027 = vunpack.c.h.b16 %v1877
      %v3028 = vunpack.c.l.b16 %v1878
      %v3029 = vunpack.c.h.b16 %v1878
      %v3030 = vunpack.c.l.b16 %v1879
      %v3031 = vunpack.c.h.b16 %v1879
      %v3032 = vunpack.c.l.b16 %v1880
      %v3033 = vunpack.c.h.b16 %v1880
      %v3034 = vunpack.c.l.b16 %v1881
      %v3035 = vunpack.c.h.b16 %v1881
      %v3036 = vunpack.c.l.b16 %v1882
      %v3037 = vunpack.c.h.b16 %v1882
      %v3038 = vunpack.c.l.b16 %v1883
      %v3039 = vunpack.c.h.b16 %v1883
      %v3040 = vunpack.c.l.b16 %v1884
      %v3041 = vunpack.c.h.b16 %v1884
      %v3042 = vunpack.c.l.b16 %v1885
      %v3043 = vunpack.c.h.b16 %v1885
      %v3044 = vunpack.c.l.b16 %v1886
      %v3045 = vunpack.c.h.b16 %v1886
      %v3046 = vunpack.c.l.b16 %v1887
      %v3047 = vunpack.c.h.b16 %v1887
      %v3048 = vunpack.c.l.b16 %v1888
      %v3049 = vunpack.c.h.b16 %v1888
      %v3050 = vunpack.c.l.b16 %v1889
      %v3051 = vunpack.c.h.b16 %v1889
      %v3052 = vunpack.c.l.b16 %v1890
      %v3053 = vunpack.c.h.b16 %v1890
      %v3054 = vunpack.c.l.b16 %v1891
      %v3055 = vunpack.c.h.b16 %v1891
      %v3056 = vunpack.c.l.b16 %v1892
      %v3057 = vunpack.c.h.b16 %v1892
      %v3058 = vunpack.c.l.b16 %v1893
      %v3059 = vunpack.c.h.b16 %v1893
      %v3060 = vunpack.c.l.b16 %v1894
      %v3061 = vunpack.c.h.b16 %v1894
      %v3062 = vunpack.c.l.b16 %v1895
      %v3063 = vunpack.c.h.b16 %v1895
      %v3064 = vunpack.c.l.b16 %v1896
      %v3065 = vunpack.c.h.b16 %v1896
      %v3066 = vunpack.c.l.b16 %v1897
      %v3067 = vunpack.c.h.b16 %v1897
      %v3068 = vunpack.c.l.b16 %v1898
      %v3069 = vunpack.c.h.b16 %v1898
      %v3070 = vunpack.c.l.b16 %v1899
      %v3071 = vunpack.c.h.b16 %v1899
      %v3072 = vunpack.c.l.b16 %v1900
      %v3073 = vunpack.c.h.b16 %v1900
      %v3074 = vunpack.c.l.b16 %v1901
      %v3075 = vunpack.c.h.b16 %v1901
      %v3076 = vunpack.c.l.b16 %v1902
      %v3077 = vunpack.c.h.b16 %v1902
      %v3078 = vunpack.c.l.b16 %v1903
      %v3079 = vunpack.c.h.b16 %v1903
      %v3080 = vunpack.c.l.b16 %v1904
      %v3081 = vunpack.c.h.b16 %v1904
      %v3082 = vunpack.c.l.b16 %v1905
      %v3083 = vunpack.c.h.b16 %v1905
      %v3084 = vunpack.c.l.b16 %v1906
      %v3085 = vunpack.c.h.b16 %v1906
      %v3086 = vunpack.c.l.b16 %v1907
      %v3087 = vunpack.c.h.b16 %v1907
      %v3088 = vunpack.c.l.b16 %v1908
      %v3089 = vunpack.c.h.b16 %v1908
      %v3090 = vunpack.c.l.b16 %v1909
      %v3091 = vunpack.c.h.b16 %v1909
      %v3092 = vunpack.c.l.b16 %v1910
      %v3093 = vunpack.c.h.b16 %v1910
      %v3094 = vunpack.c.l.b16 %v1911
      %v3095 = vunpack.c.h.b16 %v1911
      %v3096 = vunpack.c.l.b16 %v1912
      %v3097 = vunpack.c.h.b16 %v1912
      %v3098 = vunpack.c.l.b16 %v1913
      %v3099 = vunpack.c.h.b16 %v1913
      %v3100 = vunpack.c.l.b16 %v1914
      %v3101 = vunpack.c.h.b16 %v1914
      %v3102 = vunpack.c.l.b16 %v1915
      %v3103 = vunpack.c.h.b16 %v1915
      %v3104 = vunpack.c.l.b16 %v1916
      %v3105 = vunpack.c.h.b16 %v1916
      %v3106 = vunpack.c.l.b16 %v1917
      %v3107 = vunpack.c.h.b16 %v1917
      %v3108 = vunpack.c.l.b16 %v1918
      %v3109 = vunpack.c.h.b16 %v1918
      %v3110 = vunpack.c.l.b16 %v1919
      %v3111 = vunpack.c.h.b16 %v1919
      %v3112 = vunpack.c.l.b16 %v1920
      %v3113 = vunpack.c.h.b16 %v1920
      %v3114 = vunpack.c.l.b16 %v1921
      %v3115 = vunpack.c.h.b16 %v1921
      %v3116 = vunpack.c.l.b16 %v1922
      %v3117 = vunpack.c.h.b16 %v1922
      %v3118 = vunpack.c.l.b16 %v1923
      %v3119 = vunpack.c.h.b16 %v1923
      %v3120 = vunpack.c.l.b16 %v1924
      %v3121 = vunpack.c.h.b16 %v1924
      %v3122 = vunpack.c.l.b16 %v1925
      %v3123 = vunpack.c.h.b16 %v1925
      %v3124 = vunpack.c.l.b16 %v1926
      %v3125 = vunpack.c.h.b16 %v1926
      %v3126 = vunpack.c.l.b16 %v1927
      %v3127 = vunpack.c.h.b16 %v1927
      %v3128 = vpack.c.b16 %v2330, %v2328
      %v3129 = vpack.c.b16 %v2331, %v2329
      %v3130 = vpack.c.b16 %v2334, %v2332
      %v3131 = vpack.c.b16 %v2335, %v2333
      %v3132 = vpack.c.b16 %v2338, %v2336
      %v3133 = vpack.c.b16 %v2339, %v2337
      %v3134 = vpack.c.b16 %v2342, %v2340
      %v3135 = vpack.c.b16 %v2343, %v2341
      %v3136 = vpack.c.b16 %v2346, %v2344
      %v3137 = vpack.c.b16 %v2347, %v2345
      %v3138 = vpack.c.b16 %v2350, %v2348
      %v3139 = vpack.c.b16 %v2351, %v2349
      %v3140 = vpack.c.b16 %v2354, %v2352
      %v3141 = vpack.c.b16 %v2355, %v2353
      %v3142 = vpack.c.b16 %v2358, %v2356
      %v3143 = vpack.c.b16 %v2359, %v2357
      %v3144 = vpack.c.b16 %v2362, %v2360
      %v3145 = vpack.c.b16 %v2363, %v2361
      %v3146 = vpack.c.b16 %v2366, %v2364
      %v3147 = vpack.c.b16 %v2367, %v2365
      %v3148 = vpack.c.b16 %v2370, %v2368
      %v3149 = vpack.c.b16 %v2371, %v2369
      %v3150 = vpack.c.b16 %v2374, %v2372
      %v3151 = vpack.c.b16 %v2375, %v2373
      %v3152 = vpack.c.b16 %v2378, %v2376
      %v3153 = vpack.c.b16 %v2379, %v2377
      %v3154 = vpack.c.b16 %v2382, %v2380
      %v3155 = vpack.c.b16 %v2383, %v2381
      %v3156 = vpack.c.b16 %v2386, %v2384
      %v3157 = vpack.c.b16 %v2387, %v2385
      %v3158 = vpack.c.b16 %v2390, %v2388
      %v3159 = vpack.c.b16 %v2391, %v2389
      %v3160 = vpack.c.b16 %v2394, %v2392
      %v3161 = vpack.c.b16 %v2395, %v2393
      %v3162 = vpack.c.b16 %v2398, %v2396
      %v3163 = vpack.c.b16 %v2399, %v2397
      %v3164 = vpack.c.b16 %v2402, %v2400
      %v3165 = vpack.c.b16 %v2403, %v2401
      %v3166 = vpack.c.b16 %v2406, %v2404
      %v3167 = vpack.c.b16 %v2407, %v2405
      %v3168 = vpack.c.b16 %v2410, %v2408
      %v3169 = vpack.c.b16 %v2411, %v2409
      %v3170 = vpack.c.b16 %v2414, %v2412
      %v3171 = vpack.c.b16 %v2415, %v2413
      %v3172 = vpack.c.b16 %v2418, %v2416
      %v3173 = vpack.c.b16 %v2419, %v2417
      %v3174 = vpack.c.b16 %v2422, %v2420
      %v3175 = vpack.c.b16 %v2423, %v2421
      %v3176 = vpack.c.b16 %v2426, %v2424
      %v3177 = vpack.c.b16 %v2427, %v2425
      %v3178 = vpack.c.b16 %v2430, %v2428
      %v3179 = vpack.c.b16 %v2431, %v2429
      %v3180 = vpack.c.b16 %v2434, %v2432
      %v3181 = vpack.c.b16 %v2435, %v2433
      %v3182 = vpack.c.b16 %v2438, %v2436
      %v3183 = vpack.c.b16 %v2439, %v2437
      %v3184 = vpack.c.b16 %v2442, %v2440
      %v3185 = vpack.c.b16 %v2443, %v2441
      %v3186 = vpack.c.b16 %v2446, %v2444
      %v3187 = vpack.c.b16 %v2447, %v2445
      %v3188 = vpack.c.b16 %v2450, %v2448
      %v3189 = vpack.c.b16 %v2451, %v2449
      %v3190 = vpack.c.b16 %v2454, %v2452
      %v3191 = vpack.c.b16 %v2455, %v2453
      %v3192 = vpack.c.b16 %v2458, %v2456
      %v3193 = vpack.c.b16 %v2459, %v2457
      %v3194 = vpack.c.b16 %v2462, %v2460
      %v3195 = vpack.c.b16 %v2463, %v2461
      %v3196 = vpack.c.b16 %v2466, %v2464
      %v3197 = vpack.c.b16 %v2467, %v2465
      %v3198 = vpack.c.b16 %v2470, %v2468
      %v3199 = vpack.c.b16 %v2471, %v2469
      %v3200 = vpack.c.b16 %v2474, %v2472
      %v3201 = vpack.c.b16 %v2475, %v2473
      %v3202 = vpack.c.b16 %v2478, %v2476
      %v3203 = vpack.c.b16 %v2479, %v2477
      %v3204 = vpack.c.b16 %v2482, %v2480
      %v3205 = vpack.c.b16 %v2483, %v2481
      %v3206 = vpack.c.b16 %v2486, %v2484
      %v3207 = vpack.c.b16 %v2487, %v2485
      %v3208 = vpack.c.b16 %v2490, %v2488
      %v3209 = vpack.c.b16 %v2491, %v2489
      %v3210 = vpack.c.b16 %v2494, %v2492
      %v3211 = vpack.c.b16 %v2495, %v2493
      %v3212 = vpack.c.b16 %v2498, %v2496
      %v3213 = vpack.c.b16 %v2499, %v2497
      %v3214 = vpack.c.b16 %v2502, %v2500
      %v3215 = vpack.c.b16 %v2503, %v2501
      %v3216 = vpack.c.b16 %v2506, %v2504
      %v3217 = vpack.c.b16 %v2507, %v2505
      %v3218 = vpack.c.b16 %v2510, %v2508
      %v3219 = vpack.c.b16 %v2511, %v2509
      %v3220 = vpack.c.b16 %v2514, %v2512
      %v3221 = vpack.c.b16 %v2515, %v2513
      %v3222 = vpack.c.b16 %v2518, %v2516
      %v3223 = vpack.c.b16 %v2519, %v2517
      %v3224 = vpack.c.b16 %v2522, %v2520
      %v3225 = vpack.c.b16 %v2523, %v2521
      %v3226 = vpack.c.b16 %v2526, %v2524
      %v3227 = vpack.c.b16 %v2527, %v2525
      %v3228 = vpack.c.b16 %v2530, %v2528
      %v3229 = vpack.c.b16 %v2531, %v2529
      %v3230 = vpack.c.b16 %v2534, %v2532
      %v3231 = vpack.c.b16 %v2535, %v2533
      %v3232 = vpack.c.b16 %v2538, %v2536
      %v3233 = vpack.c.b16 %v2539, %v2537
      %v3234 = vpack.c.b16 %v2542, %v2540
      %v3235 = vpack.c.b16 %v2543, %v2541
      %v3236 = vpack.c.b16 %v2546, %v2544
      %v3237 = vpack.c.b16 %v2547, %v2545
      %v3238 = vpack.c.b16 %v2550, %v2548
      %v3239 = vpack.c.b16 %v2551, %v2549
      %v3240 = vpack.c.b16 %v2554, %v2552
      %v3241 = vpack.c.b16 %v2555, %v2553
      %v3242 = vpack.c.b16 %v2558, %v2556
      %v3243 = vpack.c.b16 %v2559, %v2557
      %v3244 = vpack.c.b16 %v2562, %v2560
      %v3245 = vpack.c.b16 %v2563, %v2561
      %v3246 = vpack.c.b16 %v2566, %v2564
      %v3247 = vpack.c.b16 %v2567, %v2565
      %v3248 = vpack.c.b16 %v2570, %v2568
      %v3249 = vpack.c.b16 %v2571, %v2569
      %v3250 = vpack.c.b16 %v2574, %v2572
      %v3251 = vpack.c.b16 %v2575, %v2573
      %v3252 = vpack.c.b16 %v2578, %v2576
      %v3253 = vpack.c.b16 %v2579, %v2577
      %v3254 = vpack.c.b16 %v2582, %v2580
      %v3255 = vpack.c.b16 %v2583, %v2581
      %v3256 = vpack.c.b16 %v2586, %v2584
      %v3257 = vpack.c.b16 %v2587, %v2585
      %v3258 = vpack.c.b16 %v2590, %v2588
      %v3259 = vpack.c.b16 %v2591, %v2589
      %v3260 = vpack.c.b16 %v2594, %v2592
      %v3261 = vpack.c.b16 %v2595, %v2593
      %v3262 = vpack.c.b16 %v2598, %v2596
      %v3263 = vpack.c.b16 %v2599, %v2597
      %v3264 = vpack.c.b16 %v2602, %v2600
      %v3265 = vpack.c.b16 %v2603, %v2601
      %v3266 = vpack.c.b16 %v2606, %v2604
      %v3267 = vpack.c.b16 %v2607, %v2605
      %v3268 = vpack.c.b16 %v2610, %v2608
      %v3269 = vpack.c.b16 %v2611, %v2609
      %v3270 = vpack.c.b16 %v2614, %v2612
      %v3271 = vpack.c.b16 %v2615, %v2613
      %v3272 = vpack.c.b16 %v2618, %v2616
      %v3273 = vpack.c.b16 %v2619, %v2617
      %v3274 = vpack.c.b16 %v2622, %v2620
      %v3275 = vpack.c.b16 %v2623, %v2621
      %v3276 = vpack.c.b16 %v2626, %v2624
      %v3277 = vpack.c.b16 %v2627, %v2625
      %v3278 = vpack.c.b16 %v2630, %v2628
      %v3279 = vpack.c.b16 %v2631, %v2629
      %v3280 = vpack.c.b16 %v2634, %v2632
      %v3281 = vpack.c.b16 %v2635, %v2633
      %v3282 = vpack.c.b16 %v2638, %v2636
      %v3283 = vpack.c.b16 %v2639, %v2637
      %v3284 = vpack.c.b16 %v2642, %v2640
      %v3285 = vpack.c.b16 %v2643, %v2641
      %v3286 = vpack.c.b16 %v2646, %v2644
      %v3287 = vpack.c.b16 %v2647, %v2645
      %v3288 = vpack.c.b16 %v2650, %v2648
      %v3289 = vpack.c.b16 %v2651, %v2649
      %v3290 = vpack.c.b16 %v2654, %v2652
      %v3291 = vpack.c.b16 %v2655, %v2653
      %v3292 = vpack.c.b16 %v2658, %v2656
      %v3293 = vpack.c.b16 %v2659, %v2657
      %v3294 = vpack.c.b16 %v2662, %v2660
      %v3295 = vpack.c.b16 %v2663, %v2661
      %v3296 = vpack.c.b16 %v2666, %v2664
      %v3297 = vpack.c.b16 %v2667, %v2665
      %v3298 = vpack.c.b16 %v2670, %v2668
      %v3299 = vpack.c.b16 %v2671, %v2669
      %v3300 = vpack.c.b16 %v2674, %v2672
      %v3301 = vpack.c.b16 %v2675, %v2673
      %v3302 = vpack.c.b16 %v2678, %v2676
      %v3303 = vpack.c.b16 %v2679, %v2677
      %v3304 = vpack.c.b16 %v2682, %v2680
      %v3305 = vpack.c.b16 %v2683, %v2681
      %v3306 = vpack.c.b16 %v2686, %v2684
      %v3307 = vpack.c.b16 %v2687, %v2685
      %v3308 = vpack.c.b16 %v2690, %v2688
      %v3309 = vpack.c.b16 %v2691, %v2689
      %v3310 = vpack.c.b16 %v2694, %v2692
      %v3311 = vpack.c.b16 %v2695, %v2693
      %v3312 = vpack.c.b16 %v2698, %v2696
      %v3313 = vpack.c.b16 %v2699, %v2697
      %v3314 = vpack.c.b16 %v2702, %v2700
      %v3315 = vpack.c.b16 %v2703, %v2701
      %v3316 = vpack.c.b16 %v2706, %v2704
      %v3317 = vpack.c.b16 %v2707, %v2705
      %v3318 = vpack.c.b16 %v2710, %v2708
      %v3319 = vpack.c.b16 %v2711, %v2709
      %v3320 = vpack.c.b16 %v2714, %v2712
      %v3321 = vpack.c.b16 %v2715, %v2713
      %v3322 = vpack.c.b16 %v2718, %v2716
      %v3323 = vpack.c.b16 %v2719, %v2717
      %v3324 = vpack.c.b16 %v2722, %v2720
      %v3325 = vpack.c.b16 %v2723, %v2721
      %v3326 = vpack.c.b16 %v2726, %v2724
      %v3327 = vpack.c.b16 %v2727, %v2725
      %v3328 = vpack.c.b16 %v2730, %v2728
      %v3329 = vpack.c.b16 %v2731, %v2729
      %v3330 = vpack.c.b16 %v2734, %v2732
      %v3331 = vpack.c.b16 %v2735, %v2733
      %v3332 = vpack.c.b16 %v2738, %v2736
      %v3333 = vpack.c.b16 %v2739, %v2737
      %v3334 = vpack.c.b16 %v2742, %v2740
      %v3335 = vpack.c.b16 %v2743, %v2741
      %v3336 = vpack.c.b16 %v2746, %v2744
      %v3337 = vpack.c.b16 %v2747, %v2745
      %v3338 = vpack.c.b16 %v2750, %v2748
      %v3339 = vpack.c.b16 %v2751, %v2749
      %v3340 = vpack.c.b16 %v2754, %v2752
      %v3341 = vpack.c.b16 %v2755, %v2753
      %v3342 = vpack.c.b16 %v2758, %v2756
      %v3343 = vpack.c.b16 %v2759, %v2757
      %v3344 = vpack.c.b16 %v2762, %v2760
      %v3345 = vpack.c.b16 %v2763, %v2761
      %v3346 = vpack.c.b16 %v2766, %v2764
      %v3347 = vpack.c.b16 %v2767, %v2765
      %v3348 = vpack.c.b16 %v2770, %v2768
      %v3349 = vpack.c.b16 %v2771, %v2769
      %v3350 = vpack.c.b16 %v2774, %v2772
      %v3351 = vpack.c.b16 %v2775, %v2773
      %v3352 = vpack.c.b16 %v2778, %v2776
      %v3353 = vpack.c.b16 %v2779, %v2777
      %v3354 = vpack.c.b16 %v2782, %v2780
      %v3355 = vpack.c.b16 %v2783, %v2781
      %v3356 = vpack.c.b16 %v2786, %v2784
      %v3357 = vpack.c.b16 %v2787, %v2785
      %v3358 = vpack.c.b16 %v2790, %v2788
      %v3359 = vpack.c.b16 %v2791, %v2789
      %v3360 = vpack.c.b16 %v2794, %v2792
      %v3361 = vpack.c.b16 %v2795, %v2793
      %v3362 = vpack.c.b16 %v2798, %v2796
      %v3363 = vpack.c.b16 %v2799, %v2797
      %v3364 = vpack.c.b16 %v2802, %v2800
      %v3365 = vpack.c.b16 %v2803, %v2801
      %v3366 = vpack.c.b16 %v2806, %v2804
      %v3367 = vpack.c.b16 %v2807, %v2805
      %v3368 = vpack.c.b16 %v2810, %v2808
      %v3369 = vpack.c.b16 %v2811, %v2809
      %v3370 = vpack.c.b16 %v2814, %v2812
      %v3371 = vpack.c.b16 %v2815, %v2813
      %v3372 = vpack.c.b16 %v2818, %v2816
      %v3373 = vpack.c.b16 %v2819, %v2817
      %v3374 = vpack.c.b16 %v2822, %v2820
      %v3375 = vpack.c.b16 %v2823, %v2821
      %v3376 = vpack.c.b16 %v2826, %v2824
      %v3377 = vpack.c.b16 %v2827, %v2825
      %v3378 = vpack.c.b16 %v2830, %v2828
      %v3379 = vpack.c.b16 %v2831, %v2829
      %v3380 = vpack.c.b16 %v2834, %v2832
      %v3381 = vpack.c.b16 %v2835, %v2833
      %v3382 = vpack.c.b16 %v2838, %v2836
      %v3383 = vpack.c.b16 %v2839, %v2837
      %v3384 = vpack.c.b16 %v2842, %v2840
      %v3385 = vpack.c.b16 %v2843, %v2841
      %v3386 = vpack.c.b16 %v2846, %v2844
      %v3387 = vpack.c.b16 %v2847, %v2845
      %v3388 = vpack.c.b16 %v2850, %v2848
      %v3389 = vpack.c.b16 %v2851, %v2849
      %v3390 = vpack.c.b16 %v2854, %v2852
      %v3391 = vpack.c.b16 %v2855, %v2853
      %v3392 = vpack.c.b16 %v2858, %v2856
      %v3393 = vpack.c.b16 %v2859, %v2857
      %v3394 = vpack.c.b16 %v2862, %v2860
      %v3395 = vpack.c.b16 %v2863, %v2861
      %v3396 = vpack.c.b16 %v2866, %v2864
      %v3397 = vpack.c.b16 %v2867, %v2865
      %v3398 = vpack.c.b16 %v2870, %v2868
      %v3399 = vpack.c.b16 %v2871, %v2869
      %v3400 = vpack.c.b16 %v2874, %v2872
      %v3401 = vpack.c.b16 %v2875, %v2873
      %v3402 = vpack.c.b16 %v2878, %v2876
      %v3403 = vpack.c.b16 %v2879, %v2877
      %v3404 = vpack.c.b16 %v2882, %v2880
      %v3405 = vpack.c.b16 %v2883, %v2881
      %v3406 = vpack.c.b16 %v2886, %v2884
      %v3407 = vpack.c.b16 %v2887, %v2885
      %v3408 = vpack.c.b16 %v2890, %v2888
      %v3409 = vpack.c.b16 %v2891, %v2889
      %v3410 = vpack.c.b16 %v2894, %v2892
      %v3411 = vpack.c.b16 %v2895, %v2893
      %v3412 = vpack.c.b16 %v2898, %v2896
      %v3413 = vpack.c.b16 %v2899, %v2897
      %v3414 = vpack.c.b16 %v2902, %v2900
      %v3415 = vpack.c.b16 %v2903, %v2901
      %v3416 = vpack.c.b16 %v2906, %v2904
      %v3417 = vpack.c.b16 %v2907, %v2905
      %v3418 = vpack.c.b16 %v2910, %v2908
      %v3419 = vpack.c.b16 %v2911, %v2909
      %v3420 = vpack.c.b16 %v2914, %v2912
      %v3421 = vpack.c.b16 %v2915, %v2913
      %v3422 = vpack.c.b16 %v2918, %v2916
      %v3423 = vpack.c.b16 %v2919, %v2917
      %v3424 = vpack.c.b16 %v2922, %v2920
      %v3425 = vpack.c.b16 %v2923, %v2921
      %v3426 = vpack.c.b16 %v2926, %v2924
      %v3427 = vpack.c.b16 %v2927, %v2925
      %v3428 = vpack.c.b16 %v2930, %v2928
      %v3429 = vpack.c.b16 %v2931, %v2929
      %v3430 = vpack.c.b16 %v2934, %v2932
      %v3431 = vpack.c.b16 %v2935, %v2933
      %v3432 = vpack.c.b16 %v2938, %v2936
      %v3433 = vpack.c.b16 %v2939, %v2937
      %v3434 = vpack.c.b16 %v2942, %v2940
      %v3435 = vpack.c.b16 %v2943, %v2941
      %v3436 = vpack.c.b16 %v2946, %v2944
      %v3437 = vpack.c.b16 %v2947, %v2945
      %v3438 = vpack.c.b16 %v2950, %v2948
      %v3439 = vpack.c.b16 %v2951, %v2949
      %v3440 = vpack.c.b16 %v2954, %v2952
      %v3441 = vpack.c.b16 %v2955, %v2953
      %v3442 = vpack.c.b16 %v2958, %v2956
      %v3443 = vpack.c.b16 %v2959, %v2957
      %v3444 = vpack.c.b16 %v2962, %v2960
      %v3445 = vpack.c.b16 %v2963, %v2961
      %v3446 = vpack.c.b16 %v2966, %v2964
      %v3447 = vpack.c.b16 %v2967, %v2965
      %v3448 = vpack.c.b16 %v2970, %v2968
      %v3449 = vpack.c.b16 %v2971, %v2969
      %v3450 = vpack.c.b16 %v2974, %v2972
      %v3451 = vpack.c.b16 %v2975, %v2973
      %v3452 = vpack.c.b16 %v2978, %v2976
      %v3453 = vpack.c.b16 %v2979, %v2977
      %v3454 = vpack.c.b16 %v2982, %v2980
      %v3455 = vpack.c.b16 %v2983, %v2981
      %v3456 = vpack.c.b16 %v2986, %v2984
      %v3457 = vpack.c.b16 %v2987, %v2985
      %v3458 = vpack.c.b16 %v2990, %v2988
      %v3459 = vpack.c.b16 %v2991, %v2989
      %v3460 = vpack.c.b16 %v2994, %v2992
      %v3461 = vpack.c.b16 %v2995, %v2993
      %v3462 = vpack.c.b16 %v2998, %v2996
      %v3463 = vpack.c.b16 %v2999, %v2997
      %v3464 = vpack.c.b16 %v3002, %v3000
      %v3465 = vpack.c.b16 %v3003, %v3001
      %v3466 = vpack.c.b16 %v3006, %v3004
      %v3467 = vpack.c.b16 %v3007, %v3005
      %v3468 = vpack.c.b16 %v3010, %v3008
      %v3469 = vpack.c.b16 %v3011, %v3009
      %v3470 = vpack.c.b16 %v3014, %v3012
      %v3471 = vpack.c.b16 %v3015, %v3013
      %v3472 = vpack.c.b16 %v3018, %v3016
      %v3473 = vpack.c.b16 %v3019, %v3017
      %v3474 = vpack.c.b16 %v3022, %v3020
      %v3475 = vpack.c.b16 %v3023, %v3021
      %v3476 = vpack.c.b16 %v3026, %v3024
      %v3477 = vpack.c.b16 %v3027, %v3025
      %v3478 = vpack.c.b16 %v3030, %v3028
      %v3479 = vpack.c.b16 %v3031, %v3029
      %v3480 = vpack.c.b16 %v3034, %v3032
      %v3481 = vpack.c.b16 %v3035, %v3033
      %v3482 = vpack.c.b16 %v3038, %v3036
      %v3483 = vpack.c.b16 %v3039, %v3037
      %v3484 = vpack.c.b16 %v3042, %v3040
      %v3485 = vpack.c.b16 %v3043, %v3041
      %v3486 = vpack.c.b16 %v3046, %v3044
      %v3487 = vpack.c.b16 %v3047, %v3045
      %v3488 = vpack.c.b16 %v3050, %v3048
      %v3489 = vpack.c.b16 %v3051, %v3049
      %v3490 = vpack.c.b16 %v3054, %v3052
      %v3491 = vpack.c.b16 %v3055, %v3053
      %v3492 = vpack.c.b16 %v3058, %v3056
      %v3493 = vpack.c.b16 %v3059, %v3057
      %v3494 = vpack.c.b16 %v3062, %v3060
      %v3495 = vpack.c.b16 %v3063, %v3061
      %v3496 = vpack.c.b16 %v3066, %v3064
      %v3497 = vpack.c.b16 %v3067, %v3065
      %v3498 = vpack.c.b16 %v3070, %v3068
      %v3499 = vpack.c.b16 %v3071, %v3069
      %v3500 = vpack.c.b16 %v3074, %v3072
      %v3501 = vpack.c.b16 %v3075, %v3073
      %v3502 = vpack.c.b16 %v3078, %v3076
      %v3503 = vpack.c.b16 %v3079, %v3077
      %v3504 = vpack.c.b16 %v3082, %v3080
      %v3505 = vpack.c.b16 %v3083, %v3081
      %v3506 = vpack.c.b16 %v3086, %v3084
      %v3507 = vpack.c.b16 %v3087, %v3085
      %v3508 = vpack.c.b16 %v3090, %v3088
      %v3509 = vpack.c.b16 %v3091, %v3089
      %v3510 = vpack.c.b16 %v3094, %v3092
      %v3511 = vpack.c.b16 %v3095, %v3093
      %v3512 = vpack.c.b16 %v3098, %v3096
      %v3513 = vpack.c.b16 %v3099, %v3097
      %v3514 = vpack.c.b16 %v3102, %v3100
      %v3515 = vpack.c.b16 %v3103, %v3101
      %v3516 = vpack.c.b16 %v3106, %v3104
      %v3517 = vpack.c.b16 %v3107, %v3105
      %v3518 = vpack.c.b16 %v3110, %v3108
      %v3519 = vpack.c.b16 %v3111, %v3109
      %v3520 = vpack.c.b16 %v3114, %v3112
      %v3521 = vpack.c.b16 %v3115, %v3113
      %v3522 = vpack.c.b16 %v3118, %v3116
      %v3523 = vpack.c.b16 %v3119, %v3117
      %v3524 = vpack.c.b16 %v3122, %v3120
      %v3525 = vpack.c.b16 %v3123, %v3121
      %v3526 = vpack.c.b16 %v3126, %v3124
      %v3527 = vpack.c.b16 %v3127, %v3125
      %3928 = vmatprep.subr.bf16.mxu0 %v3129
      %3929 = vmatpush1.bf16.msra.mxu0 %v3128
      %3930 = vmatprep.subr.bf16.mxu0 %v3131
      %3931 = vmatpush1.bf16.msra.mxu0 %v3130
      %3932 = vmatprep.subr.bf16.mxu0 %v3133
      %3933 = vmatpush1.bf16.msra.mxu0 %v3132
      %3934 = vmatprep.subr.bf16.mxu0 %v3135
      %3935 = vmatpush1.bf16.msra.mxu0 %v3134
      %3936 = vmatprep.subr.bf16.mxu0 %v3137
      %3937 = vmatpush1.bf16.msra.mxu0 %v3136
      %3938 = vmatprep.subr.bf16.mxu0 %v3139
      %3939 = vmatpush1.bf16.msra.mxu0 %v3138
      %3940 = vmatprep.subr.bf16.mxu0 %v3141
      %3941 = vmatpush1.bf16.msra.mxu0 %v3140
      %3942 = vmatprep.subr.bf16.mxu0 %v3143
      %3943 = vmatpush1.bf16.msra.mxu0 %v3142
      %3944 = vmatprep.subr.bf16.mxu0 %v3145
      %3945 = vmatpush1.bf16.msra.mxu0 %v3144
      %3946 = vmatprep.subr.bf16.mxu0 %v3147
      %3947 = vmatpush1.bf16.msra.mxu0 %v3146
      %3948 = vmatprep.subr.bf16.mxu0 %v3149
      %3949 = vmatpush1.bf16.msra.mxu0 %v3148
      %3950 = vmatprep.subr.bf16.mxu0 %v3151
      %3951 = vmatpush1.bf16.msra.mxu0 %v3150
      %3952 = vmatprep.subr.bf16.mxu0 %v3153
      %3953 = vmatpush1.bf16.msra.mxu0 %v3152
      %3954 = vmatprep.subr.bf16.mxu0 %v3155
      %3955 = vmatpush1.bf16.msra.mxu0 %v3154
      %3956 = vmatprep.subr.bf16.mxu0 %v3157
      %3957 = vmatpush1.bf16.msra.mxu0 %v3156
      %3958 = vmatprep.subr.bf16.mxu0 %v3159
      %3959 = vmatpush1.bf16.msra.mxu0 %v3158
      %3960 = vmatprep.mubr.bf16.mxu0 %v1329
      %3961 = vmatmul.mubr.bf16.gmra.mrb[0].mxu0 %v1328
      %v3962 = vpop.f32.mrb[0].mxu0
      %v3963 = vadd.f32 0.0, %v3962
      %v3964 = vpop.f32.mrb[0].mxu0
      %v3965 = vadd.f32 0.0, %v3964
      %v3966 = vpop.f32.mrb[0].mxu0
      %v3967 = vadd.f32 0.0, %v3966
      %v3968 = vpop.f32.mrb[0].mxu0
      %v3969 = vadd.f32 0.0, %v3968
      %3970 = vmatprep.mubr.bf16.mxu0 %v1354
      %3971 = vmatmul.mubr.bf16.gmra.mrb[0].mxu0 %v1353
      %v3972 = vpop.f32.mrb[0].mxu0
      %v3973 = vadd.f32 0.0, %v3972
      %v3974 = vpop.f32.mrb[0].mxu0
      %v3975 = vadd.f32 0.0, %v3974
      %v3976 = vpop.f32.mrb[0].mxu0
      %v3977 = vadd.f32 0.0, %v3976
      %v3978 = vpop.f32.mrb[0].mxu0
      %v3979 = vadd.f32 0.0, %v3978
      %3980 = vmatprep.mubr.bf16.mxu0 %v1379
      %3981 = vmatmul.mubr.bf16.gmra.mrb[0].mxu0 %v1378
      %v3982 = vpop.f32.mrb[0].mxu0
      %v3983 = vadd.f32 0.0, %v3982
      %v3984 = vpop.f32.mrb[0].mxu0
      %v3985 = vadd.f32 0.0, %v3984
      %v3986 = vpop.f32.mrb[0].mxu0
      %v3987 = vadd.f32 0.0, %v3986
      %v3988 = vpop.f32.mrb[0].mxu0
      %v3989 = vadd.f32 0.0, %v3988
      %3990 = vmatprep.mubr.bf16.mxu0 %v1404
      %3991 = vmatmul.mubr.bf16.gmra.mrb[0].mxu0 %v1403
      %v3992 = vpop.f32.mrb[0].mxu0
      %v3993 = vadd.f32 0.0, %v3992
      %v3994 = vpop.f32.mrb[0].mxu0
      %v3995 = vadd.f32 0.0, %v3994
      %v3996 = vpop.f32.mrb[0].mxu0
      %v3997 = vadd.f32 0.0, %v3996
      %v3998 = vpop.f32.mrb[0].mxu0
      %v3999 = vadd.f32 0.0, %v3998
      %4000 = vmatprep.mubr.bf16.mxu0 %v1429
      %4001 = vmatmul.mubr.bf16.gmra.mrb[0].mxu0 %v1428
      %v4002 = vpop.f32.mrb[0].mxu0
      %v4003 = vadd.f32 0.0, %v4002
      %v4004 = vpop.f32.mrb[0].mxu0
      %v4005 = vadd.f32 0.0, %v4004
      %v4006 = vpop.f32.mrb[0].mxu0
      %v4007 = vadd.f32 0.0, %v4006
      %v4008 = vpop.f32.mrb[0].mxu0
      %v4009 = vadd.f32 0.0, %v4008
      %4010 = vmatprep.mubr.bf16.mxu0 %v1454
      %4011 = vmatmul.mubr.bf16.gmra.mrb[0].mxu0 %v1453
      %v4012 = vpop.f32.mrb[0].mxu0
      %v4013 = vadd.f32 0.0, %v4012
      %v4014 = vpop.f32.mrb[0].mxu0
      %v4015 = vadd.f32 0.0, %v4014
      %v4016 = vpop.f32.mrb[0].mxu0
      %v4017 = vadd.f32 0.0, %v4016
      %v4018 = vpop.f32.mrb[0].mxu0
      %v4019 = vadd.f32 0.0, %v4018
      %4020 = vmatprep.mubr.bf16.mxu0 %v1479
      %4021 = vmatmul.mubr.bf16.gmra.mrb[0].mxu0 %v1478
      %v4022 = vpop.f32.mrb[0].mxu0
      %v4023 = vadd.f32 0.0, %v4022
      %v4024 = vpop.f32.mrb[0].mxu0
      %v4025 = vadd.f32 0.0, %v4024
      %v4026 = vpop.f32.mrb[0].mxu0
      %v4027 = vadd.f32 0.0, %v4026
      %v4028 = vpop.f32.mrb[0].mxu0
      %v4029 = vadd.f32 0.0, %v4028
      %4030 = vmatprep.mubr.bf16.mxu0 %v1504
      %4031 = vmatmul.mubr.bf16.gmra.mrb[0].mxu0 %v1503
      %v4032 = vpop.f32.mrb[0].mxu0
      %v4033 = vadd.f32 0.0, %v4032
      %v4034 = vpop.f32.mrb[0].mxu0
      %v4035 = vadd.f32 0.0, %v4034
      %v4036 = vpop.f32.mrb[0].mxu0
      %v4037 = vadd.f32 0.0, %v4036
      %v4038 = vpop.f32.mrb[0].mxu0
      %v4039 = vadd.f32 0.0, %v4038
      %4040 = vdwg.mxu0
      %4041 = vmatprep.subr.bf16.mxu0 %v3161
      %4042 = vmatpush1.bf16.msra.mxu0 %v3160
      %4043 = vmatprep.subr.bf16.mxu0 %v3163
      %4044 = vmatpush1.bf16.msra.mxu0 %v3162
      %4045 = vmatprep.subr.bf16.mxu0 %v3165
      %4046 = vmatpush1.bf16.msra.mxu0 %v3164
      %4047 = vmatprep.subr.bf16.mxu0 %v3167
      %4048 = vmatpush1.bf16.msra.mxu0 %v3166
      %4049 = vmatprep.subr.bf16.mxu0 %v3169
      %4050 = vmatpush1.bf16.msra.mxu0 %v3168
      %4051 = vmatprep.subr.bf16.mxu0 %v3171
      %4052 = vmatpush1.bf16.msra.mxu0 %v3170
      %4053 = vmatprep.subr.bf16.mxu0 %v3173
      %4054 = vmatpush1.bf16.msra.mxu0 %v3172
      %4055 = vmatprep.subr.bf16.mxu0 %v3175
      %4056 = vmatpush1.bf16.msra.mxu0 %v3174
      %4057 = vmatprep.subr.bf16.mxu0 %v3177
      %4058 = vmatpush1.bf16.msra.mxu0 %v3176
      %4059 = vmatprep.subr.bf16.mxu0 %v3179
      %4060 = vmatpush1.bf16.msra.mxu0 %v3178
      %4061 = vmatprep.subr.bf16.mxu0 %v3181
      %4062 = vmatpush1.bf16.msra.mxu0 %v3180
      %4063 = vmatprep.subr.bf16.mxu0 %v3183
      %4064 = vmatpush1.bf16.msra.mxu0 %v3182
      %4065 = vmatprep.subr.bf16.mxu0 %v3185
      %4066 = vmatpush1.bf16.msra.mxu0 %v3184
      %4067 = vmatprep.subr.bf16.mxu0 %v3187
      %4068 = vmatpush1.bf16.msra.mxu0 %v3186
      %4069 = vmatprep.subr.bf16.mxu0 %v3189
      %4070 = vmatpush1.bf16.msra.mxu0 %v3188
      %4071 = vmatprep.subr.bf16.mxu0 %v3191
      %4072 = vmatpush1.bf16.msra.mxu0 %v3190
      %4073 = vmatprep.mubr.bf16.mxu0 %v1331
      %4074 = vmatmul.mubr.bf16.gmra.mrb[0].mxu0 %v1330
      %v4075 = vpop.f32.mrb[0].mxu0
      %v4076 = vadd.f32 %v3963, %v4075
      %v4077 = vpop.f32.mrb[0].mxu0
      %v4078 = vadd.f32 %v3965, %v4077
      %v4079 = vpop.f32.mrb[0].mxu0
      %v4080 = vadd.f32 %v3967, %v4079
      %v4081 = vpop.f32.mrb[0].mxu0
      %v4082 = vadd.f32 %v3969, %v4081
      %4083 = vmatprep.mubr.bf16.mxu0 %v1356
      %4084 = vmatmul.mubr.bf16.gmra.mrb[0].mxu0 %v1355
      %v4085 = vpop.f32.mrb[0].mxu0
      %v4086 = vadd.f32 %v3973, %v4085
      %v4087 = vpop.f32.mrb[0].mxu0
      %v4088 = vadd.f32 %v3975, %v4087
      %v4089 = vpop.f32.mrb[0].mxu0
      %v4090 = vadd.f32 %v3977, %v4089
      %v4091 = vpop.f32.mrb[0].mxu0
      %v4092 = vadd.f32 %v3979, %v4091
      %4093 = vmatprep.mubr.bf16.mxu0 %v1381
      %4094 = vmatmul.mubr.bf16.gmra.mrb[0].mxu0 %v1380
      %v4095 = vpop.f32.mrb[0].mxu0
      %v4096 = vadd.f32 %v3983, %v4095
      %v4097 = vpop.f32.mrb[0].mxu0
      %v4098 = vadd.f32 %v3985, %v4097
      %v4099 = vpop.f32.mrb[0].mxu0
      %v4100 = vadd.f32 %v3987, %v4099
      %v4101 = vpop.f32.mrb[0].mxu0
      %v4102 = vadd.f32 %v3989, %v4101
      %4103 = vmatprep.mubr.bf16.mxu0 %v1406
      %4104 = vmatmul.mubr.bf16.gmra.mrb[0].mxu0 %v1405
      %v4105 = vpop.f32.mrb[0].mxu0
      %v4106 = vadd.f32 %v3993, %v4105
      %v4107 = vpop.f32.mrb[0].mxu0
      %v4108 = vadd.f32 %v3995, %v4107
      %v4109 = vpop.f32.mrb[0].mxu0
      %v4110 = vadd.f32 %v3997, %v4109
      %v4111 = vpop.f32.mrb[0].mxu0
      %v4112 = vadd.f32 %v3999, %v4111
      %4113 = vmatprep.mubr.bf16.mxu0 %v1431
      %4114 = vmatmul.mubr.bf16.gmra.mrb[0].mxu0 %v1430
      %v4115 = vpop.f32.mrb[0].mxu0
      %v4116 = vadd.f32 %v4003, %v4115
      %v4117 = vpop.f32.mrb[0].mxu0
      %v4118 = vadd.f32 %v4005, %v4117
      %v4119 = vpop.f32.mrb[0].mxu0
      %v4120 = vadd.f32 %v4007, %v4119
      %v4121 = vpop.f32.mrb[0].mxu0
      %v4122 = vadd.f32 %v4009, %v4121
      %4123 = vmatprep.mubr.bf16.mxu0 %v1456
      %4124 = vmatmul.mubr.bf16.gmra.mrb[0].mxu0 %v1455
      %v4125 = vpop.f32.mrb[0].mxu0
      %v4126 = vadd.f32 %v4013, %v4125
      %v4127 = vpop.f32.mrb[0].mxu0
      %v4128 = vadd.f32 %v4015, %v4127
      %v4129 = vpop.f32.mrb[0].mxu0
      %v4130 = vadd.f32 %v4017, %v4129
      %v4131 = vpop.f32.mrb[0].mxu0
      %v4132 = vadd.f32 %v4019, %v4131
      %4133 = vmatprep.mubr.bf16.mxu0 %v1481
      %4134 = vmatmul.mubr.bf16.gmra.mrb[0].mxu0 %v1480
      %v4135 = vpop.f32.mrb[0].mxu0
      %v4136 = vadd.f32 %v4023, %v4135
      %v4137 = vpop.f32.mrb[0].mxu0
      %v4138 = vadd.f32 %v4025, %v4137
      %v4139 = vpop.f32.mrb[0].mxu0
      %v4140 = vadd.f32 %v4027, %v4139
      %v4141 = vpop.f32.mrb[0].mxu0
      %v4142 = vadd.f32 %v4029, %v4141
      %4143 = vmatprep.mubr.bf16.mxu0 %v1506
      %4144 = vmatmul.mubr.bf16.gmra.mrb[0].mxu0 %v1505
      %v4145 = vpop.f32.mrb[0].mxu0
      %v4146 = vadd.f32 %v4033, %v4145
      %v4147 = vpop.f32.mrb[0].mxu0
      %v4148 = vadd.f32 %v4035, %v4147
      %v4149 = vpop.f32.mrb[0].mxu0
      %v4150 = vadd.f32 %v4037, %v4149
      %v4151 = vpop.f32.mrb[0].mxu0
      %v4152 = vadd.f32 %v4039, %v4151
      %4153 = vdwg.mxu0
      %4154 = vmatprep.subr.bf16.mxu0 %v3193
      %4155 = vmatpush1.bf16.msra.mxu0 %v3192
      %4156 = vmatprep.subr.bf16.mxu0 %v3195
      %4157 = vmatpush1.bf16.msra.mxu0 %v3194
      %4158 = vmatprep.subr.bf16.mxu0 %v3197
      %4159 = vmatpush1.bf16.msra.mxu0 %v3196
      %4160 = vmatprep.subr.bf16.mxu0 %v3199
      %4161 = vmatpush1.bf16.msra.mxu0 %v3198
      %4162 = vmatprep.subr.bf16.mxu0 %v3201
      %4163 = vmatpush1.bf16.msra.mxu0 %v3200
      %4164 = vmatprep.subr.bf16.mxu0 %v3203
      %4165 = vmatpush1.bf16.msra.mxu0 %v3202
      %4166 = vmatprep.subr.bf16.mxu0 %v3205
      %4167 = vmatpush1.bf16.msra.mxu0 %v3204
      %4168 = vmatprep.subr.bf16.mxu0 %v3207
      %4169 = vmatpush1.bf16.msra.mxu0 %v3206
      %4170 = vmatprep.subr.bf16.mxu0 %v3209
      %4171 = vmatpush1.bf16.msra.mxu0 %v3208
      %4172 = vmatprep.subr.bf16.mxu0 %v3211
      %4173 = vmatpush1.bf16.msra.mxu0 %v3210
      %4174 = vmatprep.subr.bf16.mxu0 %v3213
      %4175 = vmatpush1.bf16.msra.mxu0 %v3212
      %4176 = vmatprep.subr.bf16.mxu0 %v3215
      %4177 = vmatpush1.bf16.msra.mxu0 %v3214
      %4178 = vmatprep.subr.bf16.mxu0 %v3217
      %4179 = vmatpush1.bf16.msra.mxu0 %v3216
      %4180 = vmatprep.subr.bf16.mxu0 %v3219
      %4181 = vmatpush1.bf16.msra.mxu0 %v3218
      %4182 = vmatprep.subr.bf16.mxu0 %v3221
      %4183 = vmatpush1.bf16.msra.mxu0 %v3220
      %4184 = vmatprep.subr.bf16.mxu0 %v3223
      %4185 = vmatpush1.bf16.msra.mxu0 %v3222
      %4186 = vmatprep.mubr.bf16.mxu0 %v1333
      %4187 = vmatmul.mubr.bf16.gmra.mrb[0].mxu0 %v1332
      %v4188 = vpop.f32.mrb[0].mxu0
      %v4189 = vadd.f32 %v4076, %v4188
      %v4190 = vpop.f32.mrb[0].mxu0
      %v4191 = vadd.f32 %v4078, %v4190
      %v4192 = vpop.f32.mrb[0].mxu0
      %v4193 = vadd.f32 %v4080, %v4192
      %v4194 = vpop.f32.mrb[0].mxu0
      %v4195 = vadd.f32 %v4082, %v4194
      %4196 = vmatprep.mubr.bf16.mxu0 %v1358
      %4197 = vmatmul.mubr.bf16.gmra.mrb[0].mxu0 %v1357
      %v4198 = vpop.f32.mrb[0].mxu0
      %v4199 = vadd.f32 %v4086, %v4198
      %v4200 = vpop.f32.mrb[0].mxu0
      %v4201 = vadd.f32 %v4088, %v4200
      %v4202 = vpop.f32.mrb[0].mxu0
      %v4203 = vadd.f32 %v4090, %v4202
      %v4204 = vpop.f32.mrb[0].mxu0
      %v4205 = vadd.f32 %v4092, %v4204
      %4206 = vmatprep.mubr.bf16.mxu0 %v1383
      %4207 = vmatmul.mubr.bf16.gmra.mrb[0].mxu0 %v1382
      %v4208 = vpop.f32.mrb[0].mxu0
      %v4209 = vadd.f32 %v4096, %v4208
      %v4210 = vpop.f32.mrb[0].mxu0
      %v4211 = vadd.f32 %v4098, %v4210
      %v4212 = vpop.f32.mrb[0].mxu0
      %v4213 = vadd.f32 %v4100, %v4212
      %v4214 = vpop.f32.mrb[0].mxu0
      %v4215 = vadd.f32 %v4102, %v4214
      %4216 = vmatprep.mubr.bf16.mxu0 %v1408
      %4217 = vmatmul.mubr.bf16.gmra.mrb[0].mxu0 %v1407
      %v4218 = vpop.f32.mrb[0].mxu0
      %v4219 = vadd.f32 %v4106, %v4218
      %v4220 = vpop.f32.mrb[0].mxu0
      %v4221 = vadd.f32 %v4108, %v4220
      %v4222 = vpop.f32.mrb[0].mxu0
      %v4223 = vadd.f32 %v4110, %v4222
      %v4224 = vpop.f32.mrb[0].mxu0
      %v4225 = vadd.f32 %v4112, %v4224
      %4226 = vmatprep.mubr.bf16.mxu0 %v1433
      %4227 = vmatmul.mubr.bf16.gmra.mrb[0].mxu0 %v1432
      %v4228 = vpop.f32.mrb[0].mxu0
      %v4229 = vadd.f32 %v4116, %v4228
      %v4230 = vpop.f32.mrb[0].mxu0
      %v4231 = vadd.f32 %v4118, %v4230
      %v4232 = vpop.f32.mrb[0].mxu0
      %v4233 = vadd.f32 %v4120, %v4232
      %v4234 = vpop.f32.mrb[0].mxu0
      %v4235 = vadd.f32 %v4122, %v4234
      %4236 = vmatprep.mubr.bf16.mxu0 %v1458
      %4237 = vmatmul.mubr.bf16.gmra.mrb[0].mxu0 %v1457
      %v4238 = vpop.f32.mrb[0].mxu0
      %v4239 = vadd.f32 %v4126, %v4238
      %v4240 = vpop.f32.mrb[0].mxu0
      %v4241 = vadd.f32 %v4128, %v4240
      %v4242 = vpop.f32.mrb[0].mxu0
      %v4243 = vadd.f32 %v4130, %v4242
      %v4244 = vpop.f32.mrb[0].mxu0
      %v4245 = vadd.f32 %v4132, %v4244
      %4246 = vmatprep.mubr.bf16.mxu0 %v1483
      %4247 = vmatmul.mubr.bf16.gmra.mrb[0].mxu0 %v1482
      %v4248 = vpop.f32.mrb[0].mxu0
      %v4249 = vadd.f32 %v4136, %v4248
      %v4250 = vpop.f32.mrb[0].mxu0
      %v4251 = vadd.f32 %v4138, %v4250
      %v4252 = vpop.f32.mrb[0].mxu0
      %v4253 = vadd.f32 %v4140, %v4252
      %v4254 = vpop.f32.mrb[0].mxu0
      %v4255 = vadd.f32 %v4142, %v4254
      %4256 = vmatprep.mubr.bf16.mxu0 %v1508
      %4257 = vmatmul.mubr.bf16.gmra.mrb[0].mxu0 %v1507
      %v4258 = vpop.f32.mrb[0].mxu0
      %v4259 = vadd.f32 %v4146, %v4258
      %v4260 = vpop.f32.mrb[0].mxu0
      %v4261 = vadd.f32 %v4148, %v4260
      %v4262 = vpop.f32.mrb[0].mxu0
      %v4263 = vadd.f32 %v4150, %v4262
      %v4264 = vpop.f32.mrb[0].mxu0
      %v4265 = vadd.f32 %v4152, %v4264
      %4266 = vdwg.mxu0
      %4267 = vmatprep.subr.bf16.mxu0 %v3225
      %4268 = vmatpush1.bf16.msra.mxu0 %v3224
      %4269 = vmatprep.subr.bf16.mxu0 %v3227
      %4270 = vmatpush1.bf16.msra.mxu0 %v3226
      %4271 = vmatprep.subr.bf16.mxu0 %v3229
      %4272 = vmatpush1.bf16.msra.mxu0 %v3228
      %4273 = vmatprep.subr.bf16.mxu0 %v3231
      %4274 = vmatpush1.bf16.msra.mxu0 %v3230
      %4275 = vmatprep.subr.bf16.mxu0 %v3233
      %4276 = vmatpush1.bf16.msra.mxu0 %v3232
      %4277 = vmatprep.subr.bf16.mxu0 %v3235
      %4278 = vmatpush1.bf16.msra.mxu0 %v3234
      %4279 = vmatprep.subr.bf16.mxu0 %v3237
      %4280 = vmatpush1.bf16.msra.mxu0 %v3236
      %4281 = vmatprep.subr.bf16.mxu0 %v3239
      %4282 = vmatpush1.bf16.msra.mxu0 %v3238
      %4283 = vmatprep.subr.bf16.mxu0 %v3241
      %4284 = vmatpush1.bf16.msra.mxu0 %v3240
      %4285 = vmatprep.subr.bf16.mxu0 %v3243
      %4286 = vmatpush1.bf16.msra.mxu0 %v3242
      %4287 = vmatprep.subr.bf16.mxu0 %v3245
      %4288 = vmatpush1.bf16.msra.mxu0 %v3244
      %4289 = vmatprep.subr.bf16.mxu0 %v3247
      %4290 = vmatpush1.bf16.msra.mxu0 %v3246
      %4291 = vmatprep.subr.bf16.mxu0 %v3249
      %4292 = vmatpush1.bf16.msra.mxu0 %v3248
      %4293 = vmatprep.subr.bf16.mxu0 %v3251
      %4294 = vmatpush1.bf16.msra.mxu0 %v3250
      %4295 = vmatprep.subr.bf16.mxu0 %v3253
      %4296 = vmatpush1.bf16.msra.mxu0 %v3252
      %4297 = vmatprep.subr.bf16.mxu0 %v3255
      %4298 = vmatpush1.bf16.msra.mxu0 %v3254
      %4299 = vmatprep.mubr.bf16.mxu0 %v1335
      %4300 = vmatmul.mubr.bf16.gmra.mrb[0].mxu0 %v1334
      %v4301 = vpop.f32.mrb[0].mxu0
      %v4302 = vadd.f32 %v4189, %v4301
      %v4303 = vpop.f32.mrb[0].mxu0
      %v4304 = vadd.f32 %v4191, %v4303
      %v4305 = vpop.f32.mrb[0].mxu0
      %v4306 = vadd.f32 %v4193, %v4305
      %v4307 = vpop.f32.mrb[0].mxu0
      %v4308 = vadd.f32 %v4195, %v4307
      %4309 = vmatprep.mubr.bf16.mxu0 %v1360
      %4310 = vmatmul.mubr.bf16.gmra.mrb[0].mxu0 %v1359
      %v4311 = vpop.f32.mrb[0].mxu0
      %v4312 = vadd.f32 %v4199, %v4311
      %v4313 = vpop.f32.mrb[0].mxu0
      %v4314 = vadd.f32 %v4201, %v4313
      %v4315 = vpop.f32.mrb[0].mxu0
      %v4316 = vadd.f32 %v4203, %v4315
      %v4317 = vpop.f32.mrb[0].mxu0
      %v4318 = vadd.f32 %v4205, %v4317
      %4319 = vmatprep.mubr.bf16.mxu0 %v1385
      %4320 = vmatmul.mubr.bf16.gmra.mrb[0].mxu0 %v1384
      %v4321 = vpop.f32.mrb[0].mxu0
      %v4322 = vadd.f32 %v4209, %v4321
      %v4323 = vpop.f32.mrb[0].mxu0
      %v4324 = vadd.f32 %v4211, %v4323
      %v4325 = vpop.f32.mrb[0].mxu0
      %v4326 = vadd.f32 %v4213, %v4325
      %v4327 = vpop.f32.mrb[0].mxu0
      %v4328 = vadd.f32 %v4215, %v4327
      %4329 = vmatprep.mubr.bf16.mxu0 %v1410
      %4330 = vmatmul.mubr.bf16.gmra.mrb[0].mxu0 %v1409
      %v4331 = vpop.f32.mrb[0].mxu0
      %v4332 = vadd.f32 %v4219, %v4331
      %v4333 = vpop.f32.mrb[0].mxu0
      %v4334 = vadd.f32 %v4221, %v4333
      %v4335 = vpop.f32.mrb[0].mxu0
      %v4336 = vadd.f32 %v4223, %v4335
      %v4337 = vpop.f32.mrb[0].mxu0
      %v4338 = vadd.f32 %v4225, %v4337
      %4339 = vmatprep.mubr.bf16.mxu0 %v1435
      %4340 = vmatmul.mubr.bf16.gmra.mrb[0].mxu0 %v1434
      %v4341 = vpop.f32.mrb[0].mxu0
      %v4342 = vadd.f32 %v4229, %v4341
      %v4343 = vpop.f32.mrb[0].mxu0
      %v4344 = vadd.f32 %v4231, %v4343
      %v4345 = vpop.f32.mrb[0].mxu0
      %v4346 = vadd.f32 %v4233, %v4345
      %v4347 = vpop.f32.mrb[0].mxu0
      %v4348 = vadd.f32 %v4235, %v4347
      %4349 = vmatprep.mubr.bf16.mxu0 %v1460
      %4350 = vmatmul.mubr.bf16.gmra.mrb[0].mxu0 %v1459
      %v4351 = vpop.f32.mrb[0].mxu0
      %v4352 = vadd.f32 %v4239, %v4351
      %v4353 = vpop.f32.mrb[0].mxu0
      %v4354 = vadd.f32 %v4241, %v4353
      %v4355 = vpop.f32.mrb[0].mxu0
      %v4356 = vadd.f32 %v4243, %v4355
      %v4357 = vpop.f32.mrb[0].mxu0
      %v4358 = vadd.f32 %v4245, %v4357
      %4359 = vmatprep.mubr.bf16.mxu0 %v1485
      %4360 = vmatmul.mubr.bf16.gmra.mrb[0].mxu0 %v1484
      %v4361 = vpop.f32.mrb[0].mxu0
      %v4362 = vadd.f32 %v4249, %v4361
      %v4363 = vpop.f32.mrb[0].mxu0
      %v4364 = vadd.f32 %v4251, %v4363
      %v4365 = vpop.f32.mrb[0].mxu0
      %v4366 = vadd.f32 %v4253, %v4365
      %v4367 = vpop.f32.mrb[0].mxu0
      %v4368 = vadd.f32 %v4255, %v4367
      %4369 = vmatprep.mubr.bf16.mxu0 %v1510
      %4370 = vmatmul.mubr.bf16.gmra.mrb[0].mxu0 %v1509
      %v4371 = vpop.f32.mrb[0].mxu0
      %v4372 = vadd.f32 %v4259, %v4371
      %v4373 = vpop.f32.mrb[0].mxu0
      %v4374 = vadd.f32 %v4261, %v4373
      %v4375 = vpop.f32.mrb[0].mxu0
      %v4376 = vadd.f32 %v4263, %v4375
      %v4377 = vpop.f32.mrb[0].mxu0
      %v4378 = vadd.f32 %v4265, %v4377
      %4379 = vdwg.mxu0
      %4380 = vmatprep.subr.bf16.mxu0 %v3257
      %4381 = vmatpush1.bf16.msra.mxu0 %v3256
      %4382 = vmatprep.subr.bf16.mxu0 %v3259
      %4383 = vmatpush1.bf16.msra.mxu0 %v3258
      %4384 = vmatprep.subr.bf16.mxu0 %v3261
      %4385 = vmatpush1.bf16.msra.mxu0 %v3260
      %4386 = vmatprep.subr.bf16.mxu0 %v3263
      %4387 = vmatpush1.bf16.msra.mxu0 %v3262
      %4388 = vmatprep.subr.bf16.mxu0 %v3265
      %4389 = vmatpush1.bf16.msra.mxu0 %v3264
      %4390 = vmatprep.subr.bf16.mxu0 %v3267
      %4391 = vmatpush1.bf16.msra.mxu0 %v3266
      %4392 = vmatprep.subr.bf16.mxu0 %v3269
      %4393 = vmatpush1.bf16.msra.mxu0 %v3268
      %4394 = vmatprep.subr.bf16.mxu0 %v3271
      %4395 = vmatpush1.bf16.msra.mxu0 %v3270
      %4396 = vmatprep.subr.bf16.mxu0 %v3273
      %4397 = vmatpush1.bf16.msra.mxu0 %v3272
      %4398 = vmatprep.subr.bf16.mxu0 %v3275
      %4399 = vmatpush1.bf16.msra.mxu0 %v3274
      %4400 = vmatprep.subr.bf16.mxu0 %v3277
      %4401 = vmatpush1.bf16.msra.mxu0 %v3276
      %4402 = vmatprep.subr.bf16.mxu0 %v3279
      %4403 = vmatpush1.bf16.msra.mxu0 %v3278
      %4404 = vmatprep.subr.bf16.mxu0 %v3281
      %4405 = vmatpush1.bf16.msra.mxu0 %v3280
      %4406 = vmatprep.subr.bf16.mxu0 %v3283
      %4407 = vmatpush1.bf16.msra.mxu0 %v3282
      %4408 = vmatprep.subr.bf16.mxu0 %v3285
      %4409 = vmatpush1.bf16.msra.mxu0 %v3284
      %4410 = vmatprep.subr.bf16.mxu0 %v3287
      %4411 = vmatpush1.bf16.msra.mxu0 %v3286
      %4412 = vmatprep.mubr.bf16.mxu0 %v1337
      %4413 = vmatmul.mubr.bf16.gmra.mrb[0].mxu0 %v1336
      %v4414 = vpop.f32.mrb[0].mxu0
      %v4415 = vadd.f32 %v4302, %v4414
      %v4416 = vpop.f32.mrb[0].mxu0
      %v4417 = vadd.f32 %v4304, %v4416
      %v4418 = vpop.f32.mrb[0].mxu0
      %v4419 = vadd.f32 %v4306, %v4418
      %v4420 = vpop.f32.mrb[0].mxu0
      %v4421 = vadd.f32 %v4308, %v4420
      %4422 = vmatprep.mubr.bf16.mxu0 %v1362
      %4423 = vmatmul.mubr.bf16.gmra.mrb[0].mxu0 %v1361
      %v4424 = vpop.f32.mrb[0].mxu0
      %v4425 = vadd.f32 %v4312, %v4424
      %v4426 = vpop.f32.mrb[0].mxu0
      %v4427 = vadd.f32 %v4314, %v4426
      %v4428 = vpop.f32.mrb[0].mxu0
      %v4429 = vadd.f32 %v4316, %v4428
      %v4430 = vpop.f32.mrb[0].mxu0
      %v4431 = vadd.f32 %v4318, %v4430
      %4432 = vmatprep.mubr.bf16.mxu0 %v1387
      %4433 = vmatmul.mubr.bf16.gmra.mrb[0].mxu0 %v1386
      %v4434 = vpop.f32.mrb[0].mxu0
      %v4435 = vadd.f32 %v4322, %v4434
      %v4436 = vpop.f32.mrb[0].mxu0
      %v4437 = vadd.f32 %v4324, %v4436
      %v4438 = vpop.f32.mrb[0].mxu0
      %v4439 = vadd.f32 %v4326, %v4438
      %v4440 = vpop.f32.mrb[0].mxu0
      %v4441 = vadd.f32 %v4328, %v4440
      %4442 = vmatprep.mubr.bf16.mxu0 %v1412
      %4443 = vmatmul.mubr.bf16.gmra.mrb[0].mxu0 %v1411
      %v4444 = vpop.f32.mrb[0].mxu0
      %v4445 = vadd.f32 %v4332, %v4444
      %v4446 = vpop.f32.mrb[0].mxu0
      %v4447 = vadd.f32 %v4334, %v4446
      %v4448 = vpop.f32.mrb[0].mxu0
      %v4449 = vadd.f32 %v4336, %v4448
      %v4450 = vpop.f32.mrb[0].mxu0
      %v4451 = vadd.f32 %v4338, %v4450
      %4452 = vmatprep.mubr.bf16.mxu0 %v1437
      %4453 = vmatmul.mubr.bf16.gmra.mrb[0].mxu0 %v1436
      %v4454 = vpop.f32.mrb[0].mxu0
      %v4455 = vadd.f32 %v4342, %v4454
      %v4456 = vpop.f32.mrb[0].mxu0
      %v4457 = vadd.f32 %v4344, %v4456
      %v4458 = vpop.f32.mrb[0].mxu0
      %v4459 = vadd.f32 %v4346, %v4458
      %v4460 = vpop.f32.mrb[0].mxu0
      %v4461 = vadd.f32 %v4348, %v4460
      %4462 = vmatprep.mubr.bf16.mxu0 %v1462
      %4463 = vmatmul.mubr.bf16.gmra.mrb[0].mxu0 %v1461
      %v4464 = vpop.f32.mrb[0].mxu0
      %v4465 = vadd.f32 %v4352, %v4464
      %v4466 = vpop.f32.mrb[0].mxu0
      %v4467 = vadd.f32 %v4354, %v4466
      %v4468 = vpop.f32.mrb[0].mxu0
      %v4469 = vadd.f32 %v4356, %v4468
      %v4470 = vpop.f32.mrb[0].mxu0
      %v4471 = vadd.f32 %v4358, %v4470
      %4472 = vmatprep.mubr.bf16.mxu0 %v1487
      %4473 = vmatmul.mubr.bf16.gmra.mrb[0].mxu0 %v1486
      %v4474 = vpop.f32.mrb[0].mxu0
      %v4475 = vadd.f32 %v4362, %v4474
      %v4476 = vpop.f32.mrb[0].mxu0
      %v4477 = vadd.f32 %v4364, %v4476
      %v4478 = vpop.f32.mrb[0].mxu0
      %v4479 = vadd.f32 %v4366, %v4478
      %v4480 = vpop.f32.mrb[0].mxu0
      %v4481 = vadd.f32 %v4368, %v4480
      %4482 = vmatprep.mubr.bf16.mxu0 %v1512
      %4483 = vmatmul.mubr.bf16.gmra.mrb[0].mxu0 %v1511
      %v4484 = vpop.f32.mrb[0].mxu0
      %v4485 = vadd.f32 %v4372, %v4484
      %v4486 = vpop.f32.mrb[0].mxu0
      %v4487 = vadd.f32 %v4374, %v4486
      %v4488 = vpop.f32.mrb[0].mxu0
      %v4489 = vadd.f32 %v4376, %v4488
      %v4490 = vpop.f32.mrb[0].mxu0
      %v4491 = vadd.f32 %v4378, %v4490
      %4492 = vdwg.mxu0
      %4493 = vmatprep.subr.bf16.mxu0 %v3289
      %4494 = vmatpush1.bf16.msra.mxu0 %v3288
      %4495 = vmatprep.subr.bf16.mxu0 %v3291
      %4496 = vmatpush1.bf16.msra.mxu0 %v3290
      %4497 = vmatprep.subr.bf16.mxu0 %v3293
      %4498 = vmatpush1.bf16.msra.mxu0 %v3292
      %4499 = vmatprep.subr.bf16.mxu0 %v3295
      %4500 = vmatpush1.bf16.msra.mxu0 %v3294
      %4501 = vmatprep.subr.bf16.mxu0 %v3297
      %4502 = vmatpush1.bf16.msra.mxu0 %v3296
      %4503 = vmatprep.subr.bf16.mxu0 %v3299
      %4504 = vmatpush1.bf16.msra.mxu0 %v3298
      %4505 = vmatprep.subr.bf16.mxu0 %v3301
      %4506 = vmatpush1.bf16.msra.mxu0 %v3300
      %4507 = vmatprep.subr.bf16.mxu0 %v3303
      %4508 = vmatpush1.bf16.msra.mxu0 %v3302
      %4509 = vmatprep.subr.bf16.mxu0 %v3305
      %4510 = vmatpush1.bf16.msra.mxu0 %v3304
      %4511 = vmatprep.subr.bf16.mxu0 %v3307
      %4512 = vmatpush1.bf16.msra.mxu0 %v3306
      %4513 = vmatprep.subr.bf16.mxu0 %v3309
      %4514 = vmatpush1.bf16.msra.mxu0 %v3308
      %4515 = vmatprep.subr.bf16.mxu0 %v3311
      %4516 = vmatpush1.bf16.msra.mxu0 %v3310
      %4517 = vmatprep.subr.bf16.mxu0 %v3313
      %4518 = vmatpush1.bf16.msra.mxu0 %v3312
      %4519 = vmatprep.subr.bf16.mxu0 %v3315
      %4520 = vmatpush1.bf16.msra.mxu0 %v3314
      %4521 = vmatprep.subr.bf16.mxu0 %v3317
      %4522 = vmatpush1.bf16.msra.mxu0 %v3316
      %4523 = vmatprep.subr.bf16.mxu0 %v3319
      %4524 = vmatpush1.bf16.msra.mxu0 %v3318
      %4525 = vmatprep.mubr.bf16.mxu0 %v1339
      %4526 = vmatmul.mubr.bf16.gmra.mrb[0].mxu0 %v1338
      %v4527 = vpop.f32.mrb[0].mxu0
      %v4528 = vadd.f32 %v4415, %v4527
      %v4529 = vpop.f32.mrb[0].mxu0
      %v4530 = vadd.f32 %v4417, %v4529
      %v4531 = vpop.f32.mrb[0].mxu0
      %v4532 = vadd.f32 %v4419, %v4531
      %v4533 = vpop.f32.mrb[0].mxu0
      %v4534 = vadd.f32 %v4421, %v4533
      %4535 = vmatprep.mubr.bf16.mxu0 %v1364
      %4536 = vmatmul.mubr.bf16.gmra.mrb[0].mxu0 %v1363
      %v4537 = vpop.f32.mrb[0].mxu0
      %v4538 = vadd.f32 %v4425, %v4537
      %v4539 = vpop.f32.mrb[0].mxu0
      %v4540 = vadd.f32 %v4427, %v4539
      %v4541 = vpop.f32.mrb[0].mxu0
      %v4542 = vadd.f32 %v4429, %v4541
      %v4543 = vpop.f32.mrb[0].mxu0
      %v4544 = vadd.f32 %v4431, %v4543
      %4545 = vmatprep.mubr.bf16.mxu0 %v1389
      %4546 = vmatmul.mubr.bf16.gmra.mrb[0].mxu0 %v1388
      %v4547 = vpop.f32.mrb[0].mxu0
      %v4548 = vadd.f32 %v4435, %v4547
      %v4549 = vpop.f32.mrb[0].mxu0
      %v4550 = vadd.f32 %v4437, %v4549
      %v4551 = vpop.f32.mrb[0].mxu0
      %v4552 = vadd.f32 %v4439, %v4551
      %v4553 = vpop.f32.mrb[0].mxu0
      %v4554 = vadd.f32 %v4441, %v4553
      %4555 = vmatprep.mubr.bf16.mxu0 %v1414
      %4556 = vmatmul.mubr.bf16.gmra.mrb[0].mxu0 %v1413
      %v4557 = vpop.f32.mrb[0].mxu0
      %v4558 = vadd.f32 %v4445, %v4557
      %v4559 = vpop.f32.mrb[0].mxu0
      %v4560 = vadd.f32 %v4447, %v4559
      %v4561 = vpop.f32.mrb[0].mxu0
      %v4562 = vadd.f32 %v4449, %v4561
      %v4563 = vpop.f32.mrb[0].mxu0
      %v4564 = vadd.f32 %v4451, %v4563
      %4565 = vmatprep.mubr.bf16.mxu0 %v1439
      %4566 = vmatmul.mubr.bf16.gmra.mrb[0].mxu0 %v1438
      %v4567 = vpop.f32.mrb[0].mxu0
      %v4568 = vadd.f32 %v4455, %v4567
      %v4569 = vpop.f32.mrb[0].mxu0
      %v4570 = vadd.f32 %v4457, %v4569
      %v4571 = vpop.f32.mrb[0].mxu0
      %v4572 = vadd.f32 %v4459, %v4571
      %v4573 = vpop.f32.mrb[0].mxu0
      %v4574 = vadd.f32 %v4461, %v4573
      %4575 = vmatprep.mubr.bf16.mxu0 %v1464
      %4576 = vmatmul.mubr.bf16.gmra.mrb[0].mxu0 %v1463
      %v4577 = vpop.f32.mrb[0].mxu0
      %v4578 = vadd.f32 %v4465, %v4577
      %v4579 = vpop.f32.mrb[0].mxu0
      %v4580 = vadd.f32 %v4467, %v4579
      %v4581 = vpop.f32.mrb[0].mxu0
      %v4582 = vadd.f32 %v4469, %v4581
      %v4583 = vpop.f32.mrb[0].mxu0
      %v4584 = vadd.f32 %v4471, %v4583
      %4585 = vmatprep.mubr.bf16.mxu0 %v1489
      %4586 = vmatmul.mubr.bf16.gmra.mrb[0].mxu0 %v1488
      %v4587 = vpop.f32.mrb[0].mxu0
      %v4588 = vadd.f32 %v4475, %v4587
      %v4589 = vpop.f32.mrb[0].mxu0
      %v4590 = vadd.f32 %v4477, %v4589
      %v4591 = vpop.f32.mrb[0].mxu0
      %v4592 = vadd.f32 %v4479, %v4591
      %v4593 = vpop.f32.mrb[0].mxu0
      %v4594 = vadd.f32 %v4481, %v4593
      %4595 = vmatprep.mubr.bf16.mxu0 %v1514
      %4596 = vmatmul.mubr.bf16.gmra.mrb[0].mxu0 %v1513
      %v4597 = vpop.f32.mrb[0].mxu0
      %v4598 = vadd.f32 %v4485, %v4597
      %v4599 = vpop.f32.mrb[0].mxu0
      %v4600 = vadd.f32 %v4487, %v4599
      %v4601 = vpop.f32.mrb[0].mxu0
      %v4602 = vadd.f32 %v4489, %v4601
      %v4603 = vpop.f32.mrb[0].mxu0
      %v4604 = vadd.f32 %v4491, %v4603
      %4605 = vdwg.mxu0
      %4606 = vmatprep.subr.bf16.mxu0 %v3321
      %4607 = vmatpush1.bf16.msra.mxu0 %v3320
      %4608 = vmatprep.subr.bf16.mxu0 %v3323
      %4609 = vmatpush1.bf16.msra.mxu0 %v3322
      %4610 = vmatprep.subr.bf16.mxu0 %v3325
      %4611 = vmatpush1.bf16.msra.mxu0 %v3324
      %4612 = vmatprep.subr.bf16.mxu0 %v3327
      %4613 = vmatpush1.bf16.msra.mxu0 %v3326
      %4614 = vmatprep.subr.bf16.mxu0 %v3329
      %4615 = vmatpush1.bf16.msra.mxu0 %v3328
      %4616 = vmatprep.subr.bf16.mxu0 %v3331
      %4617 = vmatpush1.bf16.msra.mxu0 %v3330
      %4618 = vmatprep.subr.bf16.mxu0 %v3333
      %4619 = vmatpush1.bf16.msra.mxu0 %v3332
      %4620 = vmatprep.subr.bf16.mxu0 %v3335
      %4621 = vmatpush1.bf16.msra.mxu0 %v3334
      %4622 = vmatprep.subr.bf16.mxu0 %v3337
      %4623 = vmatpush1.bf16.msra.mxu0 %v3336
      %4624 = vmatprep.subr.bf16.mxu0 %v3339
      %4625 = vmatpush1.bf16.msra.mxu0 %v3338
      %4626 = vmatprep.subr.bf16.mxu0 %v3341
      %4627 = vmatpush1.bf16.msra.mxu0 %v3340
      %4628 = vmatprep.subr.bf16.mxu0 %v3343
      %4629 = vmatpush1.bf16.msra.mxu0 %v3342
      %4630 = vmatprep.subr.bf16.mxu0 %v3345
      %4631 = vmatpush1.bf16.msra.mxu0 %v3344
      %4632 = vmatprep.subr.bf16.mxu0 %v3347
      %4633 = vmatpush1.bf16.msra.mxu0 %v3346
      %4634 = vmatprep.subr.bf16.mxu0 %v3349
      %4635 = vmatpush1.bf16.msra.mxu0 %v3348
      %4636 = vmatprep.subr.bf16.mxu0 %v3351
      %4637 = vmatpush1.bf16.msra.mxu0 %v3350
      %4638 = vmatprep.mubr.bf16.mxu0 %v1341
      %4639 = vmatmul.mubr.bf16.gmra.mrb[0].mxu0 %v1340
      %v4640 = vpop.f32.mrb[0].mxu0
      %v4641 = vadd.f32 %v4528, %v4640
      %v4642 = vpop.f32.mrb[0].mxu0
      %v4643 = vadd.f32 %v4530, %v4642
      %v4644 = vpop.f32.mrb[0].mxu0
      %v4645 = vadd.f32 %v4532, %v4644
      %v4646 = vpop.f32.mrb[0].mxu0
      %v4647 = vadd.f32 %v4534, %v4646
      %4648 = vmatprep.mubr.bf16.mxu0 %v1366
      %4649 = vmatmul.mubr.bf16.gmra.mrb[0].mxu0 %v1365
      %v4650 = vpop.f32.mrb[0].mxu0
      %v4651 = vadd.f32 %v4538, %v4650
      %v4652 = vpop.f32.mrb[0].mxu0
      %v4653 = vadd.f32 %v4540, %v4652
      %v4654 = vpop.f32.mrb[0].mxu0
      %v4655 = vadd.f32 %v4542, %v4654
      %v4656 = vpop.f32.mrb[0].mxu0
      %v4657 = vadd.f32 %v4544, %v4656
      %4658 = vmatprep.mubr.bf16.mxu0 %v1391
      %4659 = vmatmul.mubr.bf16.gmra.mrb[0].mxu0 %v1390
      %v4660 = vpop.f32.mrb[0].mxu0
      %v4661 = vadd.f32 %v4548, %v4660
      %v4662 = vpop.f32.mrb[0].mxu0
      %v4663 = vadd.f32 %v4550, %v4662
      %v4664 = vpop.f32.mrb[0].mxu0
      %v4665 = vadd.f32 %v4552, %v4664
      %v4666 = vpop.f32.mrb[0].mxu0
      %v4667 = vadd.f32 %v4554, %v4666
      %4668 = vmatprep.mubr.bf16.mxu0 %v1416
      %4669 = vmatmul.mubr.bf16.gmra.mrb[0].mxu0 %v1415
      %v4670 = vpop.f32.mrb[0].mxu0
      %v4671 = vadd.f32 %v4558, %v4670
      %v4672 = vpop.f32.mrb[0].mxu0
      %v4673 = vadd.f32 %v4560, %v4672
      %v4674 = vpop.f32.mrb[0].mxu0
      %v4675 = vadd.f32 %v4562, %v4674
      %v4676 = vpop.f32.mrb[0].mxu0
      %v4677 = vadd.f32 %v4564, %v4676
      %4678 = vmatprep.mubr.bf16.mxu0 %v1441
      %4679 = vmatmul.mubr.bf16.gmra.mrb[0].mxu0 %v1440
      %v4680 = vpop.f32.mrb[0].mxu0
      %v4681 = vadd.f32 %v4568, %v4680
      %v4682 = vpop.f32.mrb[0].mxu0
      %v4683 = vadd.f32 %v4570, %v4682
      %v4684 = vpop.f32.mrb[0].mxu0
      %v4685 = vadd.f32 %v4572, %v4684
      %v4686 = vpop.f32.mrb[0].mxu0
      %v4687 = vadd.f32 %v4574, %v4686
      %4688 = vmatprep.mubr.bf16.mxu0 %v1466
      %4689 = vmatmul.mubr.bf16.gmra.mrb[0].mxu0 %v1465
      %v4690 = vpop.f32.mrb[0].mxu0
      %v4691 = vadd.f32 %v4578, %v4690
      %v4692 = vpop.f32.mrb[0].mxu0
      %v4693 = vadd.f32 %v4580, %v4692
      %v4694 = vpop.f32.mrb[0].mxu0
      %v4695 = vadd.f32 %v4582, %v4694
      %v4696 = vpop.f32.mrb[0].mxu0
      %v4697 = vadd.f32 %v4584, %v4696
      %4698 = vmatprep.mubr.bf16.mxu0 %v1491
      %4699 = vmatmul.mubr.bf16.gmra.mrb[0].mxu0 %v1490
      %v4700 = vpop.f32.mrb[0].mxu0
      %v4701 = vadd.f32 %v4588, %v4700
      %v4702 = vpop.f32.mrb[0].mxu0
      %v4703 = vadd.f32 %v4590, %v4702
      %v4704 = vpop.f32.mrb[0].mxu0
      %v4705 = vadd.f32 %v4592, %v4704
      %v4706 = vpop.f32.mrb[0].mxu0
      %v4707 = vadd.f32 %v4594, %v4706
      %4708 = vmatprep.mubr.bf16.mxu0 %v1516
      %4709 = vmatmul.mubr.bf16.gmra.mrb[0].mxu0 %v1515
      %v4710 = vpop.f32.mrb[0].mxu0
      %v4711 = vadd.f32 %v4598, %v4710
      %v4712 = vpop.f32.mrb[0].mxu0
      %v4713 = vadd.f32 %v4600, %v4712
      %v4714 = vpop.f32.mrb[0].mxu0
      %v4715 = vadd.f32 %v4602, %v4714
      %v4716 = vpop.f32.mrb[0].mxu0
      %v4717 = vadd.f32 %v4604, %v4716
      %4718 = vdwg.mxu0
      %4719 = vmatprep.subr.bf16.mxu0 %v3353
      %4720 = vmatpush1.bf16.msra.mxu0 %v3352
      %4721 = vmatprep.subr.bf16.mxu0 %v3355
      %4722 = vmatpush1.bf16.msra.mxu0 %v3354
      %4723 = vmatprep.subr.bf16.mxu0 %v3357
      %4724 = vmatpush1.bf16.msra.mxu0 %v3356
      %4725 = vmatprep.subr.bf16.mxu0 %v3359
      %4726 = vmatpush1.bf16.msra.mxu0 %v3358
      %4727 = vmatprep.subr.bf16.mxu0 %v3361
      %4728 = vmatpush1.bf16.msra.mxu0 %v3360
      %4729 = vmatprep.subr.bf16.mxu0 %v3363
      %4730 = vmatpush1.bf16.msra.mxu0 %v3362
      %4731 = vmatprep.subr.bf16.mxu0 %v3365
      %4732 = vmatpush1.bf16.msra.mxu0 %v3364
      %4733 = vmatprep.subr.bf16.mxu0 %v3367
      %4734 = vmatpush1.bf16.msra.mxu0 %v3366
      %4735 = vmatprep.subr.bf16.mxu0 %v3369
      %4736 = vmatpush1.bf16.msra.mxu0 %v3368
      %4737 = vmatprep.subr.bf16.mxu0 %v3371
      %4738 = vmatpush1.bf16.msra.mxu0 %v3370
      %4739 = vmatprep.subr.bf16.mxu0 %v3373
      %4740 = vmatpush1.bf16.msra.mxu0 %v3372
      %4741 = vmatprep.subr.bf16.mxu0 %v3375
      %4742 = vmatpush1.bf16.msra.mxu0 %v3374
      %4743 = vmatprep.subr.bf16.mxu0 %v3377
      %4744 = vmatpush1.bf16.msra.mxu0 %v3376
      %4745 = vmatprep.subr.bf16.mxu0 %v3379
      %4746 = vmatpush1.bf16.msra.mxu0 %v3378
      %4747 = vmatprep.subr.bf16.mxu0 %v3381
      %4748 = vmatpush1.bf16.msra.mxu0 %v3380
      %4749 = vmatprep.subr.bf16.mxu0 %v3383
      %4750 = vmatpush1.bf16.msra.mxu0 %v3382
      %4751 = vmatprep.mubr.bf16.mxu0 %v1343
      %4752 = vmatmul.mubr.bf16.gmra.mrb[0].mxu0 %v1342
      %v4753 = vpop.f32.mrb[0].mxu0
      %v4754 = vadd.f32 %v4641, %v4753
      %v4755 = vpop.f32.mrb[0].mxu0
      %v4756 = vadd.f32 %v4643, %v4755
      %v4757 = vpop.f32.mrb[0].mxu0
      %v4758 = vadd.f32 %v4645, %v4757
      %v4759 = vpop.f32.mrb[0].mxu0
      %v4760 = vadd.f32 %v4647, %v4759
      %4761 = vmatprep.mubr.bf16.mxu0 %v1368
      %4762 = vmatmul.mubr.bf16.gmra.mrb[0].mxu0 %v1367
      %v4763 = vpop.f32.mrb[0].mxu0
      %v4764 = vadd.f32 %v4651, %v4763
      %v4765 = vpop.f32.mrb[0].mxu0
      %v4766 = vadd.f32 %v4653, %v4765
      %v4767 = vpop.f32.mrb[0].mxu0
      %v4768 = vadd.f32 %v4655, %v4767
      %v4769 = vpop.f32.mrb[0].mxu0
      %v4770 = vadd.f32 %v4657, %v4769
      %4771 = vmatprep.mubr.bf16.mxu0 %v1393
      %4772 = vmatmul.mubr.bf16.gmra.mrb[0].mxu0 %v1392
      %v4773 = vpop.f32.mrb[0].mxu0
      %v4774 = vadd.f32 %v4661, %v4773
      %v4775 = vpop.f32.mrb[0].mxu0
      %v4776 = vadd.f32 %v4663, %v4775
      %v4777 = vpop.f32.mrb[0].mxu0
      %v4778 = vadd.f32 %v4665, %v4777
      %v4779 = vpop.f32.mrb[0].mxu0
      %v4780 = vadd.f32 %v4667, %v4779
      %4781 = vmatprep.mubr.bf16.mxu0 %v1418
      %4782 = vmatmul.mubr.bf16.gmra.mrb[0].mxu0 %v1417
      %v4783 = vpop.f32.mrb[0].mxu0
      %v4784 = vadd.f32 %v4671, %v4783
      %v4785 = vpop.f32.mrb[0].mxu0
      %v4786 = vadd.f32 %v4673, %v4785
      %v4787 = vpop.f32.mrb[0].mxu0
      %v4788 = vadd.f32 %v4675, %v4787
      %v4789 = vpop.f32.mrb[0].mxu0
      %v4790 = vadd.f32 %v4677, %v4789
      %4791 = vmatprep.mubr.bf16.mxu0 %v1443
      %4792 = vmatmul.mubr.bf16.gmra.mrb[0].mxu0 %v1442
      %v4793 = vpop.f32.mrb[0].mxu0
      %v4794 = vadd.f32 %v4681, %v4793
      %v4795 = vpop.f32.mrb[0].mxu0
      %v4796 = vadd.f32 %v4683, %v4795
      %v4797 = vpop.f32.mrb[0].mxu0
      %v4798 = vadd.f32 %v4685, %v4797
      %v4799 = vpop.f32.mrb[0].mxu0
      %v4800 = vadd.f32 %v4687, %v4799
      %4801 = vmatprep.mubr.bf16.mxu0 %v1468
      %4802 = vmatmul.mubr.bf16.gmra.mrb[0].mxu0 %v1467
      %v4803 = vpop.f32.mrb[0].mxu0
      %v4804 = vadd.f32 %v4691, %v4803
      %v4805 = vpop.f32.mrb[0].mxu0
      %v4806 = vadd.f32 %v4693, %v4805
      %v4807 = vpop.f32.mrb[0].mxu0
      %v4808 = vadd.f32 %v4695, %v4807
      %v4809 = vpop.f32.mrb[0].mxu0
      %v4810 = vadd.f32 %v4697, %v4809
      %4811 = vmatprep.mubr.bf16.mxu0 %v1493
      %4812 = vmatmul.mubr.bf16.gmra.mrb[0].mxu0 %v1492
      %v4813 = vpop.f32.mrb[0].mxu0
      %v4814 = vadd.f32 %v4701, %v4813
      %v4815 = vpop.f32.mrb[0].mxu0
      %v4816 = vadd.f32 %v4703, %v4815
      %v4817 = vpop.f32.mrb[0].mxu0
      %v4818 = vadd.f32 %v4705, %v4817
      %v4819 = vpop.f32.mrb[0].mxu0
      %v4820 = vadd.f32 %v4707, %v4819
      %4821 = vmatprep.mubr.bf16.mxu0 %v1518
      %4822 = vmatmul.mubr.bf16.gmra.mrb[0].mxu0 %v1517
      %v4823 = vpop.f32.mrb[0].mxu0
      %v4824 = vadd.f32 %v4711, %v4823
      %v4825 = vpop.f32.mrb[0].mxu0
      %v4826 = vadd.f32 %v4713, %v4825
      %v4827 = vpop.f32.mrb[0].mxu0
      %v4828 = vadd.f32 %v4715, %v4827
      %v4829 = vpop.f32.mrb[0].mxu0
      %v4830 = vadd.f32 %v4717, %v4829
      %4831 = vdwg.mxu0
      %4832 = vmatprep.subr.bf16.mxu0 %v3385
      %4833 = vmatpush1.bf16.msra.mxu0 %v3384
      %4834 = vmatprep.subr.bf16.mxu0 %v3387
      %4835 = vmatpush1.bf16.msra.mxu0 %v3386
      %4836 = vmatprep.subr.bf16.mxu0 %v3389
      %4837 = vmatpush1.bf16.msra.mxu0 %v3388
      %4838 = vmatprep.subr.bf16.mxu0 %v3391
      %4839 = vmatpush1.bf16.msra.mxu0 %v3390
      %4840 = vmatprep.subr.bf16.mxu0 %v3393
      %4841 = vmatpush1.bf16.msra.mxu0 %v3392
      %4842 = vmatprep.subr.bf16.mxu0 %v3395
      %4843 = vmatpush1.bf16.msra.mxu0 %v3394
      %4844 = vmatprep.subr.bf16.mxu0 %v3397
      %4845 = vmatpush1.bf16.msra.mxu0 %v3396
      %4846 = vmatprep.subr.bf16.mxu0 %v3399
      %4847 = vmatpush1.bf16.msra.mxu0 %v3398
      %4848 = vmatprep.subr.bf16.mxu0 %v3401
      %4849 = vmatpush1.bf16.msra.mxu0 %v3400
      %4850 = vmatprep.subr.bf16.mxu0 %v3403
      %4851 = vmatpush1.bf16.msra.mxu0 %v3402
      %4852 = vmatprep.subr.bf16.mxu0 %v3405
      %4853 = vmatpush1.bf16.msra.mxu0 %v3404
      %4854 = vmatprep.subr.bf16.mxu0 %v3407
      %4855 = vmatpush1.bf16.msra.mxu0 %v3406
      %4856 = vmatprep.subr.bf16.mxu0 %v3409
      %4857 = vmatpush1.bf16.msra.mxu0 %v3408
      %4858 = vmatprep.subr.bf16.mxu0 %v3411
      %4859 = vmatpush1.bf16.msra.mxu0 %v3410
      %4860 = vmatprep.subr.bf16.mxu0 %v3413
      %4861 = vmatpush1.bf16.msra.mxu0 %v3412
      %4862 = vmatprep.subr.bf16.mxu0 %v3415
      %4863 = vmatpush1.bf16.msra.mxu0 %v3414
      %4864 = vmatprep.mubr.bf16.mxu0 %v1345
      %4865 = vmatmul.mubr.bf16.gmra.mrb[0].mxu0 %v1344
      %v4866 = vpop.f32.mrb[0].mxu0
      %v4867 = vadd.f32 %v4754, %v4866
      %v4868 = vpop.f32.mrb[0].mxu0
      %v4869 = vadd.f32 %v4756, %v4868
      %v4870 = vpop.f32.mrb[0].mxu0
      %v4871 = vadd.f32 %v4758, %v4870
      %v4872 = vpop.f32.mrb[0].mxu0
      %v4873 = vadd.f32 %v4760, %v4872
      %4874 = vmatprep.mubr.bf16.mxu0 %v1370
      %4875 = vmatmul.mubr.bf16.gmra.mrb[0].mxu0 %v1369
      %v4876 = vpop.f32.mrb[0].mxu0
      %v4877 = vadd.f32 %v4764, %v4876
      %v4878 = vpop.f32.mrb[0].mxu0
      %v4879 = vadd.f32 %v4766, %v4878
      %v4880 = vpop.f32.mrb[0].mxu0
      %v4881 = vadd.f32 %v4768, %v4880
      %v4882 = vpop.f32.mrb[0].mxu0
      %v4883 = vadd.f32 %v4770, %v4882
      %4884 = vmatprep.mubr.bf16.mxu0 %v1395
      %4885 = vmatmul.mubr.bf16.gmra.mrb[0].mxu0 %v1394
      %v4886 = vpop.f32.mrb[0].mxu0
      %v4887 = vadd.f32 %v4774, %v4886
      %v4888 = vpop.f32.mrb[0].mxu0
      %v4889 = vadd.f32 %v4776, %v4888
      %v4890 = vpop.f32.mrb[0].mxu0
      %v4891 = vadd.f32 %v4778, %v4890
      %v4892 = vpop.f32.mrb[0].mxu0
      %v4893 = vadd.f32 %v4780, %v4892
      %4894 = vmatprep.mubr.bf16.mxu0 %v1420
      %4895 = vmatmul.mubr.bf16.gmra.mrb[0].mxu0 %v1419
      %v4896 = vpop.f32.mrb[0].mxu0
      %v4897 = vadd.f32 %v4784, %v4896
      %v4898 = vpop.f32.mrb[0].mxu0
      %v4899 = vadd.f32 %v4786, %v4898
      %v4900 = vpop.f32.mrb[0].mxu0
      %v4901 = vadd.f32 %v4788, %v4900
      %v4902 = vpop.f32.mrb[0].mxu0
      %v4903 = vadd.f32 %v4790, %v4902
      %4904 = vmatprep.mubr.bf16.mxu0 %v1445
      %4905 = vmatmul.mubr.bf16.gmra.mrb[0].mxu0 %v1444
      %v4906 = vpop.f32.mrb[0].mxu0
      %v4907 = vadd.f32 %v4794, %v4906
      %v4908 = vpop.f32.mrb[0].mxu0
      %v4909 = vadd.f32 %v4796, %v4908
      %v4910 = vpop.f32.mrb[0].mxu0
      %v4911 = vadd.f32 %v4798, %v4910
      %v4912 = vpop.f32.mrb[0].mxu0
      %v4913 = vadd.f32 %v4800, %v4912
      %4914 = vmatprep.mubr.bf16.mxu0 %v1470
      %4915 = vmatmul.mubr.bf16.gmra.mrb[0].mxu0 %v1469
      %v4916 = vpop.f32.mrb[0].mxu0
      %v4917 = vadd.f32 %v4804, %v4916
      %v4918 = vpop.f32.mrb[0].mxu0
      %v4919 = vadd.f32 %v4806, %v4918
      %v4920 = vpop.f32.mrb[0].mxu0
      %v4921 = vadd.f32 %v4808, %v4920
      %v4922 = vpop.f32.mrb[0].mxu0
      %v4923 = vadd.f32 %v4810, %v4922
      %4924 = vmatprep.mubr.bf16.mxu0 %v1495
      %4925 = vmatmul.mubr.bf16.gmra.mrb[0].mxu0 %v1494
      %v4926 = vpop.f32.mrb[0].mxu0
      %v4927 = vadd.f32 %v4814, %v4926
      %v4928 = vpop.f32.mrb[0].mxu0
      %v4929 = vadd.f32 %v4816, %v4928
      %v4930 = vpop.f32.mrb[0].mxu0
      %v4931 = vadd.f32 %v4818, %v4930
      %v4932 = vpop.f32.mrb[0].mxu0
      %v4933 = vadd.f32 %v4820, %v4932
      %4934 = vmatprep.mubr.bf16.mxu0 %v1520
      %4935 = vmatmul.mubr.bf16.gmra.mrb[0].mxu0 %v1519
      %v4936 = vpop.f32.mrb[0].mxu0
      %v4937 = vadd.f32 %v4824, %v4936
      %v4938 = vpop.f32.mrb[0].mxu0
      %v4939 = vadd.f32 %v4826, %v4938
      %v4940 = vpop.f32.mrb[0].mxu0
      %v4941 = vadd.f32 %v4828, %v4940
      %v4942 = vpop.f32.mrb[0].mxu0
      %v4943 = vadd.f32 %v4830, %v4942
      %4944 = vdwg.mxu0
      %4945 = vmatprep.subr.bf16.mxu0 %v3417
      %4946 = vmatpush1.bf16.msra.mxu0 %v3416
      %4947 = vmatprep.subr.bf16.mxu0 %v3419
      %4948 = vmatpush1.bf16.msra.mxu0 %v3418
      %4949 = vmatprep.subr.bf16.mxu0 %v3421
      %4950 = vmatpush1.bf16.msra.mxu0 %v3420
      %4951 = vmatprep.subr.bf16.mxu0 %v3423
      %4952 = vmatpush1.bf16.msra.mxu0 %v3422
      %4953 = vmatprep.subr.bf16.mxu0 %v3425
      %4954 = vmatpush1.bf16.msra.mxu0 %v3424
      %4955 = vmatprep.subr.bf16.mxu0 %v3427
      %4956 = vmatpush1.bf16.msra.mxu0 %v3426
      %4957 = vmatprep.subr.bf16.mxu0 %v3429
      %4958 = vmatpush1.bf16.msra.mxu0 %v3428
      %4959 = vmatprep.subr.bf16.mxu0 %v3431
      %4960 = vmatpush1.bf16.msra.mxu0 %v3430
      %4961 = vmatprep.subr.bf16.mxu0 %v3433
      %4962 = vmatpush1.bf16.msra.mxu0 %v3432
      %4963 = vmatprep.subr.bf16.mxu0 %v3435
      %4964 = vmatpush1.bf16.msra.mxu0 %v3434
      %4965 = vmatprep.subr.bf16.mxu0 %v3437
      %4966 = vmatpush1.bf16.msra.mxu0 %v3436
      %4967 = vmatprep.subr.bf16.mxu0 %v3439
      %4968 = vmatpush1.bf16.msra.mxu0 %v3438
      %4969 = vmatprep.subr.bf16.mxu0 %v3441
      %4970 = vmatpush1.bf16.msra.mxu0 %v3440
      %4971 = vmatprep.subr.bf16.mxu0 %v3443
      %4972 = vmatpush1.bf16.msra.mxu0 %v3442
      %4973 = vmatprep.subr.bf16.mxu0 %v3445
      %4974 = vmatpush1.bf16.msra.mxu0 %v3444
      %4975 = vmatprep.subr.bf16.mxu0 %v3447
      %4976 = vmatpush1.bf16.msra.mxu0 %v3446
      %4977 = vmatprep.mubr.bf16.mxu0 %v1347
      %4978 = vmatmul.mubr.bf16.gmra.mrb[0].mxu0 %v1346
      %v4979 = vpop.f32.mrb[0].mxu0
      %v4980 = vadd.f32 %v4867, %v4979
      %v4981 = vpop.f32.mrb[0].mxu0
      %v4982 = vadd.f32 %v4869, %v4981
      %v4983 = vpop.f32.mrb[0].mxu0
      %v4984 = vadd.f32 %v4871, %v4983
      %v4985 = vpop.f32.mrb[0].mxu0
      %v4986 = vadd.f32 %v4873, %v4985
      %4987 = vmatprep.mubr.bf16.mxu0 %v1372
      %4988 = vmatmul.mubr.bf16.gmra.mrb[0].mxu0 %v1371
      %v4989 = vpop.f32.mrb[0].mxu0
      %v4990 = vadd.f32 %v4877, %v4989
      %v4991 = vpop.f32.mrb[0].mxu0
      %v4992 = vadd.f32 %v4879, %v4991
      %v4993 = vpop.f32.mrb[0].mxu0
      %v4994 = vadd.f32 %v4881, %v4993
      %v4995 = vpop.f32.mrb[0].mxu0
      %v4996 = vadd.f32 %v4883, %v4995
      %4997 = vmatprep.mubr.bf16.mxu0 %v1397
      %4998 = vmatmul.mubr.bf16.gmra.mrb[0].mxu0 %v1396
      %v4999 = vpop.f32.mrb[0].mxu0
      %v5000 = vadd.f32 %v4887, %v4999
      %v5001 = vpop.f32.mrb[0].mxu0
      %v5002 = vadd.f32 %v4889, %v5001
      %v5003 = vpop.f32.mrb[0].mxu0
      %v5004 = vadd.f32 %v4891, %v5003
      %v5005 = vpop.f32.mrb[0].mxu0
      %v5006 = vadd.f32 %v4893, %v5005
      %5007 = vmatprep.mubr.bf16.mxu0 %v1422
      %5008 = vmatmul.mubr.bf16.gmra.mrb[0].mxu0 %v1421
      %v5009 = vpop.f32.mrb[0].mxu0
      %v5010 = vadd.f32 %v4897, %v5009
      %v5011 = vpop.f32.mrb[0].mxu0
      %v5012 = vadd.f32 %v4899, %v5011
      %v5013 = vpop.f32.mrb[0].mxu0
      %v5014 = vadd.f32 %v4901, %v5013
      %v5015 = vpop.f32.mrb[0].mxu0
      %v5016 = vadd.f32 %v4903, %v5015
      %5017 = vmatprep.mubr.bf16.mxu0 %v1447
      %5018 = vmatmul.mubr.bf16.gmra.mrb[0].mxu0 %v1446
      %v5019 = vpop.f32.mrb[0].mxu0
      %v5020 = vadd.f32 %v4907, %v5019
      %v5021 = vpop.f32.mrb[0].mxu0
      %v5022 = vadd.f32 %v4909, %v5021
      %v5023 = vpop.f32.mrb[0].mxu0
      %v5024 = vadd.f32 %v4911, %v5023
      %v5025 = vpop.f32.mrb[0].mxu0
      %v5026 = vadd.f32 %v4913, %v5025
      %5027 = vmatprep.mubr.bf16.mxu0 %v1472
      %5028 = vmatmul.mubr.bf16.gmra.mrb[0].mxu0 %v1471
      %v5029 = vpop.f32.mrb[0].mxu0
      %v5030 = vadd.f32 %v4917, %v5029
      %v5031 = vpop.f32.mrb[0].mxu0
      %v5032 = vadd.f32 %v4919, %v5031
      %v5033 = vpop.f32.mrb[0].mxu0
      %v5034 = vadd.f32 %v4921, %v5033
      %v5035 = vpop.f32.mrb[0].mxu0
      %v5036 = vadd.f32 %v4923, %v5035
      %5037 = vmatprep.mubr.bf16.mxu0 %v1497
      %5038 = vmatmul.mubr.bf16.gmra.mrb[0].mxu0 %v1496
      %v5039 = vpop.f32.mrb[0].mxu0
      %v5040 = vadd.f32 %v4927, %v5039
      %v5041 = vpop.f32.mrb[0].mxu0
      %v5042 = vadd.f32 %v4929, %v5041
      %v5043 = vpop.f32.mrb[0].mxu0
      %v5044 = vadd.f32 %v4931, %v5043
      %v5045 = vpop.f32.mrb[0].mxu0
      %v5046 = vadd.f32 %v4933, %v5045
      %5047 = vmatprep.mubr.bf16.mxu0 %v1522
      %5048 = vmatmul.mubr.bf16.gmra.mrb[0].mxu0 %v1521
      %v5049 = vpop.f32.mrb[0].mxu0
      %v5050 = vadd.f32 %v4937, %v5049
      %v5051 = vpop.f32.mrb[0].mxu0
      %v5052 = vadd.f32 %v4939, %v5051
      %v5053 = vpop.f32.mrb[0].mxu0
      %v5054 = vadd.f32 %v4941, %v5053
      %v5055 = vpop.f32.mrb[0].mxu0
      %v5056 = vadd.f32 %v4943, %v5055
      %5057 = vdwg.mxu0
      %5058 = vmatprep.subr.bf16.mxu0 %v3449
      %5059 = vmatpush1.bf16.msra.mxu0 %v3448
      %5060 = vmatprep.subr.bf16.mxu0 %v3451
      %5061 = vmatpush1.bf16.msra.mxu0 %v3450
      %5062 = vmatprep.subr.bf16.mxu0 %v3453
      %5063 = vmatpush1.bf16.msra.mxu0 %v3452
      %5064 = vmatprep.subr.bf16.mxu0 %v3455
      %5065 = vmatpush1.bf16.msra.mxu0 %v3454
      %5066 = vmatprep.subr.bf16.mxu0 %v3457
      %5067 = vmatpush1.bf16.msra.mxu0 %v3456
      %5068 = vmatprep.subr.bf16.mxu0 %v3459
      %5069 = vmatpush1.bf16.msra.mxu0 %v3458
      %5070 = vmatprep.subr.bf16.mxu0 %v3461
      %5071 = vmatpush1.bf16.msra.mxu0 %v3460
      %5072 = vmatprep.subr.bf16.mxu0 %v3463
      %5073 = vmatpush1.bf16.msra.mxu0 %v3462
      %5074 = vmatprep.subr.bf16.mxu0 %v3465
      %5075 = vmatpush1.bf16.msra.mxu0 %v3464
      %5076 = vmatprep.subr.bf16.mxu0 %v3467
      %5077 = vmatpush1.bf16.msra.mxu0 %v3466
      %5078 = vmatprep.subr.bf16.mxu0 %v3469
      %5079 = vmatpush1.bf16.msra.mxu0 %v3468
      %5080 = vmatprep.subr.bf16.mxu0 %v3471
      %5081 = vmatpush1.bf16.msra.mxu0 %v3470
      %5082 = vmatprep.subr.bf16.mxu0 %v3473
      %5083 = vmatpush1.bf16.msra.mxu0 %v3472
      %5084 = vmatprep.subr.bf16.mxu0 %v3475
      %5085 = vmatpush1.bf16.msra.mxu0 %v3474
      %5086 = vmatprep.subr.bf16.mxu0 %v3477
      %5087 = vmatpush1.bf16.msra.mxu0 %v3476
      %5088 = vmatprep.subr.bf16.mxu0 %v3479
      %5089 = vmatpush1.bf16.msra.mxu0 %v3478
      %5090 = vmatprep.mubr.bf16.mxu0 %v1349
      %5091 = vmatmul.mubr.bf16.gmra.mrb[0].mxu0 %v1348
      %v5092 = vpop.f32.mrb[0].mxu0
      %v5093 = vadd.f32 %v4980, %v5092
      %v5094 = vpop.f32.mrb[0].mxu0
      %v5095 = vadd.f32 %v4982, %v5094
      %v5096 = vpop.f32.mrb[0].mxu0
      %v5097 = vadd.f32 %v4984, %v5096
      %v5098 = vpop.f32.mrb[0].mxu0
      %v5099 = vadd.f32 %v4986, %v5098
      %5100 = vmatprep.mubr.bf16.mxu0 %v1374
      %5101 = vmatmul.mubr.bf16.gmra.mrb[0].mxu0 %v1373
      %v5102 = vpop.f32.mrb[0].mxu0
      %v5103 = vadd.f32 %v4990, %v5102
      %v5104 = vpop.f32.mrb[0].mxu0
      %v5105 = vadd.f32 %v4992, %v5104
      %v5106 = vpop.f32.mrb[0].mxu0
      %v5107 = vadd.f32 %v4994, %v5106
      %v5108 = vpop.f32.mrb[0].mxu0
      %v5109 = vadd.f32 %v4996, %v5108
      %5110 = vmatprep.mubr.bf16.mxu0 %v1399
      %5111 = vmatmul.mubr.bf16.gmra.mrb[0].mxu0 %v1398
      %v5112 = vpop.f32.mrb[0].mxu0
      %v5113 = vadd.f32 %v5000, %v5112
      %v5114 = vpop.f32.mrb[0].mxu0
      %v5115 = vadd.f32 %v5002, %v5114
      %v5116 = vpop.f32.mrb[0].mxu0
      %v5117 = vadd.f32 %v5004, %v5116
      %v5118 = vpop.f32.mrb[0].mxu0
      %v5119 = vadd.f32 %v5006, %v5118
      %5120 = vmatprep.mubr.bf16.mxu0 %v1424
      %5121 = vmatmul.mubr.bf16.gmra.mrb[0].mxu0 %v1423
      %v5122 = vpop.f32.mrb[0].mxu0
      %v5123 = vadd.f32 %v5010, %v5122
      %v5124 = vpop.f32.mrb[0].mxu0
      %v5125 = vadd.f32 %v5012, %v5124
      %v5126 = vpop.f32.mrb[0].mxu0
      %v5127 = vadd.f32 %v5014, %v5126
      %v5128 = vpop.f32.mrb[0].mxu0
      %v5129 = vadd.f32 %v5016, %v5128
      %5130 = vmatprep.mubr.bf16.mxu0 %v1449
      %5131 = vmatmul.mubr.bf16.gmra.mrb[0].mxu0 %v1448
      %v5132 = vpop.f32.mrb[0].mxu0
      %v5133 = vadd.f32 %v5020, %v5132
      %v5134 = vpop.f32.mrb[0].mxu0
      %v5135 = vadd.f32 %v5022, %v5134
      %v5136 = vpop.f32.mrb[0].mxu0
      %v5137 = vadd.f32 %v5024, %v5136
      %v5138 = vpop.f32.mrb[0].mxu0
      %v5139 = vadd.f32 %v5026, %v5138
      %5140 = vmatprep.mubr.bf16.mxu0 %v1474
      %5141 = vmatmul.mubr.bf16.gmra.mrb[0].mxu0 %v1473
      %v5142 = vpop.f32.mrb[0].mxu0
      %v5143 = vadd.f32 %v5030, %v5142
      %v5144 = vpop.f32.mrb[0].mxu0
      %v5145 = vadd.f32 %v5032, %v5144
      %v5146 = vpop.f32.mrb[0].mxu0
      %v5147 = vadd.f32 %v5034, %v5146
      %v5148 = vpop.f32.mrb[0].mxu0
      %v5149 = vadd.f32 %v5036, %v5148
      %5150 = vmatprep.mubr.bf16.mxu0 %v1499
      %5151 = vmatmul.mubr.bf16.gmra.mrb[0].mxu0 %v1498
      %v5152 = vpop.f32.mrb[0].mxu0
      %v5153 = vadd.f32 %v5040, %v5152
      %v5154 = vpop.f32.mrb[0].mxu0
      %v5155 = vadd.f32 %v5042, %v5154
      %v5156 = vpop.f32.mrb[0].mxu0
      %v5157 = vadd.f32 %v5044, %v5156
      %v5158 = vpop.f32.mrb[0].mxu0
      %v5159 = vadd.f32 %v5046, %v5158
      %5160 = vmatprep.mubr.bf16.mxu0 %v1524
      %5161 = vmatmul.mubr.bf16.gmra.mrb[0].mxu0 %v1523
      %v5162 = vpop.f32.mrb[0].mxu0
      %v5163 = vadd.f32 %v5050, %v5162
      %v5164 = vpop.f32.mrb[0].mxu0
      %v5165 = vadd.f32 %v5052, %v5164
      %v5166 = vpop.f32.mrb[0].mxu0
      %v5167 = vadd.f32 %v5054, %v5166
      %v5168 = vpop.f32.mrb[0].mxu0
      %v5169 = vadd.f32 %v5056, %v5168
      %5170 = vdwg.mxu0
      %5171 = vmatprep.subr.bf16.mxu0 %v3481
      %5172 = vmatpush1.bf16.msra.mxu0 %v3480
      %5173 = vmatprep.subr.bf16.mxu0 %v3483
      %5174 = vmatpush1.bf16.msra.mxu0 %v3482
      %5175 = vmatprep.subr.bf16.mxu0 %v3485
      %5176 = vmatpush1.bf16.msra.mxu0 %v3484
      %5177 = vmatprep.subr.bf16.mxu0 %v3487
      %5178 = vmatpush1.bf16.msra.mxu0 %v3486
      %5179 = vmatprep.subr.bf16.mxu0 %v3489
      %5180 = vmatpush1.bf16.msra.mxu0 %v3488
      %5181 = vmatprep.subr.bf16.mxu0 %v3491
      %5182 = vmatpush1.bf16.msra.mxu0 %v3490
      %5183 = vmatprep.subr.bf16.mxu0 %v3493
      %5184 = vmatpush1.bf16.msra.mxu0 %v3492
      %5185 = vmatprep.subr.bf16.mxu0 %v3495
      %5186 = vmatpush1.bf16.msra.mxu0 %v3494
      %5187 = vmatprep.subr.bf16.mxu0 %v3497
      %5188 = vmatpush1.bf16.msra.mxu0 %v3496
      %5189 = vmatprep.subr.bf16.mxu0 %v3499
      %5190 = vmatpush1.bf16.msra.mxu0 %v3498
      %5191 = vmatprep.subr.bf16.mxu0 %v3501
      %5192 = vmatpush1.bf16.msra.mxu0 %v3500
      %5193 = vmatprep.subr.bf16.mxu0 %v3503
      %5194 = vmatpush1.bf16.msra.mxu0 %v3502
      %5195 = vmatprep.subr.bf16.mxu0 %v3505
      %5196 = vmatpush1.bf16.msra.mxu0 %v3504
      %5197 = vmatprep.subr.bf16.mxu0 %v3507
      %5198 = vmatpush1.bf16.msra.mxu0 %v3506
      %5199 = vmatprep.subr.bf16.mxu0 %v3509
      %5200 = vmatpush1.bf16.msra.mxu0 %v3508
      %5201 = vmatprep.subr.bf16.mxu0 %v3511
      %5202 = vmatpush1.bf16.msra.mxu0 %v3510
      %5203 = vmatprep.mubr.bf16.mxu0 %v1351
      %5204 = vmatmul.mubr.bf16.gmra.mrb[0].mxu0 %v1350
      %v5205 = vpop.f32.mrb[0].mxu0
      %v5206 = vadd.f32 %v5093, %v5205
      %v5207 = vpop.f32.mrb[0].mxu0
      %v5208 = vadd.f32 %v5095, %v5207
      %v5209 = vpop.f32.mrb[0].mxu0
      %v5210 = vadd.f32 %v5097, %v5209
      %v5211 = vpop.f32.mrb[0].mxu0
      %v5212 = vadd.f32 %v5099, %v5211
      %5213 = vmatprep.mubr.bf16.mxu0 %v1376
      %5214 = vmatmul.mubr.bf16.gmra.mrb[0].mxu0 %v1375
      %v5215 = vpop.f32.mrb[0].mxu0
      %v5216 = vadd.f32 %v5103, %v5215
      %v5217 = vpop.f32.mrb[0].mxu0
      %v5218 = vadd.f32 %v5105, %v5217
      %v5219 = vpop.f32.mrb[0].mxu0
      %v5220 = vadd.f32 %v5107, %v5219
      %v5221 = vpop.f32.mrb[0].mxu0
      %v5222 = vadd.f32 %v5109, %v5221
      %5223 = vmatprep.mubr.bf16.mxu0 %v1401
      %5224 = vmatmul.mubr.bf16.gmra.mrb[0].mxu0 %v1400
      %v5225 = vpop.f32.mrb[0].mxu0
      %v5226 = vadd.f32 %v5113, %v5225
      %v5227 = vpop.f32.mrb[0].mxu0
      %v5228 = vadd.f32 %v5115, %v5227
      %v5229 = vpop.f32.mrb[0].mxu0
      %v5230 = vadd.f32 %v5117, %v5229
      %v5231 = vpop.f32.mrb[0].mxu0
      %v5232 = vadd.f32 %v5119, %v5231
      %5233 = vmatprep.mubr.bf16.mxu0 %v1426
      %5234 = vmatmul.mubr.bf16.gmra.mrb[0].mxu0 %v1425
      %v5235 = vpop.f32.mrb[0].mxu0
      %v5236 = vadd.f32 %v5123, %v5235
      %v5237 = vpop.f32.mrb[0].mxu0
      %v5238 = vadd.f32 %v5125, %v5237
      %v5239 = vpop.f32.mrb[0].mxu0
      %v5240 = vadd.f32 %v5127, %v5239
      %v5241 = vpop.f32.mrb[0].mxu0
      %v5242 = vadd.f32 %v5129, %v5241
      %5243 = vmatprep.mubr.bf16.mxu0 %v1451
      %5244 = vmatmul.mubr.bf16.gmra.mrb[0].mxu0 %v1450
      %v5245 = vpop.f32.mrb[0].mxu0
      %v5246 = vadd.f32 %v5133, %v5245
      %v5247 = vpop.f32.mrb[0].mxu0
      %v5248 = vadd.f32 %v5135, %v5247
      %v5249 = vpop.f32.mrb[0].mxu0
      %v5250 = vadd.f32 %v5137, %v5249
      %v5251 = vpop.f32.mrb[0].mxu0
      %v5252 = vadd.f32 %v5139, %v5251
      %5253 = vmatprep.mubr.bf16.mxu0 %v1476
      %5254 = vmatmul.mubr.bf16.gmra.mrb[0].mxu0 %v1475
      %v5255 = vpop.f32.mrb[0].mxu0
      %v5256 = vadd.f32 %v5143, %v5255
      %v5257 = vpop.f32.mrb[0].mxu0
      %v5258 = vadd.f32 %v5145, %v5257
      %v5259 = vpop.f32.mrb[0].mxu0
      %v5260 = vadd.f32 %v5147, %v5259
      %v5261 = vpop.f32.mrb[0].mxu0
      %v5262 = vadd.f32 %v5149, %v5261
      %5263 = vmatprep.mubr.bf16.mxu0 %v1501
      %5264 = vmatmul.mubr.bf16.gmra.mrb[0].mxu0 %v1500
      %v5265 = vpop.f32.mrb[0].mxu0
      %v5266 = vadd.f32 %v5153, %v5265
      %v5267 = vpop.f32.mrb[0].mxu0
      %v5268 = vadd.f32 %v5155, %v5267
      %v5269 = vpop.f32.mrb[0].mxu0
      %v5270 = vadd.f32 %v5157, %v5269
      %v5271 = vpop.f32.mrb[0].mxu0
      %v5272 = vadd.f32 %v5159, %v5271
      %5273 = vmatprep.mubr.bf16.mxu0 %v1526
      %5274 = vmatmul.mubr.bf16.gmra.mrb[0].mxu0 %v1525
      %v5275 = vpop.f32.mrb[0].mxu0
      %v5276 = vadd.f32 %v5163, %v5275
      %v5277 = vpop.f32.mrb[0].mxu0
      %v5278 = vadd.f32 %v5165, %v5277
      %v5279 = vpop.f32.mrb[0].mxu0
      %v5280 = vadd.f32 %v5167, %v5279
      %v5281 = vpop.f32.mrb[0].mxu0
      %v5282 = vadd.f32 %v5169, %v5281
      %5283 = vdwg.mxu0
      %5284 = vmatprep.subr.bf16.mxu0 %v3513
      %5285 = vmatpush1.bf16.msra.mxu0 %v3512
      %5286 = vmatprep.subr.bf16.mxu0 %v3515
      %5287 = vmatpush1.bf16.msra.mxu0 %v3514
      %5288 = vmatprep.subr.bf16.mxu0 %v3517
      %5289 = vmatpush1.bf16.msra.mxu0 %v3516
      %5290 = vmatprep.subr.bf16.mxu0 %v3519
      %5291 = vmatpush1.bf16.msra.mxu0 %v3518
      %5292 = vmatprep.subr.bf16.mxu0 %v3521
      %5293 = vmatpush1.bf16.msra.mxu0 %v3520
      %5294 = vmatprep.subr.bf16.mxu0 %v3523
      %5295 = vmatpush1.bf16.msra.mxu0 %v3522
      %5296 = vmatprep.subr.bf16.mxu0 %v3525
      %5297 = vmatpush1.bf16.msra.mxu0 %v3524
      %5298 = vmatprep.subr.bf16.mxu0 %v3527
      %5299 = vmatpush1.bf16.msra.mxu0 %v3526
      %5300 = vmatprep.subr.bf16.mxu0 0
      %5301 = vmatpush1.bf16.msra.mxu0 0
      %5302 = vmatprep.subr.bf16.mxu0 0
      %5303 = vmatpush1.bf16.msra.mxu0 0
      %5304 = vmatprep.subr.bf16.mxu0 0
      %5305 = vmatpush1.bf16.msra.mxu0 0
      %5306 = vmatprep.subr.bf16.mxu0 0
      %5307 = vmatpush1.bf16.msra.mxu0 0
      %5308 = vmatprep.subr.bf16.mxu0 0
      %5309 = vmatpush1.bf16.msra.mxu0 0
      %5310 = vmatprep.subr.bf16.mxu0 0
      %5311 = vmatpush1.bf16.msra.mxu0 0
      %5312 = vmatprep.subr.bf16.mxu0 0
      %5313 = vmatpush1.bf16.msra.mxu0 0
      %5314 = vmatprep.subr.bf16.mxu0 0
      %5315 = vmatpush1.bf16.msra.mxu0 0
      %5316 = vmatprep.mubr.bf16.mxu0 0
      %5317 = vmatmul.mubr.bf16.gmra.mrb[0].mxu0 %v1352
      %v5318 = vpop.f32.mrb[0].mxu0
      %v5319 = vadd.f32 %v5206, %v5318
      %v5320 = vpop.f32.mrb[0].mxu0
      %v5321 = vadd.f32 %v5208, %v5320
      %v5322 = vpop.f32.mrb[0].mxu0
      %v5323 = vadd.f32 %v5210, %v5322
      %v5324 = vpop.f32.mrb[0].mxu0
      %v5325 = vadd.f32 %v5212, %v5324
      %5326 = vmatprep.mubr.bf16.mxu0 0
      %5327 = vmatmul.mubr.bf16.gmra.mrb[0].mxu0 %v1377
      %v5328 = vpop.f32.mrb[0].mxu0
      %v5329 = vadd.f32 %v5216, %v5328
      %v5330 = vpop.f32.mrb[0].mxu0
      %v5331 = vadd.f32 %v5218, %v5330
      %v5332 = vpop.f32.mrb[0].mxu0
      %v5333 = vadd.f32 %v5220, %v5332
      %v5334 = vpop.f32.mrb[0].mxu0
      %v5335 = vadd.f32 %v5222, %v5334
      %5336 = vmatprep.mubr.bf16.mxu0 0
      %5337 = vmatmul.mubr.bf16.gmra.mrb[0].mxu0 %v1402
      %v5338 = vpop.f32.mrb[0].mxu0
      %v5339 = vadd.f32 %v5226, %v5338
      %v5340 = vpop.f32.mrb[0].mxu0
      %v5341 = vadd.f32 %v5228, %v5340
      %v5342 = vpop.f32.mrb[0].mxu0
      %v5343 = vadd.f32 %v5230, %v5342
      %v5344 = vpop.f32.mrb[0].mxu0
      %v5345 = vadd.f32 %v5232, %v5344
      %5346 = vmatprep.mubr.bf16.mxu0 0
      %5347 = vmatmul.mubr.bf16.gmra.mrb[0].mxu0 %v1427
      %v5348 = vpop.f32.mrb[0].mxu0
      %v5349 = vadd.f32 %v5236, %v5348
      %v5350 = vpop.f32.mrb[0].mxu0
      %v5351 = vadd.f32 %v5238, %v5350
      %v5352 = vpop.f32.mrb[0].mxu0
      %v5353 = vadd.f32 %v5240, %v5352
      %v5354 = vpop.f32.mrb[0].mxu0
      %v5355 = vadd.f32 %v5242, %v5354
      %5356 = vmatprep.mubr.bf16.mxu0 0
      %5357 = vmatmul.mubr.bf16.gmra.mrb[0].mxu0 %v1452
      %v5358 = vpop.f32.mrb[0].mxu0
      %v5359 = vadd.f32 %v5246, %v5358
      %v5360 = vpop.f32.mrb[0].mxu0
      %v5361 = vadd.f32 %v5248, %v5360
      %v5362 = vpop.f32.mrb[0].mxu0
      %v5363 = vadd.f32 %v5250, %v5362
      %v5364 = vpop.f32.mrb[0].mxu0
      %v5365 = vadd.f32 %v5252, %v5364
      %5366 = vmatprep.mubr.bf16.mxu0 0
      %5367 = vmatmul.mubr.bf16.gmra.mrb[0].mxu0 %v1477
      %v5368 = vpop.f32.mrb[0].mxu0
      %v5369 = vadd.f32 %v5256, %v5368
      %v5370 = vpop.f32.mrb[0].mxu0
      %v5371 = vadd.f32 %v5258, %v5370
      %v5372 = vpop.f32.mrb[0].mxu0
      %v5373 = vadd.f32 %v5260, %v5372
      %v5374 = vpop.f32.mrb[0].mxu0
      %v5375 = vadd.f32 %v5262, %v5374
      %5376 = vmatprep.mubr.bf16.mxu0 0
      %5377 = vmatmul.mubr.bf16.gmra.mrb[0].mxu0 %v1502
      %v5378 = vpop.f32.mrb[0].mxu0
      %v5379 = vadd.f32 %v5266, %v5378
      %v5380 = vpop.f32.mrb[0].mxu0
      %v5381 = vadd.f32 %v5268, %v5380
      %v5382 = vpop.f32.mrb[0].mxu0
      %v5383 = vadd.f32 %v5270, %v5382
      %v5384 = vpop.f32.mrb[0].mxu0
      %v5385 = vadd.f32 %v5272, %v5384
      %5386 = vmatprep.mubr.bf16.mxu0 0
      %5387 = vmatmul.mubr.bf16.gmra.mrb[0].mxu0 %v1527
      %v5388 = vpop.f32.mrb[0].mxu0
      %v5389 = vadd.f32 %v5276, %v5388
      %v5390 = vpop.f32.mrb[0].mxu0
      %v5391 = vadd.f32 %v5278, %v5390
      %v5392 = vpop.f32.mrb[0].mxu0
      %v5393 = vadd.f32 %v5280, %v5392
      %v5394 = vpop.f32.mrb[0].mxu0
      %v5395 = vadd.f32 %v5282, %v5394
      %5396 = vdwg.mxu0
      %v5397 = vpack.c.bf16 %v5323, %v5319
      %v5398 = vpack.c.bf16 %v5325, %v5321
      %v5399 = vpack.c.bf16 %v5333, %v5329
      %v5400 = vpack.c.bf16 %v5335, %v5331
      %v5401 = vpack.c.bf16 %v5343, %v5339
      %v5402 = vpack.c.bf16 %v5345, %v5341
      %v5403 = vpack.c.bf16 %v5353, %v5349
      %v5404 = vpack.c.bf16 %v5355, %v5351
      %v5405 = vpack.c.bf16 %v5363, %v5359
      %v5406 = vpack.c.bf16 %v5365, %v5361
      %v5407 = vpack.c.bf16 %v5373, %v5369
      %v5408 = vpack.c.bf16 %v5375, %v5371
      %v5409 = vpack.c.bf16 %v5383, %v5379
      %v5410 = vpack.c.bf16 %v5385, %v5381
      %v5411 = vpack.c.bf16 %v5393, %v5389
      %v5412 = vpack.c.bf16 %v5395, %v5391
      %v5429 = vunpack.c.l.b16 %v5397
      %v5430 = vunpack.c.l.b16 %v5398
      %v5431 = vunpack.c.h.b16 %v5397
      %v5432 = vunpack.c.h.b16 %v5398
      %v5433 = vunpack.c.l.b16 %v5399
      %v5434 = vunpack.c.l.b16 %v5400
      %v5435 = vunpack.c.h.b16 %v5399
      %v5436 = vunpack.c.h.b16 %v5400
      %v5437 = vunpack.c.l.b16 %v5401
      %v5438 = vunpack.c.l.b16 %v5402
      %v5439 = vunpack.c.h.b16 %v5401
      %v5440 = vunpack.c.h.b16 %v5402
      %v5441 = vunpack.c.l.b16 %v5403
      %v5442 = vunpack.c.l.b16 %v5404
      %v5443 = vunpack.c.h.b16 %v5403
      %v5444 = vunpack.c.h.b16 %v5404
      %v5445 = vunpack.c.l.b16 %v5405
      %v5446 = vunpack.c.l.b16 %v5406
      %v5447 = vunpack.c.h.b16 %v5405
      %v5448 = vunpack.c.h.b16 %v5406
      %v5449 = vunpack.c.l.b16 %v5407
      %v5450 = vunpack.c.l.b16 %v5408
      %v5451 = vunpack.c.h.b16 %v5407
      %v5452 = vunpack.c.h.b16 %v5408
      %v5453 = vunpack.c.l.b16 %v5409
      %v5454 = vunpack.c.l.b16 %v5410
      %v5455 = vunpack.c.h.b16 %v5409
      %v5456 = vunpack.c.h.b16 %v5410
      %v5457 = vunpack.c.l.b16 %v5411
      %v5458 = vunpack.c.l.b16 %v5412
      %v5459 = vunpack.c.h.b16 %v5411
      %v5460 = vunpack.c.h.b16 %v5412
      %v5461 = vpack.c.b16 %v5430, %v5429
      %v5462 = vpack.c.b16 %v5432, %v5431
      %v5463 = vpack.c.b16 %v5434, %v5433
      %v5464 = vpack.c.b16 %v5436, %v5435
      %v5465 = vpack.c.b16 %v5438, %v5437
      %v5466 = vpack.c.b16 %v5440, %v5439
      %v5467 = vpack.c.b16 %v5442, %v5441
      %v5468 = vpack.c.b16 %v5444, %v5443
      %v5469 = vpack.c.b16 %v5446, %v5445
      %v5470 = vpack.c.b16 %v5448, %v5447
      %v5471 = vpack.c.b16 %v5450, %v5449
      %v5472 = vpack.c.b16 %v5452, %v5451
      %v5473 = vpack.c.b16 %v5454, %v5453
      %v5474 = vpack.c.b16 %v5456, %v5455
      %v5475 = vpack.c.b16 %v5458, %v5457
      %v5476 = vpack.c.b16 %v5460, %v5459
      %5493 = vst [vmem:[%s260] sm:$0xff] %v5461
      %5494 = vst [vmem:[%s260 + $0x8] sm:$0xff] %v5462
      %5495 = vst [vmem:[%s260 + $0x10] sm:$0xff] %v5463
      %5496 = vst [vmem:[%s260 + $0x18] sm:$0xff] %v5464
      %5497 = vst [vmem:[%s260 + $0x20] sm:$0xff] %v5465
      %5498 = vst [vmem:[%s260 + $0x28] sm:$0xff] %v5466
      %5499 = vst [vmem:[%s260 + $0x30] sm:$0xff] %v5467
      %5500 = vst [vmem:[%s260 + $0x38] sm:$0xff] %v5468
      %5501 = vst [vmem:[%s260 + $0x40] sm:$0xff] %v5469
      %5502 = vst [vmem:[%s260 + $0x48] sm:$0xff] %v5470
      %5503 = vst [vmem:[%s260 + $0x50] sm:$0xff] %v5471
      %5504 = vst [vmem:[%s260 + $0x58] sm:$0xff] %v5472
      %5505 = vst [vmem:[%s260 + $0x60] sm:$0xff] %v5473
      %5506 = vst [vmem:[%s260 + $0x68] sm:$0xff] %v5474
      %5507 = vst [vmem:[%s260 + $0x70] sm:$0xff] %v5475
      %5508 = vst [vmem:[%s260 + $0x78] sm:$0xff] %v5476
      %v5509 = vadd.f32 %v5319, %v5323
      %v5510 = vadd.f32 %v5509, %v5329
      %v5511 = vadd.f32 %v5510, %v5333
      %v5512 = vadd.f32 %v5511, %v5339
      %v5513 = vadd.f32 %v5512, %v5343
      %v5514 = vadd.f32 %v5513, %v5349
      %v5515 = vadd.f32 %v5514, %v5353
      %v5516 = vadd.f32 %v5515, %v5359
      %v5517 = vadd.f32 %v5516, %v5363
      %v5518 = vadd.f32 %v5517, %v5369
      %v5519 = vadd.f32 %v5518, %v5373
      %v5520 = vadd.f32 %v5519, %v5379
      %v5521 = vadd.f32 %v5520, %v5383
      %v5522 = vadd.f32 %v5521, %v5389
      %v5523 = vadd.f32 %v5522, %v5393
      %v5524 = vrot.slane %v5523, 4
      %v5525 = vadd.f32 %v5523, %v5524
      %v5526 = vrot.slane %v5525, 2
      %v5527 = vadd.f32 %v5525, %v5526
      %v5528 = vrot.slane %v5527, 1
      %v5529 = vadd.f32 %v5527, %v5528
      %v5530 = vadd.f32 %v5321, %v5325
      %v5531 = vadd.f32 %v5530, %v5331
      %v5532 = vadd.f32 %v5531, %v5335
      %v5533 = vadd.f32 %v5532, %v5341
      %v5534 = vadd.f32 %v5533, %v5345
      %v5535 = vadd.f32 %v5534, %v5351
      %v5536 = vadd.f32 %v5535, %v5355
      %v5537 = vadd.f32 %v5536, %v5361
      %v5538 = vadd.f32 %v5537, %v5365
      %v5539 = vadd.f32 %v5538, %v5371
      %v5540 = vadd.f32 %v5539, %v5375
      %v5541 = vadd.f32 %v5540, %v5381
      %v5542 = vadd.f32 %v5541, %v5385
      %v5543 = vadd.f32 %v5542, %v5391
      %v5544 = vadd.f32 %v5543, %v5395
      %v5545 = vrot.slane %v5544, 4
      %v5546 = vadd.f32 %v5544, %v5545
      %v5547 = vrot.slane %v5546, 2
      %v5548 = vadd.f32 %v5546, %v5547
      %v5549 = vrot.slane %v5548, 1
      %v5550 = vadd.f32 %v5548, %v5549
      %v5551 = vmul.f32 %v5319, %v5319
      %v5552 = vmul.f32 %v5321, %v5321
      %v5553 = vmul.f32 %v5323, %v5323
      %v5554 = vmul.f32 %v5325, %v5325
      %v5555 = vmul.f32 %v5329, %v5329
      %v5556 = vmul.f32 %v5331, %v5331
      %v5557 = vmul.f32 %v5333, %v5333
      %v5558 = vmul.f32 %v5335, %v5335
      %v5559 = vmul.f32 %v5339, %v5339
      %v5560 = vmul.f32 %v5341, %v5341
      %v5561 = vmul.f32 %v5343, %v5343
      %v5562 = vmul.f32 %v5345, %v5345
      %v5563 = vmul.f32 %v5349, %v5349
      %v5564 = vmul.f32 %v5351, %v5351
      %v5565 = vmul.f32 %v5353, %v5353
      %v5566 = vmul.f32 %v5355, %v5355
      %v5567 = vmul.f32 %v5359, %v5359
      %v5568 = vmul.f32 %v5361, %v5361
      %v5569 = vmul.f32 %v5363, %v5363
      %v5570 = vmul.f32 %v5365, %v5365
      %v5571 = vmul.f32 %v5369, %v5369
      %v5572 = vmul.f32 %v5371, %v5371
      %v5573 = vmul.f32 %v5373, %v5373
      %v5574 = vmul.f32 %v5375, %v5375
      %v5575 = vmul.f32 %v5379, %v5379
      %v5576 = vmul.f32 %v5381, %v5381
      %v5577 = vmul.f32 %v5383, %v5383
      %v5578 = vmul.f32 %v5385, %v5385
      %v5579 = vmul.f32 %v5389, %v5389
      %v5580 = vmul.f32 %v5391, %v5391
      %v5581 = vmul.f32 %v5393, %v5393
      %v5582 = vmul.f32 %v5395, %v5395
      %v5583 = vadd.f32 %v5551, %v5553
      %v5584 = vadd.f32 %v5583, %v5555
      %v5585 = vadd.f32 %v5584, %v5557
      %v5586 = vadd.f32 %v5585, %v5559
      %v5587 = vadd.f32 %v5586, %v5561
      %v5588 = vadd.f32 %v5587, %v5563
      %v5589 = vadd.f32 %v5588, %v5565
      %v5590 = vadd.f32 %v5589, %v5567
      %v5591 = vadd.f32 %v5590, %v5569
      %v5592 = vadd.f32 %v5591, %v5571
      %v5593 = vadd.f32 %v5592, %v5573
      %v5594 = vadd.f32 %v5593, %v5575
      %v5595 = vadd.f32 %v5594, %v5577
      %v5596 = vadd.f32 %v5595, %v5579
      %v5597 = vadd.f32 %v5596, %v5581
      %v5598 = vrot.slane %v5597, 4
      %v5599 = vadd.f32 %v5597, %v5598
      %v5600 = vrot.slane %v5599, 2
      %v5601 = vadd.f32 %v5599, %v5600
      %v5602 = vrot.slane %v5601, 1
      %v5603 = vadd.f32 %v5601, %v5602
      %v5604 = vadd.f32 %v5552, %v5554
      %v5605 = vadd.f32 %v5604, %v5556
      %v5606 = vadd.f32 %v5605, %v5558
      %v5607 = vadd.f32 %v5606, %v5560
      %v5608 = vadd.f32 %v5607, %v5562
      %v5609 = vadd.f32 %v5608, %v5564
      %v5610 = vadd.f32 %v5609, %v5566
      %v5611 = vadd.f32 %v5610, %v5568
      %v5612 = vadd.f32 %v5611, %v5570
      %v5613 = vadd.f32 %v5612, %v5572
      %v5614 = vadd.f32 %v5613, %v5574
      %v5615 = vadd.f32 %v5614, %v5576
      %v5616 = vadd.f32 %v5615, %v5578
      %v5617 = vadd.f32 %v5616, %v5580
      %v5618 = vadd.f32 %v5617, %v5582
      %v5619 = vrot.slane %v5618, 4
      %v5620 = vadd.f32 %v5618, %v5619
      %v5621 = vrot.slane %v5620, 2
      %v5622 = vadd.f32 %v5620, %v5621
      %v5623 = vrot.slane %v5622, 1
      %v5624 = vadd.f32 %v5622, %v5623
      %vm5625 = vcmask 1043456
      %v5626 = vsel %vm5625, %v5529, %v5603
      %v5627 = vsel %vm5625, %v5550, %v5624
      %5628 = vst [vmem:[%s270] sm:$0xff] %v5626
      %5629 = vst [vmem:[%s270 + $0x8] sm:$0xff] %v5627
      %s5630 = smul.u32 %s21, 2
      %s5631 = sadd.s32 %s5630, %s22
      %s5632 = smul.u32 16, %s5631
      %p5633 = scmp.lt.s32.totalorder %s5632, 63
      %s5634 = scalar_select %p5633, %s5632, 63
      %s5635 = smul.addr %s5634, 2
      %s5636 = smul.addr %s5635, 4
      %s5637 = scalar_lea.vmem %s4, %s5636
      %s5638 = smul.u32 %s21, 2
      %s5639 = sadd.s32 %s5638, %s22
      %p5640 = scmp.lt.s32.totalorder %s5639, 3
      %s5641 = scalar_select %p5640, %s5639, 3
      %s5642 = smul.addr %s5641, 2
      %s5643 = smul.addr %s5642, 8
      %s5644 = scalar_lea.vmem %s5, %s5643
      // Predicated region
      $region41: #{inception_forward.4} parent=35 // pred_check
        %p5645 = pneg %p140
      $region42: #{inception_forward.4} parent=35 // pred_check_branch
        %5647 = sbr.rel (%p5645) target = $region44
      $region43: #{inception_forward.4} parent=35 // pred_region
        %s5648 = smul.u32 %s21, 2
        %s5649 = sadd.s32 %s5648, %s22
        %s5650 = smul.u32 16, %s5649
      $region44: #{inception_forward.4} parent=35 // pred_fallthru
        _
      // Predicated region
      $region45: #{inception_forward.4} parent=35 // pred_check
        %p5651 = pneg %p170
      $region46: #{inception_forward.4} parent=35 // pred_check_branch
        %5653 = sbr.rel (%p5651) target = $region48
      $region47: #{inception_forward.4} parent=35 // pred_region
        %s5654 = smul.u32 %s21, 2
        %s5655 = sadd.s32 %s5654, %s22
      $region48: #{inception_forward.4} parent=35 // pred_fallthru
        _
    $region36: #{inception_forward.4} parent=5 // pred_fallthru
      _
    %p5656 = scmp.le.s32.totalorder 2, %s12
    // Predicated region
    $region49: #{inception_forward.4} parent=5 // pred_check
      %p5657 = pneg %p5656
    $region50: #{inception_forward.4} parent=5 // pred_check_branch
      %5659 = sbr.rel (%p5657) target = $region52
    $region51: #{inception_forward.4} parent=5 // pred_region
      %s5660 = ssub.s32 %s12, 2
      // Predicated region
      $region53: #{inception_forward.4} parent=51 // pred_check
        %p5661 = pneg %p146
      $region54: #{inception_forward.4} parent=51 // pred_check_branch
        %5663 = sbr.rel (%p5661) target = $region56
      $region55: #{inception_forward.4} parent=51 // pred_region
        %s5664 = smul.u32 %s23, 2
        %s5665 = sadd.s32 %s5664, %s24
        %s5666 = smul.u32 16, %s5665
        %p5667 = scmp.lt.s32.totalorder %s5666, 63
        %s5668 = scalar_select %p5667, %s5666, 63
        %s5669 = smul.addr %s5668, 2
        %s5670 = smul.addr %s5669, 4
        %s5671 = scalar_lea.vmem %s4, %s5670
      $region56: #{inception_forward.4} parent=51 // pred_fallthru
        _
      // Predicated region
      $region57: #{inception_forward.4} parent=51 // pred_check
        %p5672 = pneg %p176
      $region58: #{inception_forward.4} parent=51 // pred_check_branch
        %5674 = sbr.rel (%p5672) target = $region60
      $region59: #{inception_forward.4} parent=51 // pred_region
        %s5675 = smul.u32 %s23, 2
        %s5676 = sadd.s32 %s5675, %s24
        %p5677 = scmp.lt.s32.totalorder %s5676, 3
        %s5678 = scalar_select %p5677, %s5676, 3
        %s5679 = smul.addr %s5678, 2
        %s5680 = smul.addr %s5679, 8
        %s5681 = scalar_lea.vmem %s5, %s5680
      $region60: #{inception_forward.4} parent=51 // pred_fallthru
        _
    $region52: #{inception_forward.4} parent=5 // pred_fallthru
      _
  $region6: #{inception_forward.4} parent=0 // loop_footer
    %s16 = sadd.s32 1, %s12
  $region7: #{inception_forward.4} parent=0 // loop_footer_branch
    %11 = sbr.rel target = $region3
  $region8: #{inception_forward.4} parent=0 // loop_exit
    _

</llo_original>
